<compile_context>
chip_gen: v7x
topology: tpu7x:2x2x1
jax: 0.10.0
libtpu: 0.0.40
codegen_flags: <defaults>
</compile_context>

<pallas_src>
import functools

import jax
import jax.numpy as jnp
from jax import lax
from jax.experimental import pallas as pl
from jax.experimental.pallas import tpu as pltpu

EPS = 1e-5

_TM_CAP = 128     # keep >=2 parallel M steps on the big layers (v7x megacore)
_TK_MAX = 2048    # single-K-step threshold (all U-Net layers fit well below)


# ---------------------------------------------------------------------------
# Fused GEMM Pallas kernels:  out = act((A @ B) * col_scale + col_bias)
# A, B are bf16; accumulation and epilogue are f32; out dtype is configurable.
# ---------------------------------------------------------------------------
def _gemm_kernel_single(a_ref, b_ref, scale_ref, bias_ref, o_ref, *, relu):
    """Whole K in one tile: no scratch accumulator, direct store."""
    y = jnp.dot(a_ref[...], b_ref[...], preferred_element_type=jnp.float32)
    y = y * scale_ref[...] + bias_ref[...]
    if relu:
        y = jnp.maximum(y, 0.0)
    o_ref[...] = y.astype(o_ref.dtype)


def _gemm_kernel_ksplit(a_ref, b_ref, scale_ref, bias_ref, o_ref, acc_ref, *, relu):
    """Fallback for very large K: accumulate in a f32 VMEM scratch."""
    @pl.when(pl.program_id(2) == 0)
    def _init():
        acc_ref[...] = jnp.zeros_like(acc_ref)

    acc_ref[...] += jnp.dot(a_ref[...], b_ref[...],
                            preferred_element_type=jnp.float32)

    @pl.when(pl.program_id(2) == pl.num_programs(2) - 1)
    def _finalize():
        y = acc_ref[...] * scale_ref[...] + bias_ref[...]
        if relu:
            y = jnp.maximum(y, 0.0)
        o_ref[...] = y.astype(o_ref.dtype)


def _round_up(x, m):
    return ((x + m - 1) // m) * m


def _largest_divisor_tile(mp, cap):
    t = cap
    while t > 8 and mp % t:
        t -= 8
    return t


def fused_gemm(a, b, col_scale, col_bias, *, relu, out_dtype=jnp.bfloat16):
    """act((a @ b) * col_scale + col_bias) with per-output-column scale/bias."""
    M, K = a.shape
    K2, N = b.shape
    assert K == K2

    a = a.astype(jnp.bfloat16)
    b = b.astype(jnp.bfloat16)
    scale = col_scale.astype(jnp.float32).reshape(1, N)
    bias = col_bias.astype(jnp.float32).reshape(1, N)

    # M tiling: sublane aligned; cap so large layers expose several grid steps.
    Mp = _round_up(M, 8)
    tm = Mp if Mp <= _TM_CAP else _largest_divisor_tile(Mp, _TM_CAP)
    if Mp != M:
        a = jnp.pad(a, ((0, Mp - M), (0, 0)))

    # N tiling: lane-dense 128 when possible; otherwise full (unpadded) dim.
    tn = 128 if (N % 128 == 0) else N

    out_bytes = Mp * N * jnp.dtype(out_dtype).itemsize
    cost = pl.CostEstimate(flops=2 * M * N * K, transcendentals=0,
                           bytes_accessed=Mp * K * 2 + K * N * 2 + out_bytes)

    if K <= _TK_MAX:
        grid = (Mp // tm, N // tn)
        out = pl.pallas_call(
            functools.partial(_gemm_kernel_single, relu=relu),
            out_shape=jax.ShapeDtypeStruct((Mp, N), out_dtype),
            grid_spec=pltpu.PrefetchScalarGridSpec(
                num_scalar_prefetch=0,
                grid=grid,
                in_specs=[
                    pl.BlockSpec((tm, K), lambda i, j: (i, 0)),
                    pl.BlockSpec((K, tn), lambda i, j: (0, j)),
                    pl.BlockSpec((1, tn), lambda i, j: (0, j)),
                    pl.BlockSpec((1, tn), lambda i, j: (0, j)),
                ],
                out_specs=pl.BlockSpec((tm, tn), lambda i, j: (i, j)),
            ),
            compiler_params=pltpu.CompilerParams(
                dimension_semantics=("parallel", "parallel")),
            cost_estimate=cost,
        )(a, b, scale, bias)
    else:
        tk = _TK_MAX
        Kp = _round_up(K, tk)
        a = jnp.pad(a, ((0, 0), (0, Kp - K)))
        b = jnp.pad(b, ((0, Kp - K), (0, 0)))
        grid = (Mp // tm, N // tn, Kp // tk)
        out = pl.pallas_call(
            functools.partial(_gemm_kernel_ksplit, relu=relu),
            out_shape=jax.ShapeDtypeStruct((Mp, N), out_dtype),
            grid_spec=pltpu.PrefetchScalarGridSpec(
                num_scalar_prefetch=0,
                grid=grid,
                in_specs=[
                    pl.BlockSpec((tm, tk), lambda i, j, k: (i, k)),
                    pl.BlockSpec((tk, tn), lambda i, j, k: (k, j)),
                    pl.BlockSpec((1, tn), lambda i, j, k: (0, j)),
                    pl.BlockSpec((1, tn), lambda i, j, k: (0, j)),
                ],
                out_specs=pl.BlockSpec((tm, tn), lambda i, j, k: (i, j)),
                scratch_shapes=[pltpu.VMEM((tm, tn), jnp.float32)],
            ),
            compiler_params=pltpu.CompilerParams(
                dimension_semantics=("parallel", "parallel", "arbitrary")),
            cost_estimate=cost,
        )(a, b, scale, bias)

    return out[:M] if Mp != M else out


# ---------------------------------------------------------------------------
# Layer wrappers (NHWC layout, bf16 activations).  Layout-only work is XLA.
# ---------------------------------------------------------------------------
def _im2col_3x3(x):
    n, h, w, c = x.shape
    xp = jnp.pad(x, ((0, 0), (1, 1), (1, 1), (0, 0)))
    cols = [xp[:, dy:dy + h, dx:dx + w, :] for dy in range(3) for dx in range(3)]
    return jnp.concatenate(cols, axis=-1).reshape(n * h * w, 9 * c)


def conv3x3(x, w, col_scale, col_bias, relu, out_dtype=jnp.bfloat16):
    """3x3 conv, padding=1; w in PyTorch layout (Cout, Cin, 3, 3)."""
    n, h, wd, cin = x.shape
    cout = w.shape[0]
    patches = _im2col_3x3(x)
    wm = jnp.transpose(w, (2, 3, 1, 0)).reshape(9 * cin, cout)
    y = fused_gemm(patches, wm, col_scale, col_bias, relu=relu, out_dtype=out_dtype)
    return y.reshape(n, h, wd, cout)


def conv1x1(x, w, b, out_dtype=jnp.float32):
    """1x1 conv; w in PyTorch layout (Cout, Cin, 1, 1)."""
    n, h, wd, cin = x.shape
    cout = w.shape[0]
    a = x.reshape(n * h * wd, cin)
    wm = w.reshape(cout, cin).T
    y = fused_gemm(a, wm, jnp.ones((cout,), jnp.float32), b, relu=False,
                   out_dtype=out_dtype)
    return y.reshape(n, h, wd, cout)


def conv_transpose2x2(x, w, b):
    """ConvTranspose2d(k=2, stride=2); w in PyTorch layout (Cin, Cout, 2, 2)."""
    n, h, wd, cin = x.shape
    cout = w.shape[1]
    a = x.reshape(n * h * wd, cin)
    wm = jnp.transpose(w, (0, 2, 3, 1)).reshape(cin, 4 * cout)   # (ci, di, dj, co)
    bias = jnp.tile(b, 4)
    y = fused_gemm(a, wm, jnp.ones((4 * cout,), jnp.float32), bias, relu=False,
                   out_dtype=jnp.bfloat16)
    y = y.reshape(n, h, wd, 2, 2, cout)
    y = jnp.transpose(y, (0, 1, 3, 2, 4, 5)).reshape(n, 2 * h, 2 * wd, cout)
    return y


def maxpool2x2(x):
    n, h, w, c = x.shape
    return x.reshape(n, h // 2, 2, w // 2, 2, c).max(axis=(2, 4))


def conv_block_fwd(x, p, pool=True):
    s1 = p["g1"] / jnp.sqrt(p["v1"] + EPS)
    b1 = (p["b1"] - p["m1"]) * s1 + p["be1"]
    x = conv3x3(x, p["w1"], s1, b1, relu=True)
    s2 = p["g2"] / jnp.sqrt(p["v2"] + EPS)
    b2 = (p["b2"] - p["m2"]) * s2 + p["be2"]
    x = conv3x3(x, p["w2"], s2, b2, relu=True)
    skip = x
    if pool:
        x = maxpool2x2(x)
    return x, skip


def up_conv_block_fwd(x, skip, p):
    x = conv_transpose2x2(x, p["wt"], p["bt"])
    skip = skip[:, :x.shape[1], :x.shape[2], :]      # crop if shapes mismatch
    x = jnp.concatenate([x, skip], axis=-1)          # cat([x, skip_x], dim=C)
    cout = p["w1"].shape[0]
    ones = jnp.ones((cout,), jnp.float32)
    x = conv3x3(x, p["w1"], ones, p["b1"], relu=True)
    x = conv3x3(x, p["w2"], ones, p["b2"], relu=True)
    return x


@jax.jit
def unet_forward(x_nchw, params):
    x = jnp.transpose(x_nchw, (0, 2, 3, 1)).astype(jnp.bfloat16)  # NCHW -> NHWC once
    x, s1 = conv_block_fwd(x, params["c1"])
    x, s2 = conv_block_fwd(x, params["c2"])
    x, s3 = conv_block_fwd(x, params["c3"])
    x, s4 = conv_block_fwd(x, params["c4"])
    x, _ = conv_block_fwd(x, params["c5"], pool=False)
    x = up_conv_block_fwd(x, s4, params["u6"])
    x = up_conv_block_fwd(x, s3, params["u7"])
    x = up_conv_block_fwd(x, s2, params["u8"])
    x = up_conv_block_fwd(x, s1, params["u9"])
    x = conv1x1(x, params["w10"], params["b10"], out_dtype=jnp.float32)
    return jnp.transpose(x, (0, 3, 1, 2))                          # back to NCHW


# ---------------------------------------------------------------------------
# Parameter construction (PyTorch layouts)
# ---------------------------------------------------------------------------
def _init_conv_block(key, cin, cout):
    ks = jax.random.split(key, 12)
    return dict(
        w1=0.1 * jax.random.normal(ks[0], (cout, cin, 3, 3), jnp.float32),
        b1=0.1 * jax.random.normal(ks[1], (cout,), jnp.float32),
        g1=1.0 + 0.1 * jax.random.normal(ks[2], (cout,), jnp.float32),
        be1=0.1 * jax.random.normal(ks[3], (cout,), jnp.float32),
        m1=0.1 * jax.random.normal(ks[4], (cout,), jnp.float32),
        v1=1.0 + 0.5 * jax.random.uniform(ks[5], (cout,), jnp.float32),
        w2=0.1 * jax.random.normal(ks[6], (cout, cout, 3, 3), jnp.float32),
        b2=0.1 * jax.random.normal(ks[7], (cout,), jnp.float32),
        g2=1.0 + 0.1 * jax.random.normal(ks[8], (cout,), jnp.float32),
        be2=0.1 * jax.random.normal(ks[9], (cout,), jnp.float32),
        m2=0.1 * jax.random.normal(ks[10], (cout,), jnp.float32),
        v2=1.0 + 0.5 * jax.random.uniform(ks[11], (cout,), jnp.float32),
    )


def _init_up_block(key, cin, cout):
    ks = jax.random.split(key, 6)
    return dict(
        wt=0.1 * jax.random.normal(ks[0], (cin, cout, 2, 2), jnp.float32),
        bt=0.1 * jax.random.normal(ks[1], (cout,), jnp.float32),
        w1=0.1 * jax.random.normal(ks[2], (cout, cin, 3, 3), jnp.float32),
        b1=0.1 * jax.random.normal(ks[3], (cout,), jnp.float32),
        w2=0.1 * jax.random.normal(ks[4], (cout, cout, 3, 3), jnp.float32),
        b2=0.1 * jax.random.normal(ks[5], (cout,), jnp.float32),
    )


def make_params(key, init_depth=8, n_classes=4):
    c = [3, init_depth, init_depth * 2, init_depth * 4, init_depth * 8, init_depth * 16]
    ks = jax.random.split(key, 11)
    return dict(
        c1=_init_conv_block(ks[0], c[0], c[1]),
        c2=_init_conv_block(ks[1], c[1], c[2]),
        c3=_init_conv_block(ks[2], c[2], c[3]),
        c4=_init_conv_block(ks[3], c[3], c[4]),
        c5=_init_conv_block(ks[4], c[4], c[5]),
        u6=_init_up_block(ks[5], c[5], c[4]),
        u7=_init_up_block(ks[6], c[4], c[3]),
        u8=_init_up_block(ks[7], c[3], c[2]),
        u9=_init_up_block(ks[8], c[2], c[1]),
        w10=0.1 * jax.random.normal(ks[9], (n_classes, c[1], 1, 1), jnp.float32),
        b10=0.1 * jax.random.normal(ks[10], (n_classes,), jnp.float32),
    )


# ---------------------------------------------------------------------------
# Pure-JAX reference mirroring the kernel's numerics (bf16 operands, f32
# accumulation, bf16 inter-layer activations) via XLA convolutions.
# ---------------------------------------------------------------------------
def _ref_conv3x3(x, w, b):
    wt = jnp.transpose(w, (2, 3, 1, 0)).astype(jnp.bfloat16)   # HWIO
    y = lax.conv_general_dilated(x.astype(jnp.bfloat16), wt, (1, 1), "SAME",
                                 dimension_numbers=("NHWC", "HWIO", "NHWC"),
                                 preferred_element_type=jnp.float32)
    return y + b


def _ref_conv_block(x, p, pool=True):
    y = _ref_conv3x3(x, p["w1"], p["b1"])
    y = (y - p["m1"]) / jnp.sqrt(p["v1"] + EPS) * p["g1"] + p["be1"]
    y = jnp.maximum(y, 0.0).astype(jnp.bfloat16)
    y = _ref_conv3x3(y, p["w2"], p["b2"])
    y = (y - p["m2"]) / jnp.sqrt(p["v2"] + EPS) * p["g2"] + p["be2"]
    y = jnp.maximum(y, 0.0).astype(jnp.bfloat16)
    skip = y
    if pool:
        y = maxpool2x2(y)
    return y, skip


def _ref_convT(x, w, b):
    y = jnp.einsum("nhwi,iojk->nhjwko", x.astype(jnp.bfloat16),
                   w.astype(jnp.bfloat16), preferred_element_type=jnp.float32)
    n, h, _, wd, _, co = y.shape
    return (y.reshape(n, 2 * h, 2 * wd, co) + b).astype(jnp.bfloat16)


def _ref_up_block(x, skip, p):
    x = _ref_convT(x, p["wt"], p["bt"])
    skip = skip[:, :x.shape[1], :x.shape[2], :]
    x = jnp.concatenate([x, skip], axis=-1)
    x = jnp.maximum(_ref_conv3x3(x, p["w1"], p["b1"]), 0.0).astype(jnp.bfloat16)
    x = jnp.maximum(_ref_conv3x3(x, p["w2"], p["b2"]), 0.0).astype(jnp.bfloat16)
    return x


def _ref_unet_forward(x_nchw, params):
    x = jnp.transpose(x_nchw, (0, 2, 3, 1)).astype(jnp.bfloat16)
    x, s1 = _ref_conv_block(x, params["c1"])
    x, s2 = _ref_conv_block(x, params["c2"])
    x, s3 = _ref_conv_block(x, params["c3"])
    x, s4 = _ref_conv_block(x, params["c4"])
    x, _ = _ref_conv_block(x, params["c5"], pool=False)
    x = _ref_up_block(x, s4, params["u6"])
    x = _ref_up_block(x, s3, params["u7"])
    x = _ref_up_block(x, s2, params["u8"])
    x = _ref_up_block(x, s1, params["u9"])
    co, ci = params["w10"].shape[:2]
    x = jnp.einsum("nhwc,oc->nhwo", x.astype(jnp.bfloat16),
                   params["w10"].reshape(co, ci).astype(jnp.bfloat16),
                   preferred_element_type=jnp.float32) + params["b10"]
    return jnp.transpose(x, (0, 3, 1, 2))


if __name__ == "__main__":
    key = jax.random.PRNGKey(0)
    kp, kx = jax.random.split(key)
    init_depth, n_classes = 8, 4
    params = make_params(kp, init_depth=init_depth, n_classes=n_classes)

    # NCHW input, 3 channels as in the PyTorch Unet (in_ch = 3)
    x = jax.random.normal(kx, (2, 3, 16, 16), dtype=jnp.float32)

    out = unet_forward(x, params)
    jax.block_until_ready(out)
    assert out.shape == (2, n_classes, 16, 16), out.shape

    ref = _ref_unet_forward(x, params)
    rel_err = jnp.max(jnp.abs(out - ref)) / (jnp.max(jnp.abs(ref)) + 1e-6)
    assert rel_err < 2e-2, float(rel_err)

    print("KERNEL_OK")
</pallas_src>

<mosaic_0001>
module attributes {stable_mosaic.version = 11 : i64} {
  func.func @_gemm_kernel_single(%arg0: i32, %arg1: i32, %arg2: memref<128x27xbf16, #tpu.memory_space<vmem>>, %arg3: memref<27x8xbf16, #tpu.memory_space<vmem>>, %arg4: memref<1x8xf32, #tpu.memory_space<vmem>>, %arg5: memref<1x8xf32, #tpu.memory_space<vmem>>, %arg6: memref<128x8xbf16, #tpu.memory_space<vmem>>) attributes {dimension_semantics = [#tpu.dimension_semantics<parallel>, #tpu.dimension_semantics<parallel>], iteration_bounds = array<i64: 4, 1>, scalar_prefetch = 0 : i64, scratch_operands = 0 : i64, tpu.core_type = #tpu.core_type<tc>, window_params = [{transform_indices = @transform_0, window_bounds = array<i64: 128, 27>}, {transform_indices = @transform_1, window_bounds = array<i64: 27, 8>}, {transform_indices = @transform_2, window_bounds = array<i64: 1, 8>}, {transform_indices = @transform_3, window_bounds = array<i64: 1, 8>}, {transform_indices = @transform_4, window_bounds = array<i64: 128, 8>}]} {
    %c0 = arith.constant 0 : index
    %c0_0 = arith.constant 0 : index
    %0 = vector.load %arg2[%c0, %c0_0] : memref<128x27xbf16, #tpu.memory_space<vmem>>, vector<128x27xbf16>
    %c0_1 = arith.constant 0 : index
    %c0_2 = arith.constant 0 : index
    %1 = vector.load %arg3[%c0_1, %c0_2] : memref<27x8xbf16, #tpu.memory_space<vmem>>, vector<27x8xbf16>
    %cst = arith.constant dense<0.000000e+00> : vector<128x8xf32>
    %2 = tpu.matmul %0, %1, %cst {dimension_numbers = #tpu.dot_dimension_numbers<[1], [0], [0], [1], [0, 0, 1, 1], [], []>} : vector<128x27xbf16>, vector<27x8xbf16>, vector<128x8xf32> -> vector<128x8xf32>
    %c0_3 = arith.constant 0 : index
    %c0_4 = arith.constant 0 : index
    %3 = vector.load %arg4[%c0_3, %c0_4] : memref<1x8xf32, #tpu.memory_space<vmem>>, vector<1x8xf32>
    %4 = vector.broadcast %3 : vector<1x8xf32> to vector<128x8xf32>
    %5 = arith.mulf %2, %4 : vector<128x8xf32>
    %c0_5 = arith.constant 0 : index
    %c0_6 = arith.constant 0 : index
    %6 = vector.load %arg5[%c0_5, %c0_6] : memref<1x8xf32, #tpu.memory_space<vmem>>, vector<1x8xf32>
    %7 = vector.broadcast %6 : vector<1x8xf32> to vector<128x8xf32>
    %8 = arith.addf %5, %7 : vector<128x8xf32>
    %cst_7 = arith.constant 0.000000e+00 : f32
    %9 = vector.broadcast %cst_7 : f32 to vector<128x8xf32>
    %10 = arith.maximumf %8, %9 : vector<128x8xf32>
    %11 = arith.truncf %10 : vector<128x8xf32> to vector<128x8xbf16>
    %c0_8 = arith.constant 0 : index
    %c0_9 = arith.constant 0 : index
    %12 = vector.load %arg6[%c0_8, %c0_9] : memref<128x8xbf16, #tpu.memory_space<vmem>>, vector<128x8xbf16>
    tpu.vector_store %arg6[%c0_8, %c0_9], %11 {strides = array<i32>} : memref<128x8xbf16, #tpu.memory_space<vmem>>, vector<128x8xbf16>,
    return
  }
  func.func @transform_0(%arg0: i32, %arg1: i32) -> (i32, i32) {
    %c0_i32 = arith.constant 0 : i32
    %c0_i32_0 = arith.constant 0 : i32
    return %arg0, %c0_i32 : i32, i32
  }
  func.func @transform_1(%arg0: i32, %arg1: i32) -> (i32, i32) {
    %c0_i32 = arith.constant 0 : i32
    %c0_i32_0 = arith.constant 0 : i32
    return %c0_i32, %arg1 : i32, i32
  }
  func.func @transform_2(%arg0: i32, %arg1: i32) -> (i32, i32) {
    %c0_i32 = arith.constant 0 : i32
    %c0_i32_0 = arith.constant 0 : i32
    return %c0_i32, %arg1 : i32, i32
  }
  func.func @transform_3(%arg0: i32, %arg1: i32) -> (i32, i32) {
    %c0_i32 = arith.constant 0 : i32
    %c0_i32_0 = arith.constant 0 : i32
    return %c0_i32, %arg1 : i32, i32
  }
  func.func @transform_4(%arg0: i32, %arg1: i32) -> (i32, i32) {
    %c0_i32 = arith.constant 0 : i32
    return %arg0, %arg1 : i32, i32
  }
}

module attributes {stable_mosaic.version = 11 : i64} {
  func.func @_gemm_kernel_single(%arg0: i32, %arg1: i32, %arg2: memref<128x72xbf16, #tpu.memory_space<vmem>>, %arg3: memref<72x8xbf16, #tpu.memory_space<vmem>>, %arg4: memref<1x8xf32, #tpu.memory_space<vmem>>, %arg5: memref<1x8xf32, #tpu.memory_space<vmem>>, %arg6: memref<128x8xbf16, #tpu.memory_space<vmem>>) attributes {dimension_semantics = [#tpu.dimension_semantics<parallel>, #tpu.dimension_semantics<parallel>], iteration_bounds = array<i64: 4, 1>, scalar_prefetch = 0 : i64, scratch_operands = 0 : i64, tpu.core_type = #tpu.core_type<tc>, window_params = [{transform_indices = @transform_0, window_bounds = array<i64: 128, 72>}, {transform_indices = @transform_1, window_bounds = array<i64: 72, 8>}, {transform_indices = @transform_2, window_bounds = array<i64: 1, 8>}, {transform_indices = @transform_3, window_bounds = array<i64: 1, 8>}, {transform_indices = @transform_4, window_bounds = array<i64: 128, 8>}]} {
    %c0 = arith.constant 0 : index
    %c0_0 = arith.constant 0 : index
    %0 = vector.load %arg2[%c0, %c0_0] : memref<128x72xbf16, #tpu.memory_space<vmem>>, vector<128x72xbf16>
    %c0_1 = arith.constant 0 : index
    %c0_2 = arith.constant 0 : index
    %1 = vector.load %arg3[%c0_1, %c0_2] : memref<72x8xbf16, #tpu.memory_space<vmem>>, vector<72x8xbf16>
    %cst = arith.constant dense<0.000000e+00> : vector<128x8xf32>
    %2 = tpu.matmul %0, %1, %cst {dimension_numbers = #tpu.dot_dimension_numbers<[1], [0], [0], [1], [0, 0, 1, 1], [], []>} : vector<128x72xbf16>, vector<72x8xbf16>, vector<128x8xf32> -> vector<128x8xf32>
    %c0_3 = arith.constant 0 : index
    %c0_4 = arith.constant 0 : index
    %3 = vector.load %arg4[%c0_3, %c0_4] : memref<1x8xf32, #tpu.memory_space<vmem>>, vector<1x8xf32>
    %4 = vector.broadcast %3 : vector<1x8xf32> to vector<128x8xf32>
    %5 = arith.mulf %2, %4 : vector<128x8xf32>
    %c0_5 = arith.constant 0 : index
    %c0_6 = arith.constant 0 : index
    %6 = vector.load %arg5[%c0_5, %c0_6] : memref<1x8xf32, #tpu.memory_space<vmem>>, vector<1x8xf32>
    %7 = vector.broadcast %6 : vector<1x8xf32> to vector<128x8xf32>
    %8 = arith.addf %5, %7 : vector<128x8xf32>
    %cst_7 = arith.constant 0.000000e+00 : f32
    %9 = vector.broadcast %cst_7 : f32 to vector<128x8xf32>
    %10 = arith.maximumf %8, %9 : vector<128x8xf32>
    %11 = arith.truncf %10 : vector<128x8xf32> to vector<128x8xbf16>
    %c0_8 = arith.constant 0 : index
    %c0_9 = arith.constant 0 : index
    %12 = vector.load %arg6[%c0_8, %c0_9] : memref<128x8xbf16, #tpu.memory_space<vmem>>, vector<128x8xbf16>
    tpu.vector_store %arg6[%c0_8, %c0_9], %11 {strides = array<i32>} : memref<128x8xbf16, #tpu.memory_space<vmem>>, vector<128x8xbf16>,
    return
  }
  func.func @transform_0(%arg0: i32, %arg1: i32) -> (i32, i32) {
    %c0_i32 = arith.constant 0 : i32
    %c0_i32_0 = arith.constant 0 : i32
    return %arg0, %c0_i32 : i32, i32
  }
  func.func @transform_1(%arg0: i32, %arg1: i32) -> (i32, i32) {
    %c0_i32 = arith.constant 0 : i32
    %c0_i32_0 = arith.constant 0 : i32
    return %c0_i32, %arg1 : i32, i32
  }
  func.func @transform_2(%arg0: i32, %arg1: i32) -> (i32, i32) {
    %c0_i32 = arith.constant 0 : i32
    %c0_i32_0 = arith.constant 0 : i32
    return %c0_i32, %arg1 : i32, i32
  }
  func.func @transform_3(%arg0: i32, %arg1: i32) -> (i32, i32) {
    %c0_i32 = arith.constant 0 : i32
    %c0_i32_0 = arith.constant 0 : i32
    return %c0_i32, %arg1 : i32, i32
  }
  func.func @transform_4(%arg0: i32, %arg1: i32) -> (i32, i32) {
    %c0_i32 = arith.constant 0 : i32
    return %arg0, %arg1 : i32, i32
  }
}

module attributes {stable_mosaic.version = 11 : i64} {
  func.func @_gemm_kernel_single(%arg0: i32, %arg1: i32, %arg2: memref<128x72xbf16, #tpu.memory_space<vmem>>, %arg3: memref<72x16xbf16, #tpu.memory_space<vmem>>, %arg4: memref<1x16xf32, #tpu.memory_space<vmem>>, %arg5: memref<1x16xf32, #tpu.memory_space<vmem>>, %arg6: memref<128x16xbf16, #tpu.memory_space<vmem>>) attributes {dimension_semantics = [#tpu.dimension_semantics<parallel>, #tpu.dimension_semantics<parallel>], iteration_bounds = array<i64: 1, 1>, scalar_prefetch = 0 : i64, scratch_operands = 0 : i64, tpu.core_type = #tpu.core_type<tc>, window_params = [{transform_indices = @transform_0, window_bounds = array<i64: 128, 72>}, {transform_indices = @transform_1, window_bounds = array<i64: 72, 16>}, {transform_indices = @transform_2, window_bounds = array<i64: 1, 16>}, {transform_indices = @transform_3, window_bounds = array<i64: 1, 16>}, {transform_indices = @transform_4, window_bounds = array<i64: 128, 16>}]} {
    %c0 = arith.constant 0 : index
    %c0_0 = arith.constant 0 : index
    %0 = vector.load %arg2[%c0, %c0_0] : memref<128x72xbf16, #tpu.memory_space<vmem>>, vector<128x72xbf16>
    %c0_1 = arith.constant 0 : index
    %c0_2 = arith.constant 0 : index
    %1 = vector.load %arg3[%c0_1, %c0_2] : memref<72x16xbf16, #tpu.memory_space<vmem>>, vector<72x16xbf16>
    %cst = arith.constant dense<0.000000e+00> : vector<128x16xf32>
    %2 = tpu.matmul %0, %1, %cst {dimension_numbers = #tpu.dot_dimension_numbers<[1], [0], [0], [1], [0, 0, 1, 1], [], []>} : vector<128x72xbf16>, vector<72x16xbf16>, vector<128x16xf32> -> vector<128x16xf32>
    %c0_3 = arith.constant 0 : index
    %c0_4 = arith.constant 0 : index
    %3 = vector.load %arg4[%c0_3, %c0_4] : memref<1x16xf32, #tpu.memory_space<vmem>>, vector<1x16xf32>
    %4 = vector.broadcast %3 : vector<1x16xf32> to vector<128x16xf32>
    %5 = arith.mulf %2, %4 : vector<128x16xf32>
    %c0_5 = arith.constant 0 : index
    %c0_6 = arith.constant 0 : index
    %6 = vector.load %arg5[%c0_5, %c0_6] : memref<1x16xf32, #tpu.memory_space<vmem>>, vector<1x16xf32>
    %7 = vector.broadcast %6 : vector<1x16xf32> to vector<128x16xf32>
    %8 = arith.addf %5, %7 : vector<128x16xf32>
    %cst_7 = arith.constant 0.000000e+00 : f32
    %9 = vector.broadcast %cst_7 : f32 to vector<128x16xf32>
    %10 = arith.maximumf %8, %9 : vector<128x16xf32>
    %11 = arith.truncf %10 : vector<128x16xf32> to vector<128x16xbf16>
    %c0_8 = arith.constant 0 : index
    %c0_9 = arith.constant 0 : index
    %12 = vector.load %arg6[%c0_8, %c0_9] : memref<128x16xbf16, #tpu.memory_space<vmem>>, vector<128x16xbf16>
    tpu.vector_store %arg6[%c0_8, %c0_9], %11 {strides = array<i32>} : memref<128x16xbf16, #tpu.memory_space<vmem>>, vector<128x16xbf16>,
    return
  }
  func.func @transform_0(%arg0: i32, %arg1: i32) -> (i32, i32) {
    %c0_i32 = arith.constant 0 : i32
    %c0_i32_0 = arith.constant 0 : i32
    return %arg0, %c0_i32 : i32, i32
  }
  func.func @transform_1(%arg0: i32, %arg1: i32) -> (i32, i32) {
    %c0_i32 = arith.constant 0 : i32
    %c0_i32_0 = arith.constant 0 : i32
    return %c0_i32, %arg1 : i32, i32
  }
  func.func @transform_2(%arg0: i32, %arg1: i32) -> (i32, i32) {
    %c0_i32 = arith.constant 0 : i32
    %c0_i32_0 = arith.constant 0 : i32
    return %c0_i32, %arg1 : i32, i32
  }
  func.func @transform_3(%arg0: i32, %arg1: i32) -> (i32, i32) {
    %c0_i32 = arith.constant 0 : i32
    %c0_i32_0 = arith.constant 0 : i32
    return %c0_i32, %arg1 : i32, i32
  }
  func.func @transform_4(%arg0: i32, %arg1: i32) -> (i32, i32) {
    %c0_i32 = arith.constant 0 : i32
    return %arg0, %arg1 : i32, i32
  }
}

module attributes {stable_mosaic.version = 11 : i64} {
  func.func @_gemm_kernel_single(%arg0: i32, %arg1: i32, %arg2: memref<128x144xbf16, #tpu.memory_space<vmem>>, %arg3: memref<144x16xbf16, #tpu.memory_space<vmem>>, %arg4: memref<1x16xf32, #tpu.memory_space<vmem>>, %arg5: memref<1x16xf32, #tpu.memory_space<vmem>>, %arg6: memref<128x16xbf16, #tpu.memory_space<vmem>>) attributes {dimension_semantics = [#tpu.dimension_semantics<parallel>, #tpu.dimension_semantics<parallel>], iteration_bounds = array<i64: 1, 1>, scalar_prefetch = 0 : i64, scratch_operands = 0 : i64, tpu.core_type = #tpu.core_type<tc>, window_params = [{transform_indices = @transform_0, window_bounds = array<i64: 128, 144>}, {transform_indices = @transform_1, window_bounds = array<i64: 144, 16>}, {transform_indices = @transform_2, window_bounds = array<i64: 1, 16>}, {transform_indices = @transform_3, window_bounds = array<i64: 1, 16>}, {transform_indices = @transform_4, window_bounds = array<i64: 128, 16>}]} {
    %c0 = arith.constant 0 : index
    %c0_0 = arith.constant 0 : index
    %0 = vector.load %arg2[%c0, %c0_0] : memref<128x144xbf16, #tpu.memory_space<vmem>>, vector<128x144xbf16>
    %c0_1 = arith.constant 0 : index
    %c0_2 = arith.constant 0 : index
    %1 = vector.load %arg3[%c0_1, %c0_2] : memref<144x16xbf16, #tpu.memory_space<vmem>>, vector<144x16xbf16>
    %cst = arith.constant dense<0.000000e+00> : vector<128x16xf32>
    %2 = tpu.matmul %0, %1, %cst {dimension_numbers = #tpu.dot_dimension_numbers<[1], [0], [0], [1], [0, 0, 1, 1], [], []>} : vector<128x144xbf16>, vector<144x16xbf16>, vector<128x16xf32> -> vector<128x16xf32>
    %c0_3 = arith.constant 0 : index
    %c0_4 = arith.constant 0 : index
    %3 = vector.load %arg4[%c0_3, %c0_4] : memref<1x16xf32, #tpu.memory_space<vmem>>, vector<1x16xf32>
    %4 = vector.broadcast %3 : vector<1x16xf32> to vector<128x16xf32>
    %5 = arith.mulf %2, %4 : vector<128x16xf32>
    %c0_5 = arith.constant 0 : index
    %c0_6 = arith.constant 0 : index
    %6 = vector.load %arg5[%c0_5, %c0_6] : memref<1x16xf32, #tpu.memory_space<vmem>>, vector<1x16xf32>
    %7 = vector.broadcast %6 : vector<1x16xf32> to vector<128x16xf32>
    %8 = arith.addf %5, %7 : vector<128x16xf32>
    %cst_7 = arith.constant 0.000000e+00 : f32
    %9 = vector.broadcast %cst_7 : f32 to vector<128x16xf32>
    %10 = arith.maximumf %8, %9 : vector<128x16xf32>
    %11 = arith.truncf %10 : vector<128x16xf32> to vector<128x16xbf16>
    %c0_8 = arith.constant 0 : index
    %c0_9 = arith.constant 0 : index
    %12 = vector.load %arg6[%c0_8, %c0_9] : memref<128x16xbf16, #tpu.memory_space<vmem>>, vector<128x16xbf16>
    tpu.vector_store %arg6[%c0_8, %c0_9], %11 {strides = array<i32>} : memref<128x16xbf16, #tpu.memory_space<vmem>>, vector<128x16xbf16>,
    return
  }
  func.func @transform_0(%arg0: i32, %arg1: i32) -> (i32, i32) {
    %c0_i32 = arith.constant 0 : i32
    %c0_i32_0 = arith.constant 0 : i32
    return %arg0, %c0_i32 : i32, i32
  }
  func.func @transform_1(%arg0: i32, %arg1: i32) -> (i32, i32) {
    %c0_i32 = arith.constant 0 : i32
    %c0_i32_0 = arith.constant 0 : i32
    return %c0_i32, %arg1 : i32, i32
  }
  func.func @transform_2(%arg0: i32, %arg1: i32) -> (i32, i32) {
    %c0_i32 = arith.constant 0 : i32
    %c0_i32_0 = arith.constant 0 : i32
    return %c0_i32, %arg1 : i32, i32
  }
  func.func @transform_3(%arg0: i32, %arg1: i32) -> (i32, i32) {
    %c0_i32 = arith.constant 0 : i32
    %c0_i32_0 = arith.constant 0 : i32
    return %c0_i32, %arg1 : i32, i32
  }
  func.func @transform_4(%arg0: i32, %arg1: i32) -> (i32, i32) {
    %c0_i32 = arith.constant 0 : i32
    return %arg0, %arg1 : i32, i32
  }
}

module attributes {stable_mosaic.version = 11 : i64} {
  func.func @_gemm_kernel_single(%arg0: i32, %arg1: i32, %arg2: memref<32x144xbf16, #tpu.memory_space<vmem>>, %arg3: memref<144x32xbf16, #tpu.memory_space<vmem>>, %arg4: memref<1x32xf32, #tpu.memory_space<vmem>>, %arg5: memref<1x32xf32, #tpu.memory_space<vmem>>, %arg6: memref<32x32xbf16, #tpu.memory_space<vmem>>) attributes {dimension_semantics = [#tpu.dimension_semantics<parallel>, #tpu.dimension_semantics<parallel>], iteration_bounds = array<i64: 1, 1>, scalar_prefetch = 0 : i64, scratch_operands = 0 : i64, tpu.core_type = #tpu.core_type<tc>, window_params = [{transform_indices = @transform_0, window_bounds = array<i64: 32, 144>}, {transform_indices = @transform_1, window_bounds = array<i64: 144, 32>}, {transform_indices = @transform_2, window_bounds = array<i64: 1, 32>}, {transform_indices = @transform_3, window_bounds = array<i64: 1, 32>}, {transform_indices = @transform_4, window_bounds = array<i64: 32, 32>}]} {
    %c0 = arith.constant 0 : index
    %c0_0 = arith.constant 0 : index
    %0 = vector.load %arg2[%c0, %c0_0] : memref<32x144xbf16, #tpu.memory_space<vmem>>, vector<32x144xbf16>
    %c0_1 = arith.constant 0 : index
    %c0_2 = arith.constant 0 : index
    %1 = vector.load %arg3[%c0_1, %c0_2] : memref<144x32xbf16, #tpu.memory_space<vmem>>, vector<144x32xbf16>
    %cst = arith.constant dense<0.000000e+00> : vector<32x32xf32>
    %2 = tpu.matmul %0, %1, %cst {dimension_numbers = #tpu.dot_dimension_numbers<[1], [0], [0], [1], [0, 0, 1, 1], [], []>} : vector<32x144xbf16>, vector<144x32xbf16>, vector<32x32xf32> -> vector<32x32xf32>
    %c0_3 = arith.constant 0 : index
    %c0_4 = arith.constant 0 : index
    %3 = vector.load %arg4[%c0_3, %c0_4] : memref<1x32xf32, #tpu.memory_space<vmem>>, vector<1x32xf32>
    %4 = vector.broadcast %3 : vector<1x32xf32> to vector<32x32xf32>
    %5 = arith.mulf %2, %4 : vector<32x32xf32>
    %c0_5 = arith.constant 0 : index
    %c0_6 = arith.constant 0 : index
    %6 = vector.load %arg5[%c0_5, %c0_6] : memref<1x32xf32, #tpu.memory_space<vmem>>, vector<1x32xf32>
    %7 = vector.broadcast %6 : vector<1x32xf32> to vector<32x32xf32>
    %8 = arith.addf %5, %7 : vector<32x32xf32>
    %cst_7 = arith.constant 0.000000e+00 : f32
    %9 = vector.broadcast %cst_7 : f32 to vector<32x32xf32>
    %10 = arith.maximumf %8, %9 : vector<32x32xf32>
    %11 = arith.truncf %10 : vector<32x32xf32> to vector<32x32xbf16>
    %c0_8 = arith.constant 0 : index
    %c0_9 = arith.constant 0 : index
    %12 = vector.load %arg6[%c0_8, %c0_9] : memref<32x32xbf16, #tpu.memory_space<vmem>>, vector<32x32xbf16>
    tpu.vector_store %arg6[%c0_8, %c0_9], %11 {strides = array<i32>} : memref<32x32xbf16, #tpu.memory_space<vmem>>, vector<32x32xbf16>,
    return
  }
  func.func @transform_0(%arg0: i32, %arg1: i32) -> (i32, i32) {
    %c0_i32 = arith.constant 0 : i32
    %c0_i32_0 = arith.constant 0 : i32
    return %arg0, %c0_i32 : i32, i32
  }
  func.func @transform_1(%arg0: i32, %arg1: i32) -> (i32, i32) {
    %c0_i32 = arith.constant 0 : i32
    %c0_i32_0 = arith.constant 0 : i32
    return %c0_i32, %arg1 : i32, i32
  }
  func.func @transform_2(%arg0: i32, %arg1: i32) -> (i32, i32) {
    %c0_i32 = arith.constant 0 : i32
    %c0_i32_0 = arith.constant 0 : i32
    return %c0_i32, %arg1 : i32, i32
  }
  func.func @transform_3(%arg0: i32, %arg1: i32) -> (i32, i32) {
    %c0_i32 = arith.constant 0 : i32
    %c0_i32_0 = arith.constant 0 : i32
    return %c0_i32, %arg1 : i32, i32
  }
  func.func @transform_4(%arg0: i32, %arg1: i32) -> (i32, i32) {
    %c0_i32 = arith.constant 0 : i32
    return %arg0, %arg1 : i32, i32
  }
}

module attributes {stable_mosaic.version = 11 : i64} {
  func.func @_gemm_kernel_single(%arg0: i32, %arg1: i32, %arg2: memref<32x288xbf16, #tpu.memory_space<vmem>>, %arg3: memref<288x32xbf16, #tpu.memory_space<vmem>>, %arg4: memref<1x32xf32, #tpu.memory_space<vmem>>, %arg5: memref<1x32xf32, #tpu.memory_space<vmem>>, %arg6: memref<32x32xbf16, #tpu.memory_space<vmem>>) attributes {dimension_semantics = [#tpu.dimension_semantics<parallel>, #tpu.dimension_semantics<parallel>], iteration_bounds = array<i64: 1, 1>, scalar_prefetch = 0 : i64, scratch_operands = 0 : i64, tpu.core_type = #tpu.core_type<tc>, window_params = [{transform_indices = @transform_0, window_bounds = array<i64: 32, 288>}, {transform_indices = @transform_1, window_bounds = array<i64: 288, 32>}, {transform_indices = @transform_2, window_bounds = array<i64: 1, 32>}, {transform_indices = @transform_3, window_bounds = array<i64: 1, 32>}, {transform_indices = @transform_4, window_bounds = array<i64: 32, 32>}]} {
    %c0 = arith.constant 0 : index
    %c0_0 = arith.constant 0 : index
    %0 = vector.load %arg2[%c0, %c0_0] : memref<32x288xbf16, #tpu.memory_space<vmem>>, vector<32x288xbf16>
    %c0_1 = arith.constant 0 : index
    %c0_2 = arith.constant 0 : index
    %1 = vector.load %arg3[%c0_1, %c0_2] : memref<288x32xbf16, #tpu.memory_space<vmem>>, vector<288x32xbf16>
    %cst = arith.constant dense<0.000000e+00> : vector<32x32xf32>
    %2 = tpu.matmul %0, %1, %cst {dimension_numbers = #tpu.dot_dimension_numbers<[1], [0], [0], [1], [0, 0, 1, 1], [], []>} : vector<32x288xbf16>, vector<288x32xbf16>, vector<32x32xf32> -> vector<32x32xf32>
    %c0_3 = arith.constant 0 : index
    %c0_4 = arith.constant 0 : index
    %3 = vector.load %arg4[%c0_3, %c0_4] : memref<1x32xf32, #tpu.memory_space<vmem>>, vector<1x32xf32>
    %4 = vector.broadcast %3 : vector<1x32xf32> to vector<32x32xf32>
    %5 = arith.mulf %2, %4 : vector<32x32xf32>
    %c0_5 = arith.constant 0 : index
    %c0_6 = arith.constant 0 : index
    %6 = vector.load %arg5[%c0_5, %c0_6] : memref<1x32xf32, #tpu.memory_space<vmem>>, vector<1x32xf32>
    %7 = vector.broadcast %6 : vector<1x32xf32> to vector<32x32xf32>
    %8 = arith.addf %5, %7 : vector<32x32xf32>
    %cst_7 = arith.constant 0.000000e+00 : f32
    %9 = vector.broadcast %cst_7 : f32 to vector<32x32xf32>
    %10 = arith.maximumf %8, %9 : vector<32x32xf32>
    %11 = arith.truncf %10 : vector<32x32xf32> to vector<32x32xbf16>
    %c0_8 = arith.constant 0 : index
    %c0_9 = arith.constant 0 : index
    %12 = vector.load %arg6[%c0_8, %c0_9] : memref<32x32xbf16, #tpu.memory_space<vmem>>, vector<32x32xbf16>
    tpu.vector_store %arg6[%c0_8, %c0_9], %11 {strides = array<i32>} : memref<32x32xbf16, #tpu.memory_space<vmem>>, vector<32x32xbf16>,
    return
  }
  func.func @transform_0(%arg0: i32, %arg1: i32) -> (i32, i32) {
    %c0_i32 = arith.constant 0 : i32
    %c0_i32_0 = arith.constant 0 : i32
    return %arg0, %c0_i32 : i32, i32
  }
  func.func @transform_1(%arg0: i32, %arg1: i32) -> (i32, i32) {
    %c0_i32 = arith.constant 0 : i32
    %c0_i32_0 = arith.constant 0 : i32
    return %c0_i32, %arg1 : i32, i32
  }
  func.func @transform_2(%arg0: i32, %arg1: i32) -> (i32, i32) {
    %c0_i32 = arith.constant 0 : i32
    %c0_i32_0 = arith.constant 0 : i32
    return %c0_i32, %arg1 : i32, i32
  }
  func.func @transform_3(%arg0: i32, %arg1: i32) -> (i32, i32) {
    %c0_i32 = arith.constant 0 : i32
    %c0_i32_0 = arith.constant 0 : i32
    return %c0_i32, %arg1 : i32, i32
  }
  func.func @transform_4(%arg0: i32, %arg1: i32) -> (i32, i32) {
    %c0_i32 = arith.constant 0 : i32
    return %arg0, %arg1 : i32, i32
  }
}

module attributes {stable_mosaic.version = 11 : i64} {
  func.func @_gemm_kernel_single(%arg0: i32, %arg1: i32, %arg2: memref<8x288xbf16, #tpu.memory_space<vmem>>, %arg3: memref<288x64xbf16, #tpu.memory_space<vmem>>, %arg4: memref<1x64xf32, #tpu.memory_space<vmem>>, %arg5: memref<1x64xf32, #tpu.memory_space<vmem>>, %arg6: memref<8x64xbf16, #tpu.memory_space<vmem>>) attributes {dimension_semantics = [#tpu.dimension_semantics<parallel>, #tpu.dimension_semantics<parallel>], iteration_bounds = array<i64: 1, 1>, scalar_prefetch = 0 : i64, scratch_operands = 0 : i64, tpu.core_type = #tpu.core_type<tc>, window_params = [{transform_indices = @transform_0, window_bounds = array<i64: 8, 288>}, {transform_indices = @transform_1, window_bounds = array<i64: 288, 64>}, {transform_indices = @transform_2, window_bounds = array<i64: 1, 64>}, {transform_indices = @transform_3, window_bounds = array<i64: 1, 64>}, {transform_indices = @transform_4, window_bounds = array<i64: 8, 64>}]} {
    %c0 = arith.constant 0 : index
    %c0_0 = arith.constant 0 : index
    %0 = vector.load %arg2[%c0, %c0_0] : memref<8x288xbf16, #tpu.memory_space<vmem>>, vector<8x288xbf16>
    %c0_1 = arith.constant 0 : index
    %c0_2 = arith.constant 0 : index
    %1 = vector.load %arg3[%c0_1, %c0_2] : memref<288x64xbf16, #tpu.memory_space<vmem>>, vector<288x64xbf16>
    %cst = arith.constant dense<0.000000e+00> : vector<8x64xf32>
    %2 = tpu.matmul %0, %1, %cst {dimension_numbers = #tpu.dot_dimension_numbers<[1], [0], [0], [1], [0, 0, 1, 1], [], []>} : vector<8x288xbf16>, vector<288x64xbf16>, vector<8x64xf32> -> vector<8x64xf32>
    %c0_3 = arith.constant 0 : index
    %c0_4 = arith.constant 0 : index
    %3 = vector.load %arg4[%c0_3, %c0_4] : memref<1x64xf32, #tpu.memory_space<vmem>>, vector<1x64xf32>
    %4 = vector.broadcast %3 : vector<1x64xf32> to vector<8x64xf32>
    %5 = arith.mulf %2, %4 : vector<8x64xf32>
    %c0_5 = arith.constant 0 : index
    %c0_6 = arith.constant 0 : index
    %6 = vector.load %arg5[%c0_5, %c0_6] : memref<1x64xf32, #tpu.memory_space<vmem>>, vector<1x64xf32>
    %7 = vector.broadcast %6 : vector<1x64xf32> to vector<8x64xf32>
    %8 = arith.addf %5, %7 : vector<8x64xf32>
    %cst_7 = arith.constant 0.000000e+00 : f32
    %9 = vector.broadcast %cst_7 : f32 to vector<8x64xf32>
    %10 = arith.maximumf %8, %9 : vector<8x64xf32>
    %11 = arith.truncf %10 : vector<8x64xf32> to vector<8x64xbf16>
    %c0_8 = arith.constant 0 : index
    %c0_9 = arith.constant 0 : index
    %12 = vector.load %arg6[%c0_8, %c0_9] : memref<8x64xbf16, #tpu.memory_space<vmem>>, vector<8x64xbf16>
    tpu.vector_store %arg6[%c0_8, %c0_9], %11 {strides = array<i32>} : memref<8x64xbf16, #tpu.memory_space<vmem>>, vector<8x64xbf16>,
    return
  }
  func.func @transform_0(%arg0: i32, %arg1: i32) -> (i32, i32) {
    %c0_i32 = arith.constant 0 : i32
    %c0_i32_0 = arith.constant 0 : i32
    return %arg0, %c0_i32 : i32, i32
  }
  func.func @transform_1(%arg0: i32, %arg1: i32) -> (i32, i32) {
    %c0_i32 = arith.constant 0 : i32
    %c0_i32_0 = arith.constant 0 : i32
    return %c0_i32, %arg1 : i32, i32
  }
  func.func @transform_2(%arg0: i32, %arg1: i32) -> (i32, i32) {
    %c0_i32 = arith.constant 0 : i32
    %c0_i32_0 = arith.constant 0 : i32
    return %c0_i32, %arg1 : i32, i32
  }
  func.func @transform_3(%arg0: i32, %arg1: i32) -> (i32, i32) {
    %c0_i32 = arith.constant 0 : i32
    %c0_i32_0 = arith.constant 0 : i32
    return %c0_i32, %arg1 : i32, i32
  }
  func.func @transform_4(%arg0: i32, %arg1: i32) -> (i32, i32) {
    %c0_i32 = arith.constant 0 : i32
    return %arg0, %arg1 : i32, i32
  }
}

module attributes {stable_mosaic.version = 11 : i64} {
  func.func @_gemm_kernel_single(%arg0: i32, %arg1: i32, %arg2: memref<8x576xbf16, #tpu.memory_space<vmem>>, %arg3: memref<576x64xbf16, #tpu.memory_space<vmem>>, %arg4: memref<1x64xf32, #tpu.memory_space<vmem>>, %arg5: memref<1x64xf32, #tpu.memory_space<vmem>>, %arg6: memref<8x64xbf16, #tpu.memory_space<vmem>>) attributes {dimension_semantics = [#tpu.dimension_semantics<parallel>, #tpu.dimension_semantics<parallel>], iteration_bounds = array<i64: 1, 1>, scalar_prefetch = 0 : i64, scratch_operands = 0 : i64, tpu.core_type = #tpu.core_type<tc>, window_params = [{transform_indices = @transform_0, window_bounds = array<i64: 8, 576>}, {transform_indices = @transform_1, window_bounds = array<i64: 576, 64>}, {transform_indices = @transform_2, window_bounds = array<i64: 1, 64>}, {transform_indices = @transform_3, window_bounds = array<i64: 1, 64>}, {transform_indices = @transform_4, window_bounds = array<i64: 8, 64>}]} {
    %c0 = arith.constant 0 : index
    %c0_0 = arith.constant 0 : index
    %0 = vector.load %arg2[%c0, %c0_0] : memref<8x576xbf16, #tpu.memory_space<vmem>>, vector<8x576xbf16>
    %c0_1 = arith.constant 0 : index
    %c0_2 = arith.constant 0 : index
    %1 = vector.load %arg3[%c0_1, %c0_2] : memref<576x64xbf16, #tpu.memory_space<vmem>>, vector<576x64xbf16>
    %cst = arith.constant dense<0.000000e+00> : vector<8x64xf32>
    %2 = tpu.matmul %0, %1, %cst {dimension_numbers = #tpu.dot_dimension_numbers<[1], [0], [0], [1], [0, 0, 1, 1], [], []>} : vector<8x576xbf16>, vector<576x64xbf16>, vector<8x64xf32> -> vector<8x64xf32>
    %c0_3 = arith.constant 0 : index
    %c0_4 = arith.constant 0 : index
    %3 = vector.load %arg4[%c0_3, %c0_4] : memref<1x64xf32, #tpu.memory_space<vmem>>, vector<1x64xf32>
    %4 = vector.broadcast %3 : vector<1x64xf32> to vector<8x64xf32>
    %5 = arith.mulf %2, %4 : vector<8x64xf32>
    %c0_5 = arith.constant 0 : index
    %c0_6 = arith.constant 0 : index
    %6 = vector.load %arg5[%c0_5, %c0_6] : memref<1x64xf32, #tpu.memory_space<vmem>>, vector<1x64xf32>
    %7 = vector.broadcast %6 : vector<1x64xf32> to vector<8x64xf32>
    %8 = arith.addf %5, %7 : vector<8x64xf32>
    %cst_7 = arith.constant 0.000000e+00 : f32
    %9 = vector.broadcast %cst_7 : f32 to vector<8x64xf32>
    %10 = arith.maximumf %8, %9 : vector<8x64xf32>
    %11 = arith.truncf %10 : vector<8x64xf32> to vector<8x64xbf16>
    %c0_8 = arith.constant 0 : index
    %c0_9 = arith.constant 0 : index
    %12 = vector.load %arg6[%c0_8, %c0_9] : memref<8x64xbf16, #tpu.memory_space<vmem>>, vector<8x64xbf16>
    tpu.vector_store %arg6[%c0_8, %c0_9], %11 {strides = array<i32>} : memref<8x64xbf16, #tpu.memory_space<vmem>>, vector<8x64xbf16>,
    return
  }
  func.func @transform_0(%arg0: i32, %arg1: i32) -> (i32, i32) {
    %c0_i32 = arith.constant 0 : i32
    %c0_i32_0 = arith.constant 0 : i32
    return %arg0, %c0_i32 : i32, i32
  }
  func.func @transform_1(%arg0: i32, %arg1: i32) -> (i32, i32) {
    %c0_i32 = arith.constant 0 : i32
    %c0_i32_0 = arith.constant 0 : i32
    return %c0_i32, %arg1 : i32, i32
  }
  func.func @transform_2(%arg0: i32, %arg1: i32) -> (i32, i32) {
    %c0_i32 = arith.constant 0 : i32
    %c0_i32_0 = arith.constant 0 : i32
    return %c0_i32, %arg1 : i32, i32
  }
  func.func @transform_3(%arg0: i32, %arg1: i32) -> (i32, i32) {
    %c0_i32 = arith.constant 0 : i32
    %c0_i32_0 = arith.constant 0 : i32
    return %c0_i32, %arg1 : i32, i32
  }
  func.func @transform_4(%arg0: i32, %arg1: i32) -> (i32, i32) {
    %c0_i32 = arith.constant 0 : i32
    return %arg0, %arg1 : i32, i32
  }
}

module attributes {stable_mosaic.version = 11 : i64} {
  func.func @_gemm_kernel_single(%arg0: i32, %arg1: i32, %arg2: memref<8x576xbf16, #tpu.memory_space<vmem>>, %arg3: memref<576x128xbf16, #tpu.memory_space<vmem>>, %arg4: memref<1x128xf32, #tpu.memory_space<vmem>>, %arg5: memref<1x128xf32, #tpu.memory_space<vmem>>, %arg6: memref<8x128xbf16, #tpu.memory_space<vmem>>) attributes {dimension_semantics = [#tpu.dimension_semantics<parallel>, #tpu.dimension_semantics<parallel>], iteration_bounds = array<i64: 1, 1>, scalar_prefetch = 0 : i64, scratch_operands = 0 : i64, tpu.core_type = #tpu.core_type<tc>, window_params = [{transform_indices = @transform_0, window_bounds = array<i64: 8, 576>}, {transform_indices = @transform_1, window_bounds = array<i64: 576, 128>}, {transform_indices = @transform_2, window_bounds = array<i64: 1, 128>}, {transform_indices = @transform_3, window_bounds = array<i64: 1, 128>}, {transform_indices = @transform_4, window_bounds = array<i64: 8, 128>}]} {
    %c0 = arith.constant 0 : index
    %c0_0 = arith.constant 0 : index
    %0 = vector.load %arg2[%c0, %c0_0] : memref<8x576xbf16, #tpu.memory_space<vmem>>, vector<8x576xbf16>
    %c0_1 = arith.constant 0 : index
    %c0_2 = arith.constant 0 : index
    %1 = vector.load %arg3[%c0_1, %c0_2] : memref<576x128xbf16, #tpu.memory_space<vmem>>, vector<576x128xbf16>
    %cst = arith.constant dense<0.000000e+00> : vector<8x128xf32>
    %2 = tpu.matmul %0, %1, %cst {dimension_numbers = #tpu.dot_dimension_numbers<[1], [0], [0], [1], [0, 0, 1, 1], [], []>} : vector<8x576xbf16>, vector<576x128xbf16>, vector<8x128xf32> -> vector<8x128xf32>
    %c0_3 = arith.constant 0 : index
    %c0_4 = arith.constant 0 : index
    %3 = vector.load %arg4[%c0_3, %c0_4] : memref<1x128xf32, #tpu.memory_space<vmem>>, vector<1x128xf32>
    %4 = vector.broadcast %3 : vector<1x128xf32> to vector<8x128xf32>
    %5 = arith.mulf %2, %4 : vector<8x128xf32>
    %c0_5 = arith.constant 0 : index
    %c0_6 = arith.constant 0 : index
    %6 = vector.load %arg5[%c0_5, %c0_6] : memref<1x128xf32, #tpu.memory_space<vmem>>, vector<1x128xf32>
    %7 = vector.broadcast %6 : vector<1x128xf32> to vector<8x128xf32>
    %8 = arith.addf %5, %7 : vector<8x128xf32>
    %cst_7 = arith.constant 0.000000e+00 : f32
    %9 = vector.broadcast %cst_7 : f32 to vector<8x128xf32>
    %10 = arith.maximumf %8, %9 : vector<8x128xf32>
    %11 = arith.truncf %10 : vector<8x128xf32> to vector<8x128xbf16>
    %c0_8 = arith.constant 0 : index
    %c0_9 = arith.constant 0 : index
    %12 = vector.load %arg6[%c0_8, %c0_9] : memref<8x128xbf16, #tpu.memory_space<vmem>>, vector<8x128xbf16>
    tpu.vector_store %arg6[%c0_8, %c0_9], %11 {strides = array<i32>} : memref<8x128xbf16, #tpu.memory_space<vmem>>, vector<8x128xbf16>,
    return
  }
  func.func @transform_0(%arg0: i32, %arg1: i32) -> (i32, i32) {
    %c0_i32 = arith.constant 0 : i32
    %c0_i32_0 = arith.constant 0 : i32
    return %arg0, %c0_i32 : i32, i32
  }
  func.func @transform_1(%arg0: i32, %arg1: i32) -> (i32, i32) {
    %c0_i32 = arith.constant 0 : i32
    %c0_i32_0 = arith.constant 0 : i32
    return %c0_i32, %arg1 : i32, i32
  }
  func.func @transform_2(%arg0: i32, %arg1: i32) -> (i32, i32) {
    %c0_i32 = arith.constant 0 : i32
    %c0_i32_0 = arith.constant 0 : i32
    return %c0_i32, %arg1 : i32, i32
  }
  func.func @transform_3(%arg0: i32, %arg1: i32) -> (i32, i32) {
    %c0_i32 = arith.constant 0 : i32
    %c0_i32_0 = arith.constant 0 : i32
    return %c0_i32, %arg1 : i32, i32
  }
  func.func @transform_4(%arg0: i32, %arg1: i32) -> (i32, i32) {
    %c0_i32 = arith.constant 0 : i32
    return %arg0, %arg1 : i32, i32
  }
}

module attributes {stable_mosaic.version = 11 : i64} {
  func.func @_gemm_kernel_single(%arg0: i32, %arg1: i32, %arg2: memref<8x1152xbf16, #tpu.memory_space<vmem>>, %arg3: memref<1152x128xbf16, #tpu.memory_space<vmem>>, %arg4: memref<1x128xf32, #tpu.memory_space<vmem>>, %arg5: memref<1x128xf32, #tpu.memory_space<vmem>>, %arg6: memref<8x128xbf16, #tpu.memory_space<vmem>>) attributes {dimension_semantics = [#tpu.dimension_semantics<parallel>, #tpu.dimension_semantics<parallel>], iteration_bounds = array<i64: 1, 1>, scalar_prefetch = 0 : i64, scratch_operands = 0 : i64, tpu.core_type = #tpu.core_type<tc>, window_params = [{transform_indices = @transform_0, window_bounds = array<i64: 8, 1152>}, {transform_indices = @transform_1, window_bounds = array<i64: 1152, 128>}, {transform_indices = @transform_2, window_bounds = array<i64: 1, 128>}, {transform_indices = @transform_3, window_bounds = array<i64: 1, 128>}, {transform_indices = @transform_4, window_bounds = array<i64: 8, 128>}]} {
    %c0 = arith.constant 0 : index
    %c0_0 = arith.constant 0 : index
    %0 = vector.load %arg2[%c0, %c0_0] : memref<8x1152xbf16, #tpu.memory_space<vmem>>, vector<8x1152xbf16>
    %c0_1 = arith.constant 0 : index
    %c0_2 = arith.constant 0 : index
    %1 = vector.load %arg3[%c0_1, %c0_2] : memref<1152x128xbf16, #tpu.memory_space<vmem>>, vector<1152x128xbf16>
    %cst = arith.constant dense<0.000000e+00> : vector<8x128xf32>
    %2 = tpu.matmul %0, %1, %cst {dimension_numbers = #tpu.dot_dimension_numbers<[1], [0], [0], [1], [0, 0, 1, 1], [], []>} : vector<8x1152xbf16>, vector<1152x128xbf16>, vector<8x128xf32> -> vector<8x128xf32>
    %c0_3 = arith.constant 0 : index
    %c0_4 = arith.constant 0 : index
    %3 = vector.load %arg4[%c0_3, %c0_4] : memref<1x128xf32, #tpu.memory_space<vmem>>, vector<1x128xf32>
    %4 = vector.broadcast %3 : vector<1x128xf32> to vector<8x128xf32>
    %5 = arith.mulf %2, %4 : vector<8x128xf32>
    %c0_5 = arith.constant 0 : index
    %c0_6 = arith.constant 0 : index
    %6 = vector.load %arg5[%c0_5, %c0_6] : memref<1x128xf32, #tpu.memory_space<vmem>>, vector<1x128xf32>
    %7 = vector.broadcast %6 : vector<1x128xf32> to vector<8x128xf32>
    %8 = arith.addf %5, %7 : vector<8x128xf32>
    %cst_7 = arith.constant 0.000000e+00 : f32
    %9 = vector.broadcast %cst_7 : f32 to vector<8x128xf32>
    %10 = arith.maximumf %8, %9 : vector<8x128xf32>
    %11 = arith.truncf %10 : vector<8x128xf32> to vector<8x128xbf16>
    %c0_8 = arith.constant 0 : index
    %c0_9 = arith.constant 0 : index
    %12 = vector.load %arg6[%c0_8, %c0_9] : memref<8x128xbf16, #tpu.memory_space<vmem>>, vector<8x128xbf16>
    tpu.vector_store %arg6[%c0_8, %c0_9], %11 {strides = array<i32>} : memref<8x128xbf16, #tpu.memory_space<vmem>>, vector<8x128xbf16>,
    return
  }
  func.func @transform_0(%arg0: i32, %arg1: i32) -> (i32, i32) {
    %c0_i32 = arith.constant 0 : i32
    %c0_i32_0 = arith.constant 0 : i32
    return %arg0, %c0_i32 : i32, i32
  }
  func.func @transform_1(%arg0: i32, %arg1: i32) -> (i32, i32) {
    %c0_i32 = arith.constant 0 : i32
    %c0_i32_0 = arith.constant 0 : i32
    return %c0_i32, %arg1 : i32, i32
  }
  func.func @transform_2(%arg0: i32, %arg1: i32) -> (i32, i32) {
    %c0_i32 = arith.constant 0 : i32
    %c0_i32_0 = arith.constant 0 : i32
    return %c0_i32, %arg1 : i32, i32
  }
  func.func @transform_3(%arg0: i32, %arg1: i32) -> (i32, i32) {
    %c0_i32 = arith.constant 0 : i32
    %c0_i32_0 = arith.constant 0 : i32
    return %c0_i32, %arg1 : i32, i32
  }
  func.func @transform_4(%arg0: i32, %arg1: i32) -> (i32, i32) {
    %c0_i32 = arith.constant 0 : i32
    return %arg0, %arg1 : i32, i32
  }
}

module attributes {stable_mosaic.version = 11 : i64} {
  func.func @_gemm_kernel_single(%arg0: i32, %arg1: i32, %arg2: memref<8x128xbf16, #tpu.memory_space<vmem>>, %arg3: memref<128x128xbf16, #tpu.memory_space<vmem>>, %arg4: memref<1x128xf32, #tpu.memory_space<vmem>>, %arg5: memref<1x128xf32, #tpu.memory_space<vmem>>, %arg6: memref<8x128xbf16, #tpu.memory_space<vmem>>) attributes {dimension_semantics = [#tpu.dimension_semantics<parallel>, #tpu.dimension_semantics<parallel>], iteration_bounds = array<i64: 1, 2>, scalar_prefetch = 0 : i64, scratch_operands = 0 : i64, tpu.core_type = #tpu.core_type<tc>, window_params = [{transform_indices = @transform_0, window_bounds = array<i64: 8, 128>}, {transform_indices = @transform_1, window_bounds = array<i64: 128, 128>}, {transform_indices = @transform_2, window_bounds = array<i64: 1, 128>}, {transform_indices = @transform_3, window_bounds = array<i64: 1, 128>}, {transform_indices = @transform_4, window_bounds = array<i64: 8, 128>}]} {
    %c0 = arith.constant 0 : index
    %c0_0 = arith.constant 0 : index
    %0 = vector.load %arg2[%c0, %c0_0] : memref<8x128xbf16, #tpu.memory_space<vmem>>, vector<8x128xbf16>
    %c0_1 = arith.constant 0 : index
    %c0_2 = arith.constant 0 : index
    %1 = vector.load %arg3[%c0_1, %c0_2] : memref<128x128xbf16, #tpu.memory_space<vmem>>, vector<128x128xbf16>
    %cst = arith.constant dense<0.000000e+00> : vector<8x128xf32>
    %2 = tpu.matmul %0, %1, %cst {dimension_numbers = #tpu.dot_dimension_numbers<[1], [0], [0], [1], [0, 0, 1, 1], [], []>} : vector<8x128xbf16>, vector<128x128xbf16>, vector<8x128xf32> -> vector<8x128xf32>
    %c0_3 = arith.constant 0 : index
    %c0_4 = arith.constant 0 : index
    %3 = vector.load %arg4[%c0_3, %c0_4] : memref<1x128xf32, #tpu.memory_space<vmem>>, vector<1x128xf32>
    %4 = vector.broadcast %3 : vector<1x128xf32> to vector<8x128xf32>
    %5 = arith.mulf %2, %4 : vector<8x128xf32>
    %c0_5 = arith.constant 0 : index
    %c0_6 = arith.constant 0 : index
    %6 = vector.load %arg5[%c0_5, %c0_6] : memref<1x128xf32, #tpu.memory_space<vmem>>, vector<1x128xf32>
    %7 = vector.broadcast %6 : vector<1x128xf32> to vector<8x128xf32>
    %8 = arith.addf %5, %7 : vector<8x128xf32>
    %9 = arith.truncf %8 : vector<8x128xf32> to vector<8x128xbf16>
    %c0_7 = arith.constant 0 : index
    %c0_8 = arith.constant 0 : index
    %10 = vector.load %arg6[%c0_7, %c0_8] : memref<8x128xbf16, #tpu.memory_space<vmem>>, vector<8x128xbf16>
    tpu.vector_store %arg6[%c0_7, %c0_8], %9 {strides = array<i32>} : memref<8x128xbf16, #tpu.memory_space<vmem>>, vector<8x128xbf16>,
    return
  }
  func.func @transform_0(%arg0: i32, %arg1: i32) -> (i32, i32) {
    %c0_i32 = arith.constant 0 : i32
    %c0_i32_0 = arith.constant 0 : i32
    return %arg0, %c0_i32 : i32, i32
  }
  func.func @transform_1(%arg0: i32, %arg1: i32) -> (i32, i32) {
    %c0_i32 = arith.constant 0 : i32
    %c0_i32_0 = arith.constant 0 : i32
    return %c0_i32, %arg1 : i32, i32
  }
  func.func @transform_2(%arg0: i32, %arg1: i32) -> (i32, i32) {
    %c0_i32 = arith.constant 0 : i32
    %c0_i32_0 = arith.constant 0 : i32
    return %c0_i32, %arg1 : i32, i32
  }
  func.func @transform_3(%arg0: i32, %arg1: i32) -> (i32, i32) {
    %c0_i32 = arith.constant 0 : i32
    %c0_i32_0 = arith.constant 0 : i32
    return %c0_i32, %arg1 : i32, i32
  }
  func.func @transform_4(%arg0: i32, %arg1: i32) -> (i32, i32) {
    %c0_i32 = arith.constant 0 : i32
    return %arg0, %arg1 : i32, i32
  }
}

module attributes {stable_mosaic.version = 11 : i64} {
  func.func @_gemm_kernel_single(%arg0: i32, %arg1: i32, %arg2: memref<8x1152xbf16, #tpu.memory_space<vmem>>, %arg3: memref<1152x64xbf16, #tpu.memory_space<vmem>>, %arg4: memref<1x64xf32, #tpu.memory_space<vmem>>, %arg5: memref<1x64xf32, #tpu.memory_space<vmem>>, %arg6: memref<8x64xbf16, #tpu.memory_space<vmem>>) attributes {dimension_semantics = [#tpu.dimension_semantics<parallel>, #tpu.dimension_semantics<parallel>], iteration_bounds = array<i64: 1, 1>, scalar_prefetch = 0 : i64, scratch_operands = 0 : i64, tpu.core_type = #tpu.core_type<tc>, window_params = [{transform_indices = @transform_0, window_bounds = array<i64: 8, 1152>}, {transform_indices = @transform_1, window_bounds = array<i64: 1152, 64>}, {transform_indices = @transform_2, window_bounds = array<i64: 1, 64>}, {transform_indices = @transform_3, window_bounds = array<i64: 1, 64>}, {transform_indices = @transform_4, window_bounds = array<i64: 8, 64>}]} {
    %c0 = arith.constant 0 : index
    %c0_0 = arith.constant 0 : index
    %0 = vector.load %arg2[%c0, %c0_0] : memref<8x1152xbf16, #tpu.memory_space<vmem>>, vector<8x1152xbf16>
    %c0_1 = arith.constant 0 : index
    %c0_2 = arith.constant 0 : index
    %1 = vector.load %arg3[%c0_1, %c0_2] : memref<1152x64xbf16, #tpu.memory_space<vmem>>, vector<1152x64xbf16>
    %cst = arith.constant dense<0.000000e+00> : vector<8x64xf32>
    %2 = tpu.matmul %0, %1, %cst {dimension_numbers = #tpu.dot_dimension_numbers<[1], [0], [0], [1], [0, 0, 1, 1], [], []>} : vector<8x1152xbf16>, vector<1152x64xbf16>, vector<8x64xf32> -> vector<8x64xf32>
    %c0_3 = arith.constant 0 : index
    %c0_4 = arith.constant 0 : index
    %3 = vector.load %arg4[%c0_3, %c0_4] : memref<1x64xf32, #tpu.memory_space<vmem>>, vector<1x64xf32>
    %4 = vector.broadcast %3 : vector<1x64xf32> to vector<8x64xf32>
    %5 = arith.mulf %2, %4 : vector<8x64xf32>
    %c0_5 = arith.constant 0 : index
    %c0_6 = arith.constant 0 : index
    %6 = vector.load %arg5[%c0_5, %c0_6] : memref<1x64xf32, #tpu.memory_space<vmem>>, vector<1x64xf32>
    %7 = vector.broadcast %6 : vector<1x64xf32> to vector<8x64xf32>
    %8 = arith.addf %5, %7 : vector<8x64xf32>
    %cst_7 = arith.constant 0.000000e+00 : f32
    %9 = vector.broadcast %cst_7 : f32 to vector<8x64xf32>
    %10 = arith.maximumf %8, %9 : vector<8x64xf32>
    %11 = arith.truncf %10 : vector<8x64xf32> to vector<8x64xbf16>
    %c0_8 = arith.constant 0 : index
    %c0_9 = arith.constant 0 : index
    %12 = vector.load %arg6[%c0_8, %c0_9] : memref<8x64xbf16, #tpu.memory_space<vmem>>, vector<8x64xbf16>
    tpu.vector_store %arg6[%c0_8, %c0_9], %11 {strides = array<i32>} : memref<8x64xbf16, #tpu.memory_space<vmem>>, vector<8x64xbf16>,
    return
  }
  func.func @transform_0(%arg0: i32, %arg1: i32) -> (i32, i32) {
    %c0_i32 = arith.constant 0 : i32
    %c0_i32_0 = arith.constant 0 : i32
    return %arg0, %c0_i32 : i32, i32
  }
  func.func @transform_1(%arg0: i32, %arg1: i32) -> (i32, i32) {
    %c0_i32 = arith.constant 0 : i32
    %c0_i32_0 = arith.constant 0 : i32
    return %c0_i32, %arg1 : i32, i32
  }
  func.func @transform_2(%arg0: i32, %arg1: i32) -> (i32, i32) {
    %c0_i32 = arith.constant 0 : i32
    %c0_i32_0 = arith.constant 0 : i32
    return %c0_i32, %arg1 : i32, i32
  }
  func.func @transform_3(%arg0: i32, %arg1: i32) -> (i32, i32) {
    %c0_i32 = arith.constant 0 : i32
    %c0_i32_0 = arith.constant 0 : i32
    return %c0_i32, %arg1 : i32, i32
  }
  func.func @transform_4(%arg0: i32, %arg1: i32) -> (i32, i32) {
    %c0_i32 = arith.constant 0 : i32
    return %arg0, %arg1 : i32, i32
  }
}

module attributes {stable_mosaic.version = 11 : i64} {
  func.func @_gemm_kernel_single(%arg0: i32, %arg1: i32, %arg2: memref<8x64xbf16, #tpu.memory_space<vmem>>, %arg3: memref<64x128xbf16, #tpu.memory_space<vmem>>, %arg4: memref<1x128xf32, #tpu.memory_space<vmem>>, %arg5: memref<1x128xf32, #tpu.memory_space<vmem>>, %arg6: memref<8x128xbf16, #tpu.memory_space<vmem>>) attributes {dimension_semantics = [#tpu.dimension_semantics<parallel>, #tpu.dimension_semantics<parallel>], iteration_bounds = array<i64: 1, 1>, scalar_prefetch = 0 : i64, scratch_operands = 0 : i64, tpu.core_type = #tpu.core_type<tc>, window_params = [{transform_indices = @transform_0, window_bounds = array<i64: 8, 64>}, {transform_indices = @transform_1, window_bounds = array<i64: 64, 128>}, {transform_indices = @transform_2, window_bounds = array<i64: 1, 128>}, {transform_indices = @transform_3, window_bounds = array<i64: 1, 128>}, {transform_indices = @transform_4, window_bounds = array<i64: 8, 128>}]} {
    %c0 = arith.constant 0 : index
    %c0_0 = arith.constant 0 : index
    %0 = vector.load %arg2[%c0, %c0_0] : memref<8x64xbf16, #tpu.memory_space<vmem>>, vector<8x64xbf16>
    %c0_1 = arith.constant 0 : index
    %c0_2 = arith.constant 0 : index
    %1 = vector.load %arg3[%c0_1, %c0_2] : memref<64x128xbf16, #tpu.memory_space<vmem>>, vector<64x128xbf16>
    %cst = arith.constant dense<0.000000e+00> : vector<8x128xf32>
    %2 = tpu.matmul %0, %1, %cst {dimension_numbers = #tpu.dot_dimension_numbers<[1], [0], [0], [1], [0, 0, 1, 1], [], []>} : vector<8x64xbf16>, vector<64x128xbf16>, vector<8x128xf32> -> vector<8x128xf32>
    %c0_3 = arith.constant 0 : index
    %c0_4 = arith.constant 0 : index
    %3 = vector.load %arg4[%c0_3, %c0_4] : memref<1x128xf32, #tpu.memory_space<vmem>>, vector<1x128xf32>
    %4 = vector.broadcast %3 : vector<1x128xf32> to vector<8x128xf32>
    %5 = arith.mulf %2, %4 : vector<8x128xf32>
    %c0_5 = arith.constant 0 : index
    %c0_6 = arith.constant 0 : index
    %6 = vector.load %arg5[%c0_5, %c0_6] : memref<1x128xf32, #tpu.memory_space<vmem>>, vector<1x128xf32>
    %7 = vector.broadcast %6 : vector<1x128xf32> to vector<8x128xf32>
    %8 = arith.addf %5, %7 : vector<8x128xf32>
    %9 = arith.truncf %8 : vector<8x128xf32> to vector<8x128xbf16>
    %c0_7 = arith.constant 0 : index
    %c0_8 = arith.constant 0 : index
    %10 = vector.load %arg6[%c0_7, %c0_8] : memref<8x128xbf16, #tpu.memory_space<vmem>>, vector<8x128xbf16>
    tpu.vector_store %arg6[%c0_7, %c0_8], %9 {strides = array<i32>} : memref<8x128xbf16, #tpu.memory_space<vmem>>, vector<8x128xbf16>,
    return
  }
  func.func @transform_0(%arg0: i32, %arg1: i32) -> (i32, i32) {
    %c0_i32 = arith.constant 0 : i32
    %c0_i32_0 = arith.constant 0 : i32
    return %arg0, %c0_i32 : i32, i32
  }
  func.func @transform_1(%arg0: i32, %arg1: i32) -> (i32, i32) {
    %c0_i32 = arith.constant 0 : i32
    %c0_i32_0 = arith.constant 0 : i32
    return %c0_i32, %arg1 : i32, i32
  }
  func.func @transform_2(%arg0: i32, %arg1: i32) -> (i32, i32) {
    %c0_i32 = arith.constant 0 : i32
    %c0_i32_0 = arith.constant 0 : i32
    return %c0_i32, %arg1 : i32, i32
  }
  func.func @transform_3(%arg0: i32, %arg1: i32) -> (i32, i32) {
    %c0_i32 = arith.constant 0 : i32
    %c0_i32_0 = arith.constant 0 : i32
    return %c0_i32, %arg1 : i32, i32
  }
  func.func @transform_4(%arg0: i32, %arg1: i32) -> (i32, i32) {
    %c0_i32 = arith.constant 0 : i32
    return %arg0, %arg1 : i32, i32
  }
}

module attributes {stable_mosaic.version = 11 : i64} {
  func.func @_gemm_kernel_single(%arg0: i32, %arg1: i32, %arg2: memref<32x576xbf16, #tpu.memory_space<vmem>>, %arg3: memref<576x32xbf16, #tpu.memory_space<vmem>>, %arg4: memref<1x32xf32, #tpu.memory_space<vmem>>, %arg5: memref<1x32xf32, #tpu.memory_space<vmem>>, %arg6: memref<32x32xbf16, #tpu.memory_space<vmem>>) attributes {dimension_semantics = [#tpu.dimension_semantics<parallel>, #tpu.dimension_semantics<parallel>], iteration_bounds = array<i64: 1, 1>, scalar_prefetch = 0 : i64, scratch_operands = 0 : i64, tpu.core_type = #tpu.core_type<tc>, window_params = [{transform_indices = @transform_0, window_bounds = array<i64: 32, 576>}, {transform_indices = @transform_1, window_bounds = array<i64: 576, 32>}, {transform_indices = @transform_2, window_bounds = array<i64: 1, 32>}, {transform_indices = @transform_3, window_bounds = array<i64: 1, 32>}, {transform_indices = @transform_4, window_bounds = array<i64: 32, 32>}]} {
    %c0 = arith.constant 0 : index
    %c0_0 = arith.constant 0 : index
    %0 = vector.load %arg2[%c0, %c0_0] : memref<32x576xbf16, #tpu.memory_space<vmem>>, vector<32x576xbf16>
    %c0_1 = arith.constant 0 : index
    %c0_2 = arith.constant 0 : index
    %1 = vector.load %arg3[%c0_1, %c0_2] : memref<576x32xbf16, #tpu.memory_space<vmem>>, vector<576x32xbf16>
    %cst = arith.constant dense<0.000000e+00> : vector<32x32xf32>
    %2 = tpu.matmul %0, %1, %cst {dimension_numbers = #tpu.dot_dimension_numbers<[1], [0], [0], [1], [0, 0, 1, 1], [], []>} : vector<32x576xbf16>, vector<576x32xbf16>, vector<32x32xf32> -> vector<32x32xf32>
    %c0_3 = arith.constant 0 : index
    %c0_4 = arith.constant 0 : index
    %3 = vector.load %arg4[%c0_3, %c0_4] : memref<1x32xf32, #tpu.memory_space<vmem>>, vector<1x32xf32>
    %4 = vector.broadcast %3 : vector<1x32xf32> to vector<32x32xf32>
    %5 = arith.mulf %2, %4 : vector<32x32xf32>
    %c0_5 = arith.constant 0 : index
    %c0_6 = arith.constant 0 : index
    %6 = vector.load %arg5[%c0_5, %c0_6] : memref<1x32xf32, #tpu.memory_space<vmem>>, vector<1x32xf32>
    %7 = vector.broadcast %6 : vector<1x32xf32> to vector<32x32xf32>
    %8 = arith.addf %5, %7 : vector<32x32xf32>
    %cst_7 = arith.constant 0.000000e+00 : f32
    %9 = vector.broadcast %cst_7 : f32 to vector<32x32xf32>
    %10 = arith.maximumf %8, %9 : vector<32x32xf32>
    %11 = arith.truncf %10 : vector<32x32xf32> to vector<32x32xbf16>
    %c0_8 = arith.constant 0 : index
    %c0_9 = arith.constant 0 : index
    %12 = vector.load %arg6[%c0_8, %c0_9] : memref<32x32xbf16, #tpu.memory_space<vmem>>, vector<32x32xbf16>
    tpu.vector_store %arg6[%c0_8, %c0_9], %11 {strides = array<i32>} : memref<32x32xbf16, #tpu.memory_space<vmem>>, vector<32x32xbf16>,
    return
  }
  func.func @transform_0(%arg0: i32, %arg1: i32) -> (i32, i32) {
    %c0_i32 = arith.constant 0 : i32
    %c0_i32_0 = arith.constant 0 : i32
    return %arg0, %c0_i32 : i32, i32
  }
  func.func @transform_1(%arg0: i32, %arg1: i32) -> (i32, i32) {
    %c0_i32 = arith.constant 0 : i32
    %c0_i32_0 = arith.constant 0 : i32
    return %c0_i32, %arg1 : i32, i32
  }
  func.func @transform_2(%arg0: i32, %arg1: i32) -> (i32, i32) {
    %c0_i32 = arith.constant 0 : i32
    %c0_i32_0 = arith.constant 0 : i32
    return %c0_i32, %arg1 : i32, i32
  }
  func.func @transform_3(%arg0: i32, %arg1: i32) -> (i32, i32) {
    %c0_i32 = arith.constant 0 : i32
    %c0_i32_0 = arith.constant 0 : i32
    return %c0_i32, %arg1 : i32, i32
  }
  func.func @transform_4(%arg0: i32, %arg1: i32) -> (i32, i32) {
    %c0_i32 = arith.constant 0 : i32
    return %arg0, %arg1 : i32, i32
  }
}

module attributes {stable_mosaic.version = 11 : i64} {
  func.func @_gemm_kernel_single(%arg0: i32, %arg1: i32, %arg2: memref<32x32xbf16, #tpu.memory_space<vmem>>, %arg3: memref<32x64xbf16, #tpu.memory_space<vmem>>, %arg4: memref<1x64xf32, #tpu.memory_space<vmem>>, %arg5: memref<1x64xf32, #tpu.memory_space<vmem>>, %arg6: memref<32x64xbf16, #tpu.memory_space<vmem>>) attributes {dimension_semantics = [#tpu.dimension_semantics<parallel>, #tpu.dimension_semantics<parallel>], iteration_bounds = array<i64: 1, 1>, scalar_prefetch = 0 : i64, scratch_operands = 0 : i64, tpu.core_type = #tpu.core_type<tc>, window_params = [{transform_indices = @transform_0, window_bounds = array<i64: 32, 32>}, {transform_indices = @transform_1, window_bounds = array<i64: 32, 64>}, {transform_indices = @transform_2, window_bounds = array<i64: 1, 64>}, {transform_indices = @transform_3, window_bounds = array<i64: 1, 64>}, {transform_indices = @transform_4, window_bounds = array<i64: 32, 64>}]} {
    %c0 = arith.constant 0 : index
    %c0_0 = arith.constant 0 : index
    %0 = vector.load %arg2[%c0, %c0_0] : memref<32x32xbf16, #tpu.memory_space<vmem>>, vector<32x32xbf16>
    %c0_1 = arith.constant 0 : index
    %c0_2 = arith.constant 0 : index
    %1 = vector.load %arg3[%c0_1, %c0_2] : memref<32x64xbf16, #tpu.memory_space<vmem>>, vector<32x64xbf16>
    %cst = arith.constant dense<0.000000e+00> : vector<32x64xf32>
    %2 = tpu.matmul %0, %1, %cst {dimension_numbers = #tpu.dot_dimension_numbers<[1], [0], [0], [1], [0, 0, 1, 1], [], []>} : vector<32x32xbf16>, vector<32x64xbf16>, vector<32x64xf32> -> vector<32x64xf32>
    %c0_3 = arith.constant 0 : index
    %c0_4 = arith.constant 0 : index
    %3 = vector.load %arg4[%c0_3, %c0_4] : memref<1x64xf32, #tpu.memory_space<vmem>>, vector<1x64xf32>
    %4 = vector.broadcast %3 : vector<1x64xf32> to vector<32x64xf32>
    %5 = arith.mulf %2, %4 : vector<32x64xf32>
    %c0_5 = arith.constant 0 : index
    %c0_6 = arith.constant 0 : index
    %6 = vector.load %arg5[%c0_5, %c0_6] : memref<1x64xf32, #tpu.memory_space<vmem>>, vector<1x64xf32>
    %7 = vector.broadcast %6 : vector<1x64xf32> to vector<32x64xf32>
    %8 = arith.addf %5, %7 : vector<32x64xf32>
    %9 = arith.truncf %8 : vector<32x64xf32> to vector<32x64xbf16>
    %c0_7 = arith.constant 0 : index
    %c0_8 = arith.constant 0 : index
    %10 = vector.load %arg6[%c0_7, %c0_8] : memref<32x64xbf16, #tpu.memory_space<vmem>>, vector<32x64xbf16>
    tpu.vector_store %arg6[%c0_7, %c0_8], %9 {strides = array<i32>} : memref<32x64xbf16, #tpu.memory_space<vmem>>, vector<32x64xbf16>,
    return
  }
  func.func @transform_0(%arg0: i32, %arg1: i32) -> (i32, i32) {
    %c0_i32 = arith.constant 0 : i32
    %c0_i32_0 = arith.constant 0 : i32
    return %arg0, %c0_i32 : i32, i32
  }
  func.func @transform_1(%arg0: i32, %arg1: i32) -> (i32, i32) {
    %c0_i32 = arith.constant 0 : i32
    %c0_i32_0 = arith.constant 0 : i32
    return %c0_i32, %arg1 : i32, i32
  }
  func.func @transform_2(%arg0: i32, %arg1: i32) -> (i32, i32) {
    %c0_i32 = arith.constant 0 : i32
    %c0_i32_0 = arith.constant 0 : i32
    return %c0_i32, %arg1 : i32, i32
  }
  func.func @transform_3(%arg0: i32, %arg1: i32) -> (i32, i32) {
    %c0_i32 = arith.constant 0 : i32
    %c0_i32_0 = arith.constant 0 : i32
    return %c0_i32, %arg1 : i32, i32
  }
  func.func @transform_4(%arg0: i32, %arg1: i32) -> (i32, i32) {
    %c0_i32 = arith.constant 0 : i32
    return %arg0, %arg1 : i32, i32
  }
}

module attributes {stable_mosaic.version = 11 : i64} {
  func.func @_gemm_kernel_single(%arg0: i32, %arg1: i32, %arg2: memref<128x288xbf16, #tpu.memory_space<vmem>>, %arg3: memref<288x16xbf16, #tpu.memory_space<vmem>>, %arg4: memref<1x16xf32, #tpu.memory_space<vmem>>, %arg5: memref<1x16xf32, #tpu.memory_space<vmem>>, %arg6: memref<128x16xbf16, #tpu.memory_space<vmem>>) attributes {dimension_semantics = [#tpu.dimension_semantics<parallel>, #tpu.dimension_semantics<parallel>], iteration_bounds = array<i64: 1, 1>, scalar_prefetch = 0 : i64, scratch_operands = 0 : i64, tpu.core_type = #tpu.core_type<tc>, window_params = [{transform_indices = @transform_0, window_bounds = array<i64: 128, 288>}, {transform_indices = @transform_1, window_bounds = array<i64: 288, 16>}, {transform_indices = @transform_2, window_bounds = array<i64: 1, 16>}, {transform_indices = @transform_3, window_bounds = array<i64: 1, 16>}, {transform_indices = @transform_4, window_bounds = array<i64: 128, 16>}]} {
    %c0 = arith.constant 0 : index
    %c0_0 = arith.constant 0 : index
    %0 = vector.load %arg2[%c0, %c0_0] : memref<128x288xbf16, #tpu.memory_space<vmem>>, vector<128x288xbf16>
    %c0_1 = arith.constant 0 : index
    %c0_2 = arith.constant 0 : index
    %1 = vector.load %arg3[%c0_1, %c0_2] : memref<288x16xbf16, #tpu.memory_space<vmem>>, vector<288x16xbf16>
    %cst = arith.constant dense<0.000000e+00> : vector<128x16xf32>
    %2 = tpu.matmul %0, %1, %cst {dimension_numbers = #tpu.dot_dimension_numbers<[1], [0], [0], [1], [0, 0, 1, 1], [], []>} : vector<128x288xbf16>, vector<288x16xbf16>, vector<128x16xf32> -> vector<128x16xf32>
    %c0_3 = arith.constant 0 : index
    %c0_4 = arith.constant 0 : index
    %3 = vector.load %arg4[%c0_3, %c0_4] : memref<1x16xf32, #tpu.memory_space<vmem>>, vector<1x16xf32>
    %4 = vector.broadcast %3 : vector<1x16xf32> to vector<128x16xf32>
    %5 = arith.mulf %2, %4 : vector<128x16xf32>
    %c0_5 = arith.constant 0 : index
    %c0_6 = arith.constant 0 : index
    %6 = vector.load %arg5[%c0_5, %c0_6] : memref<1x16xf32, #tpu.memory_space<vmem>>, vector<1x16xf32>
    %7 = vector.broadcast %6 : vector<1x16xf32> to vector<128x16xf32>
    %8 = arith.addf %5, %7 : vector<128x16xf32>
    %cst_7 = arith.constant 0.000000e+00 : f32
    %9 = vector.broadcast %cst_7 : f32 to vector<128x16xf32>
    %10 = arith.maximumf %8, %9 : vector<128x16xf32>
    %11 = arith.truncf %10 : vector<128x16xf32> to vector<128x16xbf16>
    %c0_8 = arith.constant 0 : index
    %c0_9 = arith.constant 0 : index
    %12 = vector.load %arg6[%c0_8, %c0_9] : memref<128x16xbf16, #tpu.memory_space<vmem>>, vector<128x16xbf16>
    tpu.vector_store %arg6[%c0_8, %c0_9], %11 {strides = array<i32>} : memref<128x16xbf16, #tpu.memory_space<vmem>>, vector<128x16xbf16>,
    return
  }
  func.func @transform_0(%arg0: i32, %arg1: i32) -> (i32, i32) {
    %c0_i32 = arith.constant 0 : i32
    %c0_i32_0 = arith.constant 0 : i32
    return %arg0, %c0_i32 : i32, i32
  }
  func.func @transform_1(%arg0: i32, %arg1: i32) -> (i32, i32) {
    %c0_i32 = arith.constant 0 : i32
    %c0_i32_0 = arith.constant 0 : i32
    return %c0_i32, %arg1 : i32, i32
  }
  func.func @transform_2(%arg0: i32, %arg1: i32) -> (i32, i32) {
    %c0_i32 = arith.constant 0 : i32
    %c0_i32_0 = arith.constant 0 : i32
    return %c0_i32, %arg1 : i32, i32
  }
  func.func @transform_3(%arg0: i32, %arg1: i32) -> (i32, i32) {
    %c0_i32 = arith.constant 0 : i32
    %c0_i32_0 = arith.constant 0 : i32
    return %c0_i32, %arg1 : i32, i32
  }
  func.func @transform_4(%arg0: i32, %arg1: i32) -> (i32, i32) {
    %c0_i32 = arith.constant 0 : i32
    return %arg0, %arg1 : i32, i32
  }
}

module attributes {stable_mosaic.version = 11 : i64} {
  func.func @_gemm_kernel_single(%arg0: i32, %arg1: i32, %arg2: memref<128x16xbf16, #tpu.memory_space<vmem>>, %arg3: memref<16x32xbf16, #tpu.memory_space<vmem>>, %arg4: memref<1x32xf32, #tpu.memory_space<vmem>>, %arg5: memref<1x32xf32, #tpu.memory_space<vmem>>, %arg6: memref<128x32xbf16, #tpu.memory_space<vmem>>) attributes {dimension_semantics = [#tpu.dimension_semantics<parallel>, #tpu.dimension_semantics<parallel>], iteration_bounds = array<i64: 1, 1>, scalar_prefetch = 0 : i64, scratch_operands = 0 : i64, tpu.core_type = #tpu.core_type<tc>, window_params = [{transform_indices = @transform_0, window_bounds = array<i64: 128, 16>}, {transform_indices = @transform_1, window_bounds = array<i64: 16, 32>}, {transform_indices = @transform_2, window_bounds = array<i64: 1, 32>}, {transform_indices = @transform_3, window_bounds = array<i64: 1, 32>}, {transform_indices = @transform_4, window_bounds = array<i64: 128, 32>}]} {
    %c0 = arith.constant 0 : index
    %c0_0 = arith.constant 0 : index
    %0 = vector.load %arg2[%c0, %c0_0] : memref<128x16xbf16, #tpu.memory_space<vmem>>, vector<128x16xbf16>
    %c0_1 = arith.constant 0 : index
    %c0_2 = arith.constant 0 : index
    %1 = vector.load %arg3[%c0_1, %c0_2] : memref<16x32xbf16, #tpu.memory_space<vmem>>, vector<16x32xbf16>
    %cst = arith.constant dense<0.000000e+00> : vector<128x32xf32>
    %2 = tpu.matmul %0, %1, %cst {dimension_numbers = #tpu.dot_dimension_numbers<[1], [0], [0], [1], [0, 0, 1, 1], [], []>} : vector<128x16xbf16>, vector<16x32xbf16>, vector<128x32xf32> -> vector<128x32xf32>
    %c0_3 = arith.constant 0 : index
    %c0_4 = arith.constant 0 : index
    %3 = vector.load %arg4[%c0_3, %c0_4] : memref<1x32xf32, #tpu.memory_space<vmem>>, vector<1x32xf32>
    %4 = vector.broadcast %3 : vector<1x32xf32> to vector<128x32xf32>
    %5 = arith.mulf %2, %4 : vector<128x32xf32>
    %c0_5 = arith.constant 0 : index
    %c0_6 = arith.constant 0 : index
    %6 = vector.load %arg5[%c0_5, %c0_6] : memref<1x32xf32, #tpu.memory_space<vmem>>, vector<1x32xf32>
    %7 = vector.broadcast %6 : vector<1x32xf32> to vector<128x32xf32>
    %8 = arith.addf %5, %7 : vector<128x32xf32>
    %9 = arith.truncf %8 : vector<128x32xf32> to vector<128x32xbf16>
    %c0_7 = arith.constant 0 : index
    %c0_8 = arith.constant 0 : index
    %10 = vector.load %arg6[%c0_7, %c0_8] : memref<128x32xbf16, #tpu.memory_space<vmem>>, vector<128x32xbf16>
    tpu.vector_store %arg6[%c0_7, %c0_8], %9 {strides = array<i32>} : memref<128x32xbf16, #tpu.memory_space<vmem>>, vector<128x32xbf16>,
    return
  }
  func.func @transform_0(%arg0: i32, %arg1: i32) -> (i32, i32) {
    %c0_i32 = arith.constant 0 : i32
    %c0_i32_0 = arith.constant 0 : i32
    return %arg0, %c0_i32 : i32, i32
  }
  func.func @transform_1(%arg0: i32, %arg1: i32) -> (i32, i32) {
    %c0_i32 = arith.constant 0 : i32
    %c0_i32_0 = arith.constant 0 : i32
    return %c0_i32, %arg1 : i32, i32
  }
  func.func @transform_2(%arg0: i32, %arg1: i32) -> (i32, i32) {
    %c0_i32 = arith.constant 0 : i32
    %c0_i32_0 = arith.constant 0 : i32
    return %c0_i32, %arg1 : i32, i32
  }
  func.func @transform_3(%arg0: i32, %arg1: i32) -> (i32, i32) {
    %c0_i32 = arith.constant 0 : i32
    %c0_i32_0 = arith.constant 0 : i32
    return %c0_i32, %arg1 : i32, i32
  }
  func.func @transform_4(%arg0: i32, %arg1: i32) -> (i32, i32) {
    %c0_i32 = arith.constant 0 : i32
    return %arg0, %arg1 : i32, i32
  }
}

module attributes {stable_mosaic.version = 11 : i64} {
  func.func @_gemm_kernel_single(%arg0: i32, %arg1: i32, %arg2: memref<128x144xbf16, #tpu.memory_space<vmem>>, %arg3: memref<144x8xbf16, #tpu.memory_space<vmem>>, %arg4: memref<1x8xf32, #tpu.memory_space<vmem>>, %arg5: memref<1x8xf32, #tpu.memory_space<vmem>>, %arg6: memref<128x8xbf16, #tpu.memory_space<vmem>>) attributes {dimension_semantics = [#tpu.dimension_semantics<parallel>, #tpu.dimension_semantics<parallel>], iteration_bounds = array<i64: 4, 1>, scalar_prefetch = 0 : i64, scratch_operands = 0 : i64, tpu.core_type = #tpu.core_type<tc>, window_params = [{transform_indices = @transform_0, window_bounds = array<i64: 128, 144>}, {transform_indices = @transform_1, window_bounds = array<i64: 144, 8>}, {transform_indices = @transform_2, window_bounds = array<i64: 1, 8>}, {transform_indices = @transform_3, window_bounds = array<i64: 1, 8>}, {transform_indices = @transform_4, window_bounds = array<i64: 128, 8>}]} {
    %c0 = arith.constant 0 : index
    %c0_0 = arith.constant 0 : index
    %0 = vector.load %arg2[%c0, %c0_0] : memref<128x144xbf16, #tpu.memory_space<vmem>>, vector<128x144xbf16>
    %c0_1 = arith.constant 0 : index
    %c0_2 = arith.constant 0 : index
    %1 = vector.load %arg3[%c0_1, %c0_2] : memref<144x8xbf16, #tpu.memory_space<vmem>>, vector<144x8xbf16>
    %cst = arith.constant dense<0.000000e+00> : vector<128x8xf32>
    %2 = tpu.matmul %0, %1, %cst {dimension_numbers = #tpu.dot_dimension_numbers<[1], [0], [0], [1], [0, 0, 1, 1], [], []>} : vector<128x144xbf16>, vector<144x8xbf16>, vector<128x8xf32> -> vector<128x8xf32>
    %c0_3 = arith.constant 0 : index
    %c0_4 = arith.constant 0 : index
    %3 = vector.load %arg4[%c0_3, %c0_4] : memref<1x8xf32, #tpu.memory_space<vmem>>, vector<1x8xf32>
    %4 = vector.broadcast %3 : vector<1x8xf32> to vector<128x8xf32>
    %5 = arith.mulf %2, %4 : vector<128x8xf32>
    %c0_5 = arith.constant 0 : index
    %c0_6 = arith.constant 0 : index
    %6 = vector.load %arg5[%c0_5, %c0_6] : memref<1x8xf32, #tpu.memory_space<vmem>>, vector<1x8xf32>
    %7 = vector.broadcast %6 : vector<1x8xf32> to vector<128x8xf32>
    %8 = arith.addf %5, %7 : vector<128x8xf32>
    %cst_7 = arith.constant 0.000000e+00 : f32
    %9 = vector.broadcast %cst_7 : f32 to vector<128x8xf32>
    %10 = arith.maximumf %8, %9 : vector<128x8xf32>
    %11 = arith.truncf %10 : vector<128x8xf32> to vector<128x8xbf16>
    %c0_8 = arith.constant 0 : index
    %c0_9 = arith.constant 0 : index
    %12 = vector.load %arg6[%c0_8, %c0_9] : memref<128x8xbf16, #tpu.memory_space<vmem>>, vector<128x8xbf16>
    tpu.vector_store %arg6[%c0_8, %c0_9], %11 {strides = array<i32>} : memref<128x8xbf16, #tpu.memory_space<vmem>>, vector<128x8xbf16>,
    return
  }
  func.func @transform_0(%arg0: i32, %arg1: i32) -> (i32, i32) {
    %c0_i32 = arith.constant 0 : i32
    %c0_i32_0 = arith.constant 0 : i32
    return %arg0, %c0_i32 : i32, i32
  }
  func.func @transform_1(%arg0: i32, %arg1: i32) -> (i32, i32) {
    %c0_i32 = arith.constant 0 : i32
    %c0_i32_0 = arith.constant 0 : i32
    return %c0_i32, %arg1 : i32, i32
  }
  func.func @transform_2(%arg0: i32, %arg1: i32) -> (i32, i32) {
    %c0_i32 = arith.constant 0 : i32
    %c0_i32_0 = arith.constant 0 : i32
    return %c0_i32, %arg1 : i32, i32
  }
  func.func @transform_3(%arg0: i32, %arg1: i32) -> (i32, i32) {
    %c0_i32 = arith.constant 0 : i32
    %c0_i32_0 = arith.constant 0 : i32
    return %c0_i32, %arg1 : i32, i32
  }
  func.func @transform_4(%arg0: i32, %arg1: i32) -> (i32, i32) {
    %c0_i32 = arith.constant 0 : i32
    return %arg0, %arg1 : i32, i32
  }
}

module attributes {stable_mosaic.version = 11 : i64} {
  func.func @_gemm_kernel_single(%arg0: i32, %arg1: i32, %arg2: memref<128x8xbf16, #tpu.memory_space<vmem>>, %arg3: memref<8x4xbf16, #tpu.memory_space<vmem>>, %arg4: memref<1x4xf32, #tpu.memory_space<vmem>>, %arg5: memref<1x4xf32, #tpu.memory_space<vmem>>, %arg6: memref<128x4xf32, #tpu.memory_space<vmem>>) attributes {dimension_semantics = [#tpu.dimension_semantics<parallel>, #tpu.dimension_semantics<parallel>], iteration_bounds = array<i64: 4, 1>, scalar_prefetch = 0 : i64, scratch_operands = 0 : i64, tpu.core_type = #tpu.core_type<tc>, window_params = [{transform_indices = @transform_0, window_bounds = array<i64: 128, 8>}, {transform_indices = @transform_1, window_bounds = array<i64: 8, 4>}, {transform_indices = @transform_2, window_bounds = array<i64: 1, 4>}, {transform_indices = @transform_3, window_bounds = array<i64: 1, 4>}, {transform_indices = @transform_4, window_bounds = array<i64: 128, 4>}]} {
    %c0 = arith.constant 0 : index
    %c0_0 = arith.constant 0 : index
    %0 = vector.load %arg2[%c0, %c0_0] : memref<128x8xbf16, #tpu.memory_space<vmem>>, vector<128x8xbf16>
    %c0_1 = arith.constant 0 : index
    %c0_2 = arith.constant 0 : index
    %1 = vector.load %arg3[%c0_1, %c0_2] : memref<8x4xbf16, #tpu.memory_space<vmem>>, vector<8x4xbf16>
    %cst = arith.constant dense<0.000000e+00> : vector<128x4xf32>
    %2 = tpu.matmul %0, %1, %cst {dimension_numbers = #tpu.dot_dimension_numbers<[1], [0], [0], [1], [0, 0, 1, 1], [], []>} : vector<128x8xbf16>, vector<8x4xbf16>, vector<128x4xf32> -> vector<128x4xf32>
    %c0_3 = arith.constant 0 : index
    %c0_4 = arith.constant 0 : index
    %3 = vector.load %arg4[%c0_3, %c0_4] : memref<1x4xf32, #tpu.memory_space<vmem>>, vector<1x4xf32>
    %4 = vector.broadcast %3 : vector<1x4xf32> to vector<128x4xf32>
    %5 = arith.mulf %2, %4 : vector<128x4xf32>
    %c0_5 = arith.constant 0 : index
    %c0_6 = arith.constant 0 : index
    %6 = vector.load %arg5[%c0_5, %c0_6] : memref<1x4xf32, #tpu.memory_space<vmem>>, vector<1x4xf32>
    %7 = vector.broadcast %6 : vector<1x4xf32> to vector<128x4xf32>
    %8 = arith.addf %5, %7 : vector<128x4xf32>
    %c0_7 = arith.constant 0 : index
    %c0_8 = arith.constant 0 : index
    %9 = vector.load %arg6[%c0_7, %c0_8] : memref<128x4xf32, #tpu.memory_space<vmem>>, vector<128x4xf32>
    tpu.vector_store %arg6[%c0_7, %c0_8], %8 {strides = array<i32>} : memref<128x4xf32, #tpu.memory_space<vmem>>, vector<128x4xf32>,
    return
  }
  func.func @transform_0(%arg0: i32, %arg1: i32) -> (i32, i32) {
    %c0_i32 = arith.constant 0 : i32
    %c0_i32_0 = arith.constant 0 : i32
    return %arg0, %c0_i32 : i32, i32
  }
  func.func @transform_1(%arg0: i32, %arg1: i32) -> (i32, i32) {
    %c0_i32 = arith.constant 0 : i32
    %c0_i32_0 = arith.constant 0 : i32
    return %c0_i32, %arg1 : i32, i32
  }
  func.func @transform_2(%arg0: i32, %arg1: i32) -> (i32, i32) {
    %c0_i32 = arith.constant 0 : i32
    %c0_i32_0 = arith.constant 0 : i32
    return %c0_i32, %arg1 : i32, i32
  }
  func.func @transform_3(%arg0: i32, %arg1: i32) -> (i32, i32) {
    %c0_i32 = arith.constant 0 : i32
    %c0_i32_0 = arith.constant 0 : i32
    return %c0_i32, %arg1 : i32, i32
  }
  func.func @transform_4(%arg0: i32, %arg1: i32) -> (i32, i32) {
    %c0_i32 = arith.constant 0 : i32
    return %arg0, %arg1 : i32, i32
  }
}

</mosaic_0001>

<llo_original>
// kernel: unet_forward.23
$region0: #{unet_forward.23}
  #allocation0 [shape = 'u32[]', space=smem, size = 0x4, offset = 0x4, fixed_abs, tag = 'smem constant byte address 0x4 - core index']
  #allocation1 [shape = 'u32[144,128]{1,0:T(1,128)}', space=vmem, size = 0x12000, scoped, tag = 'internal scratch']
  %s0 = inlined_call_operand.vmem [shape: bf16[512,27], index: 0, kind: input, shape index: {}]
  %s1 = inlined_call_operand.vmem [shape: bf16[27,8], index: 1, kind: input, shape index: {}]
  %s2 = inlined_call_operand.vmem [shape: f32[1,8], index: 2, kind: input, shape index: {}]
  %s3 = inlined_call_operand.vmem [shape: f32[1,8], index: 3, kind: input, shape index: {}]
  %s4 = inlined_call_operand.vmem [shape: bf16[512,8], index: 4, kind: output, shape index: {}]
  %s5 = sld [smem:[#allocation0]]
  $region49: #{unet_forward.23} parent=0
    _
  %s7 = ssub.s32 1, %s5
  %s8 = scalar_select 0, %s7, %s5
  loop: start=0, step=1, limit=6
  $region2: #{unet_forward.23} parent=0 // loop_pre_header
    _
  $region3: #{unet_forward.23} parent=0 // loop_header
    %s10 = sphi 0, %s14
    %p11 = scmp.ge.s32.totalorder %s10, 6
    %s17 = sphi 0, %s29
    %s18 = sphi 0, %s25
    %s19 = sphi 0, %s17
    %s20 = sphi 0, %s18
    %s21 = sphi 0, %s19
    %s22 = sphi 0, %s20
    %s32 = sphi 0, %s34
    %s35 = sphi 0, %s32
    %s36 = sphi 0, %s35
    %s52 = sphi 0, %s36
    %s58 = sphi 0, %s60
    %s61 = sphi 0, %s58
    %s62 = sphi 0, %s61
    %s78 = sphi 0, %s62
    %s84 = sphi 0, %s86
    %s87 = sphi 0, %s84
    %s88 = sphi 0, %s87
    %s104 = sphi 0, %s88
    %s110 = sphi 0, %s112
    %s113 = sphi 0, %s110
    %s114 = sphi 0, %s113
    %s130 = sphi 0, %s114
    %s138 = sphi 0, %s140
    %s141 = sphi 0, %s138
    %s142 = sphi 0, %s141
    %s158 = sphi 0, %s142
  $region4: #{unet_forward.23} parent=0 // loop_header_branch
    %13 = sbr.rel (%p11) target = $region8
  $region5: #{unet_forward.23} parent=0 // loop_body
    %s15 = ssub.s32 %s10, 1
    %s16 = ssub.s32 %s10, 2
    %s23 = sadd.s32 1, %s18
    %p24 = scmp.ge.s32.totalorder %s23, 1
    %s25 = scalar_select %p24, 0, %s23
    %s26 = sadd.s32 1, %s17
    %s27 = scalar_select %p24, %s26, %s17
    %p28 = scmp.ge.s32.totalorder %s27, 4
    %s29 = scalar_select %p28, 0, %s27
    %s30 = ssub.s32 %s17, %s29
    %p31 = scmp.eq.s32.totalorder %s30, 0
    %s33 = sadd.s32 %s32, 1
    %s34 = scalar_select %p31, %s32, %s33
    %p37 = pneg %p31
    %p38 = scmp.eq.s32.totalorder %s10, 3
    %p39 = por %p37, %p38
    %p40 = scmp.ne.s32.totalorder %s32, %s35
    %p41 = scmp.eq.s32.totalorder %s10, 0
    %p42 = por %p40, %p41
    %p43 = scmp.ne.s32.totalorder %s32, %s35
    %p44 = scmp.eq.s32.totalorder %s15, 3
    %p45 = por %p43, %p44
    %p46 = scmp.ne.s32.totalorder %s35, %s36
    %p47 = scmp.eq.s32.totalorder %s15, 0
    %p48 = por %p46, %p47
    %p49 = scmp.ne.s32.totalorder %s35, %s36
    %p50 = scmp.eq.s32.totalorder %s16, 3
    %p51 = por %p49, %p50
    %p53 = scmp.ne.s32.totalorder %s36, %s52
    %p54 = scmp.eq.s32.totalorder %s16, 0
    %p55 = por %p53, %p54
    %s56 = ssub.s32 %s18, %s25
    %p57 = scmp.eq.s32.totalorder %s56, 0
    %s59 = sadd.s32 %s58, 1
    %s60 = scalar_select %p57, %s58, %s59
    %p63 = pneg %p57
    %p64 = scmp.eq.s32.totalorder %s10, 3
    %p65 = por %p63, %p64
    %p66 = scmp.ne.s32.totalorder %s58, %s61
    %p67 = scmp.eq.s32.totalorder %s10, 0
    %p68 = por %p66, %p67
    %p69 = scmp.ne.s32.totalorder %s58, %s61
    %p70 = scmp.eq.s32.totalorder %s15, 3
    %p71 = por %p69, %p70
    %p72 = scmp.ne.s32.totalorder %s61, %s62
    %p73 = scmp.eq.s32.totalorder %s15, 0
    %p74 = por %p72, %p73
    %p75 = scmp.ne.s32.totalorder %s61, %s62
    %p76 = scmp.eq.s32.totalorder %s16, 3
    %p77 = por %p75, %p76
    %p79 = scmp.ne.s32.totalorder %s62, %s78
    %p80 = scmp.eq.s32.totalorder %s16, 0
    %p81 = por %p79, %p80
    %s82 = ssub.s32 %s18, %s25
    %p83 = scmp.eq.s32.totalorder %s82, 0
    %s85 = sadd.s32 %s84, 1
    %s86 = scalar_select %p83, %s84, %s85
    %p89 = pneg %p83
    %p90 = scmp.eq.s32.totalorder %s10, 3
    %p91 = por %p89, %p90
    %p92 = scmp.ne.s32.totalorder %s84, %s87
    %p93 = scmp.eq.s32.totalorder %s10, 0
    %p94 = por %p92, %p93
    %p95 = scmp.ne.s32.totalorder %s84, %s87
    %p96 = scmp.eq.s32.totalorder %s15, 3
    %p97 = por %p95, %p96
    %p98 = scmp.ne.s32.totalorder %s87, %s88
    %p99 = scmp.eq.s32.totalorder %s15, 0
    %p100 = por %p98, %p99
    %p101 = scmp.ne.s32.totalorder %s87, %s88
    %p102 = scmp.eq.s32.totalorder %s16, 3
    %p103 = por %p101, %p102
    %p105 = scmp.ne.s32.totalorder %s88, %s104
    %p106 = scmp.eq.s32.totalorder %s16, 0
    %p107 = por %p105, %p106
    %s108 = ssub.s32 %s18, %s25
    %p109 = scmp.eq.s32.totalorder %s108, 0
    %s111 = sadd.s32 %s110, 1
    %s112 = scalar_select %p109, %s110, %s111
    %p115 = pneg %p109
    %p116 = scmp.eq.s32.totalorder %s10, 3
    %p117 = por %p115, %p116
    %p118 = scmp.ne.s32.totalorder %s110, %s113
    %p119 = scmp.eq.s32.totalorder %s10, 0
    %p120 = por %p118, %p119
    %p121 = scmp.ne.s32.totalorder %s110, %s113
    %p122 = scmp.eq.s32.totalorder %s15, 3
    %p123 = por %p121, %p122
    %p124 = scmp.ne.s32.totalorder %s113, %s114
    %p125 = scmp.eq.s32.totalorder %s15, 0
    %p126 = por %p124, %p125
    %p127 = scmp.ne.s32.totalorder %s113, %s114
    %p128 = scmp.eq.s32.totalorder %s16, 3
    %p129 = por %p127, %p128
    %p131 = scmp.ne.s32.totalorder %s114, %s130
    %p132 = scmp.eq.s32.totalorder %s16, 0
    %p133 = por %p131, %p132
    %s134 = ssub.s32 %s17, %s29
    %s135 = ssub.s32 %s18, %s25
    %s136 = sor.u32 %s134, %s135
    %p137 = scmp.eq.s32.totalorder %s136, 0
    %s139 = sadd.s32 %s138, 1
    %s140 = scalar_select %p137, %s138, %s139
    %p143 = pneg %p137
    %p144 = scmp.eq.s32.totalorder %s10, 3
    %p145 = por %p143, %p144
    %p146 = scmp.ne.s32.totalorder %s138, %s141
    %p147 = scmp.eq.s32.totalorder %s10, 0
    %p148 = por %p146, %p147
    %p149 = scmp.ne.s32.totalorder %s138, %s141
    %p150 = scmp.eq.s32.totalorder %s15, 3
    %p151 = por %p149, %p150
    %p152 = scmp.ne.s32.totalorder %s141, %s142
    %p153 = scmp.eq.s32.totalorder %s15, 0
    %p154 = por %p152, %p153
    %p155 = scmp.ne.s32.totalorder %s141, %s142
    %p156 = scmp.eq.s32.totalorder %s16, 3
    %p157 = por %p155, %p156
    %p159 = scmp.ne.s32.totalorder %s142, %s158
    %p160 = scmp.eq.s32.totalorder %s16, 0
    %p161 = por %p159, %p160
    %p162 = scmp.le.s32.totalorder 1, %s10
    %p163 = scmp.lt.s32.totalorder %s10, 5
    %p164 = pnand %p162, %p163
    %p165 = pneg %p164
    // Predicated region
    $region9: #{unet_forward.23} parent=5 // pred_check
      _
    $region10: #{unet_forward.23} parent=5 // pred_check_branch
      %167 = sbr.rel (%p164) target = $region12
    $region11: #{unet_forward.23} parent=5 // pred_region
      %s168 = ssub.s32 %s10, 1
      // Predicated region
      $region13: #{unet_forward.23} parent=11 // pred_check
        %p169 = pneg %p74
      $region14: #{unet_forward.23} parent=11 // pred_check_branch
        %171 = sbr.rel (%p169) target = $region16
      $region15: #{unet_forward.23} parent=11 // pred_region
        %p172 = scmp.lt.s32.totalorder %s20, 0
        %s173 = scalar_select %p172, %s20, 0
        %s174 = smul.addr %s173, 4
        %s175 = scalar_lea.vmem %s1, %s174
      $region16: #{unet_forward.23} parent=11 // pred_fallthru
        _
      // Predicated region
      $region17: #{unet_forward.23} parent=11 // pred_check
        %p176 = pneg %p100
      $region18: #{unet_forward.23} parent=11 // pred_check_branch
        %178 = sbr.rel (%p176) target = $region20
      $region19: #{unet_forward.23} parent=11 // pred_region
        %p179 = scmp.lt.s32.totalorder %s20, 0
        %s180 = scalar_select %p179, %s20, 0
        %s181 = scalar_lea.vmem %s2, %s180
      $region20: #{unet_forward.23} parent=11 // pred_fallthru
        _
      // Predicated region
      $region21: #{unet_forward.23} parent=11 // pred_check
        %p182 = pneg %p126
      $region22: #{unet_forward.23} parent=11 // pred_check_branch
        %184 = sbr.rel (%p182) target = $region24
      $region23: #{unet_forward.23} parent=11 // pred_region
        %p185 = scmp.lt.s32.totalorder %s20, 0
        %s186 = scalar_select %p185, %s20, 0
        %s187 = scalar_lea.vmem %s3, %s186
      $region24: #{unet_forward.23} parent=11 // pred_fallthru
        _
    $region12: #{unet_forward.23} parent=5 // pred_fallthru
      _
    %p188 = scmp.lt.s32.totalorder %s10, 4
    // Predicated region
    $region25: #{unet_forward.23} parent=5 // pred_check
      %p189 = pneg %p188
    $region26: #{unet_forward.23} parent=5 // pred_check_branch
      %191 = sbr.rel (%p189) target = $region28
    $region27: #{unet_forward.23} parent=5 // pred_region
      // Predicated region
      $region29: #{unet_forward.23} parent=27 // pred_check
        %p192 = pneg %p42
      $region30: #{unet_forward.23} parent=27 // pred_check_branch
        %194 = sbr.rel (%p192) target = $region32
      $region31: #{unet_forward.23} parent=27 // pred_region
        %s195 = smul.u32 16, %s17
        %p196 = scmp.lt.s32.totalorder %s195, 63
        %s197 = scalar_select %p196, %s195, 63
        %s198 = smul.addr %s197, 4
        %s199 = scalar_lea.vmem %s0, %s198
        %s200 = smul.u32 16, %s17
      $region32: #{unet_forward.23} parent=27 // pred_fallthru
        _
    $region28: #{unet_forward.23} parent=5 // pred_fallthru
      _
    %p201 = scmp.le.s32.totalorder 1, %s10
    %p202 = scmp.lt.s32.totalorder %s10, 5
    %p203 = pnand %p201, %p202
    %p204 = pneg %p203
    // Predicated region
    $region33: #{unet_forward.23} parent=5 // pred_check
      _
    $region34: #{unet_forward.23} parent=5 // pred_check_branch
      %206 = sbr.rel (%p203) target = $region36
    $region35: #{unet_forward.23} parent=5 // pred_region
      %s207 = ssub.s32 %s10, 1
      %s208 = smul.u32 16, %s19
      %p209 = scmp.lt.s32.totalorder %s208, 63
      %s210 = scalar_select %p209, %s208, 63
      %s211 = smul.addr %s210, 4
      %s212 = scalar_lea.vmem %s0, %s211
      %p213 = pneg %p48
      %p214 = pneg %p45
      %p215 = scmp.lt.s32.totalorder %s20, 0
      %s216 = scalar_select %p215, %s20, 0
      %s217 = smul.addr %s216, 4
      %s218 = scalar_lea.vmem %s1, %s217
      %p219 = pneg %p74
      %p220 = pneg %p71
      %p221 = scmp.lt.s32.totalorder %s20, 0
      %s222 = scalar_select %p221, %s20, 0
      %s223 = scalar_lea.vmem %s2, %s222
      %p224 = pneg %p100
      %p225 = pneg %p97
      %p226 = scmp.lt.s32.totalorder %s20, 0
      %s227 = scalar_select %p226, %s20, 0
      %s228 = scalar_lea.vmem %s3, %s227
      %p229 = pneg %p126
      %p230 = pneg %p123
      %p231 = pneg %p154
      %p232 = pneg %p151
      %s233 = smul.u32 16, %s19
      %p234 = scmp.lt.s32.totalorder %s233, 63
      %s235 = scalar_select %p234, %s233, 63
      %p236 = scmp.lt.s32.totalorder %s20, 0
      %s237 = scalar_select %p236, %s20, 0
      %s238 = sadd.s32 %s237, %s235
      %s239 = smul.addr %s238, 4
      %s240 = scalar_lea.vmem %s4, %s239
      %s241 = smul.u32 16, %s19
      %p242 = scmp.lt.s32.totalorder %s241, 63
      %s243 = scalar_select %p242, %s241, 63
      %s244 = smul.addr %s243, 4
      %s245 = scalar_lea.vmem %s0, %s244
      %s246 = smul.u32 16, %s19
      %p247 = scmp.lt.s32.totalorder %s20, 0
      %s248 = scalar_select %p247, %s20, 0
      %s249 = smul.addr %s248, 4
      %s250 = scalar_lea.vmem %s1, %s249
      %p251 = scmp.lt.s32.totalorder %s20, 0
      %s252 = scalar_select %p251, %s20, 0
      %s253 = scalar_lea.vmem %s2, %s252
      %p254 = scmp.lt.s32.totalorder %s20, 0
      %s255 = scalar_select %p254, %s20, 0
      %s256 = scalar_lea.vmem %s3, %s255
      %s257 = smul.u32 16, %s19
      %p258 = scmp.lt.s32.totalorder %s257, 63
      %s259 = scalar_select %p258, %s257, 63
      %p260 = scmp.lt.s32.totalorder %s20, 0
      %s261 = scalar_select %p260, %s20, 0
      %s262 = sadd.s32 %s261, %s259
      %s263 = smul.addr %s262, 4
      %s264 = scalar_lea.vmem %s4, %s263
      %s265 = smul.u32 16, %s19
      %v267 = vld [vmem:[%s245] sm:$0xf]
      %v268 = vld [vmem:[%s245 + $0x4] sm:$0xf]
      %v269 = vld [vmem:[%s245 + $0x8] sm:$0xf]
      %v270 = vld [vmem:[%s245 + $0xc] sm:$0xf]
      %v271 = vld [vmem:[%s245 + $0x10] sm:$0xf]
      %v272 = vld [vmem:[%s245 + $0x14] sm:$0xf]
      %v273 = vld [vmem:[%s245 + $0x18] sm:$0xf]
      %v274 = vld [vmem:[%s245 + $0x1c] sm:$0xf]
      %v275 = vld [vmem:[%s245 + $0x20] sm:$0xf]
      %v276 = vld [vmem:[%s245 + $0x24] sm:$0xf]
      %v277 = vld [vmem:[%s245 + $0x28] sm:$0xf]
      %v278 = vld [vmem:[%s245 + $0x2c] sm:$0xf]
      %v279 = vld [vmem:[%s245 + $0x30] sm:$0xf]
      %v280 = vld [vmem:[%s245 + $0x34] sm:$0xf]
      %v281 = vld [vmem:[%s245 + $0x38] sm:$0xf]
      %v282 = vld [vmem:[%s245 + $0x3c] sm:$0xf]
      %v283 = vld [vmem:[%s250] sm:$0xf]
      %v284 = vld [vmem:[%s250 + $0x4] sm:$0xf]
      %v285 = vld [vmem:[%s250 + $0x8] sm:$0xf]
      %v286 = vld [vmem:[%s250 + $0xc] sm:$0x3]
      %v303 = vunpack.c.l.b16 %v267
      %v304 = vunpack.c.l.b16 %v268
      %v305 = vunpack.c.l.b16 %v269
      %v306 = vunpack.c.l.b16 %v270
      %v307 = vunpack.c.l.b16 %v271
      %v308 = vunpack.c.l.b16 %v272
      %v309 = vunpack.c.l.b16 %v273
      %v310 = vunpack.c.l.b16 %v274
      %v311 = vunpack.c.l.b16 %v275
      %v312 = vunpack.c.l.b16 %v276
      %v313 = vunpack.c.l.b16 %v277
      %v314 = vunpack.c.l.b16 %v278
      %v315 = vunpack.c.l.b16 %v279
      %v316 = vunpack.c.l.b16 %v280
      %v317 = vunpack.c.l.b16 %v281
      %v318 = vunpack.c.l.b16 %v282
      %v319 = vpack.c.b16 %v304, %v303
      %v320 = vpack.c.b16 %v306, %v305
      %v321 = vpack.c.b16 %v308, %v307
      %v322 = vpack.c.b16 %v310, %v309
      %v323 = vpack.c.b16 %v312, %v311
      %v324 = vpack.c.b16 %v314, %v313
      %v325 = vpack.c.b16 %v316, %v315
      %v326 = vpack.c.b16 %v318, %v317
      %v331 = vunpack.c.l.b16 %v283
      %v332 = vunpack.c.l.b16 %v284
      %v333 = vunpack.c.l.b16 %v285
      %v334 = vunpack.c.l.b16 %v286
      %v335 = vpack.c.b16 %v332, %v331
      %v336 = vpack.c.b16 %v334, %v333
      %vm338 = vcmask 220160
      %v340 = vsel %vm338, %v319, 0
      %v343 = vsel %vm338, %v320, 0
      %v346 = vsel %vm338, %v321, 0
      %v349 = vsel %vm338, %v322, 0
      %v352 = vsel %vm338, %v323, 0
      %v355 = vsel %vm338, %v324, 0
      %v358 = vsel %vm338, %v325, 0
      %v361 = vsel %vm338, %v326, 0
      %vm363 = vcmask 1044480
      %vm364 = vcmask 1045504
      %v365 = vsel %vm363, 4294967295, 65535
      %v366 = vsel %vm364, %v365, 0
      %v368 = vand.u32 %v336, %v366
      %370 = vmatprep.subr.bf16.mxu0 0
      %371 = vmatpush1.bf16.msra.mxu0 %v335
      %372 = vmatprep.subr.bf16.mxu0 0
      %373 = vmatpush1.bf16.msra.mxu0 %v368
      %374 = vmatprep.subr.bf16.mxu0 0
      %375 = vmatpush1.bf16.msra.mxu0 0
      %376 = vmatprep.subr.bf16.mxu0 0
      %377 = vmatpush1.bf16.msra.mxu0 0
      %378 = vmatprep.subr.bf16.mxu0 0
      %379 = vmatpush1.bf16.msra.mxu0 0
      %380 = vmatprep.subr.bf16.mxu0 0
      %381 = vmatpush1.bf16.msra.mxu0 0
      %382 = vmatprep.subr.bf16.mxu0 0
      %383 = vmatpush1.bf16.msra.mxu0 0
      %384 = vmatprep.subr.bf16.mxu0 0
      %385 = vmatpush1.bf16.msra.mxu0 0
      %386 = vmatprep.subr.bf16.mxu0 0
      %387 = vmatpush1.bf16.msra.mxu0 0
      %388 = vmatprep.subr.bf16.mxu0 0
      %389 = vmatpush1.bf16.msra.mxu0 0
      %390 = vmatprep.subr.bf16.mxu0 0
      %391 = vmatpush1.bf16.msra.mxu0 0
      %392 = vmatprep.subr.bf16.mxu0 0
      %393 = vmatpush1.bf16.msra.mxu0 0
      %394 = vmatprep.subr.bf16.mxu0 0
      %395 = vmatpush1.bf16.msra.mxu0 0
      %396 = vmatprep.subr.bf16.mxu0 0
      %397 = vmatpush1.bf16.msra.mxu0 0
      %398 = vmatprep.subr.bf16.mxu0 0
      %399 = vmatpush1.bf16.msra.mxu0 0
      %400 = vmatprep.subr.bf16.mxu0 0
      %401 = vmatpush1.bf16.msra.mxu0 0
      %402 = vmatprep.mubr.bf16.mxu0 0
      %403 = vmatmul.mubr.bf16.gmra.mrb[0].mxu0 %v340
      %v404 = vpop.f32.mrb[0].mxu0
      %v405 = vadd.f32 0.0, %v404
      %v406 = vpop.f32.mrb[0].mxu0
      %v407 = vpop.f32.mrb[0].mxu0
      %v408 = vadd.f32 0.0, %v407
      %v409 = vpop.f32.mrb[0].mxu0
      %410 = vmatprep.mubr.bf16.mxu0 0
      %411 = vmatmul.mubr.bf16.gmra.mrb[0].mxu0 %v343
      %v412 = vpop.f32.mrb[0].mxu0
      %v413 = vadd.f32 0.0, %v412
      %v414 = vpop.f32.mrb[0].mxu0
      %v415 = vpop.f32.mrb[0].mxu0
      %v416 = vadd.f32 0.0, %v415
      %v417 = vpop.f32.mrb[0].mxu0
      %418 = vmatprep.mubr.bf16.mxu0 0
      %419 = vmatmul.mubr.bf16.gmra.mrb[0].mxu0 %v346
      %v420 = vpop.f32.mrb[0].mxu0
      %v421 = vadd.f32 0.0, %v420
      %v422 = vpop.f32.mrb[0].mxu0
      %v423 = vpop.f32.mrb[0].mxu0
      %v424 = vadd.f32 0.0, %v423
      %v425 = vpop.f32.mrb[0].mxu0
      %426 = vmatprep.mubr.bf16.mxu0 0
      %427 = vmatmul.mubr.bf16.gmra.mrb[0].mxu0 %v349
      %v428 = vpop.f32.mrb[0].mxu0
      %v429 = vadd.f32 0.0, %v428
      %v430 = vpop.f32.mrb[0].mxu0
      %v431 = vpop.f32.mrb[0].mxu0
      %v432 = vadd.f32 0.0, %v431
      %v433 = vpop.f32.mrb[0].mxu0
      %434 = vmatprep.mubr.bf16.mxu0 0
      %435 = vmatmul.mubr.bf16.gmra.mrb[0].mxu0 %v352
      %v436 = vpop.f32.mrb[0].mxu0
      %v437 = vadd.f32 0.0, %v436
      %v438 = vpop.f32.mrb[0].mxu0
      %v439 = vpop.f32.mrb[0].mxu0
      %v440 = vadd.f32 0.0, %v439
      %v441 = vpop.f32.mrb[0].mxu0
      %442 = vmatprep.mubr.bf16.mxu0 0
      %443 = vmatmul.mubr.bf16.gmra.mrb[0].mxu0 %v355
      %v444 = vpop.f32.mrb[0].mxu0
      %v445 = vadd.f32 0.0, %v444
      %v446 = vpop.f32.mrb[0].mxu0
      %v447 = vpop.f32.mrb[0].mxu0
      %v448 = vadd.f32 0.0, %v447
      %v449 = vpop.f32.mrb[0].mxu0
      %450 = vmatprep.mubr.bf16.mxu0 0
      %451 = vmatmul.mubr.bf16.gmra.mrb[0].mxu0 %v358
      %v452 = vpop.f32.mrb[0].mxu0
      %v453 = vadd.f32 0.0, %v452
      %v454 = vpop.f32.mrb[0].mxu0
      %v455 = vpop.f32.mrb[0].mxu0
      %v456 = vadd.f32 0.0, %v455
      %v457 = vpop.f32.mrb[0].mxu0
      %458 = vmatprep.mubr.bf16.mxu0 0
      %459 = vmatmul.mubr.bf16.gmra.mrb[0].mxu0 %v361
      %v460 = vpop.f32.mrb[0].mxu0
      %v461 = vadd.f32 0.0, %v460
      %v462 = vpop.f32.mrb[0].mxu0
      %v463 = vpop.f32.mrb[0].mxu0
      %v464 = vadd.f32 0.0, %v463
      %v465 = vpop.f32.mrb[0].mxu0
      %466 = vdwg.mxu0
      %v467 = vld [vmem:[%s253] sm:$0x1]
      %v469 = vlaneseq
      %v470 = vshrl.u32 %v469, 7
      %v471 = vsub.s32 0, %v470
      %v472 = vrot.slane %v467, %v471
      %v474 = vmul.f32 %v405, %v472
      %v475 = vmul.f32 %v408, %v472
      %v476 = vmul.f32 %v413, %v472
      %v477 = vmul.f32 %v416, %v472
      %v478 = vmul.f32 %v421, %v472
      %v479 = vmul.f32 %v424, %v472
      %v480 = vmul.f32 %v429, %v472
      %v481 = vmul.f32 %v432, %v472
      %v482 = vmul.f32 %v437, %v472
      %v483 = vmul.f32 %v440, %v472
      %v484 = vmul.f32 %v445, %v472
      %v485 = vmul.f32 %v448, %v472
      %v486 = vmul.f32 %v453, %v472
      %v487 = vmul.f32 %v456, %v472
      %v488 = vmul.f32 %v461, %v472
      %v489 = vmul.f32 %v464, %v472
      %v490 = vld [vmem:[%s256] sm:$0x1]
      %v492 = vlaneseq
      %v493 = vshrl.u32 %v492, 7
      %v494 = vsub.s32 0, %v493
      %v495 = vrot.slane %v490, %v494
      %v497 = vadd.f32 %v474, %v495
      %v498 = vadd.f32 %v475, %v495
      %v499 = vadd.f32 %v476, %v495
      %v500 = vadd.f32 %v477, %v495
      %v501 = vadd.f32 %v478, %v495
      %v502 = vadd.f32 %v479, %v495
      %v503 = vadd.f32 %v480, %v495
      %v504 = vadd.f32 %v481, %v495
      %v505 = vadd.f32 %v482, %v495
      %v506 = vadd.f32 %v483, %v495
      %v507 = vadd.f32 %v484, %v495
      %v508 = vadd.f32 %v485, %v495
      %v509 = vadd.f32 %v486, %v495
      %v510 = vadd.f32 %v487, %v495
      %v511 = vadd.f32 %v488, %v495
      %v512 = vadd.f32 %v489, %v495
      %v513 = vmax.f32 %v497, 0.0
      %v514 = vmax.f32 %v498, 0.0
      %v515 = vmax.f32 %v499, 0.0
      %v516 = vmax.f32 %v500, 0.0
      %v517 = vmax.f32 %v501, 0.0
      %v518 = vmax.f32 %v502, 0.0
      %v519 = vmax.f32 %v503, 0.0
      %v520 = vmax.f32 %v504, 0.0
      %v521 = vmax.f32 %v505, 0.0
      %v522 = vmax.f32 %v506, 0.0
      %v523 = vmax.f32 %v507, 0.0
      %v524 = vmax.f32 %v508, 0.0
      %v525 = vmax.f32 %v509, 0.0
      %v526 = vmax.f32 %v510, 0.0
      %v527 = vmax.f32 %v511, 0.0
      %v528 = vmax.f32 %v512, 0.0
      %v529 = vpack.c.bf16 %v514, %v513
      %v530 = vpack.c.bf16 %v516, %v515
      %v531 = vpack.c.bf16 %v518, %v517
      %v532 = vpack.c.bf16 %v520, %v519
      %v533 = vpack.c.bf16 %v522, %v521
      %v534 = vpack.c.bf16 %v524, %v523
      %v535 = vpack.c.bf16 %v526, %v525
      %v536 = vpack.c.bf16 %v528, %v527
      %v545 = vunpack.c.l.b16 %v529
      %v546 = vunpack.c.h.b16 %v529
      %v547 = vunpack.c.l.b16 %v530
      %v548 = vunpack.c.h.b16 %v530
      %v549 = vunpack.c.l.b16 %v531
      %v550 = vunpack.c.h.b16 %v531
      %v551 = vunpack.c.l.b16 %v532
      %v552 = vunpack.c.h.b16 %v532
      %v553 = vunpack.c.l.b16 %v533
      %v554 = vunpack.c.h.b16 %v533
      %v555 = vunpack.c.l.b16 %v534
      %v556 = vunpack.c.h.b16 %v534
      %v557 = vunpack.c.l.b16 %v535
      %v558 = vunpack.c.h.b16 %v535
      %v559 = vunpack.c.l.b16 %v536
      %v560 = vunpack.c.h.b16 %v536
      %v561 = vpack.c.b16 %v545, %v545
      %v562 = vpack.c.b16 %v546, %v546
      %v563 = vpack.c.b16 %v547, %v547
      %v564 = vpack.c.b16 %v548, %v548
      %v565 = vpack.c.b16 %v549, %v549
      %v566 = vpack.c.b16 %v550, %v550
      %v567 = vpack.c.b16 %v551, %v551
      %v568 = vpack.c.b16 %v552, %v552
      %v569 = vpack.c.b16 %v553, %v553
      %v570 = vpack.c.b16 %v554, %v554
      %v571 = vpack.c.b16 %v555, %v555
      %v572 = vpack.c.b16 %v556, %v556
      %v573 = vpack.c.b16 %v557, %v557
      %v574 = vpack.c.b16 %v558, %v558
      %v575 = vpack.c.b16 %v559, %v559
      %v576 = vpack.c.b16 %v560, %v560
      %vm593 = vcmask 60416
      %594 = vst.msk [vmem:[%s264] sm:$0xf] %vm593, %v561
      %595 = vst.msk [vmem:[%s264 + $0x4] sm:$0xf] %vm593, %v562
      %596 = vst.msk [vmem:[%s264 + $0x8] sm:$0xf] %vm593, %v563
      %597 = vst.msk [vmem:[%s264 + $0xc] sm:$0xf] %vm593, %v564
      %598 = vst.msk [vmem:[%s264 + $0x10] sm:$0xf] %vm593, %v565
      %599 = vst.msk [vmem:[%s264 + $0x14] sm:$0xf] %vm593, %v566
      %600 = vst.msk [vmem:[%s264 + $0x18] sm:$0xf] %vm593, %v567
      %601 = vst.msk [vmem:[%s264 + $0x1c] sm:$0xf] %vm593, %v568
      %602 = vst.msk [vmem:[%s264 + $0x20] sm:$0xf] %vm593, %v569
      %603 = vst.msk [vmem:[%s264 + $0x24] sm:$0xf] %vm593, %v570
      %604 = vst.msk [vmem:[%s264 + $0x28] sm:$0xf] %vm593, %v571
      %605 = vst.msk [vmem:[%s264 + $0x2c] sm:$0xf] %vm593, %v572
      %606 = vst.msk [vmem:[%s264 + $0x30] sm:$0xf] %vm593, %v573
      %607 = vst.msk [vmem:[%s264 + $0x34] sm:$0xf] %vm593, %v574
      %608 = vst.msk [vmem:[%s264 + $0x38] sm:$0xf] %vm593, %v575
      %609 = vst.msk [vmem:[%s264 + $0x3c] sm:$0xf] %vm593, %v576
      %s610 = smul.u32 16, %s19
      %p611 = scmp.lt.s32.totalorder %s610, 63
      %s612 = scalar_select %p611, %s610, 63
      %p613 = scmp.lt.s32.totalorder %s20, 0
      %s614 = scalar_select %p613, %s20, 0
      %s615 = sadd.s32 %s614, %s612
      %s616 = smul.addr %s615, 4
      %s617 = scalar_lea.vmem %s4, %s616
      // Predicated region
      $region37: #{unet_forward.23} parent=35 // pred_check
        %p618 = pneg %p151
      $region38: #{unet_forward.23} parent=35 // pred_check_branch
        %620 = sbr.rel (%p618) target = $region40
      $region39: #{unet_forward.23} parent=35 // pred_region
        %s621 = smul.u32 16, %s19
      $region40: #{unet_forward.23} parent=35 // pred_fallthru
        _
    $region36: #{unet_forward.23} parent=5 // pred_fallthru
      _
    %p622 = scmp.le.s32.totalorder 2, %s10
    // Predicated region
    $region41: #{unet_forward.23} parent=5 // pred_check
      %p623 = pneg %p622
    $region42: #{unet_forward.23} parent=5 // pred_check_branch
      %625 = sbr.rel (%p623) target = $region44
    $region43: #{unet_forward.23} parent=5 // pred_region
      %s626 = ssub.s32 %s10, 2
      // Predicated region
      $region45: #{unet_forward.23} parent=43 // pred_check
        %p627 = pneg %p157
      $region46: #{unet_forward.23} parent=43 // pred_check_branch
        %629 = sbr.rel (%p627) target = $region48
      $region47: #{unet_forward.23} parent=43 // pred_region
        %s630 = smul.u32 16, %s21
        %p631 = scmp.lt.s32.totalorder %s630, 63
        %s632 = scalar_select %p631, %s630, 63
        %p633 = scmp.lt.s32.totalorder %s22, 0
        %s634 = scalar_select %p633, %s22, 0
        %s635 = sadd.s32 %s634, %s632
        %s636 = smul.addr %s635, 4
        %s637 = scalar_lea.vmem %s4, %s636
      $region48: #{unet_forward.23} parent=43 // pred_fallthru
        _
    $region44: #{unet_forward.23} parent=5 // pred_fallthru
      _
  $region6: #{unet_forward.23} parent=0 // loop_footer
    %s14 = sadd.s32 1, %s10
  $region7: #{unet_forward.23} parent=0 // loop_footer_branch
    %9 = sbr.rel target = $region3
  $region8: #{unet_forward.23} parent=0 // loop_exit
    _

// kernel: unet_forward.24
$region0: #{unet_forward.24}
  #allocation0 [shape = 'u32[]', space=smem, size = 0x4, offset = 0x4, fixed_abs, tag = 'smem constant byte address 0x4 - core index']
  #allocation1 [shape = 'u32[144,128]{1,0:T(1,128)}', space=vmem, size = 0x12000, scoped, tag = 'internal scratch']
  %s0 = inlined_call_operand.vmem [shape: bf16[512,72], index: 0, kind: input, shape index: {}]
  %s1 = inlined_call_operand.vmem [shape: bf16[72,8], index: 1, kind: input, shape index: {}]
  %s2 = inlined_call_operand.vmem [shape: f32[1,8], index: 2, kind: input, shape index: {}]
  %s3 = inlined_call_operand.vmem [shape: f32[1,8], index: 3, kind: input, shape index: {}]
  %s4 = inlined_call_operand.vmem [shape: bf16[512,8], index: 4, kind: output, shape index: {}]
  %s5 = sld [smem:[#allocation0]]
  $region49: #{unet_forward.24} parent=0
    _
  %s7 = ssub.s32 1, %s5
  %s8 = scalar_select 0, %s7, %s5
  loop: start=0, step=1, limit=6
  $region2: #{unet_forward.24} parent=0 // loop_pre_header
    _
  $region3: #{unet_forward.24} parent=0 // loop_header
    %s10 = sphi 0, %s14
    %p11 = scmp.ge.s32.totalorder %s10, 6
    %s17 = sphi 0, %s29
    %s18 = sphi 0, %s25
    %s19 = sphi 0, %s17
    %s20 = sphi 0, %s18
    %s21 = sphi 0, %s19
    %s22 = sphi 0, %s20
    %s32 = sphi 0, %s34
    %s35 = sphi 0, %s32
    %s36 = sphi 0, %s35
    %s52 = sphi 0, %s36
    %s58 = sphi 0, %s60
    %s61 = sphi 0, %s58
    %s62 = sphi 0, %s61
    %s78 = sphi 0, %s62
    %s84 = sphi 0, %s86
    %s87 = sphi 0, %s84
    %s88 = sphi 0, %s87
    %s104 = sphi 0, %s88
    %s110 = sphi 0, %s112
    %s113 = sphi 0, %s110
    %s114 = sphi 0, %s113
    %s130 = sphi 0, %s114
    %s138 = sphi 0, %s140
    %s141 = sphi 0, %s138
    %s142 = sphi 0, %s141
    %s158 = sphi 0, %s142
  $region4: #{unet_forward.24} parent=0 // loop_header_branch
    %13 = sbr.rel (%p11) target = $region8
  $region5: #{unet_forward.24} parent=0 // loop_body
    %s15 = ssub.s32 %s10, 1
    %s16 = ssub.s32 %s10, 2
    %s23 = sadd.s32 1, %s18
    %p24 = scmp.ge.s32.totalorder %s23, 1
    %s25 = scalar_select %p24, 0, %s23
    %s26 = sadd.s32 1, %s17
    %s27 = scalar_select %p24, %s26, %s17
    %p28 = scmp.ge.s32.totalorder %s27, 4
    %s29 = scalar_select %p28, 0, %s27
    %s30 = ssub.s32 %s17, %s29
    %p31 = scmp.eq.s32.totalorder %s30, 0
    %s33 = sadd.s32 %s32, 1
    %s34 = scalar_select %p31, %s32, %s33
    %p37 = pneg %p31
    %p38 = scmp.eq.s32.totalorder %s10, 3
    %p39 = por %p37, %p38
    %p40 = scmp.ne.s32.totalorder %s32, %s35
    %p41 = scmp.eq.s32.totalorder %s10, 0
    %p42 = por %p40, %p41
    %p43 = scmp.ne.s32.totalorder %s32, %s35
    %p44 = scmp.eq.s32.totalorder %s15, 3
    %p45 = por %p43, %p44
    %p46 = scmp.ne.s32.totalorder %s35, %s36
    %p47 = scmp.eq.s32.totalorder %s15, 0
    %p48 = por %p46, %p47
    %p49 = scmp.ne.s32.totalorder %s35, %s36
    %p50 = scmp.eq.s32.totalorder %s16, 3
    %p51 = por %p49, %p50
    %p53 = scmp.ne.s32.totalorder %s36, %s52
    %p54 = scmp.eq.s32.totalorder %s16, 0
    %p55 = por %p53, %p54
    %s56 = ssub.s32 %s18, %s25
    %p57 = scmp.eq.s32.totalorder %s56, 0
    %s59 = sadd.s32 %s58, 1
    %s60 = scalar_select %p57, %s58, %s59
    %p63 = pneg %p57
    %p64 = scmp.eq.s32.totalorder %s10, 3
    %p65 = por %p63, %p64
    %p66 = scmp.ne.s32.totalorder %s58, %s61
    %p67 = scmp.eq.s32.totalorder %s10, 0
    %p68 = por %p66, %p67
    %p69 = scmp.ne.s32.totalorder %s58, %s61
    %p70 = scmp.eq.s32.totalorder %s15, 3
    %p71 = por %p69, %p70
    %p72 = scmp.ne.s32.totalorder %s61, %s62
    %p73 = scmp.eq.s32.totalorder %s15, 0
    %p74 = por %p72, %p73
    %p75 = scmp.ne.s32.totalorder %s61, %s62
    %p76 = scmp.eq.s32.totalorder %s16, 3
    %p77 = por %p75, %p76
    %p79 = scmp.ne.s32.totalorder %s62, %s78
    %p80 = scmp.eq.s32.totalorder %s16, 0
    %p81 = por %p79, %p80
    %s82 = ssub.s32 %s18, %s25
    %p83 = scmp.eq.s32.totalorder %s82, 0
    %s85 = sadd.s32 %s84, 1
    %s86 = scalar_select %p83, %s84, %s85
    %p89 = pneg %p83
    %p90 = scmp.eq.s32.totalorder %s10, 3
    %p91 = por %p89, %p90
    %p92 = scmp.ne.s32.totalorder %s84, %s87
    %p93 = scmp.eq.s32.totalorder %s10, 0
    %p94 = por %p92, %p93
    %p95 = scmp.ne.s32.totalorder %s84, %s87
    %p96 = scmp.eq.s32.totalorder %s15, 3
    %p97 = por %p95, %p96
    %p98 = scmp.ne.s32.totalorder %s87, %s88
    %p99 = scmp.eq.s32.totalorder %s15, 0
    %p100 = por %p98, %p99
    %p101 = scmp.ne.s32.totalorder %s87, %s88
    %p102 = scmp.eq.s32.totalorder %s16, 3
    %p103 = por %p101, %p102
    %p105 = scmp.ne.s32.totalorder %s88, %s104
    %p106 = scmp.eq.s32.totalorder %s16, 0
    %p107 = por %p105, %p106
    %s108 = ssub.s32 %s18, %s25
    %p109 = scmp.eq.s32.totalorder %s108, 0
    %s111 = sadd.s32 %s110, 1
    %s112 = scalar_select %p109, %s110, %s111
    %p115 = pneg %p109
    %p116 = scmp.eq.s32.totalorder %s10, 3
    %p117 = por %p115, %p116
    %p118 = scmp.ne.s32.totalorder %s110, %s113
    %p119 = scmp.eq.s32.totalorder %s10, 0
    %p120 = por %p118, %p119
    %p121 = scmp.ne.s32.totalorder %s110, %s113
    %p122 = scmp.eq.s32.totalorder %s15, 3
    %p123 = por %p121, %p122
    %p124 = scmp.ne.s32.totalorder %s113, %s114
    %p125 = scmp.eq.s32.totalorder %s15, 0
    %p126 = por %p124, %p125
    %p127 = scmp.ne.s32.totalorder %s113, %s114
    %p128 = scmp.eq.s32.totalorder %s16, 3
    %p129 = por %p127, %p128
    %p131 = scmp.ne.s32.totalorder %s114, %s130
    %p132 = scmp.eq.s32.totalorder %s16, 0
    %p133 = por %p131, %p132
    %s134 = ssub.s32 %s17, %s29
    %s135 = ssub.s32 %s18, %s25
    %s136 = sor.u32 %s134, %s135
    %p137 = scmp.eq.s32.totalorder %s136, 0
    %s139 = sadd.s32 %s138, 1
    %s140 = scalar_select %p137, %s138, %s139
    %p143 = pneg %p137
    %p144 = scmp.eq.s32.totalorder %s10, 3
    %p145 = por %p143, %p144
    %p146 = scmp.ne.s32.totalorder %s138, %s141
    %p147 = scmp.eq.s32.totalorder %s10, 0
    %p148 = por %p146, %p147
    %p149 = scmp.ne.s32.totalorder %s138, %s141
    %p150 = scmp.eq.s32.totalorder %s15, 3
    %p151 = por %p149, %p150
    %p152 = scmp.ne.s32.totalorder %s141, %s142
    %p153 = scmp.eq.s32.totalorder %s15, 0
    %p154 = por %p152, %p153
    %p155 = scmp.ne.s32.totalorder %s141, %s142
    %p156 = scmp.eq.s32.totalorder %s16, 3
    %p157 = por %p155, %p156
    %p159 = scmp.ne.s32.totalorder %s142, %s158
    %p160 = scmp.eq.s32.totalorder %s16, 0
    %p161 = por %p159, %p160
    %p162 = scmp.le.s32.totalorder 1, %s10
    %p163 = scmp.lt.s32.totalorder %s10, 5
    %p164 = pnand %p162, %p163
    %p165 = pneg %p164
    // Predicated region
    $region9: #{unet_forward.24} parent=5 // pred_check
      _
    $region10: #{unet_forward.24} parent=5 // pred_check_branch
      %167 = sbr.rel (%p164) target = $region12
    $region11: #{unet_forward.24} parent=5 // pred_region
      %s168 = ssub.s32 %s10, 1
      // Predicated region
      $region13: #{unet_forward.24} parent=11 // pred_check
        %p169 = pneg %p74
      $region14: #{unet_forward.24} parent=11 // pred_check_branch
        %171 = sbr.rel (%p169) target = $region16
      $region15: #{unet_forward.24} parent=11 // pred_region
        %p172 = scmp.lt.s32.totalorder %s20, 0
        %s173 = scalar_select %p172, %s20, 0
        %s174 = smul.addr %s173, 4
        %s175 = scalar_lea.vmem %s1, %s174
      $region16: #{unet_forward.24} parent=11 // pred_fallthru
        _
      // Predicated region
      $region17: #{unet_forward.24} parent=11 // pred_check
        %p176 = pneg %p100
      $region18: #{unet_forward.24} parent=11 // pred_check_branch
        %178 = sbr.rel (%p176) target = $region20
      $region19: #{unet_forward.24} parent=11 // pred_region
        %p179 = scmp.lt.s32.totalorder %s20, 0
        %s180 = scalar_select %p179, %s20, 0
        %s181 = scalar_lea.vmem %s2, %s180
      $region20: #{unet_forward.24} parent=11 // pred_fallthru
        _
      // Predicated region
      $region21: #{unet_forward.24} parent=11 // pred_check
        %p182 = pneg %p126
      $region22: #{unet_forward.24} parent=11 // pred_check_branch
        %184 = sbr.rel (%p182) target = $region24
      $region23: #{unet_forward.24} parent=11 // pred_region
        %p185 = scmp.lt.s32.totalorder %s20, 0
        %s186 = scalar_select %p185, %s20, 0
        %s187 = scalar_lea.vmem %s3, %s186
      $region24: #{unet_forward.24} parent=11 // pred_fallthru
        _
    $region12: #{unet_forward.24} parent=5 // pred_fallthru
      _
    %p188 = scmp.lt.s32.totalorder %s10, 4
    // Predicated region
    $region25: #{unet_forward.24} parent=5 // pred_check
      %p189 = pneg %p188
    $region26: #{unet_forward.24} parent=5 // pred_check_branch
      %191 = sbr.rel (%p189) target = $region28
    $region27: #{unet_forward.24} parent=5 // pred_region
      // Predicated region
      $region29: #{unet_forward.24} parent=27 // pred_check
        %p192 = pneg %p42
      $region30: #{unet_forward.24} parent=27 // pred_check_branch
        %194 = sbr.rel (%p192) target = $region32
      $region31: #{unet_forward.24} parent=27 // pred_region
        %s195 = smul.u32 16, %s17
        %p196 = scmp.lt.s32.totalorder %s195, 63
        %s197 = scalar_select %p196, %s195, 63
        %s198 = smul.addr %s197, 4
        %s199 = scalar_lea.vmem %s0, %s198
        %s200 = smul.u32 16, %s17
      $region32: #{unet_forward.24} parent=27 // pred_fallthru
        _
    $region28: #{unet_forward.24} parent=5 // pred_fallthru
      _
    %p201 = scmp.le.s32.totalorder 1, %s10
    %p202 = scmp.lt.s32.totalorder %s10, 5
    %p203 = pnand %p201, %p202
    %p204 = pneg %p203
    // Predicated region
    $region33: #{unet_forward.24} parent=5 // pred_check
      _
    $region34: #{unet_forward.24} parent=5 // pred_check_branch
      %206 = sbr.rel (%p203) target = $region36
    $region35: #{unet_forward.24} parent=5 // pred_region
      %s207 = ssub.s32 %s10, 1
      %s208 = smul.u32 16, %s19
      %p209 = scmp.lt.s32.totalorder %s208, 63
      %s210 = scalar_select %p209, %s208, 63
      %s211 = smul.addr %s210, 4
      %s212 = scalar_lea.vmem %s0, %s211
      %p213 = pneg %p48
      %p214 = pneg %p45
      %p215 = scmp.lt.s32.totalorder %s20, 0
      %s216 = scalar_select %p215, %s20, 0
      %s217 = smul.addr %s216, 4
      %s218 = scalar_lea.vmem %s1, %s217
      %p219 = pneg %p74
      %p220 = pneg %p71
      %p221 = scmp.lt.s32.totalorder %s20, 0
      %s222 = scalar_select %p221, %s20, 0
      %s223 = scalar_lea.vmem %s2, %s222
      %p224 = pneg %p100
      %p225 = pneg %p97
      %p226 = scmp.lt.s32.totalorder %s20, 0
      %s227 = scalar_select %p226, %s20, 0
      %s228 = scalar_lea.vmem %s3, %s227
      %p229 = pneg %p126
      %p230 = pneg %p123
      %p231 = pneg %p154
      %p232 = pneg %p151
      %s233 = smul.u32 16, %s19
      %p234 = scmp.lt.s32.totalorder %s233, 63
      %s235 = scalar_select %p234, %s233, 63
      %p236 = scmp.lt.s32.totalorder %s20, 0
      %s237 = scalar_select %p236, %s20, 0
      %s238 = sadd.s32 %s237, %s235
      %s239 = smul.addr %s238, 4
      %s240 = scalar_lea.vmem %s4, %s239
      %s241 = smul.u32 16, %s19
      %p242 = scmp.lt.s32.totalorder %s241, 63
      %s243 = scalar_select %p242, %s241, 63
      %s244 = smul.addr %s243, 4
      %s245 = scalar_lea.vmem %s0, %s244
      %s246 = smul.u32 16, %s19
      %p247 = scmp.lt.s32.totalorder %s20, 0
      %s248 = scalar_select %p247, %s20, 0
      %s249 = smul.addr %s248, 4
      %s250 = scalar_lea.vmem %s1, %s249
      %p251 = scmp.lt.s32.totalorder %s20, 0
      %s252 = scalar_select %p251, %s20, 0
      %s253 = scalar_lea.vmem %s2, %s252
      %p254 = scmp.lt.s32.totalorder %s20, 0
      %s255 = scalar_select %p254, %s20, 0
      %s256 = scalar_lea.vmem %s3, %s255
      %s257 = smul.u32 16, %s19
      %p258 = scmp.lt.s32.totalorder %s257, 63
      %s259 = scalar_select %p258, %s257, 63
      %p260 = scmp.lt.s32.totalorder %s20, 0
      %s261 = scalar_select %p260, %s20, 0
      %s262 = sadd.s32 %s261, %s259
      %s263 = smul.addr %s262, 4
      %s264 = scalar_lea.vmem %s4, %s263
      %s265 = smul.u32 16, %s19
      %v267 = vld [vmem:[%s245] sm:$0xf]
      %v268 = vld [vmem:[%s245 + $0x4] sm:$0xf]
      %v269 = vld [vmem:[%s245 + $0x8] sm:$0xf]
      %v270 = vld [vmem:[%s245 + $0xc] sm:$0xf]
      %v271 = vld [vmem:[%s245 + $0x10] sm:$0xf]
      %v272 = vld [vmem:[%s245 + $0x14] sm:$0xf]
      %v273 = vld [vmem:[%s245 + $0x18] sm:$0xf]
      %v274 = vld [vmem:[%s245 + $0x1c] sm:$0xf]
      %v275 = vld [vmem:[%s245 + $0x20] sm:$0xf]
      %v276 = vld [vmem:[%s245 + $0x24] sm:$0xf]
      %v277 = vld [vmem:[%s245 + $0x28] sm:$0xf]
      %v278 = vld [vmem:[%s245 + $0x2c] sm:$0xf]
      %v279 = vld [vmem:[%s245 + $0x30] sm:$0xf]
      %v280 = vld [vmem:[%s245 + $0x34] sm:$0xf]
      %v281 = vld [vmem:[%s245 + $0x38] sm:$0xf]
      %v282 = vld [vmem:[%s245 + $0x3c] sm:$0xf]
      %v283 = vld [vmem:[%s250] sm:$0xf]
      %v284 = vld [vmem:[%s250 + $0x4] sm:$0xf]
      %v285 = vld [vmem:[%s250 + $0x8] sm:$0xf]
      %v286 = vld [vmem:[%s250 + $0xc] sm:$0xf]
      %v287 = vld [vmem:[%s250 + $0x10] sm:$0xf]
      %v288 = vld [vmem:[%s250 + $0x14] sm:$0xf]
      %v289 = vld [vmem:[%s250 + $0x18] sm:$0xf]
      %v290 = vld [vmem:[%s250 + $0x1c] sm:$0xf]
      %v291 = vld [vmem:[%s250 + $0x20] sm:$0xf]
      %v308 = vunpack.c.l.b16 %v267
      %v309 = vunpack.c.l.b16 %v268
      %v310 = vunpack.c.l.b16 %v269
      %v311 = vunpack.c.l.b16 %v270
      %v312 = vunpack.c.l.b16 %v271
      %v313 = vunpack.c.l.b16 %v272
      %v314 = vunpack.c.l.b16 %v273
      %v315 = vunpack.c.l.b16 %v274
      %v316 = vunpack.c.l.b16 %v275
      %v317 = vunpack.c.l.b16 %v276
      %v318 = vunpack.c.l.b16 %v277
      %v319 = vunpack.c.l.b16 %v278
      %v320 = vunpack.c.l.b16 %v279
      %v321 = vunpack.c.l.b16 %v280
      %v322 = vunpack.c.l.b16 %v281
      %v323 = vunpack.c.l.b16 %v282
      %v324 = vpack.c.b16 %v309, %v308
      %v325 = vpack.c.b16 %v311, %v310
      %v326 = vpack.c.b16 %v313, %v312
      %v327 = vpack.c.b16 %v315, %v314
      %v328 = vpack.c.b16 %v317, %v316
      %v329 = vpack.c.b16 %v319, %v318
      %v330 = vpack.c.b16 %v321, %v320
      %v331 = vpack.c.b16 %v323, %v322
      %v341 = vunpack.c.l.b16 %v283
      %v342 = vunpack.c.l.b16 %v284
      %v343 = vunpack.c.l.b16 %v285
      %v344 = vunpack.c.l.b16 %v286
      %v345 = vunpack.c.l.b16 %v287
      %v346 = vunpack.c.l.b16 %v288
      %v347 = vunpack.c.l.b16 %v289
      %v348 = vunpack.c.l.b16 %v290
      %v349 = vunpack.c.l.b16 %v291
      %v350 = vpack.c.b16 %v342, %v341
      %v351 = vpack.c.b16 %v344, %v343
      %v352 = vpack.c.b16 %v346, %v345
      %v353 = vpack.c.b16 %v348, %v347
      %v354 = vpack.c.b16 %v349, %v349
      %vm359 = vcmask 588800
      %v361 = vsel %vm359, %v324, 0
      %v364 = vsel %vm359, %v325, 0
      %v367 = vsel %vm359, %v326, 0
      %v370 = vsel %vm359, %v327, 0
      %v373 = vsel %vm359, %v328, 0
      %v376 = vsel %vm359, %v329, 0
      %v379 = vsel %vm359, %v330, 0
      %v382 = vsel %vm359, %v331, 0
      %vm384 = vcmask 1043456
      %v386 = vsel %vm384, %v354, 0
      %388 = vmatprep.subr.bf16.mxu0 0
      %389 = vmatpush1.bf16.msra.mxu0 %v350
      %390 = vmatprep.subr.bf16.mxu0 0
      %391 = vmatpush1.bf16.msra.mxu0 %v351
      %392 = vmatprep.subr.bf16.mxu0 0
      %393 = vmatpush1.bf16.msra.mxu0 %v352
      %394 = vmatprep.subr.bf16.mxu0 0
      %395 = vmatpush1.bf16.msra.mxu0 %v353
      %396 = vmatprep.subr.bf16.mxu0 0
      %397 = vmatpush1.bf16.msra.mxu0 %v386
      %398 = vmatprep.subr.bf16.mxu0 0
      %399 = vmatpush1.bf16.msra.mxu0 0
      %400 = vmatprep.subr.bf16.mxu0 0
      %401 = vmatpush1.bf16.msra.mxu0 0
      %402 = vmatprep.subr.bf16.mxu0 0
      %403 = vmatpush1.bf16.msra.mxu0 0
      %404 = vmatprep.subr.bf16.mxu0 0
      %405 = vmatpush1.bf16.msra.mxu0 0
      %406 = vmatprep.subr.bf16.mxu0 0
      %407 = vmatpush1.bf16.msra.mxu0 0
      %408 = vmatprep.subr.bf16.mxu0 0
      %409 = vmatpush1.bf16.msra.mxu0 0
      %410 = vmatprep.subr.bf16.mxu0 0
      %411 = vmatpush1.bf16.msra.mxu0 0
      %412 = vmatprep.subr.bf16.mxu0 0
      %413 = vmatpush1.bf16.msra.mxu0 0
      %414 = vmatprep.subr.bf16.mxu0 0
      %415 = vmatpush1.bf16.msra.mxu0 0
      %416 = vmatprep.subr.bf16.mxu0 0
      %417 = vmatpush1.bf16.msra.mxu0 0
      %418 = vmatprep.subr.bf16.mxu0 0
      %419 = vmatpush1.bf16.msra.mxu0 0
      %420 = vmatprep.mubr.bf16.mxu0 0
      %421 = vmatmul.mubr.bf16.gmra.mrb[0].mxu0 %v361
      %v422 = vpop.f32.mrb[0].mxu0
      %v423 = vadd.f32 0.0, %v422
      %v424 = vpop.f32.mrb[0].mxu0
      %v425 = vpop.f32.mrb[0].mxu0
      %v426 = vadd.f32 0.0, %v425
      %v427 = vpop.f32.mrb[0].mxu0
      %428 = vmatprep.mubr.bf16.mxu0 0
      %429 = vmatmul.mubr.bf16.gmra.mrb[0].mxu0 %v364
      %v430 = vpop.f32.mrb[0].mxu0
      %v431 = vadd.f32 0.0, %v430
      %v432 = vpop.f32.mrb[0].mxu0
      %v433 = vpop.f32.mrb[0].mxu0
      %v434 = vadd.f32 0.0, %v433
      %v435 = vpop.f32.mrb[0].mxu0
      %436 = vmatprep.mubr.bf16.mxu0 0
      %437 = vmatmul.mubr.bf16.gmra.mrb[0].mxu0 %v367
      %v438 = vpop.f32.mrb[0].mxu0
      %v439 = vadd.f32 0.0, %v438
      %v440 = vpop.f32.mrb[0].mxu0
      %v441 = vpop.f32.mrb[0].mxu0
      %v442 = vadd.f32 0.0, %v441
      %v443 = vpop.f32.mrb[0].mxu0
      %444 = vmatprep.mubr.bf16.mxu0 0
      %445 = vmatmul.mubr.bf16.gmra.mrb[0].mxu0 %v370
      %v446 = vpop.f32.mrb[0].mxu0
      %v447 = vadd.f32 0.0, %v446
      %v448 = vpop.f32.mrb[0].mxu0
      %v449 = vpop.f32.mrb[0].mxu0
      %v450 = vadd.f32 0.0, %v449
      %v451 = vpop.f32.mrb[0].mxu0
      %452 = vmatprep.mubr.bf16.mxu0 0
      %453 = vmatmul.mubr.bf16.gmra.mrb[0].mxu0 %v373
      %v454 = vpop.f32.mrb[0].mxu0
      %v455 = vadd.f32 0.0, %v454
      %v456 = vpop.f32.mrb[0].mxu0
      %v457 = vpop.f32.mrb[0].mxu0
      %v458 = vadd.f32 0.0, %v457
      %v459 = vpop.f32.mrb[0].mxu0
      %460 = vmatprep.mubr.bf16.mxu0 0
      %461 = vmatmul.mubr.bf16.gmra.mrb[0].mxu0 %v376
      %v462 = vpop.f32.mrb[0].mxu0
      %v463 = vadd.f32 0.0, %v462
      %v464 = vpop.f32.mrb[0].mxu0
      %v465 = vpop.f32.mrb[0].mxu0
      %v466 = vadd.f32 0.0, %v465
      %v467 = vpop.f32.mrb[0].mxu0
      %468 = vmatprep.mubr.bf16.mxu0 0
      %469 = vmatmul.mubr.bf16.gmra.mrb[0].mxu0 %v379
      %v470 = vpop.f32.mrb[0].mxu0
      %v471 = vadd.f32 0.0, %v470
      %v472 = vpop.f32.mrb[0].mxu0
      %v473 = vpop.f32.mrb[0].mxu0
      %v474 = vadd.f32 0.0, %v473
      %v475 = vpop.f32.mrb[0].mxu0
      %476 = vmatprep.mubr.bf16.mxu0 0
      %477 = vmatmul.mubr.bf16.gmra.mrb[0].mxu0 %v382
      %v478 = vpop.f32.mrb[0].mxu0
      %v479 = vadd.f32 0.0, %v478
      %v480 = vpop.f32.mrb[0].mxu0
      %v481 = vpop.f32.mrb[0].mxu0
      %v482 = vadd.f32 0.0, %v481
      %v483 = vpop.f32.mrb[0].mxu0
      %484 = vdwg.mxu0
      %v485 = vld [vmem:[%s253] sm:$0x1]
      %v487 = vlaneseq
      %v488 = vshrl.u32 %v487, 7
      %v489 = vsub.s32 0, %v488
      %v490 = vrot.slane %v485, %v489
      %v492 = vmul.f32 %v423, %v490
      %v493 = vmul.f32 %v426, %v490
      %v494 = vmul.f32 %v431, %v490
      %v495 = vmul.f32 %v434, %v490
      %v496 = vmul.f32 %v439, %v490
      %v497 = vmul.f32 %v442, %v490
      %v498 = vmul.f32 %v447, %v490
      %v499 = vmul.f32 %v450, %v490
      %v500 = vmul.f32 %v455, %v490
      %v501 = vmul.f32 %v458, %v490
      %v502 = vmul.f32 %v463, %v490
      %v503 = vmul.f32 %v466, %v490
      %v504 = vmul.f32 %v471, %v490
      %v505 = vmul.f32 %v474, %v490
      %v506 = vmul.f32 %v479, %v490
      %v507 = vmul.f32 %v482, %v490
      %v508 = vld [vmem:[%s256] sm:$0x1]
      %v510 = vlaneseq
      %v511 = vshrl.u32 %v510, 7
      %v512 = vsub.s32 0, %v511
      %v513 = vrot.slane %v508, %v512
      %v515 = vadd.f32 %v492, %v513
      %v516 = vadd.f32 %v493, %v513
      %v517 = vadd.f32 %v494, %v513
      %v518 = vadd.f32 %v495, %v513
      %v519 = vadd.f32 %v496, %v513
      %v520 = vadd.f32 %v497, %v513
      %v521 = vadd.f32 %v498, %v513
      %v522 = vadd.f32 %v499, %v513
      %v523 = vadd.f32 %v500, %v513
      %v524 = vadd.f32 %v501, %v513
      %v525 = vadd.f32 %v502, %v513
      %v526 = vadd.f32 %v503, %v513
      %v527 = vadd.f32 %v504, %v513
      %v528 = vadd.f32 %v505, %v513
      %v529 = vadd.f32 %v506, %v513
      %v530 = vadd.f32 %v507, %v513
      %v531 = vmax.f32 %v515, 0.0
      %v532 = vmax.f32 %v516, 0.0
      %v533 = vmax.f32 %v517, 0.0
      %v534 = vmax.f32 %v518, 0.0
      %v535 = vmax.f32 %v519, 0.0
      %v536 = vmax.f32 %v520, 0.0
      %v537 = vmax.f32 %v521, 0.0
      %v538 = vmax.f32 %v522, 0.0
      %v539 = vmax.f32 %v523, 0.0
      %v540 = vmax.f32 %v524, 0.0
      %v541 = vmax.f32 %v525, 0.0
      %v542 = vmax.f32 %v526, 0.0
      %v543 = vmax.f32 %v527, 0.0
      %v544 = vmax.f32 %v528, 0.0
      %v545 = vmax.f32 %v529, 0.0
      %v546 = vmax.f32 %v530, 0.0
      %v547 = vpack.c.bf16 %v532, %v531
      %v548 = vpack.c.bf16 %v534, %v533
      %v549 = vpack.c.bf16 %v536, %v535
      %v550 = vpack.c.bf16 %v538, %v537
      %v551 = vpack.c.bf16 %v540, %v539
      %v552 = vpack.c.bf16 %v542, %v541
      %v553 = vpack.c.bf16 %v544, %v543
      %v554 = vpack.c.bf16 %v546, %v545
      %v563 = vunpack.c.l.b16 %v547
      %v564 = vunpack.c.h.b16 %v547
      %v565 = vunpack.c.l.b16 %v548
      %v566 = vunpack.c.h.b16 %v548
      %v567 = vunpack.c.l.b16 %v549
      %v568 = vunpack.c.h.b16 %v549
      %v569 = vunpack.c.l.b16 %v550
      %v570 = vunpack.c.h.b16 %v550
      %v571 = vunpack.c.l.b16 %v551
      %v572 = vunpack.c.h.b16 %v551
      %v573 = vunpack.c.l.b16 %v552
      %v574 = vunpack.c.h.b16 %v552
      %v575 = vunpack.c.l.b16 %v553
      %v576 = vunpack.c.h.b16 %v553
      %v577 = vunpack.c.l.b16 %v554
      %v578 = vunpack.c.h.b16 %v554
      %v579 = vpack.c.b16 %v563, %v563
      %v580 = vpack.c.b16 %v564, %v564
      %v581 = vpack.c.b16 %v565, %v565
      %v582 = vpack.c.b16 %v566, %v566
      %v583 = vpack.c.b16 %v567, %v567
      %v584 = vpack.c.b16 %v568, %v568
      %v585 = vpack.c.b16 %v569, %v569
      %v586 = vpack.c.b16 %v570, %v570
      %v587 = vpack.c.b16 %v571, %v571
      %v588 = vpack.c.b16 %v572, %v572
      %v589 = vpack.c.b16 %v573, %v573
      %v590 = vpack.c.b16 %v574, %v574
      %v591 = vpack.c.b16 %v575, %v575
      %v592 = vpack.c.b16 %v576, %v576
      %v593 = vpack.c.b16 %v577, %v577
      %v594 = vpack.c.b16 %v578, %v578
      %vm611 = vcmask 60416
      %612 = vst.msk [vmem:[%s264] sm:$0xf] %vm611, %v579
      %613 = vst.msk [vmem:[%s264 + $0x4] sm:$0xf] %vm611, %v580
      %614 = vst.msk [vmem:[%s264 + $0x8] sm:$0xf] %vm611, %v581
      %615 = vst.msk [vmem:[%s264 + $0xc] sm:$0xf] %vm611, %v582
      %616 = vst.msk [vmem:[%s264 + $0x10] sm:$0xf] %vm611, %v583
      %617 = vst.msk [vmem:[%s264 + $0x14] sm:$0xf] %vm611, %v584
      %618 = vst.msk [vmem:[%s264 + $0x18] sm:$0xf] %vm611, %v585
      %619 = vst.msk [vmem:[%s264 + $0x1c] sm:$0xf] %vm611, %v586
      %620 = vst.msk [vmem:[%s264 + $0x20] sm:$0xf] %vm611, %v587
      %621 = vst.msk [vmem:[%s264 + $0x24] sm:$0xf] %vm611, %v588
      %622 = vst.msk [vmem:[%s264 + $0x28] sm:$0xf] %vm611, %v589
      %623 = vst.msk [vmem:[%s264 + $0x2c] sm:$0xf] %vm611, %v590
      %624 = vst.msk [vmem:[%s264 + $0x30] sm:$0xf] %vm611, %v591
      %625 = vst.msk [vmem:[%s264 + $0x34] sm:$0xf] %vm611, %v592
      %626 = vst.msk [vmem:[%s264 + $0x38] sm:$0xf] %vm611, %v593
      %627 = vst.msk [vmem:[%s264 + $0x3c] sm:$0xf] %vm611, %v594
      %s628 = smul.u32 16, %s19
      %p629 = scmp.lt.s32.totalorder %s628, 63
      %s630 = scalar_select %p629, %s628, 63
      %p631 = scmp.lt.s32.totalorder %s20, 0
      %s632 = scalar_select %p631, %s20, 0
      %s633 = sadd.s32 %s632, %s630
      %s634 = smul.addr %s633, 4
      %s635 = scalar_lea.vmem %s4, %s634
      // Predicated region
      $region37: #{unet_forward.24} parent=35 // pred_check
        %p636 = pneg %p151
      $region38: #{unet_forward.24} parent=35 // pred_check_branch
        %638 = sbr.rel (%p636) target = $region40
      $region39: #{unet_forward.24} parent=35 // pred_region
        %s639 = smul.u32 16, %s19
      $region40: #{unet_forward.24} parent=35 // pred_fallthru
        _
    $region36: #{unet_forward.24} parent=5 // pred_fallthru
      _
    %p640 = scmp.le.s32.totalorder 2, %s10
    // Predicated region
    $region41: #{unet_forward.24} parent=5 // pred_check
      %p641 = pneg %p640
    $region42: #{unet_forward.24} parent=5 // pred_check_branch
      %643 = sbr.rel (%p641) target = $region44
    $region43: #{unet_forward.24} parent=5 // pred_region
      %s644 = ssub.s32 %s10, 2
      // Predicated region
      $region45: #{unet_forward.24} parent=43 // pred_check
        %p645 = pneg %p157
      $region46: #{unet_forward.24} parent=43 // pred_check_branch
        %647 = sbr.rel (%p645) target = $region48
      $region47: #{unet_forward.24} parent=43 // pred_region
        %s648 = smul.u32 16, %s21
        %p649 = scmp.lt.s32.totalorder %s648, 63
        %s650 = scalar_select %p649, %s648, 63
        %p651 = scmp.lt.s32.totalorder %s22, 0
        %s652 = scalar_select %p651, %s22, 0
        %s653 = sadd.s32 %s652, %s650
        %s654 = smul.addr %s653, 4
        %s655 = scalar_lea.vmem %s4, %s654
      $region48: #{unet_forward.24} parent=43 // pred_fallthru
        _
    $region44: #{unet_forward.24} parent=5 // pred_fallthru
      _
  $region6: #{unet_forward.24} parent=0 // loop_footer
    %s14 = sadd.s32 1, %s10
  $region7: #{unet_forward.24} parent=0 // loop_footer_branch
    %9 = sbr.rel target = $region3
  $region8: #{unet_forward.24} parent=0 // loop_exit
    _

// kernel: unet_forward.25
$region0: #{unet_forward.25}
  #allocation0 [shape = 'u32[]', space=smem, size = 0x4, offset = 0x4, fixed_abs, tag = 'smem constant byte address 0x4 - core index']
  #allocation1 [shape = 'u32[144,128]{1,0:T(1,128)}', space=vmem, size = 0x12000, scoped, tag = 'internal scratch']
  %s0 = inlined_call_operand.vmem [shape: bf16[128,72], index: 0, kind: input, shape index: {}]
  %s1 = inlined_call_operand.vmem [shape: bf16[72,16], index: 1, kind: input, shape index: {}]
  %s2 = inlined_call_operand.vmem [shape: f32[1,16], index: 2, kind: input, shape index: {}]
  %s3 = inlined_call_operand.vmem [shape: f32[1,16], index: 3, kind: input, shape index: {}]
  %s4 = inlined_call_operand.vmem [shape: bf16[128,16], index: 4, kind: output, shape index: {}]
  %s5 = sld [smem:[#allocation0]]
  $region26: #{unet_forward.25} parent=0
    _
  %s7 = ssub.s32 1, %s5
  %s8 = scalar_select 0, %s7, %s5
  // Predicated region
  $region2: #{unet_forward.25} parent=0 // pred_check
    _
  $region3: #{unet_forward.25} parent=0 // pred_check_branch
    %10 = sbr.rel (0) target = $region5
  $region4: #{unet_forward.25} parent=0 // pred_region
    _
  $region5: #{unet_forward.25} parent=0 // pred_fallthru
    _
  // Predicated region
  $region6: #{unet_forward.25} parent=0 // pred_check
    _
  $region7: #{unet_forward.25} parent=0 // pred_check_branch
    %12 = sbr.rel (0) target = $region9
  $region8: #{unet_forward.25} parent=0 // pred_region
    _
  $region9: #{unet_forward.25} parent=0 // pred_fallthru
    _
  // Predicated region
  $region10: #{unet_forward.25} parent=0 // pred_check
    _
  $region11: #{unet_forward.25} parent=0 // pred_check_branch
    %14 = sbr.rel (0) target = $region13
  $region12: #{unet_forward.25} parent=0 // pred_region
    _
  $region13: #{unet_forward.25} parent=0 // pred_fallthru
    _
  // Predicated region
  $region14: #{unet_forward.25} parent=0 // pred_check
    _
  $region15: #{unet_forward.25} parent=0 // pred_check_branch
    %16 = sbr.rel (0) target = $region17
  $region16: #{unet_forward.25} parent=0 // pred_region
    _
  $region17: #{unet_forward.25} parent=0 // pred_fallthru
    _
  %v18 = vld [vmem:[%s0] sm:$0xf]
  %v19 = vld [vmem:[%s0 + $0x4] sm:$0xf]
  %v20 = vld [vmem:[%s0 + $0x8] sm:$0xf]
  %v21 = vld [vmem:[%s0 + $0xc] sm:$0xf]
  %v22 = vld [vmem:[%s0 + $0x10] sm:$0xf]
  %v23 = vld [vmem:[%s0 + $0x14] sm:$0xf]
  %v24 = vld [vmem:[%s0 + $0x18] sm:$0xf]
  %v25 = vld [vmem:[%s0 + $0x1c] sm:$0xf]
  %v26 = vld [vmem:[%s0 + $0x20] sm:$0xf]
  %v27 = vld [vmem:[%s0 + $0x24] sm:$0xf]
  %v28 = vld [vmem:[%s0 + $0x28] sm:$0xf]
  %v29 = vld [vmem:[%s0 + $0x2c] sm:$0xf]
  %v30 = vld [vmem:[%s0 + $0x30] sm:$0xf]
  %v31 = vld [vmem:[%s0 + $0x34] sm:$0xf]
  %v32 = vld [vmem:[%s0 + $0x38] sm:$0xf]
  %v33 = vld [vmem:[%s0 + $0x3c] sm:$0xf]
  %v34 = vld [vmem:[%s1] sm:$0xf]
  %v35 = vld [vmem:[%s1 + $0x4] sm:$0xf]
  %v36 = vld [vmem:[%s1 + $0x8] sm:$0xf]
  %v37 = vld [vmem:[%s1 + $0xc] sm:$0xf]
  %v38 = vld [vmem:[%s1 + $0x10] sm:$0xf]
  %v39 = vld [vmem:[%s1 + $0x14] sm:$0xf]
  %v40 = vld [vmem:[%s1 + $0x18] sm:$0xf]
  %v41 = vld [vmem:[%s1 + $0x1c] sm:$0xf]
  %v42 = vld [vmem:[%s1 + $0x20] sm:$0xf]
  %v59 = vunpack.c.l.b16 %v18
  %v60 = vunpack.c.l.b16 %v19
  %v61 = vunpack.c.l.b16 %v20
  %v62 = vunpack.c.l.b16 %v21
  %v63 = vunpack.c.l.b16 %v22
  %v64 = vunpack.c.l.b16 %v23
  %v65 = vunpack.c.l.b16 %v24
  %v66 = vunpack.c.l.b16 %v25
  %v67 = vunpack.c.l.b16 %v26
  %v68 = vunpack.c.l.b16 %v27
  %v69 = vunpack.c.l.b16 %v28
  %v70 = vunpack.c.l.b16 %v29
  %v71 = vunpack.c.l.b16 %v30
  %v72 = vunpack.c.l.b16 %v31
  %v73 = vunpack.c.l.b16 %v32
  %v74 = vunpack.c.l.b16 %v33
  %v75 = vpack.c.b16 %v60, %v59
  %v76 = vpack.c.b16 %v62, %v61
  %v77 = vpack.c.b16 %v64, %v63
  %v78 = vpack.c.b16 %v66, %v65
  %v79 = vpack.c.b16 %v68, %v67
  %v80 = vpack.c.b16 %v70, %v69
  %v81 = vpack.c.b16 %v72, %v71
  %v82 = vpack.c.b16 %v74, %v73
  %v92 = vunpack.c.l.b16 %v34
  %v93 = vunpack.c.l.b16 %v35
  %v94 = vunpack.c.l.b16 %v36
  %v95 = vunpack.c.l.b16 %v37
  %v96 = vunpack.c.l.b16 %v38
  %v97 = vunpack.c.l.b16 %v39
  %v98 = vunpack.c.l.b16 %v40
  %v99 = vunpack.c.l.b16 %v41
  %v100 = vunpack.c.l.b16 %v42
  %v101 = vpack.c.b16 %v93, %v92
  %v102 = vpack.c.b16 %v95, %v94
  %v103 = vpack.c.b16 %v97, %v96
  %v104 = vpack.c.b16 %v99, %v98
  %v105 = vpack.c.b16 %v100, %v100
  %vm110 = vcmask 588800
  %v112 = vsel %vm110, %v75, 0
  %v115 = vsel %vm110, %v76, 0
  %v118 = vsel %vm110, %v77, 0
  %v121 = vsel %vm110, %v78, 0
  %v124 = vsel %vm110, %v79, 0
  %v127 = vsel %vm110, %v80, 0
  %v130 = vsel %vm110, %v81, 0
  %v133 = vsel %vm110, %v82, 0
  %vm135 = vcmask 1043456
  %v137 = vsel %vm135, %v105, 0
  %139 = vmatprep.subr.bf16.mxu0 0
  %140 = vmatpush1.bf16.msra.mxu0 %v101
  %141 = vmatprep.subr.bf16.mxu0 0
  %142 = vmatpush1.bf16.msra.mxu0 %v102
  %143 = vmatprep.subr.bf16.mxu0 0
  %144 = vmatpush1.bf16.msra.mxu0 %v103
  %145 = vmatprep.subr.bf16.mxu0 0
  %146 = vmatpush1.bf16.msra.mxu0 %v104
  %147 = vmatprep.subr.bf16.mxu0 0
  %148 = vmatpush1.bf16.msra.mxu0 %v137
  %149 = vmatprep.subr.bf16.mxu0 0
  %150 = vmatpush1.bf16.msra.mxu0 0
  %151 = vmatprep.subr.bf16.mxu0 0
  %152 = vmatpush1.bf16.msra.mxu0 0
  %153 = vmatprep.subr.bf16.mxu0 0
  %154 = vmatpush1.bf16.msra.mxu0 0
  %155 = vmatprep.subr.bf16.mxu0 0
  %156 = vmatpush1.bf16.msra.mxu0 0
  %157 = vmatprep.subr.bf16.mxu0 0
  %158 = vmatpush1.bf16.msra.mxu0 0
  %159 = vmatprep.subr.bf16.mxu0 0
  %160 = vmatpush1.bf16.msra.mxu0 0
  %161 = vmatprep.subr.bf16.mxu0 0
  %162 = vmatpush1.bf16.msra.mxu0 0
  %163 = vmatprep.subr.bf16.mxu0 0
  %164 = vmatpush1.bf16.msra.mxu0 0
  %165 = vmatprep.subr.bf16.mxu0 0
  %166 = vmatpush1.bf16.msra.mxu0 0
  %167 = vmatprep.subr.bf16.mxu0 0
  %168 = vmatpush1.bf16.msra.mxu0 0
  %169 = vmatprep.subr.bf16.mxu0 0
  %170 = vmatpush1.bf16.msra.mxu0 0
  %171 = vmatprep.mubr.bf16.mxu0 0
  %172 = vmatmul.mubr.bf16.gmra.mrb[0].mxu0 %v112
  %v173 = vpop.f32.mrb[0].mxu0
  %v174 = vadd.f32 0.0, %v173
  %v175 = vpop.f32.mrb[0].mxu0
  %v176 = vpop.f32.mrb[0].mxu0
  %v177 = vadd.f32 0.0, %v176
  %v178 = vpop.f32.mrb[0].mxu0
  %179 = vmatprep.mubr.bf16.mxu0 0
  %180 = vmatmul.mubr.bf16.gmra.mrb[0].mxu0 %v115
  %v181 = vpop.f32.mrb[0].mxu0
  %v182 = vadd.f32 0.0, %v181
  %v183 = vpop.f32.mrb[0].mxu0
  %v184 = vpop.f32.mrb[0].mxu0
  %v185 = vadd.f32 0.0, %v184
  %v186 = vpop.f32.mrb[0].mxu0
  %187 = vmatprep.mubr.bf16.mxu0 0
  %188 = vmatmul.mubr.bf16.gmra.mrb[0].mxu0 %v118
  %v189 = vpop.f32.mrb[0].mxu0
  %v190 = vadd.f32 0.0, %v189
  %v191 = vpop.f32.mrb[0].mxu0
  %v192 = vpop.f32.mrb[0].mxu0
  %v193 = vadd.f32 0.0, %v192
  %v194 = vpop.f32.mrb[0].mxu0
  %195 = vmatprep.mubr.bf16.mxu0 0
  %196 = vmatmul.mubr.bf16.gmra.mrb[0].mxu0 %v121
  %v197 = vpop.f32.mrb[0].mxu0
  %v198 = vadd.f32 0.0, %v197
  %v199 = vpop.f32.mrb[0].mxu0
  %v200 = vpop.f32.mrb[0].mxu0
  %v201 = vadd.f32 0.0, %v200
  %v202 = vpop.f32.mrb[0].mxu0
  %203 = vmatprep.mubr.bf16.mxu0 0
  %204 = vmatmul.mubr.bf16.gmra.mrb[0].mxu0 %v124
  %v205 = vpop.f32.mrb[0].mxu0
  %v206 = vadd.f32 0.0, %v205
  %v207 = vpop.f32.mrb[0].mxu0
  %v208 = vpop.f32.mrb[0].mxu0
  %v209 = vadd.f32 0.0, %v208
  %v210 = vpop.f32.mrb[0].mxu0
  %211 = vmatprep.mubr.bf16.mxu0 0
  %212 = vmatmul.mubr.bf16.gmra.mrb[0].mxu0 %v127
  %v213 = vpop.f32.mrb[0].mxu0
  %v214 = vadd.f32 0.0, %v213
  %v215 = vpop.f32.mrb[0].mxu0
  %v216 = vpop.f32.mrb[0].mxu0
  %v217 = vadd.f32 0.0, %v216
  %v218 = vpop.f32.mrb[0].mxu0
  %219 = vmatprep.mubr.bf16.mxu0 0
  %220 = vmatmul.mubr.bf16.gmra.mrb[0].mxu0 %v130
  %v221 = vpop.f32.mrb[0].mxu0
  %v222 = vadd.f32 0.0, %v221
  %v223 = vpop.f32.mrb[0].mxu0
  %v224 = vpop.f32.mrb[0].mxu0
  %v225 = vadd.f32 0.0, %v224
  %v226 = vpop.f32.mrb[0].mxu0
  %227 = vmatprep.mubr.bf16.mxu0 0
  %228 = vmatmul.mubr.bf16.gmra.mrb[0].mxu0 %v133
  %v229 = vpop.f32.mrb[0].mxu0
  %v230 = vadd.f32 0.0, %v229
  %v231 = vpop.f32.mrb[0].mxu0
  %v232 = vpop.f32.mrb[0].mxu0
  %v233 = vadd.f32 0.0, %v232
  %v234 = vpop.f32.mrb[0].mxu0
  %235 = vdwg.mxu0
  %v236 = vld [vmem:[%s2] sm:$0x1]
  %v238 = vlaneseq
  %v239 = vshrl.u32 %v238, 7
  %v240 = vsub.s32 0, %v239
  %v241 = vrot.slane %v236, %v240
  %v243 = vmul.f32 %v174, %v241
  %v244 = vmul.f32 %v177, %v241
  %v245 = vmul.f32 %v182, %v241
  %v246 = vmul.f32 %v185, %v241
  %v247 = vmul.f32 %v190, %v241
  %v248 = vmul.f32 %v193, %v241
  %v249 = vmul.f32 %v198, %v241
  %v250 = vmul.f32 %v201, %v241
  %v251 = vmul.f32 %v206, %v241
  %v252 = vmul.f32 %v209, %v241
  %v253 = vmul.f32 %v214, %v241
  %v254 = vmul.f32 %v217, %v241
  %v255 = vmul.f32 %v222, %v241
  %v256 = vmul.f32 %v225, %v241
  %v257 = vmul.f32 %v230, %v241
  %v258 = vmul.f32 %v233, %v241
  %v259 = vld [vmem:[%s3] sm:$0x1]
  %v261 = vlaneseq
  %v262 = vshrl.u32 %v261, 7
  %v263 = vsub.s32 0, %v262
  %v264 = vrot.slane %v259, %v263
  %v266 = vadd.f32 %v243, %v264
  %v267 = vadd.f32 %v244, %v264
  %v268 = vadd.f32 %v245, %v264
  %v269 = vadd.f32 %v246, %v264
  %v270 = vadd.f32 %v247, %v264
  %v271 = vadd.f32 %v248, %v264
  %v272 = vadd.f32 %v249, %v264
  %v273 = vadd.f32 %v250, %v264
  %v274 = vadd.f32 %v251, %v264
  %v275 = vadd.f32 %v252, %v264
  %v276 = vadd.f32 %v253, %v264
  %v277 = vadd.f32 %v254, %v264
  %v278 = vadd.f32 %v255, %v264
  %v279 = vadd.f32 %v256, %v264
  %v280 = vadd.f32 %v257, %v264
  %v281 = vadd.f32 %v258, %v264
  %v282 = vmax.f32 %v266, 0.0
  %v283 = vmax.f32 %v267, 0.0
  %v284 = vmax.f32 %v268, 0.0
  %v285 = vmax.f32 %v269, 0.0
  %v286 = vmax.f32 %v270, 0.0
  %v287 = vmax.f32 %v271, 0.0
  %v288 = vmax.f32 %v272, 0.0
  %v289 = vmax.f32 %v273, 0.0
  %v290 = vmax.f32 %v274, 0.0
  %v291 = vmax.f32 %v275, 0.0
  %v292 = vmax.f32 %v276, 0.0
  %v293 = vmax.f32 %v277, 0.0
  %v294 = vmax.f32 %v278, 0.0
  %v295 = vmax.f32 %v279, 0.0
  %v296 = vmax.f32 %v280, 0.0
  %v297 = vmax.f32 %v281, 0.0
  %v298 = vpack.c.bf16 %v283, %v282
  %v299 = vpack.c.bf16 %v285, %v284
  %v300 = vpack.c.bf16 %v287, %v286
  %v301 = vpack.c.bf16 %v289, %v288
  %v302 = vpack.c.bf16 %v291, %v290
  %v303 = vpack.c.bf16 %v293, %v292
  %v304 = vpack.c.bf16 %v295, %v294
  %v305 = vpack.c.bf16 %v297, %v296
  %v314 = vunpack.c.l.b16 %v298
  %v315 = vunpack.c.h.b16 %v298
  %v316 = vunpack.c.l.b16 %v299
  %v317 = vunpack.c.h.b16 %v299
  %v318 = vunpack.c.l.b16 %v300
  %v319 = vunpack.c.h.b16 %v300
  %v320 = vunpack.c.l.b16 %v301
  %v321 = vunpack.c.h.b16 %v301
  %v322 = vunpack.c.l.b16 %v302
  %v323 = vunpack.c.h.b16 %v302
  %v324 = vunpack.c.l.b16 %v303
  %v325 = vunpack.c.h.b16 %v303
  %v326 = vunpack.c.l.b16 %v304
  %v327 = vunpack.c.h.b16 %v304
  %v328 = vunpack.c.l.b16 %v305
  %v329 = vunpack.c.h.b16 %v305
  %v330 = vpack.c.b16 %v314, %v314
  %v331 = vpack.c.b16 %v315, %v315
  %v332 = vpack.c.b16 %v316, %v316
  %v333 = vpack.c.b16 %v317, %v317
  %v334 = vpack.c.b16 %v318, %v318
  %v335 = vpack.c.b16 %v319, %v319
  %v336 = vpack.c.b16 %v320, %v320
  %v337 = vpack.c.b16 %v321, %v321
  %v338 = vpack.c.b16 %v322, %v322
  %v339 = vpack.c.b16 %v323, %v323
  %v340 = vpack.c.b16 %v324, %v324
  %v341 = vpack.c.b16 %v325, %v325
  %v342 = vpack.c.b16 %v326, %v326
  %v343 = vpack.c.b16 %v327, %v327
  %v344 = vpack.c.b16 %v328, %v328
  %v345 = vpack.c.b16 %v329, %v329
  %vm362 = vcmask 125952
  %363 = vst.msk [vmem:[%s4] sm:$0xf] %vm362, %v330
  %364 = vst.msk [vmem:[%s4 + $0x4] sm:$0xf] %vm362, %v331
  %365 = vst.msk [vmem:[%s4 + $0x8] sm:$0xf] %vm362, %v332
  %366 = vst.msk [vmem:[%s4 + $0xc] sm:$0xf] %vm362, %v333
  %367 = vst.msk [vmem:[%s4 + $0x10] sm:$0xf] %vm362, %v334
  %368 = vst.msk [vmem:[%s4 + $0x14] sm:$0xf] %vm362, %v335
  %369 = vst.msk [vmem:[%s4 + $0x18] sm:$0xf] %vm362, %v336
  %370 = vst.msk [vmem:[%s4 + $0x1c] sm:$0xf] %vm362, %v337
  %371 = vst.msk [vmem:[%s4 + $0x20] sm:$0xf] %vm362, %v338
  %372 = vst.msk [vmem:[%s4 + $0x24] sm:$0xf] %vm362, %v339
  %373 = vst.msk [vmem:[%s4 + $0x28] sm:$0xf] %vm362, %v340
  %374 = vst.msk [vmem:[%s4 + $0x2c] sm:$0xf] %vm362, %v341
  %375 = vst.msk [vmem:[%s4 + $0x30] sm:$0xf] %vm362, %v342
  %376 = vst.msk [vmem:[%s4 + $0x34] sm:$0xf] %vm362, %v343
  %377 = vst.msk [vmem:[%s4 + $0x38] sm:$0xf] %vm362, %v344
  %378 = vst.msk [vmem:[%s4 + $0x3c] sm:$0xf] %vm362, %v345
  // Predicated region
  $region18: #{unet_forward.25} parent=0 // pred_check
    _
  $region19: #{unet_forward.25} parent=0 // pred_check_branch
    %380 = sbr.rel (0) target = $region21
  $region20: #{unet_forward.25} parent=0 // pred_region
    _
  $region21: #{unet_forward.25} parent=0 // pred_fallthru
    _
  // Predicated region
  $region22: #{unet_forward.25} parent=0 // pred_check
    _
  $region23: #{unet_forward.25} parent=0 // pred_check_branch
    %382 = sbr.rel (0) target = $region25
  $region24: #{unet_forward.25} parent=0 // pred_region
    _
  $region25: #{unet_forward.25} parent=0 // pred_fallthru
    _

// kernel: unet_forward.26
$region0: #{unet_forward.26}
  #allocation0 [shape = 'u32[]', space=smem, size = 0x4, offset = 0x4, fixed_abs, tag = 'smem constant byte address 0x4 - core index']
  #allocation1 [shape = 'u32[144,128]{1,0:T(1,128)}', space=vmem, size = 0x12000, scoped, tag = 'internal scratch']
  %s0 = inlined_call_operand.vmem [shape: bf16[128,144], index: 0, kind: input, shape index: {}]
  %s1 = inlined_call_operand.vmem [shape: bf16[144,16], index: 1, kind: input, shape index: {}]
  %s2 = inlined_call_operand.vmem [shape: f32[1,16], index: 2, kind: input, shape index: {}]
  %s3 = inlined_call_operand.vmem [shape: f32[1,16], index: 3, kind: input, shape index: {}]
  %s4 = inlined_call_operand.vmem [shape: bf16[128,16], index: 4, kind: output, shape index: {}]
  %s5 = sld [smem:[#allocation0]]
  $region26: #{unet_forward.26} parent=0
    _
  %s7 = ssub.s32 1, %s5
  %s8 = scalar_select 0, %s7, %s5
  // Predicated region
  $region2: #{unet_forward.26} parent=0 // pred_check
    _
  $region3: #{unet_forward.26} parent=0 // pred_check_branch
    %10 = sbr.rel (0) target = $region5
  $region4: #{unet_forward.26} parent=0 // pred_region
    _
  $region5: #{unet_forward.26} parent=0 // pred_fallthru
    _
  // Predicated region
  $region6: #{unet_forward.26} parent=0 // pred_check
    _
  $region7: #{unet_forward.26} parent=0 // pred_check_branch
    %12 = sbr.rel (0) target = $region9
  $region8: #{unet_forward.26} parent=0 // pred_region
    _
  $region9: #{unet_forward.26} parent=0 // pred_fallthru
    _
  // Predicated region
  $region10: #{unet_forward.26} parent=0 // pred_check
    _
  $region11: #{unet_forward.26} parent=0 // pred_check_branch
    %14 = sbr.rel (0) target = $region13
  $region12: #{unet_forward.26} parent=0 // pred_region
    _
  $region13: #{unet_forward.26} parent=0 // pred_fallthru
    _
  // Predicated region
  $region14: #{unet_forward.26} parent=0 // pred_check
    _
  $region15: #{unet_forward.26} parent=0 // pred_check_branch
    %16 = sbr.rel (0) target = $region17
  $region16: #{unet_forward.26} parent=0 // pred_region
    _
  $region17: #{unet_forward.26} parent=0 // pred_fallthru
    _
  %v18 = vld [vmem:[%s0] sm:$0xff]
  %v19 = vld [vmem:[%s0 + $0x8] sm:$0xff]
  %v20 = vld [vmem:[%s0 + $0x10] sm:$0xff]
  %v21 = vld [vmem:[%s0 + $0x18] sm:$0xff]
  %v22 = vld [vmem:[%s0 + $0x20] sm:$0xff]
  %v23 = vld [vmem:[%s0 + $0x28] sm:$0xff]
  %v24 = vld [vmem:[%s0 + $0x30] sm:$0xff]
  %v25 = vld [vmem:[%s0 + $0x38] sm:$0xff]
  %v26 = vld [vmem:[%s0 + $0x40] sm:$0xff]
  %v27 = vld [vmem:[%s0 + $0x48] sm:$0xff]
  %v28 = vld [vmem:[%s0 + $0x50] sm:$0xff]
  %v29 = vld [vmem:[%s0 + $0x58] sm:$0xff]
  %v30 = vld [vmem:[%s0 + $0x60] sm:$0xff]
  %v31 = vld [vmem:[%s0 + $0x68] sm:$0xff]
  %v32 = vld [vmem:[%s0 + $0x70] sm:$0xff]
  %v33 = vld [vmem:[%s0 + $0x78] sm:$0xff]
  %v34 = vld [vmem:[%s1] sm:$0xf]
  %v35 = vld [vmem:[%s1 + $0x4] sm:$0xf]
  %v36 = vld [vmem:[%s1 + $0x8] sm:$0xf]
  %v37 = vld [vmem:[%s1 + $0xc] sm:$0xf]
  %v38 = vld [vmem:[%s1 + $0x10] sm:$0xf]
  %v39 = vld [vmem:[%s1 + $0x14] sm:$0xf]
  %v40 = vld [vmem:[%s1 + $0x18] sm:$0xf]
  %v41 = vld [vmem:[%s1 + $0x1c] sm:$0xf]
  %v42 = vld [vmem:[%s1 + $0x20] sm:$0xf]
  %v43 = vld [vmem:[%s1 + $0x24] sm:$0xf]
  %v44 = vld [vmem:[%s1 + $0x28] sm:$0xf]
  %v45 = vld [vmem:[%s1 + $0x2c] sm:$0xf]
  %v46 = vld [vmem:[%s1 + $0x30] sm:$0xf]
  %v47 = vld [vmem:[%s1 + $0x34] sm:$0xf]
  %v48 = vld [vmem:[%s1 + $0x38] sm:$0xf]
  %v49 = vld [vmem:[%s1 + $0x3c] sm:$0xf]
  %v50 = vld [vmem:[%s1 + $0x40] sm:$0xf]
  %v51 = vld [vmem:[%s1 + $0x44] sm:$0xf]
  %v68 = vunpack.c.l.b16 %v18
  %v69 = vunpack.c.h.b16 %v18
  %v70 = vunpack.c.l.b16 %v19
  %v71 = vunpack.c.h.b16 %v19
  %v72 = vunpack.c.l.b16 %v20
  %v73 = vunpack.c.h.b16 %v20
  %v74 = vunpack.c.l.b16 %v21
  %v75 = vunpack.c.h.b16 %v21
  %v76 = vunpack.c.l.b16 %v22
  %v77 = vunpack.c.h.b16 %v22
  %v78 = vunpack.c.l.b16 %v23
  %v79 = vunpack.c.h.b16 %v23
  %v80 = vunpack.c.l.b16 %v24
  %v81 = vunpack.c.h.b16 %v24
  %v82 = vunpack.c.l.b16 %v25
  %v83 = vunpack.c.h.b16 %v25
  %v84 = vunpack.c.l.b16 %v26
  %v85 = vunpack.c.h.b16 %v26
  %v86 = vunpack.c.l.b16 %v27
  %v87 = vunpack.c.h.b16 %v27
  %v88 = vunpack.c.l.b16 %v28
  %v89 = vunpack.c.h.b16 %v28
  %v90 = vunpack.c.l.b16 %v29
  %v91 = vunpack.c.h.b16 %v29
  %v92 = vunpack.c.l.b16 %v30
  %v93 = vunpack.c.h.b16 %v30
  %v94 = vunpack.c.l.b16 %v31
  %v95 = vunpack.c.h.b16 %v31
  %v96 = vunpack.c.l.b16 %v32
  %v97 = vunpack.c.h.b16 %v32
  %v98 = vunpack.c.l.b16 %v33
  %v99 = vunpack.c.h.b16 %v33
  %v100 = vpack.c.b16 %v70, %v68
  %v101 = vpack.c.b16 %v71, %v69
  %v102 = vpack.c.b16 %v74, %v72
  %v103 = vpack.c.b16 %v75, %v73
  %v104 = vpack.c.b16 %v78, %v76
  %v105 = vpack.c.b16 %v79, %v77
  %v106 = vpack.c.b16 %v82, %v80
  %v107 = vpack.c.b16 %v83, %v81
  %v108 = vpack.c.b16 %v86, %v84
  %v109 = vpack.c.b16 %v87, %v85
  %v110 = vpack.c.b16 %v90, %v88
  %v111 = vpack.c.b16 %v91, %v89
  %v112 = vpack.c.b16 %v94, %v92
  %v113 = vpack.c.b16 %v95, %v93
  %v114 = vpack.c.b16 %v98, %v96
  %v115 = vpack.c.b16 %v99, %v97
  %v142 = vunpack.c.l.b16 %v34
  %v143 = vunpack.c.l.b16 %v35
  %v144 = vunpack.c.l.b16 %v36
  %v145 = vunpack.c.l.b16 %v37
  %v146 = vunpack.c.l.b16 %v38
  %v147 = vunpack.c.l.b16 %v39
  %v148 = vunpack.c.l.b16 %v40
  %v149 = vunpack.c.l.b16 %v41
  %v150 = vunpack.c.l.b16 %v42
  %v151 = vunpack.c.l.b16 %v43
  %v152 = vunpack.c.l.b16 %v44
  %v153 = vunpack.c.l.b16 %v45
  %v154 = vunpack.c.l.b16 %v46
  %v155 = vunpack.c.l.b16 %v47
  %v156 = vunpack.c.l.b16 %v48
  %v157 = vunpack.c.l.b16 %v49
  %v158 = vunpack.c.l.b16 %v50
  %v159 = vunpack.c.l.b16 %v51
  %v160 = vpack.c.b16 %v143, %v142
  %v161 = vpack.c.b16 %v145, %v144
  %v162 = vpack.c.b16 %v147, %v146
  %v163 = vpack.c.b16 %v149, %v148
  %v164 = vpack.c.b16 %v151, %v150
  %v165 = vpack.c.b16 %v153, %v152
  %v166 = vpack.c.b16 %v155, %v154
  %v167 = vpack.c.b16 %v157, %v156
  %v168 = vpack.c.b16 %v159, %v158
  %vm178 = vcmask 130048
  %v180 = vsel %vm178, %v101, 0
  %v183 = vsel %vm178, %v103, 0
  %v186 = vsel %vm178, %v105, 0
  %v189 = vsel %vm178, %v107, 0
  %v192 = vsel %vm178, %v109, 0
  %v195 = vsel %vm178, %v111, 0
  %v198 = vsel %vm178, %v113, 0
  %v201 = vsel %vm178, %v115, 0
  %203 = vmatprep.subr.bf16.mxu0 0
  %204 = vmatpush1.bf16.msra.mxu0 %v160
  %205 = vmatprep.subr.bf16.mxu0 0
  %206 = vmatpush1.bf16.msra.mxu0 %v161
  %207 = vmatprep.subr.bf16.mxu0 0
  %208 = vmatpush1.bf16.msra.mxu0 %v162
  %209 = vmatprep.subr.bf16.mxu0 0
  %210 = vmatpush1.bf16.msra.mxu0 %v163
  %211 = vmatprep.subr.bf16.mxu0 0
  %212 = vmatpush1.bf16.msra.mxu0 %v164
  %213 = vmatprep.subr.bf16.mxu0 0
  %214 = vmatpush1.bf16.msra.mxu0 %v165
  %215 = vmatprep.subr.bf16.mxu0 0
  %216 = vmatpush1.bf16.msra.mxu0 %v166
  %217 = vmatprep.subr.bf16.mxu0 0
  %218 = vmatpush1.bf16.msra.mxu0 %v167
  %219 = vmatprep.subr.bf16.mxu0 0
  %220 = vmatpush1.bf16.msra.mxu0 %v168
  %221 = vmatprep.subr.bf16.mxu0 0
  %222 = vmatpush1.bf16.msra.mxu0 0
  %223 = vmatprep.subr.bf16.mxu0 0
  %224 = vmatpush1.bf16.msra.mxu0 0
  %225 = vmatprep.subr.bf16.mxu0 0
  %226 = vmatpush1.bf16.msra.mxu0 0
  %227 = vmatprep.subr.bf16.mxu0 0
  %228 = vmatpush1.bf16.msra.mxu0 0
  %229 = vmatprep.subr.bf16.mxu0 0
  %230 = vmatpush1.bf16.msra.mxu0 0
  %231 = vmatprep.subr.bf16.mxu0 0
  %232 = vmatpush1.bf16.msra.mxu0 0
  %233 = vmatprep.subr.bf16.mxu0 0
  %234 = vmatpush1.bf16.msra.mxu0 0
  %235 = vmatprep.mubr.bf16.mxu0 %v180
  %236 = vmatmul.mubr.bf16.gmra.mrb[0].mxu0 %v100
  %v237 = vpop.f32.mrb[0].mxu0
  %v238 = vadd.f32 0.0, %v237
  %v239 = vpop.f32.mrb[0].mxu0
  %v240 = vpop.f32.mrb[0].mxu0
  %v241 = vadd.f32 0.0, %v240
  %v242 = vpop.f32.mrb[0].mxu0
  %243 = vmatprep.mubr.bf16.mxu0 %v183
  %244 = vmatmul.mubr.bf16.gmra.mrb[0].mxu0 %v102
  %v245 = vpop.f32.mrb[0].mxu0
  %v246 = vadd.f32 0.0, %v245
  %v247 = vpop.f32.mrb[0].mxu0
  %v248 = vpop.f32.mrb[0].mxu0
  %v249 = vadd.f32 0.0, %v248
  %v250 = vpop.f32.mrb[0].mxu0
  %251 = vmatprep.mubr.bf16.mxu0 %v186
  %252 = vmatmul.mubr.bf16.gmra.mrb[0].mxu0 %v104
  %v253 = vpop.f32.mrb[0].mxu0
  %v254 = vadd.f32 0.0, %v253
  %v255 = vpop.f32.mrb[0].mxu0
  %v256 = vpop.f32.mrb[0].mxu0
  %v257 = vadd.f32 0.0, %v256
  %v258 = vpop.f32.mrb[0].mxu0
  %259 = vmatprep.mubr.bf16.mxu0 %v189
  %260 = vmatmul.mubr.bf16.gmra.mrb[0].mxu0 %v106
  %v261 = vpop.f32.mrb[0].mxu0
  %v262 = vadd.f32 0.0, %v261
  %v263 = vpop.f32.mrb[0].mxu0
  %v264 = vpop.f32.mrb[0].mxu0
  %v265 = vadd.f32 0.0, %v264
  %v266 = vpop.f32.mrb[0].mxu0
  %267 = vmatprep.mubr.bf16.mxu0 %v192
  %268 = vmatmul.mubr.bf16.gmra.mrb[0].mxu0 %v108
  %v269 = vpop.f32.mrb[0].mxu0
  %v270 = vadd.f32 0.0, %v269
  %v271 = vpop.f32.mrb[0].mxu0
  %v272 = vpop.f32.mrb[0].mxu0
  %v273 = vadd.f32 0.0, %v272
  %v274 = vpop.f32.mrb[0].mxu0
  %275 = vmatprep.mubr.bf16.mxu0 %v195
  %276 = vmatmul.mubr.bf16.gmra.mrb[0].mxu0 %v110
  %v277 = vpop.f32.mrb[0].mxu0
  %v278 = vadd.f32 0.0, %v277
  %v279 = vpop.f32.mrb[0].mxu0
  %v280 = vpop.f32.mrb[0].mxu0
  %v281 = vadd.f32 0.0, %v280
  %v282 = vpop.f32.mrb[0].mxu0
  %283 = vmatprep.mubr.bf16.mxu0 %v198
  %284 = vmatmul.mubr.bf16.gmra.mrb[0].mxu0 %v112
  %v285 = vpop.f32.mrb[0].mxu0
  %v286 = vadd.f32 0.0, %v285
  %v287 = vpop.f32.mrb[0].mxu0
  %v288 = vpop.f32.mrb[0].mxu0
  %v289 = vadd.f32 0.0, %v288
  %v290 = vpop.f32.mrb[0].mxu0
  %291 = vmatprep.mubr.bf16.mxu0 %v201
  %292 = vmatmul.mubr.bf16.gmra.mrb[0].mxu0 %v114
  %v293 = vpop.f32.mrb[0].mxu0
  %v294 = vadd.f32 0.0, %v293
  %v295 = vpop.f32.mrb[0].mxu0
  %v296 = vpop.f32.mrb[0].mxu0
  %v297 = vadd.f32 0.0, %v296
  %v298 = vpop.f32.mrb[0].mxu0
  %299 = vdwg.mxu0
  %v300 = vld [vmem:[%s2] sm:$0x1]
  %v302 = vlaneseq
  %v303 = vshrl.u32 %v302, 7
  %v304 = vsub.s32 0, %v303
  %v305 = vrot.slane %v300, %v304
  %v307 = vmul.f32 %v238, %v305
  %v308 = vmul.f32 %v241, %v305
  %v309 = vmul.f32 %v246, %v305
  %v310 = vmul.f32 %v249, %v305
  %v311 = vmul.f32 %v254, %v305
  %v312 = vmul.f32 %v257, %v305
  %v313 = vmul.f32 %v262, %v305
  %v314 = vmul.f32 %v265, %v305
  %v315 = vmul.f32 %v270, %v305
  %v316 = vmul.f32 %v273, %v305
  %v317 = vmul.f32 %v278, %v305
  %v318 = vmul.f32 %v281, %v305
  %v319 = vmul.f32 %v286, %v305
  %v320 = vmul.f32 %v289, %v305
  %v321 = vmul.f32 %v294, %v305
  %v322 = vmul.f32 %v297, %v305
  %v323 = vld [vmem:[%s3] sm:$0x1]
  %v325 = vlaneseq
  %v326 = vshrl.u32 %v325, 7
  %v327 = vsub.s32 0, %v326
  %v328 = vrot.slane %v323, %v327
  %v330 = vadd.f32 %v307, %v328
  %v331 = vadd.f32 %v308, %v328
  %v332 = vadd.f32 %v309, %v328
  %v333 = vadd.f32 %v310, %v328
  %v334 = vadd.f32 %v311, %v328
  %v335 = vadd.f32 %v312, %v328
  %v336 = vadd.f32 %v313, %v328
  %v337 = vadd.f32 %v314, %v328
  %v338 = vadd.f32 %v315, %v328
  %v339 = vadd.f32 %v316, %v328
  %v340 = vadd.f32 %v317, %v328
  %v341 = vadd.f32 %v318, %v328
  %v342 = vadd.f32 %v319, %v328
  %v343 = vadd.f32 %v320, %v328
  %v344 = vadd.f32 %v321, %v328
  %v345 = vadd.f32 %v322, %v328
  %v346 = vmax.f32 %v330, 0.0
  %v347 = vmax.f32 %v331, 0.0
  %v348 = vmax.f32 %v332, 0.0
  %v349 = vmax.f32 %v333, 0.0
  %v350 = vmax.f32 %v334, 0.0
  %v351 = vmax.f32 %v335, 0.0
  %v352 = vmax.f32 %v336, 0.0
  %v353 = vmax.f32 %v337, 0.0
  %v354 = vmax.f32 %v338, 0.0
  %v355 = vmax.f32 %v339, 0.0
  %v356 = vmax.f32 %v340, 0.0
  %v357 = vmax.f32 %v341, 0.0
  %v358 = vmax.f32 %v342, 0.0
  %v359 = vmax.f32 %v343, 0.0
  %v360 = vmax.f32 %v344, 0.0
  %v361 = vmax.f32 %v345, 0.0
  %v362 = vpack.c.bf16 %v347, %v346
  %v363 = vpack.c.bf16 %v349, %v348
  %v364 = vpack.c.bf16 %v351, %v350
  %v365 = vpack.c.bf16 %v353, %v352
  %v366 = vpack.c.bf16 %v355, %v354
  %v367 = vpack.c.bf16 %v357, %v356
  %v368 = vpack.c.bf16 %v359, %v358
  %v369 = vpack.c.bf16 %v361, %v360
  %v378 = vunpack.c.l.b16 %v362
  %v379 = vunpack.c.h.b16 %v362
  %v380 = vunpack.c.l.b16 %v363
  %v381 = vunpack.c.h.b16 %v363
  %v382 = vunpack.c.l.b16 %v364
  %v383 = vunpack.c.h.b16 %v364
  %v384 = vunpack.c.l.b16 %v365
  %v385 = vunpack.c.h.b16 %v365
  %v386 = vunpack.c.l.b16 %v366
  %v387 = vunpack.c.h.b16 %v366
  %v388 = vunpack.c.l.b16 %v367
  %v389 = vunpack.c.h.b16 %v367
  %v390 = vunpack.c.l.b16 %v368
  %v391 = vunpack.c.h.b16 %v368
  %v392 = vunpack.c.l.b16 %v369
  %v393 = vunpack.c.h.b16 %v369
  %v394 = vpack.c.b16 %v378, %v378
  %v395 = vpack.c.b16 %v379, %v379
  %v396 = vpack.c.b16 %v380, %v380
  %v397 = vpack.c.b16 %v381, %v381
  %v398 = vpack.c.b16 %v382, %v382
  %v399 = vpack.c.b16 %v383, %v383
  %v400 = vpack.c.b16 %v384, %v384
  %v401 = vpack.c.b16 %v385, %v385
  %v402 = vpack.c.b16 %v386, %v386
  %v403 = vpack.c.b16 %v387, %v387
  %v404 = vpack.c.b16 %v388, %v388
  %v405 = vpack.c.b16 %v389, %v389
  %v406 = vpack.c.b16 %v390, %v390
  %v407 = vpack.c.b16 %v391, %v391
  %v408 = vpack.c.b16 %v392, %v392
  %v409 = vpack.c.b16 %v393, %v393
  %vm426 = vcmask 125952
  %427 = vst.msk [vmem:[%s4] sm:$0xf] %vm426, %v394
  %428 = vst.msk [vmem:[%s4 + $0x4] sm:$0xf] %vm426, %v395
  %429 = vst.msk [vmem:[%s4 + $0x8] sm:$0xf] %vm426, %v396
  %430 = vst.msk [vmem:[%s4 + $0xc] sm:$0xf] %vm426, %v397
  %431 = vst.msk [vmem:[%s4 + $0x10] sm:$0xf] %vm426, %v398
  %432 = vst.msk [vmem:[%s4 + $0x14] sm:$0xf] %vm426, %v399
  %433 = vst.msk [vmem:[%s4 + $0x18] sm:$0xf] %vm426, %v400
  %434 = vst.msk [vmem:[%s4 + $0x1c] sm:$0xf] %vm426, %v401
  %435 = vst.msk [vmem:[%s4 + $0x20] sm:$0xf] %vm426, %v402
  %436 = vst.msk [vmem:[%s4 + $0x24] sm:$0xf] %vm426, %v403
  %437 = vst.msk [vmem:[%s4 + $0x28] sm:$0xf] %vm426, %v404
  %438 = vst.msk [vmem:[%s4 + $0x2c] sm:$0xf] %vm426, %v405
  %439 = vst.msk [vmem:[%s4 + $0x30] sm:$0xf] %vm426, %v406
  %440 = vst.msk [vmem:[%s4 + $0x34] sm:$0xf] %vm426, %v407
  %441 = vst.msk [vmem:[%s4 + $0x38] sm:$0xf] %vm426, %v408
  %442 = vst.msk [vmem:[%s4 + $0x3c] sm:$0xf] %vm426, %v409
  // Predicated region
  $region18: #{unet_forward.26} parent=0 // pred_check
    _
  $region19: #{unet_forward.26} parent=0 // pred_check_branch
    %444 = sbr.rel (0) target = $region21
  $region20: #{unet_forward.26} parent=0 // pred_region
    _
  $region21: #{unet_forward.26} parent=0 // pred_fallthru
    _
  // Predicated region
  $region22: #{unet_forward.26} parent=0 // pred_check
    _
  $region23: #{unet_forward.26} parent=0 // pred_check_branch
    %446 = sbr.rel (0) target = $region25
  $region24: #{unet_forward.26} parent=0 // pred_region
    _
  $region25: #{unet_forward.26} parent=0 // pred_fallthru
    _

// kernel: unet_forward.27
$region0: #{unet_forward.27}
  #allocation0 [shape = 'u32[]', space=smem, size = 0x4, offset = 0x4, fixed_abs, tag = 'smem constant byte address 0x4 - core index']
  #allocation1 [shape = 'u32[144,128]{1,0:T(1,128)}', space=vmem, size = 0x12000, scoped, tag = 'internal scratch']
  %s0 = inlined_call_operand.vmem [shape: bf16[32,144], index: 0, kind: input, shape index: {}]
  %s1 = inlined_call_operand.vmem [shape: bf16[144,32], index: 1, kind: input, shape index: {}]
  %s2 = inlined_call_operand.vmem [shape: f32[1,32], index: 2, kind: input, shape index: {}]
  %s3 = inlined_call_operand.vmem [shape: f32[1,32], index: 3, kind: input, shape index: {}]
  %s4 = inlined_call_operand.vmem [shape: bf16[32,32], index: 4, kind: output, shape index: {}]
  %s5 = sld [smem:[#allocation0]]
  $region26: #{unet_forward.27} parent=0
    _
  %s7 = ssub.s32 1, %s5
  %s8 = scalar_select 0, %s7, %s5
  // Predicated region
  $region2: #{unet_forward.27} parent=0 // pred_check
    _
  $region3: #{unet_forward.27} parent=0 // pred_check_branch
    %10 = sbr.rel (0) target = $region5
  $region4: #{unet_forward.27} parent=0 // pred_region
    _
  $region5: #{unet_forward.27} parent=0 // pred_fallthru
    _
  // Predicated region
  $region6: #{unet_forward.27} parent=0 // pred_check
    _
  $region7: #{unet_forward.27} parent=0 // pred_check_branch
    %12 = sbr.rel (0) target = $region9
  $region8: #{unet_forward.27} parent=0 // pred_region
    _
  $region9: #{unet_forward.27} parent=0 // pred_fallthru
    _
  // Predicated region
  $region10: #{unet_forward.27} parent=0 // pred_check
    _
  $region11: #{unet_forward.27} parent=0 // pred_check_branch
    %14 = sbr.rel (0) target = $region13
  $region12: #{unet_forward.27} parent=0 // pred_region
    _
  $region13: #{unet_forward.27} parent=0 // pred_fallthru
    _
  // Predicated region
  $region14: #{unet_forward.27} parent=0 // pred_check
    _
  $region15: #{unet_forward.27} parent=0 // pred_check_branch
    %16 = sbr.rel (0) target = $region17
  $region16: #{unet_forward.27} parent=0 // pred_region
    _
  $region17: #{unet_forward.27} parent=0 // pred_fallthru
    _
  %v18 = vld [vmem:[%s0] sm:$0xff]
  %v19 = vld [vmem:[%s0 + $0x8] sm:$0xff]
  %v20 = vld [vmem:[%s0 + $0x10] sm:$0xff]
  %v21 = vld [vmem:[%s0 + $0x18] sm:$0xff]
  %v22 = vld [vmem:[%s1] sm:$0xf]
  %v23 = vld [vmem:[%s1 + $0x4] sm:$0xf]
  %v24 = vld [vmem:[%s1 + $0x8] sm:$0xf]
  %v25 = vld [vmem:[%s1 + $0xc] sm:$0xf]
  %v26 = vld [vmem:[%s1 + $0x10] sm:$0xf]
  %v27 = vld [vmem:[%s1 + $0x14] sm:$0xf]
  %v28 = vld [vmem:[%s1 + $0x18] sm:$0xf]
  %v29 = vld [vmem:[%s1 + $0x1c] sm:$0xf]
  %v30 = vld [vmem:[%s1 + $0x20] sm:$0xf]
  %v31 = vld [vmem:[%s1 + $0x24] sm:$0xf]
  %v32 = vld [vmem:[%s1 + $0x28] sm:$0xf]
  %v33 = vld [vmem:[%s1 + $0x2c] sm:$0xf]
  %v34 = vld [vmem:[%s1 + $0x30] sm:$0xf]
  %v35 = vld [vmem:[%s1 + $0x34] sm:$0xf]
  %v36 = vld [vmem:[%s1 + $0x38] sm:$0xf]
  %v37 = vld [vmem:[%s1 + $0x3c] sm:$0xf]
  %v38 = vld [vmem:[%s1 + $0x40] sm:$0xf]
  %v39 = vld [vmem:[%s1 + $0x44] sm:$0xf]
  %v44 = vunpack.c.l.b16 %v18
  %v45 = vunpack.c.h.b16 %v18
  %v46 = vunpack.c.l.b16 %v19
  %v47 = vunpack.c.h.b16 %v19
  %v48 = vunpack.c.l.b16 %v20
  %v49 = vunpack.c.h.b16 %v20
  %v50 = vunpack.c.l.b16 %v21
  %v51 = vunpack.c.h.b16 %v21
  %v52 = vpack.c.b16 %v46, %v44
  %v53 = vpack.c.b16 %v47, %v45
  %v54 = vpack.c.b16 %v50, %v48
  %v55 = vpack.c.b16 %v51, %v49
  %v76 = vunpack.c.l.b16 %v22
  %v77 = vunpack.c.l.b16 %v23
  %v78 = vunpack.c.l.b16 %v24
  %v79 = vunpack.c.l.b16 %v25
  %v80 = vunpack.c.l.b16 %v26
  %v81 = vunpack.c.l.b16 %v27
  %v82 = vunpack.c.l.b16 %v28
  %v83 = vunpack.c.l.b16 %v29
  %v84 = vunpack.c.l.b16 %v30
  %v85 = vunpack.c.l.b16 %v31
  %v86 = vunpack.c.l.b16 %v32
  %v87 = vunpack.c.l.b16 %v33
  %v88 = vunpack.c.l.b16 %v34
  %v89 = vunpack.c.l.b16 %v35
  %v90 = vunpack.c.l.b16 %v36
  %v91 = vunpack.c.l.b16 %v37
  %v92 = vunpack.c.l.b16 %v38
  %v93 = vunpack.c.l.b16 %v39
  %v94 = vpack.c.b16 %v77, %v76
  %v95 = vpack.c.b16 %v79, %v78
  %v96 = vpack.c.b16 %v81, %v80
  %v97 = vpack.c.b16 %v83, %v82
  %v98 = vpack.c.b16 %v85, %v84
  %v99 = vpack.c.b16 %v87, %v86
  %v100 = vpack.c.b16 %v89, %v88
  %v101 = vpack.c.b16 %v91, %v90
  %v102 = vpack.c.b16 %v93, %v92
  %vm112 = vcmask 130048
  %v114 = vsel %vm112, %v53, 0
  %v117 = vsel %vm112, %v55, 0
  %119 = vmatprep.subr.bf16.mxu0 0
  %120 = vmatpush1.bf16.msra.mxu0 %v94
  %121 = vmatprep.subr.bf16.mxu0 0
  %122 = vmatpush1.bf16.msra.mxu0 %v95
  %123 = vmatprep.subr.bf16.mxu0 0
  %124 = vmatpush1.bf16.msra.mxu0 %v96
  %125 = vmatprep.subr.bf16.mxu0 0
  %126 = vmatpush1.bf16.msra.mxu0 %v97
  %127 = vmatprep.subr.bf16.mxu0 0
  %128 = vmatpush1.bf16.msra.mxu0 %v98
  %129 = vmatprep.subr.bf16.mxu0 0
  %130 = vmatpush1.bf16.msra.mxu0 %v99
  %131 = vmatprep.subr.bf16.mxu0 0
  %132 = vmatpush1.bf16.msra.mxu0 %v100
  %133 = vmatprep.subr.bf16.mxu0 0
  %134 = vmatpush1.bf16.msra.mxu0 %v101
  %135 = vmatprep.subr.bf16.mxu0 0
  %136 = vmatpush1.bf16.msra.mxu0 %v102
  %137 = vmatprep.subr.bf16.mxu0 0
  %138 = vmatpush1.bf16.msra.mxu0 0
  %139 = vmatprep.subr.bf16.mxu0 0
  %140 = vmatpush1.bf16.msra.mxu0 0
  %141 = vmatprep.subr.bf16.mxu0 0
  %142 = vmatpush1.bf16.msra.mxu0 0
  %143 = vmatprep.subr.bf16.mxu0 0
  %144 = vmatpush1.bf16.msra.mxu0 0
  %145 = vmatprep.subr.bf16.mxu0 0
  %146 = vmatpush1.bf16.msra.mxu0 0
  %147 = vmatprep.subr.bf16.mxu0 0
  %148 = vmatpush1.bf16.msra.mxu0 0
  %149 = vmatprep.subr.bf16.mxu0 0
  %150 = vmatpush1.bf16.msra.mxu0 0
  %151 = vmatprep.mubr.bf16.mxu0 %v114
  %152 = vmatmul.mubr.bf16.gmra.mrb[0].mxu0 %v52
  %v153 = vpop.f32.mrb[0].mxu0
  %v154 = vadd.f32 0.0, %v153
  %v155 = vpop.f32.mrb[0].mxu0
  %v156 = vpop.f32.mrb[0].mxu0
  %v157 = vadd.f32 0.0, %v156
  %v158 = vpop.f32.mrb[0].mxu0
  %159 = vmatprep.mubr.bf16.mxu0 %v117
  %160 = vmatmul.mubr.bf16.gmra.mrb[0].mxu0 %v54
  %v161 = vpop.f32.mrb[0].mxu0
  %v162 = vadd.f32 0.0, %v161
  %v163 = vpop.f32.mrb[0].mxu0
  %v164 = vpop.f32.mrb[0].mxu0
  %v165 = vadd.f32 0.0, %v164
  %v166 = vpop.f32.mrb[0].mxu0
  %167 = vdwg.mxu0
  %v168 = vld [vmem:[%s2] sm:$0x1]
  %v170 = vlaneseq
  %v171 = vshrl.u32 %v170, 7
  %v172 = vsub.s32 0, %v171
  %v173 = vrot.slane %v168, %v172
  %v175 = vmul.f32 %v154, %v173
  %v176 = vmul.f32 %v157, %v173
  %v177 = vmul.f32 %v162, %v173
  %v178 = vmul.f32 %v165, %v173
  %v179 = vld [vmem:[%s3] sm:$0x1]
  %v181 = vlaneseq
  %v182 = vshrl.u32 %v181, 7
  %v183 = vsub.s32 0, %v182
  %v184 = vrot.slane %v179, %v183
  %v186 = vadd.f32 %v175, %v184
  %v187 = vadd.f32 %v176, %v184
  %v188 = vadd.f32 %v177, %v184
  %v189 = vadd.f32 %v178, %v184
  %v190 = vmax.f32 %v186, 0.0
  %v191 = vmax.f32 %v187, 0.0
  %v192 = vmax.f32 %v188, 0.0
  %v193 = vmax.f32 %v189, 0.0
  %v194 = vpack.c.bf16 %v191, %v190
  %v195 = vpack.c.bf16 %v193, %v192
  %v198 = vunpack.c.l.b16 %v194
  %v199 = vunpack.c.h.b16 %v194
  %v200 = vunpack.c.l.b16 %v195
  %v201 = vunpack.c.h.b16 %v195
  %v202 = vpack.c.b16 %v198, %v198
  %v203 = vpack.c.b16 %v199, %v199
  %v204 = vpack.c.b16 %v200, %v200
  %v205 = vpack.c.b16 %v201, %v201
  %vm210 = vcmask 257024
  %211 = vst.msk [vmem:[%s4] sm:$0xf] %vm210, %v202
  %212 = vst.msk [vmem:[%s4 + $0x4] sm:$0xf] %vm210, %v203
  %213 = vst.msk [vmem:[%s4 + $0x8] sm:$0xf] %vm210, %v204
  %214 = vst.msk [vmem:[%s4 + $0xc] sm:$0xf] %vm210, %v205
  // Predicated region
  $region18: #{unet_forward.27} parent=0 // pred_check
    _
  $region19: #{unet_forward.27} parent=0 // pred_check_branch
    %216 = sbr.rel (0) target = $region21
  $region20: #{unet_forward.27} parent=0 // pred_region
    _
  $region21: #{unet_forward.27} parent=0 // pred_fallthru
    _
  // Predicated region
  $region22: #{unet_forward.27} parent=0 // pred_check
    _
  $region23: #{unet_forward.27} parent=0 // pred_check_branch
    %218 = sbr.rel (0) target = $region25
  $region24: #{unet_forward.27} parent=0 // pred_region
    _
  $region25: #{unet_forward.27} parent=0 // pred_fallthru
    _

// kernel: unet_forward.28
$region0: #{unet_forward.28}
  #allocation0 [shape = 'u32[]', space=smem, size = 0x4, offset = 0x4, fixed_abs, tag = 'smem constant byte address 0x4 - core index']
  #allocation1 [shape = 'u32[144,128]{1,0:T(1,128)}', space=vmem, size = 0x12000, scoped, tag = 'internal scratch']
  %s0 = inlined_call_operand.vmem [shape: bf16[32,288], index: 0, kind: input, shape index: {}]
  %s1 = inlined_call_operand.vmem [shape: bf16[288,32], index: 1, kind: input, shape index: {}]
  %s2 = inlined_call_operand.vmem [shape: f32[1,32], index: 2, kind: input, shape index: {}]
  %s3 = inlined_call_operand.vmem [shape: f32[1,32], index: 3, kind: input, shape index: {}]
  %s4 = inlined_call_operand.vmem [shape: bf16[32,32], index: 4, kind: output, shape index: {}]
  %s5 = sld [smem:[#allocation0]]
  $region26: #{unet_forward.28} parent=0
    _
  %s7 = ssub.s32 1, %s5
  %s8 = scalar_select 0, %s7, %s5
  // Predicated region
  $region2: #{unet_forward.28} parent=0 // pred_check
    _
  $region3: #{unet_forward.28} parent=0 // pred_check_branch
    %10 = sbr.rel (0) target = $region5
  $region4: #{unet_forward.28} parent=0 // pred_region
    _
  $region5: #{unet_forward.28} parent=0 // pred_fallthru
    _
  // Predicated region
  $region6: #{unet_forward.28} parent=0 // pred_check
    _
  $region7: #{unet_forward.28} parent=0 // pred_check_branch
    %12 = sbr.rel (0) target = $region9
  $region8: #{unet_forward.28} parent=0 // pred_region
    _
  $region9: #{unet_forward.28} parent=0 // pred_fallthru
    _
  // Predicated region
  $region10: #{unet_forward.28} parent=0 // pred_check
    _
  $region11: #{unet_forward.28} parent=0 // pred_check_branch
    %14 = sbr.rel (0) target = $region13
  $region12: #{unet_forward.28} parent=0 // pred_region
    _
  $region13: #{unet_forward.28} parent=0 // pred_fallthru
    _
  // Predicated region
  $region14: #{unet_forward.28} parent=0 // pred_check
    _
  $region15: #{unet_forward.28} parent=0 // pred_check_branch
    %16 = sbr.rel (0) target = $region17
  $region16: #{unet_forward.28} parent=0 // pred_region
    _
  $region17: #{unet_forward.28} parent=0 // pred_fallthru
    _
  %v18 = vld [vmem:[%s0] sm:$0xff]
  %v19 = vld [vmem:[%s0 + $0x8] sm:$0xf]
  %v20 = vld [vmem:[%s0 + $0xc] sm:$0xff]
  %v21 = vld [vmem:[%s0 + $0x14] sm:$0xf]
  %v22 = vld [vmem:[%s0 + $0x18] sm:$0xff]
  %v23 = vld [vmem:[%s0 + $0x20] sm:$0xf]
  %v24 = vld [vmem:[%s0 + $0x24] sm:$0xff]
  %v25 = vld [vmem:[%s0 + $0x2c] sm:$0xf]
  %v26 = vld [vmem:[%s1] sm:$0xf]
  %v27 = vld [vmem:[%s1 + $0x4] sm:$0xf]
  %v28 = vld [vmem:[%s1 + $0x8] sm:$0xf]
  %v29 = vld [vmem:[%s1 + $0xc] sm:$0xf]
  %v30 = vld [vmem:[%s1 + $0x10] sm:$0xf]
  %v31 = vld [vmem:[%s1 + $0x14] sm:$0xf]
  %v32 = vld [vmem:[%s1 + $0x18] sm:$0xf]
  %v33 = vld [vmem:[%s1 + $0x1c] sm:$0xf]
  %v34 = vld [vmem:[%s1 + $0x20] sm:$0xf]
  %v35 = vld [vmem:[%s1 + $0x24] sm:$0xf]
  %v36 = vld [vmem:[%s1 + $0x28] sm:$0xf]
  %v37 = vld [vmem:[%s1 + $0x2c] sm:$0xf]
  %v38 = vld [vmem:[%s1 + $0x30] sm:$0xf]
  %v39 = vld [vmem:[%s1 + $0x34] sm:$0xf]
  %v40 = vld [vmem:[%s1 + $0x38] sm:$0xf]
  %v41 = vld [vmem:[%s1 + $0x3c] sm:$0xf]
  %v42 = vld [vmem:[%s1 + $0x40] sm:$0xf]
  %v43 = vld [vmem:[%s1 + $0x44] sm:$0xf]
  %v44 = vld [vmem:[%s1 + $0x48] sm:$0xf]
  %v45 = vld [vmem:[%s1 + $0x4c] sm:$0xf]
  %v46 = vld [vmem:[%s1 + $0x50] sm:$0xf]
  %v47 = vld [vmem:[%s1 + $0x54] sm:$0xf]
  %v48 = vld [vmem:[%s1 + $0x58] sm:$0xf]
  %v49 = vld [vmem:[%s1 + $0x5c] sm:$0xf]
  %v50 = vld [vmem:[%s1 + $0x60] sm:$0xf]
  %v51 = vld [vmem:[%s1 + $0x64] sm:$0xf]
  %v52 = vld [vmem:[%s1 + $0x68] sm:$0xf]
  %v53 = vld [vmem:[%s1 + $0x6c] sm:$0xf]
  %v54 = vld [vmem:[%s1 + $0x70] sm:$0xf]
  %v55 = vld [vmem:[%s1 + $0x74] sm:$0xf]
  %v56 = vld [vmem:[%s1 + $0x78] sm:$0xf]
  %v57 = vld [vmem:[%s1 + $0x7c] sm:$0xf]
  %v58 = vld [vmem:[%s1 + $0x80] sm:$0xf]
  %v59 = vld [vmem:[%s1 + $0x84] sm:$0xf]
  %v60 = vld [vmem:[%s1 + $0x88] sm:$0xf]
  %v61 = vld [vmem:[%s1 + $0x8c] sm:$0xf]
  %v70 = vunpack.c.l.b16 %v18
  %v71 = vunpack.c.h.b16 %v18
  %v72 = vunpack.c.l.b16 %v19
  %v73 = vunpack.c.l.b16 %v20
  %v74 = vunpack.c.h.b16 %v20
  %v75 = vunpack.c.l.b16 %v21
  %v76 = vunpack.c.l.b16 %v22
  %v77 = vunpack.c.h.b16 %v22
  %v78 = vunpack.c.l.b16 %v23
  %v79 = vunpack.c.l.b16 %v24
  %v80 = vunpack.c.h.b16 %v24
  %v81 = vunpack.c.l.b16 %v25
  %v82 = vpack.c.b16 %v73, %v70
  %v83 = vpack.c.b16 %v74, %v71
  %v84 = vpack.c.b16 %v75, %v72
  %v85 = vpack.c.b16 %v79, %v76
  %v86 = vpack.c.b16 %v80, %v77
  %v87 = vpack.c.b16 %v81, %v78
  %v128 = vunpack.c.l.b16 %v26
  %v129 = vunpack.c.l.b16 %v27
  %v130 = vunpack.c.l.b16 %v28
  %v131 = vunpack.c.l.b16 %v29
  %v132 = vunpack.c.l.b16 %v30
  %v133 = vunpack.c.l.b16 %v31
  %v134 = vunpack.c.l.b16 %v32
  %v135 = vunpack.c.l.b16 %v33
  %v136 = vunpack.c.l.b16 %v34
  %v137 = vunpack.c.l.b16 %v35
  %v138 = vunpack.c.l.b16 %v36
  %v139 = vunpack.c.l.b16 %v37
  %v140 = vunpack.c.l.b16 %v38
  %v141 = vunpack.c.l.b16 %v39
  %v142 = vunpack.c.l.b16 %v40
  %v143 = vunpack.c.l.b16 %v41
  %v144 = vunpack.c.l.b16 %v42
  %v145 = vunpack.c.l.b16 %v43
  %v146 = vunpack.c.l.b16 %v44
  %v147 = vunpack.c.l.b16 %v45
  %v148 = vunpack.c.l.b16 %v46
  %v149 = vunpack.c.l.b16 %v47
  %v150 = vunpack.c.l.b16 %v48
  %v151 = vunpack.c.l.b16 %v49
  %v152 = vunpack.c.l.b16 %v50
  %v153 = vunpack.c.l.b16 %v51
  %v154 = vunpack.c.l.b16 %v52
  %v155 = vunpack.c.l.b16 %v53
  %v156 = vunpack.c.l.b16 %v54
  %v157 = vunpack.c.l.b16 %v55
  %v158 = vunpack.c.l.b16 %v56
  %v159 = vunpack.c.l.b16 %v57
  %v160 = vunpack.c.l.b16 %v58
  %v161 = vunpack.c.l.b16 %v59
  %v162 = vunpack.c.l.b16 %v60
  %v163 = vunpack.c.l.b16 %v61
  %v164 = vpack.c.b16 %v129, %v128
  %v165 = vpack.c.b16 %v131, %v130
  %v166 = vpack.c.b16 %v133, %v132
  %v167 = vpack.c.b16 %v135, %v134
  %v168 = vpack.c.b16 %v137, %v136
  %v169 = vpack.c.b16 %v139, %v138
  %v170 = vpack.c.b16 %v141, %v140
  %v171 = vpack.c.b16 %v143, %v142
  %v172 = vpack.c.b16 %v145, %v144
  %v173 = vpack.c.b16 %v147, %v146
  %v174 = vpack.c.b16 %v149, %v148
  %v175 = vpack.c.b16 %v151, %v150
  %v176 = vpack.c.b16 %v153, %v152
  %v177 = vpack.c.b16 %v155, %v154
  %v178 = vpack.c.b16 %v157, %v156
  %v179 = vpack.c.b16 %v159, %v158
  %v180 = vpack.c.b16 %v161, %v160
  %v181 = vpack.c.b16 %v163, %v162
  %vm200 = vcmask 261120
  %v202 = vsel %vm200, %v84, 0
  %v205 = vsel %vm200, %v87, 0
  %207 = vmatprep.subr.bf16.mxu0 0
  %208 = vmatpush1.bf16.msra.mxu0 %v164
  %209 = vmatprep.subr.bf16.mxu0 0
  %210 = vmatpush1.bf16.msra.mxu0 %v165
  %211 = vmatprep.subr.bf16.mxu0 0
  %212 = vmatpush1.bf16.msra.mxu0 %v166
  %213 = vmatprep.subr.bf16.mxu0 0
  %214 = vmatpush1.bf16.msra.mxu0 %v167
  %215 = vmatprep.subr.bf16.mxu0 0
  %216 = vmatpush1.bf16.msra.mxu0 %v168
  %217 = vmatprep.subr.bf16.mxu0 0
  %218 = vmatpush1.bf16.msra.mxu0 %v169
  %219 = vmatprep.subr.bf16.mxu0 0
  %220 = vmatpush1.bf16.msra.mxu0 %v170
  %221 = vmatprep.subr.bf16.mxu0 0
  %222 = vmatpush1.bf16.msra.mxu0 %v171
  %223 = vmatprep.subr.bf16.mxu0 0
  %224 = vmatpush1.bf16.msra.mxu0 %v172
  %225 = vmatprep.subr.bf16.mxu0 0
  %226 = vmatpush1.bf16.msra.mxu0 %v173
  %227 = vmatprep.subr.bf16.mxu0 0
  %228 = vmatpush1.bf16.msra.mxu0 %v174
  %229 = vmatprep.subr.bf16.mxu0 0
  %230 = vmatpush1.bf16.msra.mxu0 %v175
  %231 = vmatprep.subr.bf16.mxu0 0
  %232 = vmatpush1.bf16.msra.mxu0 %v176
  %233 = vmatprep.subr.bf16.mxu0 0
  %234 = vmatpush1.bf16.msra.mxu0 %v177
  %235 = vmatprep.subr.bf16.mxu0 0
  %236 = vmatpush1.bf16.msra.mxu0 %v178
  %237 = vmatprep.subr.bf16.mxu0 0
  %238 = vmatpush1.bf16.msra.mxu0 %v179
  %239 = vmatprep.mubr.bf16.mxu0 %v83
  %240 = vmatmul.mubr.bf16.gmra.mrb[0].mxu0 %v82
  %v241 = vpop.f32.mrb[0].mxu0
  %v242 = vadd.f32 0.0, %v241
  %v243 = vpop.f32.mrb[0].mxu0
  %v244 = vpop.f32.mrb[0].mxu0
  %v245 = vadd.f32 0.0, %v244
  %v246 = vpop.f32.mrb[0].mxu0
  %247 = vmatprep.mubr.bf16.mxu0 %v86
  %248 = vmatmul.mubr.bf16.gmra.mrb[0].mxu0 %v85
  %v249 = vpop.f32.mrb[0].mxu0
  %v250 = vadd.f32 0.0, %v249
  %v251 = vpop.f32.mrb[0].mxu0
  %v252 = vpop.f32.mrb[0].mxu0
  %v253 = vadd.f32 0.0, %v252
  %v254 = vpop.f32.mrb[0].mxu0
  %255 = vdwg.mxu0
  %256 = vmatprep.subr.bf16.mxu0 0
  %257 = vmatpush1.bf16.msra.mxu0 %v180
  %258 = vmatprep.subr.bf16.mxu0 0
  %259 = vmatpush1.bf16.msra.mxu0 %v181
  %260 = vmatprep.subr.bf16.mxu0 0
  %261 = vmatpush1.bf16.msra.mxu0 0
  %262 = vmatprep.subr.bf16.mxu0 0
  %263 = vmatpush1.bf16.msra.mxu0 0
  %264 = vmatprep.subr.bf16.mxu0 0
  %265 = vmatpush1.bf16.msra.mxu0 0
  %266 = vmatprep.subr.bf16.mxu0 0
  %267 = vmatpush1.bf16.msra.mxu0 0
  %268 = vmatprep.subr.bf16.mxu0 0
  %269 = vmatpush1.bf16.msra.mxu0 0
  %270 = vmatprep.subr.bf16.mxu0 0
  %271 = vmatpush1.bf16.msra.mxu0 0
  %272 = vmatprep.subr.bf16.mxu0 0
  %273 = vmatpush1.bf16.msra.mxu0 0
  %274 = vmatprep.subr.bf16.mxu0 0
  %275 = vmatpush1.bf16.msra.mxu0 0
  %276 = vmatprep.subr.bf16.mxu0 0
  %277 = vmatpush1.bf16.msra.mxu0 0
  %278 = vmatprep.subr.bf16.mxu0 0
  %279 = vmatpush1.bf16.msra.mxu0 0
  %280 = vmatprep.subr.bf16.mxu0 0
  %281 = vmatpush1.bf16.msra.mxu0 0
  %282 = vmatprep.subr.bf16.mxu0 0
  %283 = vmatpush1.bf16.msra.mxu0 0
  %284 = vmatprep.subr.bf16.mxu0 0
  %285 = vmatpush1.bf16.msra.mxu0 0
  %286 = vmatprep.subr.bf16.mxu0 0
  %287 = vmatpush1.bf16.msra.mxu0 0
  %288 = vmatprep.mubr.bf16.mxu0 0
  %289 = vmatmul.mubr.bf16.gmra.mrb[0].mxu0 %v202
  %v290 = vpop.f32.mrb[0].mxu0
  %v291 = vadd.f32 %v242, %v290
  %v292 = vpop.f32.mrb[0].mxu0
  %v293 = vpop.f32.mrb[0].mxu0
  %v294 = vadd.f32 %v245, %v293
  %v295 = vpop.f32.mrb[0].mxu0
  %296 = vmatprep.mubr.bf16.mxu0 0
  %297 = vmatmul.mubr.bf16.gmra.mrb[0].mxu0 %v205
  %v298 = vpop.f32.mrb[0].mxu0
  %v299 = vadd.f32 %v250, %v298
  %v300 = vpop.f32.mrb[0].mxu0
  %v301 = vpop.f32.mrb[0].mxu0
  %v302 = vadd.f32 %v253, %v301
  %v303 = vpop.f32.mrb[0].mxu0
  %304 = vdwg.mxu0
  %v305 = vld [vmem:[%s2] sm:$0x1]
  %v307 = vlaneseq
  %v308 = vshrl.u32 %v307, 7
  %v309 = vsub.s32 0, %v308
  %v310 = vrot.slane %v305, %v309
  %v312 = vmul.f32 %v291, %v310
  %v313 = vmul.f32 %v294, %v310
  %v314 = vmul.f32 %v299, %v310
  %v315 = vmul.f32 %v302, %v310
  %v316 = vld [vmem:[%s3] sm:$0x1]
  %v318 = vlaneseq
  %v319 = vshrl.u32 %v318, 7
  %v320 = vsub.s32 0, %v319
  %v321 = vrot.slane %v316, %v320
  %v323 = vadd.f32 %v312, %v321
  %v324 = vadd.f32 %v313, %v321
  %v325 = vadd.f32 %v314, %v321
  %v326 = vadd.f32 %v315, %v321
  %v327 = vmax.f32 %v323, 0.0
  %v328 = vmax.f32 %v324, 0.0
  %v329 = vmax.f32 %v325, 0.0
  %v330 = vmax.f32 %v326, 0.0
  %v331 = vpack.c.bf16 %v328, %v327
  %v332 = vpack.c.bf16 %v330, %v329
  %v335 = vunpack.c.l.b16 %v331
  %v336 = vunpack.c.h.b16 %v331
  %v337 = vunpack.c.l.b16 %v332
  %v338 = vunpack.c.h.b16 %v332
  %v339 = vpack.c.b16 %v335, %v335
  %v340 = vpack.c.b16 %v336, %v336
  %v341 = vpack.c.b16 %v337, %v337
  %v342 = vpack.c.b16 %v338, %v338
  %vm347 = vcmask 257024
  %348 = vst.msk [vmem:[%s4] sm:$0xf] %vm347, %v339
  %349 = vst.msk [vmem:[%s4 + $0x4] sm:$0xf] %vm347, %v340
  %350 = vst.msk [vmem:[%s4 + $0x8] sm:$0xf] %vm347, %v341
  %351 = vst.msk [vmem:[%s4 + $0xc] sm:$0xf] %vm347, %v342
  // Predicated region
  $region18: #{unet_forward.28} parent=0 // pred_check
    _
  $region19: #{unet_forward.28} parent=0 // pred_check_branch
    %353 = sbr.rel (0) target = $region21
  $region20: #{unet_forward.28} parent=0 // pred_region
    _
  $region21: #{unet_forward.28} parent=0 // pred_fallthru
    _
  // Predicated region
  $region22: #{unet_forward.28} parent=0 // pred_check
    _
  $region23: #{unet_forward.28} parent=0 // pred_check_branch
    %355 = sbr.rel (0) target = $region25
  $region24: #{unet_forward.28} parent=0 // pred_region
    _
  $region25: #{unet_forward.28} parent=0 // pred_fallthru
    _

// kernel: unet_forward.29
$region0: #{unet_forward.29}
  #allocation0 [shape = 'u32[]', space=smem, size = 0x4, offset = 0x4, fixed_abs, tag = 'smem constant byte address 0x4 - core index']
  #allocation1 [shape = 'u32[144,128]{1,0:T(1,128)}', space=vmem, size = 0x12000, scoped, tag = 'internal scratch']
  %s0 = inlined_call_operand.vmem [shape: bf16[8,288], index: 0, kind: input, shape index: {}]
  %s1 = inlined_call_operand.vmem [shape: bf16[288,64], index: 1, kind: input, shape index: {}]
  %s2 = inlined_call_operand.vmem [shape: f32[1,64], index: 2, kind: input, shape index: {}]
  %s3 = inlined_call_operand.vmem [shape: f32[1,64], index: 3, kind: input, shape index: {}]
  %s4 = inlined_call_operand.vmem [shape: bf16[8,64], index: 4, kind: output, shape index: {}]
  %s5 = sld [smem:[#allocation0]]
  $region26: #{unet_forward.29} parent=0
    _
  %s7 = ssub.s32 1, %s5
  %s8 = scalar_select 0, %s7, %s5
  // Predicated region
  $region2: #{unet_forward.29} parent=0 // pred_check
    _
  $region3: #{unet_forward.29} parent=0 // pred_check_branch
    %10 = sbr.rel (0) target = $region5
  $region4: #{unet_forward.29} parent=0 // pred_region
    _
  $region5: #{unet_forward.29} parent=0 // pred_fallthru
    _
  // Predicated region
  $region6: #{unet_forward.29} parent=0 // pred_check
    _
  $region7: #{unet_forward.29} parent=0 // pred_check_branch
    %12 = sbr.rel (0) target = $region9
  $region8: #{unet_forward.29} parent=0 // pred_region
    _
  $region9: #{unet_forward.29} parent=0 // pred_fallthru
    _
  // Predicated region
  $region10: #{unet_forward.29} parent=0 // pred_check
    _
  $region11: #{unet_forward.29} parent=0 // pred_check_branch
    %14 = sbr.rel (0) target = $region13
  $region12: #{unet_forward.29} parent=0 // pred_region
    _
  $region13: #{unet_forward.29} parent=0 // pred_fallthru
    _
  // Predicated region
  $region14: #{unet_forward.29} parent=0 // pred_check
    _
  $region15: #{unet_forward.29} parent=0 // pred_check_branch
    %16 = sbr.rel (0) target = $region17
  $region16: #{unet_forward.29} parent=0 // pred_region
    _
  $region17: #{unet_forward.29} parent=0 // pred_fallthru
    _
  %v18 = vld [vmem:[%s0] sm:$0xff]
  %v19 = vld [vmem:[%s0 + $0x8] sm:$0xf]
  %v20 = vld [vmem:[%s1] sm:$0xf]
  %v21 = vld [vmem:[%s1 + $0x4] sm:$0xf]
  %v22 = vld [vmem:[%s1 + $0x8] sm:$0xf]
  %v23 = vld [vmem:[%s1 + $0xc] sm:$0xf]
  %v24 = vld [vmem:[%s1 + $0x10] sm:$0xf]
  %v25 = vld [vmem:[%s1 + $0x14] sm:$0xf]
  %v26 = vld [vmem:[%s1 + $0x18] sm:$0xf]
  %v27 = vld [vmem:[%s1 + $0x1c] sm:$0xf]
  %v28 = vld [vmem:[%s1 + $0x20] sm:$0xf]
  %v29 = vld [vmem:[%s1 + $0x24] sm:$0xf]
  %v30 = vld [vmem:[%s1 + $0x28] sm:$0xf]
  %v31 = vld [vmem:[%s1 + $0x2c] sm:$0xf]
  %v32 = vld [vmem:[%s1 + $0x30] sm:$0xf]
  %v33 = vld [vmem:[%s1 + $0x34] sm:$0xf]
  %v34 = vld [vmem:[%s1 + $0x38] sm:$0xf]
  %v35 = vld [vmem:[%s1 + $0x3c] sm:$0xf]
  %v36 = vld [vmem:[%s1 + $0x40] sm:$0xf]
  %v37 = vld [vmem:[%s1 + $0x44] sm:$0xf]
  %v38 = vld [vmem:[%s1 + $0x48] sm:$0xf]
  %v39 = vld [vmem:[%s1 + $0x4c] sm:$0xf]
  %v40 = vld [vmem:[%s1 + $0x50] sm:$0xf]
  %v41 = vld [vmem:[%s1 + $0x54] sm:$0xf]
  %v42 = vld [vmem:[%s1 + $0x58] sm:$0xf]
  %v43 = vld [vmem:[%s1 + $0x5c] sm:$0xf]
  %v44 = vld [vmem:[%s1 + $0x60] sm:$0xf]
  %v45 = vld [vmem:[%s1 + $0x64] sm:$0xf]
  %v46 = vld [vmem:[%s1 + $0x68] sm:$0xf]
  %v47 = vld [vmem:[%s1 + $0x6c] sm:$0xf]
  %v48 = vld [vmem:[%s1 + $0x70] sm:$0xf]
  %v49 = vld [vmem:[%s1 + $0x74] sm:$0xf]
  %v50 = vld [vmem:[%s1 + $0x78] sm:$0xf]
  %v51 = vld [vmem:[%s1 + $0x7c] sm:$0xf]
  %v52 = vld [vmem:[%s1 + $0x80] sm:$0xf]
  %v53 = vld [vmem:[%s1 + $0x84] sm:$0xf]
  %v54 = vld [vmem:[%s1 + $0x88] sm:$0xf]
  %v55 = vld [vmem:[%s1 + $0x8c] sm:$0xf]
  %v58 = vunpack.c.l.b16 %v18
  %v59 = vunpack.c.h.b16 %v18
  %v60 = vunpack.c.l.b16 %v19
  %v61 = vpack.c.b16 %v58, %v58
  %v62 = vpack.c.b16 %v59, %v59
  %v63 = vpack.c.b16 %v60, %v60
  %v102 = vunpack.c.l.b16 %v20
  %v103 = vunpack.c.l.b16 %v21
  %v104 = vunpack.c.l.b16 %v22
  %v105 = vunpack.c.l.b16 %v23
  %v106 = vunpack.c.l.b16 %v24
  %v107 = vunpack.c.l.b16 %v25
  %v108 = vunpack.c.l.b16 %v26
  %v109 = vunpack.c.l.b16 %v27
  %v110 = vunpack.c.l.b16 %v28
  %v111 = vunpack.c.l.b16 %v29
  %v112 = vunpack.c.l.b16 %v30
  %v113 = vunpack.c.l.b16 %v31
  %v114 = vunpack.c.l.b16 %v32
  %v115 = vunpack.c.l.b16 %v33
  %v116 = vunpack.c.l.b16 %v34
  %v117 = vunpack.c.l.b16 %v35
  %v118 = vunpack.c.l.b16 %v36
  %v119 = vunpack.c.l.b16 %v37
  %v120 = vunpack.c.l.b16 %v38
  %v121 = vunpack.c.l.b16 %v39
  %v122 = vunpack.c.l.b16 %v40
  %v123 = vunpack.c.l.b16 %v41
  %v124 = vunpack.c.l.b16 %v42
  %v125 = vunpack.c.l.b16 %v43
  %v126 = vunpack.c.l.b16 %v44
  %v127 = vunpack.c.l.b16 %v45
  %v128 = vunpack.c.l.b16 %v46
  %v129 = vunpack.c.l.b16 %v47
  %v130 = vunpack.c.l.b16 %v48
  %v131 = vunpack.c.l.b16 %v49
  %v132 = vunpack.c.l.b16 %v50
  %v133 = vunpack.c.l.b16 %v51
  %v134 = vunpack.c.l.b16 %v52
  %v135 = vunpack.c.l.b16 %v53
  %v136 = vunpack.c.l.b16 %v54
  %v137 = vunpack.c.l.b16 %v55
  %v138 = vpack.c.b16 %v103, %v102
  %v139 = vpack.c.b16 %v105, %v104
  %v140 = vpack.c.b16 %v107, %v106
  %v141 = vpack.c.b16 %v109, %v108
  %v142 = vpack.c.b16 %v111, %v110
  %v143 = vpack.c.b16 %v113, %v112
  %v144 = vpack.c.b16 %v115, %v114
  %v145 = vpack.c.b16 %v117, %v116
  %v146 = vpack.c.b16 %v119, %v118
  %v147 = vpack.c.b16 %v121, %v120
  %v148 = vpack.c.b16 %v123, %v122
  %v149 = vpack.c.b16 %v125, %v124
  %v150 = vpack.c.b16 %v127, %v126
  %v151 = vpack.c.b16 %v129, %v128
  %v152 = vpack.c.b16 %v131, %v130
  %v153 = vpack.c.b16 %v133, %v132
  %v154 = vpack.c.b16 %v135, %v134
  %v155 = vpack.c.b16 %v137, %v136
  %vm174 = vcmask 261120
  %v176 = vsel %vm174, %v63, 0
  %178 = vmatprep.subr.bf16.mxu0 0
  %179 = vmatpush1.bf16.msra.mxu0 %v138
  %180 = vmatprep.subr.bf16.mxu0 0
  %181 = vmatpush1.bf16.msra.mxu0 %v139
  %182 = vmatprep.subr.bf16.mxu0 0
  %183 = vmatpush1.bf16.msra.mxu0 %v140
  %184 = vmatprep.subr.bf16.mxu0 0
  %185 = vmatpush1.bf16.msra.mxu0 %v141
  %186 = vmatprep.subr.bf16.mxu0 0
  %187 = vmatpush1.bf16.msra.mxu0 %v142
  %188 = vmatprep.subr.bf16.mxu0 0
  %189 = vmatpush1.bf16.msra.mxu0 %v143
  %190 = vmatprep.subr.bf16.mxu0 0
  %191 = vmatpush1.bf16.msra.mxu0 %v144
  %192 = vmatprep.subr.bf16.mxu0 0
  %193 = vmatpush1.bf16.msra.mxu0 %v145
  %194 = vmatprep.subr.bf16.mxu0 0
  %195 = vmatpush1.bf16.msra.mxu0 %v146
  %196 = vmatprep.subr.bf16.mxu0 0
  %197 = vmatpush1.bf16.msra.mxu0 %v147
  %198 = vmatprep.subr.bf16.mxu0 0
  %199 = vmatpush1.bf16.msra.mxu0 %v148
  %200 = vmatprep.subr.bf16.mxu0 0
  %201 = vmatpush1.bf16.msra.mxu0 %v149
  %202 = vmatprep.subr.bf16.mxu0 0
  %203 = vmatpush1.bf16.msra.mxu0 %v150
  %204 = vmatprep.subr.bf16.mxu0 0
  %205 = vmatpush1.bf16.msra.mxu0 %v151
  %206 = vmatprep.subr.bf16.mxu0 0
  %207 = vmatpush1.bf16.msra.mxu0 %v152
  %208 = vmatprep.subr.bf16.mxu0 0
  %209 = vmatpush1.bf16.msra.mxu0 %v153
  %210 = vmatprep.mubr.bf16.mxu0 %v62
  %211 = vmatmul.mubr.bf16.gmra.mrb[0].mxu0 %v61
  %v212 = vpop.f32.mrb[0].mxu0
  %v213 = vadd.f32 0.0, %v212
  %v214 = vpop.f32.mrb[0].mxu0
  %v215 = vpop.f32.mrb[0].mxu0
  %v216 = vpop.f32.mrb[0].mxu0
  %217 = vdwg.mxu0
  %218 = vmatprep.subr.bf16.mxu0 0
  %219 = vmatpush1.bf16.msra.mxu0 %v154
  %220 = vmatprep.subr.bf16.mxu0 0
  %221 = vmatpush1.bf16.msra.mxu0 %v155
  %222 = vmatprep.subr.bf16.mxu0 0
  %223 = vmatpush1.bf16.msra.mxu0 0
  %224 = vmatprep.subr.bf16.mxu0 0
  %225 = vmatpush1.bf16.msra.mxu0 0
  %226 = vmatprep.subr.bf16.mxu0 0
  %227 = vmatpush1.bf16.msra.mxu0 0
  %228 = vmatprep.subr.bf16.mxu0 0
  %229 = vmatpush1.bf16.msra.mxu0 0
  %230 = vmatprep.subr.bf16.mxu0 0
  %231 = vmatpush1.bf16.msra.mxu0 0
  %232 = vmatprep.subr.bf16.mxu0 0
  %233 = vmatpush1.bf16.msra.mxu0 0
  %234 = vmatprep.subr.bf16.mxu0 0
  %235 = vmatpush1.bf16.msra.mxu0 0
  %236 = vmatprep.subr.bf16.mxu0 0
  %237 = vmatpush1.bf16.msra.mxu0 0
  %238 = vmatprep.subr.bf16.mxu0 0
  %239 = vmatpush1.bf16.msra.mxu0 0
  %240 = vmatprep.subr.bf16.mxu0 0
  %241 = vmatpush1.bf16.msra.mxu0 0
  %242 = vmatprep.subr.bf16.mxu0 0
  %243 = vmatpush1.bf16.msra.mxu0 0
  %244 = vmatprep.subr.bf16.mxu0 0
  %245 = vmatpush1.bf16.msra.mxu0 0
  %246 = vmatprep.subr.bf16.mxu0 0
  %247 = vmatpush1.bf16.msra.mxu0 0
  %248 = vmatprep.subr.bf16.mxu0 0
  %249 = vmatpush1.bf16.msra.mxu0 0
  %250 = vmatprep.mubr.bf16.mxu0 0
  %251 = vmatmul.mubr.bf16.gmra.mrb[0].mxu0 %v176
  %v252 = vpop.f32.mrb[0].mxu0
  %v253 = vadd.f32 %v213, %v252
  %v254 = vpop.f32.mrb[0].mxu0
  %v255 = vpop.f32.mrb[0].mxu0
  %v256 = vpop.f32.mrb[0].mxu0
  %257 = vdwg.mxu0
  %v258 = vld [vmem:[%s2] sm:$0x1]
  %v260 = vlaneseq
  %v261 = vshrl.u32 %v260, 7
  %v262 = vsub.s32 0, %v261
  %v263 = vrot.slane %v258, %v262
  %v265 = vmul.f32 %v253, %v263
  %v266 = vld [vmem:[%s3] sm:$0x1]
  %v268 = vlaneseq
  %v269 = vshrl.u32 %v268, 7
  %v270 = vsub.s32 0, %v269
  %v271 = vrot.slane %v266, %v270
  %v273 = vadd.f32 %v265, %v271
  %v274 = vmax.f32 %v273, 0.0
  %v275 = vpack.c.bf16 %v274, %v274
  %vm276 = vcmask 519168
  %277 = vst.msk [vmem:[%s4] sm:$0xf] %vm276, %v275
  // Predicated region
  $region18: #{unet_forward.29} parent=0 // pred_check
    _
  $region19: #{unet_forward.29} parent=0 // pred_check_branch
    %279 = sbr.rel (0) target = $region21
  $region20: #{unet_forward.29} parent=0 // pred_region
    _
  $region21: #{unet_forward.29} parent=0 // pred_fallthru
    _
  // Predicated region
  $region22: #{unet_forward.29} parent=0 // pred_check
    _
  $region23: #{unet_forward.29} parent=0 // pred_check_branch
    %281 = sbr.rel (0) target = $region25
  $region24: #{unet_forward.29} parent=0 // pred_region
    _
  $region25: #{unet_forward.29} parent=0 // pred_fallthru
    _

// kernel: unet_forward.30
$region0: #{unet_forward.30}
  #allocation0 [shape = 'u32[]', space=smem, size = 0x4, offset = 0x4, fixed_abs, tag = 'smem constant byte address 0x4 - core index']
  #allocation1 [shape = 'u32[144,128]{1,0:T(1,128)}', space=vmem, size = 0x12000, scoped, tag = 'internal scratch']
  %s0 = inlined_call_operand.vmem [shape: bf16[8,576], index: 0, kind: input, shape index: {}]
  %s1 = inlined_call_operand.vmem [shape: bf16[576,64], index: 1, kind: input, shape index: {}]
  %s2 = inlined_call_operand.vmem [shape: f32[1,64], index: 2, kind: input, shape index: {}]
  %s3 = inlined_call_operand.vmem [shape: f32[1,64], index: 3, kind: input, shape index: {}]
  %s4 = inlined_call_operand.vmem [shape: bf16[8,64], index: 4, kind: output, shape index: {}]
  %s5 = sld [smem:[#allocation0]]
  $region26: #{unet_forward.30} parent=0
    _
  %s7 = ssub.s32 1, %s5
  %s8 = scalar_select 0, %s7, %s5
  // Predicated region
  $region2: #{unet_forward.30} parent=0 // pred_check
    _
  $region3: #{unet_forward.30} parent=0 // pred_check_branch
    %10 = sbr.rel (0) target = $region5
  $region4: #{unet_forward.30} parent=0 // pred_region
    _
  $region5: #{unet_forward.30} parent=0 // pred_fallthru
    _
  // Predicated region
  $region6: #{unet_forward.30} parent=0 // pred_check
    _
  $region7: #{unet_forward.30} parent=0 // pred_check_branch
    %12 = sbr.rel (0) target = $region9
  $region8: #{unet_forward.30} parent=0 // pred_region
    _
  $region9: #{unet_forward.30} parent=0 // pred_fallthru
    _
  // Predicated region
  $region10: #{unet_forward.30} parent=0 // pred_check
    _
  $region11: #{unet_forward.30} parent=0 // pred_check_branch
    %14 = sbr.rel (0) target = $region13
  $region12: #{unet_forward.30} parent=0 // pred_region
    _
  $region13: #{unet_forward.30} parent=0 // pred_fallthru
    _
  // Predicated region
  $region14: #{unet_forward.30} parent=0 // pred_check
    _
  $region15: #{unet_forward.30} parent=0 // pred_check_branch
    %16 = sbr.rel (0) target = $region17
  $region16: #{unet_forward.30} parent=0 // pred_region
    _
  $region17: #{unet_forward.30} parent=0 // pred_fallthru
    _
  %v18 = vld [vmem:[%s0] sm:$0xff]
  %v19 = vld [vmem:[%s0 + $0x8] sm:$0xff]
  %v20 = vld [vmem:[%s0 + $0x10] sm:$0xf]
  %v21 = vld [vmem:[%s1] sm:$0xf]
  %v22 = vld [vmem:[%s1 + $0x4] sm:$0xf]
  %v23 = vld [vmem:[%s1 + $0x8] sm:$0xf]
  %v24 = vld [vmem:[%s1 + $0xc] sm:$0xf]
  %v25 = vld [vmem:[%s1 + $0x10] sm:$0xf]
  %v26 = vld [vmem:[%s1 + $0x14] sm:$0xf]
  %v27 = vld [vmem:[%s1 + $0x18] sm:$0xf]
  %v28 = vld [vmem:[%s1 + $0x1c] sm:$0xf]
  %v29 = vld [vmem:[%s1 + $0x20] sm:$0xf]
  %v30 = vld [vmem:[%s1 + $0x24] sm:$0xf]
  %v31 = vld [vmem:[%s1 + $0x28] sm:$0xf]
  %v32 = vld [vmem:[%s1 + $0x2c] sm:$0xf]
  %v33 = vld [vmem:[%s1 + $0x30] sm:$0xf]
  %v34 = vld [vmem:[%s1 + $0x34] sm:$0xf]
  %v35 = vld [vmem:[%s1 + $0x38] sm:$0xf]
  %v36 = vld [vmem:[%s1 + $0x3c] sm:$0xf]
  %v37 = vld [vmem:[%s1 + $0x40] sm:$0xf]
  %v38 = vld [vmem:[%s1 + $0x44] sm:$0xf]
  %v39 = vld [vmem:[%s1 + $0x48] sm:$0xf]
  %v40 = vld [vmem:[%s1 + $0x4c] sm:$0xf]
  %v41 = vld [vmem:[%s1 + $0x50] sm:$0xf]
  %v42 = vld [vmem:[%s1 + $0x54] sm:$0xf]
  %v43 = vld [vmem:[%s1 + $0x58] sm:$0xf]
  %v44 = vld [vmem:[%s1 + $0x5c] sm:$0xf]
  %v45 = vld [vmem:[%s1 + $0x60] sm:$0xf]
  %v46 = vld [vmem:[%s1 + $0x64] sm:$0xf]
  %v47 = vld [vmem:[%s1 + $0x68] sm:$0xf]
  %v48 = vld [vmem:[%s1 + $0x6c] sm:$0xf]
  %v49 = vld [vmem:[%s1 + $0x70] sm:$0xf]
  %v50 = vld [vmem:[%s1 + $0x74] sm:$0xf]
  %v51 = vld [vmem:[%s1 + $0x78] sm:$0xf]
  %v52 = vld [vmem:[%s1 + $0x7c] sm:$0xf]
  %v53 = vld [vmem:[%s1 + $0x80] sm:$0xf]
  %v54 = vld [vmem:[%s1 + $0x84] sm:$0xf]
  %v55 = vld [vmem:[%s1 + $0x88] sm:$0xf]
  %v56 = vld [vmem:[%s1 + $0x8c] sm:$0xf]
  %v57 = vld [vmem:[%s1 + $0x90] sm:$0xf]
  %v58 = vld [vmem:[%s1 + $0x94] sm:$0xf]
  %v59 = vld [vmem:[%s1 + $0x98] sm:$0xf]
  %v60 = vld [vmem:[%s1 + $0x9c] sm:$0xf]
  %v61 = vld [vmem:[%s1 + $0xa0] sm:$0xf]
  %v62 = vld [vmem:[%s1 + $0xa4] sm:$0xf]
  %v63 = vld [vmem:[%s1 + $0xa8] sm:$0xf]
  %v64 = vld [vmem:[%s1 + $0xac] sm:$0xf]
  %v65 = vld [vmem:[%s1 + $0xb0] sm:$0xf]
  %v66 = vld [vmem:[%s1 + $0xb4] sm:$0xf]
  %v67 = vld [vmem:[%s1 + $0xb8] sm:$0xf]
  %v68 = vld [vmem:[%s1 + $0xbc] sm:$0xf]
  %v69 = vld [vmem:[%s1 + $0xc0] sm:$0xf]
  %v70 = vld [vmem:[%s1 + $0xc4] sm:$0xf]
  %v71 = vld [vmem:[%s1 + $0xc8] sm:$0xf]
  %v72 = vld [vmem:[%s1 + $0xcc] sm:$0xf]
  %v73 = vld [vmem:[%s1 + $0xd0] sm:$0xf]
  %v74 = vld [vmem:[%s1 + $0xd4] sm:$0xf]
  %v75 = vld [vmem:[%s1 + $0xd8] sm:$0xf]
  %v76 = vld [vmem:[%s1 + $0xdc] sm:$0xf]
  %v77 = vld [vmem:[%s1 + $0xe0] sm:$0xf]
  %v78 = vld [vmem:[%s1 + $0xe4] sm:$0xf]
  %v79 = vld [vmem:[%s1 + $0xe8] sm:$0xf]
  %v80 = vld [vmem:[%s1 + $0xec] sm:$0xf]
  %v81 = vld [vmem:[%s1 + $0xf0] sm:$0xf]
  %v82 = vld [vmem:[%s1 + $0xf4] sm:$0xf]
  %v83 = vld [vmem:[%s1 + $0xf8] sm:$0xf]
  %v84 = vld [vmem:[%s1 + $0xfc] sm:$0xf]
  %v85 = vld [vmem:[%s1 + $0x100] sm:$0xf]
  %v86 = vld [vmem:[%s1 + $0x104] sm:$0xf]
  %v87 = vld [vmem:[%s1 + $0x108] sm:$0xf]
  %v88 = vld [vmem:[%s1 + $0x10c] sm:$0xf]
  %v89 = vld [vmem:[%s1 + $0x110] sm:$0xf]
  %v90 = vld [vmem:[%s1 + $0x114] sm:$0xf]
  %v91 = vld [vmem:[%s1 + $0x118] sm:$0xf]
  %v92 = vld [vmem:[%s1 + $0x11c] sm:$0xf]
  %v96 = vunpack.c.l.b16 %v18
  %v97 = vunpack.c.h.b16 %v18
  %v98 = vunpack.c.l.b16 %v19
  %v99 = vunpack.c.h.b16 %v19
  %v100 = vunpack.c.l.b16 %v20
  %v101 = vpack.c.b16 %v96, %v96
  %v102 = vpack.c.b16 %v97, %v97
  %v103 = vpack.c.b16 %v98, %v98
  %v104 = vpack.c.b16 %v99, %v99
  %v105 = vpack.c.b16 %v100, %v100
  %v182 = vunpack.c.l.b16 %v21
  %v183 = vunpack.c.l.b16 %v22
  %v184 = vunpack.c.l.b16 %v23
  %v185 = vunpack.c.l.b16 %v24
  %v186 = vunpack.c.l.b16 %v25
  %v187 = vunpack.c.l.b16 %v26
  %v188 = vunpack.c.l.b16 %v27
  %v189 = vunpack.c.l.b16 %v28
  %v190 = vunpack.c.l.b16 %v29
  %v191 = vunpack.c.l.b16 %v30
  %v192 = vunpack.c.l.b16 %v31
  %v193 = vunpack.c.l.b16 %v32
  %v194 = vunpack.c.l.b16 %v33
  %v195 = vunpack.c.l.b16 %v34
  %v196 = vunpack.c.l.b16 %v35
  %v197 = vunpack.c.l.b16 %v36
  %v198 = vunpack.c.l.b16 %v37
  %v199 = vunpack.c.l.b16 %v38
  %v200 = vunpack.c.l.b16 %v39
  %v201 = vunpack.c.l.b16 %v40
  %v202 = vunpack.c.l.b16 %v41
  %v203 = vunpack.c.l.b16 %v42
  %v204 = vunpack.c.l.b16 %v43
  %v205 = vunpack.c.l.b16 %v44
  %v206 = vunpack.c.l.b16 %v45
  %v207 = vunpack.c.l.b16 %v46
  %v208 = vunpack.c.l.b16 %v47
  %v209 = vunpack.c.l.b16 %v48
  %v210 = vunpack.c.l.b16 %v49
  %v211 = vunpack.c.l.b16 %v50
  %v212 = vunpack.c.l.b16 %v51
  %v213 = vunpack.c.l.b16 %v52
  %v214 = vunpack.c.l.b16 %v53
  %v215 = vunpack.c.l.b16 %v54
  %v216 = vunpack.c.l.b16 %v55
  %v217 = vunpack.c.l.b16 %v56
  %v218 = vunpack.c.l.b16 %v57
  %v219 = vunpack.c.l.b16 %v58
  %v220 = vunpack.c.l.b16 %v59
  %v221 = vunpack.c.l.b16 %v60
  %v222 = vunpack.c.l.b16 %v61
  %v223 = vunpack.c.l.b16 %v62
  %v224 = vunpack.c.l.b16 %v63
  %v225 = vunpack.c.l.b16 %v64
  %v226 = vunpack.c.l.b16 %v65
  %v227 = vunpack.c.l.b16 %v66
  %v228 = vunpack.c.l.b16 %v67
  %v229 = vunpack.c.l.b16 %v68
  %v230 = vunpack.c.l.b16 %v69
  %v231 = vunpack.c.l.b16 %v70
  %v232 = vunpack.c.l.b16 %v71
  %v233 = vunpack.c.l.b16 %v72
  %v234 = vunpack.c.l.b16 %v73
  %v235 = vunpack.c.l.b16 %v74
  %v236 = vunpack.c.l.b16 %v75
  %v237 = vunpack.c.l.b16 %v76
  %v238 = vunpack.c.l.b16 %v77
  %v239 = vunpack.c.l.b16 %v78
  %v240 = vunpack.c.l.b16 %v79
  %v241 = vunpack.c.l.b16 %v80
  %v242 = vunpack.c.l.b16 %v81
  %v243 = vunpack.c.l.b16 %v82
  %v244 = vunpack.c.l.b16 %v83
  %v245 = vunpack.c.l.b16 %v84
  %v246 = vunpack.c.l.b16 %v85
  %v247 = vunpack.c.l.b16 %v86
  %v248 = vunpack.c.l.b16 %v87
  %v249 = vunpack.c.l.b16 %v88
  %v250 = vunpack.c.l.b16 %v89
  %v251 = vunpack.c.l.b16 %v90
  %v252 = vunpack.c.l.b16 %v91
  %v253 = vunpack.c.l.b16 %v92
  %v254 = vpack.c.b16 %v183, %v182
  %v255 = vpack.c.b16 %v185, %v184
  %v256 = vpack.c.b16 %v187, %v186
  %v257 = vpack.c.b16 %v189, %v188
  %v258 = vpack.c.b16 %v191, %v190
  %v259 = vpack.c.b16 %v193, %v192
  %v260 = vpack.c.b16 %v195, %v194
  %v261 = vpack.c.b16 %v197, %v196
  %v262 = vpack.c.b16 %v199, %v198
  %v263 = vpack.c.b16 %v201, %v200
  %v264 = vpack.c.b16 %v203, %v202
  %v265 = vpack.c.b16 %v205, %v204
  %v266 = vpack.c.b16 %v207, %v206
  %v267 = vpack.c.b16 %v209, %v208
  %v268 = vpack.c.b16 %v211, %v210
  %v269 = vpack.c.b16 %v213, %v212
  %v270 = vpack.c.b16 %v215, %v214
  %v271 = vpack.c.b16 %v217, %v216
  %v272 = vpack.c.b16 %v219, %v218
  %v273 = vpack.c.b16 %v221, %v220
  %v274 = vpack.c.b16 %v223, %v222
  %v275 = vpack.c.b16 %v225, %v224
  %v276 = vpack.c.b16 %v227, %v226
  %v277 = vpack.c.b16 %v229, %v228
  %v278 = vpack.c.b16 %v231, %v230
  %v279 = vpack.c.b16 %v233, %v232
  %v280 = vpack.c.b16 %v235, %v234
  %v281 = vpack.c.b16 %v237, %v236
  %v282 = vpack.c.b16 %v239, %v238
  %v283 = vpack.c.b16 %v241, %v240
  %v284 = vpack.c.b16 %v243, %v242
  %v285 = vpack.c.b16 %v245, %v244
  %v286 = vpack.c.b16 %v247, %v246
  %v287 = vpack.c.b16 %v249, %v248
  %v288 = vpack.c.b16 %v251, %v250
  %v289 = vpack.c.b16 %v253, %v252
  %vm326 = vcmask 523264
  %v328 = vsel %vm326, %v105, 0
  %330 = vmatprep.subr.bf16.mxu0 0
  %331 = vmatpush1.bf16.msra.mxu0 %v254
  %332 = vmatprep.subr.bf16.mxu0 0
  %333 = vmatpush1.bf16.msra.mxu0 %v255
  %334 = vmatprep.subr.bf16.mxu0 0
  %335 = vmatpush1.bf16.msra.mxu0 %v256
  %336 = vmatprep.subr.bf16.mxu0 0
  %337 = vmatpush1.bf16.msra.mxu0 %v257
  %338 = vmatprep.subr.bf16.mxu0 0
  %339 = vmatpush1.bf16.msra.mxu0 %v258
  %340 = vmatprep.subr.bf16.mxu0 0
  %341 = vmatpush1.bf16.msra.mxu0 %v259
  %342 = vmatprep.subr.bf16.mxu0 0
  %343 = vmatpush1.bf16.msra.mxu0 %v260
  %344 = vmatprep.subr.bf16.mxu0 0
  %345 = vmatpush1.bf16.msra.mxu0 %v261
  %346 = vmatprep.subr.bf16.mxu0 0
  %347 = vmatpush1.bf16.msra.mxu0 %v262
  %348 = vmatprep.subr.bf16.mxu0 0
  %349 = vmatpush1.bf16.msra.mxu0 %v263
  %350 = vmatprep.subr.bf16.mxu0 0
  %351 = vmatpush1.bf16.msra.mxu0 %v264
  %352 = vmatprep.subr.bf16.mxu0 0
  %353 = vmatpush1.bf16.msra.mxu0 %v265
  %354 = vmatprep.subr.bf16.mxu0 0
  %355 = vmatpush1.bf16.msra.mxu0 %v266
  %356 = vmatprep.subr.bf16.mxu0 0
  %357 = vmatpush1.bf16.msra.mxu0 %v267
  %358 = vmatprep.subr.bf16.mxu0 0
  %359 = vmatpush1.bf16.msra.mxu0 %v268
  %360 = vmatprep.subr.bf16.mxu0 0
  %361 = vmatpush1.bf16.msra.mxu0 %v269
  %362 = vmatprep.mubr.bf16.mxu0 %v102
  %363 = vmatmul.mubr.bf16.gmra.mrb[0].mxu0 %v101
  %v364 = vpop.f32.mrb[0].mxu0
  %v365 = vadd.f32 0.0, %v364
  %v366 = vpop.f32.mrb[0].mxu0
  %v367 = vpop.f32.mrb[0].mxu0
  %v368 = vpop.f32.mrb[0].mxu0
  %369 = vdwg.mxu0
  %370 = vmatprep.subr.bf16.mxu0 0
  %371 = vmatpush1.bf16.msra.mxu0 %v270
  %372 = vmatprep.subr.bf16.mxu0 0
  %373 = vmatpush1.bf16.msra.mxu0 %v271
  %374 = vmatprep.subr.bf16.mxu0 0
  %375 = vmatpush1.bf16.msra.mxu0 %v272
  %376 = vmatprep.subr.bf16.mxu0 0
  %377 = vmatpush1.bf16.msra.mxu0 %v273
  %378 = vmatprep.subr.bf16.mxu0 0
  %379 = vmatpush1.bf16.msra.mxu0 %v274
  %380 = vmatprep.subr.bf16.mxu0 0
  %381 = vmatpush1.bf16.msra.mxu0 %v275
  %382 = vmatprep.subr.bf16.mxu0 0
  %383 = vmatpush1.bf16.msra.mxu0 %v276
  %384 = vmatprep.subr.bf16.mxu0 0
  %385 = vmatpush1.bf16.msra.mxu0 %v277
  %386 = vmatprep.subr.bf16.mxu0 0
  %387 = vmatpush1.bf16.msra.mxu0 %v278
  %388 = vmatprep.subr.bf16.mxu0 0
  %389 = vmatpush1.bf16.msra.mxu0 %v279
  %390 = vmatprep.subr.bf16.mxu0 0
  %391 = vmatpush1.bf16.msra.mxu0 %v280
  %392 = vmatprep.subr.bf16.mxu0 0
  %393 = vmatpush1.bf16.msra.mxu0 %v281
  %394 = vmatprep.subr.bf16.mxu0 0
  %395 = vmatpush1.bf16.msra.mxu0 %v282
  %396 = vmatprep.subr.bf16.mxu0 0
  %397 = vmatpush1.bf16.msra.mxu0 %v283
  %398 = vmatprep.subr.bf16.mxu0 0
  %399 = vmatpush1.bf16.msra.mxu0 %v284
  %400 = vmatprep.subr.bf16.mxu0 0
  %401 = vmatpush1.bf16.msra.mxu0 %v285
  %402 = vmatprep.mubr.bf16.mxu0 %v104
  %403 = vmatmul.mubr.bf16.gmra.mrb[0].mxu0 %v103
  %v404 = vpop.f32.mrb[0].mxu0
  %v405 = vadd.f32 %v365, %v404
  %v406 = vpop.f32.mrb[0].mxu0
  %v407 = vpop.f32.mrb[0].mxu0
  %v408 = vpop.f32.mrb[0].mxu0
  %409 = vdwg.mxu0
  %410 = vmatprep.subr.bf16.mxu0 0
  %411 = vmatpush1.bf16.msra.mxu0 %v286
  %412 = vmatprep.subr.bf16.mxu0 0
  %413 = vmatpush1.bf16.msra.mxu0 %v287
  %414 = vmatprep.subr.bf16.mxu0 0
  %415 = vmatpush1.bf16.msra.mxu0 %v288
  %416 = vmatprep.subr.bf16.mxu0 0
  %417 = vmatpush1.bf16.msra.mxu0 %v289
  %418 = vmatprep.subr.bf16.mxu0 0
  %419 = vmatpush1.bf16.msra.mxu0 0
  %420 = vmatprep.subr.bf16.mxu0 0
  %421 = vmatpush1.bf16.msra.mxu0 0
  %422 = vmatprep.subr.bf16.mxu0 0
  %423 = vmatpush1.bf16.msra.mxu0 0
  %424 = vmatprep.subr.bf16.mxu0 0
  %425 = vmatpush1.bf16.msra.mxu0 0
  %426 = vmatprep.subr.bf16.mxu0 0
  %427 = vmatpush1.bf16.msra.mxu0 0
  %428 = vmatprep.subr.bf16.mxu0 0
  %429 = vmatpush1.bf16.msra.mxu0 0
  %430 = vmatprep.subr.bf16.mxu0 0
  %431 = vmatpush1.bf16.msra.mxu0 0
  %432 = vmatprep.subr.bf16.mxu0 0
  %433 = vmatpush1.bf16.msra.mxu0 0
  %434 = vmatprep.subr.bf16.mxu0 0
  %435 = vmatpush1.bf16.msra.mxu0 0
  %436 = vmatprep.subr.bf16.mxu0 0
  %437 = vmatpush1.bf16.msra.mxu0 0
  %438 = vmatprep.subr.bf16.mxu0 0
  %439 = vmatpush1.bf16.msra.mxu0 0
  %440 = vmatprep.subr.bf16.mxu0 0
  %441 = vmatpush1.bf16.msra.mxu0 0
  %442 = vmatprep.mubr.bf16.mxu0 0
  %443 = vmatmul.mubr.bf16.gmra.mrb[0].mxu0 %v328
  %v444 = vpop.f32.mrb[0].mxu0
  %v445 = vadd.f32 %v405, %v444
  %v446 = vpop.f32.mrb[0].mxu0
  %v447 = vpop.f32.mrb[0].mxu0
  %v448 = vpop.f32.mrb[0].mxu0
  %449 = vdwg.mxu0
  %v450 = vld [vmem:[%s2] sm:$0x1]
  %v452 = vlaneseq
  %v453 = vshrl.u32 %v452, 7
  %v454 = vsub.s32 0, %v453
  %v455 = vrot.slane %v450, %v454
  %v457 = vmul.f32 %v445, %v455
  %v458 = vld [vmem:[%s3] sm:$0x1]
  %v460 = vlaneseq
  %v461 = vshrl.u32 %v460, 7
  %v462 = vsub.s32 0, %v461
  %v463 = vrot.slane %v458, %v462
  %v465 = vadd.f32 %v457, %v463
  %v466 = vmax.f32 %v465, 0.0
  %v467 = vpack.c.bf16 %v466, %v466
  %vm468 = vcmask 519168
  %469 = vst.msk [vmem:[%s4] sm:$0xf] %vm468, %v467
  // Predicated region
  $region18: #{unet_forward.30} parent=0 // pred_check
    _
  $region19: #{unet_forward.30} parent=0 // pred_check_branch
    %471 = sbr.rel (0) target = $region21
  $region20: #{unet_forward.30} parent=0 // pred_region
    _
  $region21: #{unet_forward.30} parent=0 // pred_fallthru
    _
  // Predicated region
  $region22: #{unet_forward.30} parent=0 // pred_check
    _
  $region23: #{unet_forward.30} parent=0 // pred_check_branch
    %473 = sbr.rel (0) target = $region25
  $region24: #{unet_forward.30} parent=0 // pred_region
    _
  $region25: #{unet_forward.30} parent=0 // pred_fallthru
    _

// kernel: unet_forward.31
$region0: #{unet_forward.31}
  #allocation0 [shape = 'u32[]', space=smem, size = 0x4, offset = 0x4, fixed_abs, tag = 'smem constant byte address 0x4 - core index']
  #allocation1 [shape = 'u32[144,128]{1,0:T(1,128)}', space=vmem, size = 0x12000, scoped, tag = 'internal scratch']
  %s0 = inlined_call_operand.vmem [shape: bf16[8,576], index: 0, kind: input, shape index: {}]
  %s1 = inlined_call_operand.vmem [shape: bf16[576,128], index: 1, kind: input, shape index: {}]
  %s2 = inlined_call_operand.vmem [shape: f32[1,128], index: 2, kind: input, shape index: {}]
  %s3 = inlined_call_operand.vmem [shape: f32[1,128], index: 3, kind: input, shape index: {}]
  %s4 = inlined_call_operand.vmem [shape: bf16[8,128], index: 4, kind: output, shape index: {}]
  %s5 = sld [smem:[#allocation0]]
  $region26: #{unet_forward.31} parent=0
    _
  %s7 = ssub.s32 1, %s5
  %s8 = scalar_select 0, %s7, %s5
  // Predicated region
  $region2: #{unet_forward.31} parent=0 // pred_check
    _
  $region3: #{unet_forward.31} parent=0 // pred_check_branch
    %10 = sbr.rel (0) target = $region5
  $region4: #{unet_forward.31} parent=0 // pred_region
    _
  $region5: #{unet_forward.31} parent=0 // pred_fallthru
    _
  // Predicated region
  $region6: #{unet_forward.31} parent=0 // pred_check
    _
  $region7: #{unet_forward.31} parent=0 // pred_check_branch
    %12 = sbr.rel (0) target = $region9
  $region8: #{unet_forward.31} parent=0 // pred_region
    _
  $region9: #{unet_forward.31} parent=0 // pred_fallthru
    _
  // Predicated region
  $region10: #{unet_forward.31} parent=0 // pred_check
    _
  $region11: #{unet_forward.31} parent=0 // pred_check_branch
    %14 = sbr.rel (0) target = $region13
  $region12: #{unet_forward.31} parent=0 // pred_region
    _
  $region13: #{unet_forward.31} parent=0 // pred_fallthru
    _
  // Predicated region
  $region14: #{unet_forward.31} parent=0 // pred_check
    _
  $region15: #{unet_forward.31} parent=0 // pred_check_branch
    %16 = sbr.rel (0) target = $region17
  $region16: #{unet_forward.31} parent=0 // pred_region
    _
  $region17: #{unet_forward.31} parent=0 // pred_fallthru
    _
  %v18 = vld [vmem:[%s0] sm:$0xff]
  %v19 = vld [vmem:[%s0 + $0x8] sm:$0xff]
  %v20 = vld [vmem:[%s0 + $0x10] sm:$0xf]
  %v21 = vld [vmem:[%s1] sm:$0xf]
  %v22 = vld [vmem:[%s1 + $0x4] sm:$0xf]
  %v23 = vld [vmem:[%s1 + $0x8] sm:$0xf]
  %v24 = vld [vmem:[%s1 + $0xc] sm:$0xf]
  %v25 = vld [vmem:[%s1 + $0x10] sm:$0xf]
  %v26 = vld [vmem:[%s1 + $0x14] sm:$0xf]
  %v27 = vld [vmem:[%s1 + $0x18] sm:$0xf]
  %v28 = vld [vmem:[%s1 + $0x1c] sm:$0xf]
  %v29 = vld [vmem:[%s1 + $0x20] sm:$0xf]
  %v30 = vld [vmem:[%s1 + $0x24] sm:$0xf]
  %v31 = vld [vmem:[%s1 + $0x28] sm:$0xf]
  %v32 = vld [vmem:[%s1 + $0x2c] sm:$0xf]
  %v33 = vld [vmem:[%s1 + $0x30] sm:$0xf]
  %v34 = vld [vmem:[%s1 + $0x34] sm:$0xf]
  %v35 = vld [vmem:[%s1 + $0x38] sm:$0xf]
  %v36 = vld [vmem:[%s1 + $0x3c] sm:$0xf]
  %v37 = vld [vmem:[%s1 + $0x40] sm:$0xf]
  %v38 = vld [vmem:[%s1 + $0x44] sm:$0xf]
  %v39 = vld [vmem:[%s1 + $0x48] sm:$0xf]
  %v40 = vld [vmem:[%s1 + $0x4c] sm:$0xf]
  %v41 = vld [vmem:[%s1 + $0x50] sm:$0xf]
  %v42 = vld [vmem:[%s1 + $0x54] sm:$0xf]
  %v43 = vld [vmem:[%s1 + $0x58] sm:$0xf]
  %v44 = vld [vmem:[%s1 + $0x5c] sm:$0xf]
  %v45 = vld [vmem:[%s1 + $0x60] sm:$0xf]
  %v46 = vld [vmem:[%s1 + $0x64] sm:$0xf]
  %v47 = vld [vmem:[%s1 + $0x68] sm:$0xf]
  %v48 = vld [vmem:[%s1 + $0x6c] sm:$0xf]
  %v49 = vld [vmem:[%s1 + $0x70] sm:$0xf]
  %v50 = vld [vmem:[%s1 + $0x74] sm:$0xf]
  %v51 = vld [vmem:[%s1 + $0x78] sm:$0xf]
  %v52 = vld [vmem:[%s1 + $0x7c] sm:$0xf]
  %v53 = vld [vmem:[%s1 + $0x80] sm:$0xf]
  %v54 = vld [vmem:[%s1 + $0x84] sm:$0xf]
  %v55 = vld [vmem:[%s1 + $0x88] sm:$0xf]
  %v56 = vld [vmem:[%s1 + $0x8c] sm:$0xf]
  %v57 = vld [vmem:[%s1 + $0x90] sm:$0xf]
  %v58 = vld [vmem:[%s1 + $0x94] sm:$0xf]
  %v59 = vld [vmem:[%s1 + $0x98] sm:$0xf]
  %v60 = vld [vmem:[%s1 + $0x9c] sm:$0xf]
  %v61 = vld [vmem:[%s1 + $0xa0] sm:$0xf]
  %v62 = vld [vmem:[%s1 + $0xa4] sm:$0xf]
  %v63 = vld [vmem:[%s1 + $0xa8] sm:$0xf]
  %v64 = vld [vmem:[%s1 + $0xac] sm:$0xf]
  %v65 = vld [vmem:[%s1 + $0xb0] sm:$0xf]
  %v66 = vld [vmem:[%s1 + $0xb4] sm:$0xf]
  %v67 = vld [vmem:[%s1 + $0xb8] sm:$0xf]
  %v68 = vld [vmem:[%s1 + $0xbc] sm:$0xf]
  %v69 = vld [vmem:[%s1 + $0xc0] sm:$0xf]
  %v70 = vld [vmem:[%s1 + $0xc4] sm:$0xf]
  %v71 = vld [vmem:[%s1 + $0xc8] sm:$0xf]
  %v72 = vld [vmem:[%s1 + $0xcc] sm:$0xf]
  %v73 = vld [vmem:[%s1 + $0xd0] sm:$0xf]
  %v74 = vld [vmem:[%s1 + $0xd4] sm:$0xf]
  %v75 = vld [vmem:[%s1 + $0xd8] sm:$0xf]
  %v76 = vld [vmem:[%s1 + $0xdc] sm:$0xf]
  %v77 = vld [vmem:[%s1 + $0xe0] sm:$0xf]
  %v78 = vld [vmem:[%s1 + $0xe4] sm:$0xf]
  %v79 = vld [vmem:[%s1 + $0xe8] sm:$0xf]
  %v80 = vld [vmem:[%s1 + $0xec] sm:$0xf]
  %v81 = vld [vmem:[%s1 + $0xf0] sm:$0xf]
  %v82 = vld [vmem:[%s1 + $0xf4] sm:$0xf]
  %v83 = vld [vmem:[%s1 + $0xf8] sm:$0xf]
  %v84 = vld [vmem:[%s1 + $0xfc] sm:$0xf]
  %v85 = vld [vmem:[%s1 + $0x100] sm:$0xf]
  %v86 = vld [vmem:[%s1 + $0x104] sm:$0xf]
  %v87 = vld [vmem:[%s1 + $0x108] sm:$0xf]
  %v88 = vld [vmem:[%s1 + $0x10c] sm:$0xf]
  %v89 = vld [vmem:[%s1 + $0x110] sm:$0xf]
  %v90 = vld [vmem:[%s1 + $0x114] sm:$0xf]
  %v91 = vld [vmem:[%s1 + $0x118] sm:$0xf]
  %v92 = vld [vmem:[%s1 + $0x11c] sm:$0xf]
  %v96 = vunpack.c.l.b16 %v18
  %v97 = vunpack.c.h.b16 %v18
  %v98 = vunpack.c.l.b16 %v19
  %v99 = vunpack.c.h.b16 %v19
  %v100 = vunpack.c.l.b16 %v20
  %v101 = vpack.c.b16 %v96, %v96
  %v102 = vpack.c.b16 %v97, %v97
  %v103 = vpack.c.b16 %v98, %v98
  %v104 = vpack.c.b16 %v99, %v99
  %v105 = vpack.c.b16 %v100, %v100
  %v182 = vunpack.c.l.b16 %v21
  %v183 = vunpack.c.l.b16 %v22
  %v184 = vunpack.c.l.b16 %v23
  %v185 = vunpack.c.l.b16 %v24
  %v186 = vunpack.c.l.b16 %v25
  %v187 = vunpack.c.l.b16 %v26
  %v188 = vunpack.c.l.b16 %v27
  %v189 = vunpack.c.l.b16 %v28
  %v190 = vunpack.c.l.b16 %v29
  %v191 = vunpack.c.l.b16 %v30
  %v192 = vunpack.c.l.b16 %v31
  %v193 = vunpack.c.l.b16 %v32
  %v194 = vunpack.c.l.b16 %v33
  %v195 = vunpack.c.l.b16 %v34
  %v196 = vunpack.c.l.b16 %v35
  %v197 = vunpack.c.l.b16 %v36
  %v198 = vunpack.c.l.b16 %v37
  %v199 = vunpack.c.l.b16 %v38
  %v200 = vunpack.c.l.b16 %v39
  %v201 = vunpack.c.l.b16 %v40
  %v202 = vunpack.c.l.b16 %v41
  %v203 = vunpack.c.l.b16 %v42
  %v204 = vunpack.c.l.b16 %v43
  %v205 = vunpack.c.l.b16 %v44
  %v206 = vunpack.c.l.b16 %v45
  %v207 = vunpack.c.l.b16 %v46
  %v208 = vunpack.c.l.b16 %v47
  %v209 = vunpack.c.l.b16 %v48
  %v210 = vunpack.c.l.b16 %v49
  %v211 = vunpack.c.l.b16 %v50
  %v212 = vunpack.c.l.b16 %v51
  %v213 = vunpack.c.l.b16 %v52
  %v214 = vunpack.c.l.b16 %v53
  %v215 = vunpack.c.l.b16 %v54
  %v216 = vunpack.c.l.b16 %v55
  %v217 = vunpack.c.l.b16 %v56
  %v218 = vunpack.c.l.b16 %v57
  %v219 = vunpack.c.l.b16 %v58
  %v220 = vunpack.c.l.b16 %v59
  %v221 = vunpack.c.l.b16 %v60
  %v222 = vunpack.c.l.b16 %v61
  %v223 = vunpack.c.l.b16 %v62
  %v224 = vunpack.c.l.b16 %v63
  %v225 = vunpack.c.l.b16 %v64
  %v226 = vunpack.c.l.b16 %v65
  %v227 = vunpack.c.l.b16 %v66
  %v228 = vunpack.c.l.b16 %v67
  %v229 = vunpack.c.l.b16 %v68
  %v230 = vunpack.c.l.b16 %v69
  %v231 = vunpack.c.l.b16 %v70
  %v232 = vunpack.c.l.b16 %v71
  %v233 = vunpack.c.l.b16 %v72
  %v234 = vunpack.c.l.b16 %v73
  %v235 = vunpack.c.l.b16 %v74
  %v236 = vunpack.c.l.b16 %v75
  %v237 = vunpack.c.l.b16 %v76
  %v238 = vunpack.c.l.b16 %v77
  %v239 = vunpack.c.l.b16 %v78
  %v240 = vunpack.c.l.b16 %v79
  %v241 = vunpack.c.l.b16 %v80
  %v242 = vunpack.c.l.b16 %v81
  %v243 = vunpack.c.l.b16 %v82
  %v244 = vunpack.c.l.b16 %v83
  %v245 = vunpack.c.l.b16 %v84
  %v246 = vunpack.c.l.b16 %v85
  %v247 = vunpack.c.l.b16 %v86
  %v248 = vunpack.c.l.b16 %v87
  %v249 = vunpack.c.l.b16 %v88
  %v250 = vunpack.c.l.b16 %v89
  %v251 = vunpack.c.l.b16 %v90
  %v252 = vunpack.c.l.b16 %v91
  %v253 = vunpack.c.l.b16 %v92
  %v254 = vpack.c.b16 %v183, %v182
  %v255 = vpack.c.b16 %v185, %v184
  %v256 = vpack.c.b16 %v187, %v186
  %v257 = vpack.c.b16 %v189, %v188
  %v258 = vpack.c.b16 %v191, %v190
  %v259 = vpack.c.b16 %v193, %v192
  %v260 = vpack.c.b16 %v195, %v194
  %v261 = vpack.c.b16 %v197, %v196
  %v262 = vpack.c.b16 %v199, %v198
  %v263 = vpack.c.b16 %v201, %v200
  %v264 = vpack.c.b16 %v203, %v202
  %v265 = vpack.c.b16 %v205, %v204
  %v266 = vpack.c.b16 %v207, %v206
  %v267 = vpack.c.b16 %v209, %v208
  %v268 = vpack.c.b16 %v211, %v210
  %v269 = vpack.c.b16 %v213, %v212
  %v270 = vpack.c.b16 %v215, %v214
  %v271 = vpack.c.b16 %v217, %v216
  %v272 = vpack.c.b16 %v219, %v218
  %v273 = vpack.c.b16 %v221, %v220
  %v274 = vpack.c.b16 %v223, %v222
  %v275 = vpack.c.b16 %v225, %v224
  %v276 = vpack.c.b16 %v227, %v226
  %v277 = vpack.c.b16 %v229, %v228
  %v278 = vpack.c.b16 %v231, %v230
  %v279 = vpack.c.b16 %v233, %v232
  %v280 = vpack.c.b16 %v235, %v234
  %v281 = vpack.c.b16 %v237, %v236
  %v282 = vpack.c.b16 %v239, %v238
  %v283 = vpack.c.b16 %v241, %v240
  %v284 = vpack.c.b16 %v243, %v242
  %v285 = vpack.c.b16 %v245, %v244
  %v286 = vpack.c.b16 %v247, %v246
  %v287 = vpack.c.b16 %v249, %v248
  %v288 = vpack.c.b16 %v251, %v250
  %v289 = vpack.c.b16 %v253, %v252
  %vm326 = vcmask 523264
  %v328 = vsel %vm326, %v105, 0
  %330 = vmatprep.subr.bf16.mxu0 0
  %331 = vmatpush1.bf16.msra.mxu0 %v254
  %332 = vmatprep.subr.bf16.mxu0 0
  %333 = vmatpush1.bf16.msra.mxu0 %v255
  %334 = vmatprep.subr.bf16.mxu0 0
  %335 = vmatpush1.bf16.msra.mxu0 %v256
  %336 = vmatprep.subr.bf16.mxu0 0
  %337 = vmatpush1.bf16.msra.mxu0 %v257
  %338 = vmatprep.subr.bf16.mxu0 0
  %339 = vmatpush1.bf16.msra.mxu0 %v258
  %340 = vmatprep.subr.bf16.mxu0 0
  %341 = vmatpush1.bf16.msra.mxu0 %v259
  %342 = vmatprep.subr.bf16.mxu0 0
  %343 = vmatpush1.bf16.msra.mxu0 %v260
  %344 = vmatprep.subr.bf16.mxu0 0
  %345 = vmatpush1.bf16.msra.mxu0 %v261
  %346 = vmatprep.subr.bf16.mxu0 0
  %347 = vmatpush1.bf16.msra.mxu0 %v262
  %348 = vmatprep.subr.bf16.mxu0 0
  %349 = vmatpush1.bf16.msra.mxu0 %v263
  %350 = vmatprep.subr.bf16.mxu0 0
  %351 = vmatpush1.bf16.msra.mxu0 %v264
  %352 = vmatprep.subr.bf16.mxu0 0
  %353 = vmatpush1.bf16.msra.mxu0 %v265
  %354 = vmatprep.subr.bf16.mxu0 0
  %355 = vmatpush1.bf16.msra.mxu0 %v266
  %356 = vmatprep.subr.bf16.mxu0 0
  %357 = vmatpush1.bf16.msra.mxu0 %v267
  %358 = vmatprep.subr.bf16.mxu0 0
  %359 = vmatpush1.bf16.msra.mxu0 %v268
  %360 = vmatprep.subr.bf16.mxu0 0
  %361 = vmatpush1.bf16.msra.mxu0 %v269
  %362 = vmatprep.mubr.bf16.mxu0 %v102
  %363 = vmatmul.mubr.bf16.gmra.mrb[0].mxu0 %v101
  %v364 = vpop.f32.mrb[0].mxu0
  %v365 = vadd.f32 0.0, %v364
  %v366 = vpop.f32.mrb[0].mxu0
  %v367 = vpop.f32.mrb[0].mxu0
  %v368 = vpop.f32.mrb[0].mxu0
  %369 = vdwg.mxu0
  %370 = vmatprep.subr.bf16.mxu0 0
  %371 = vmatpush1.bf16.msra.mxu0 %v270
  %372 = vmatprep.subr.bf16.mxu0 0
  %373 = vmatpush1.bf16.msra.mxu0 %v271
  %374 = vmatprep.subr.bf16.mxu0 0
  %375 = vmatpush1.bf16.msra.mxu0 %v272
  %376 = vmatprep.subr.bf16.mxu0 0
  %377 = vmatpush1.bf16.msra.mxu0 %v273
  %378 = vmatprep.subr.bf16.mxu0 0
  %379 = vmatpush1.bf16.msra.mxu0 %v274
  %380 = vmatprep.subr.bf16.mxu0 0
  %381 = vmatpush1.bf16.msra.mxu0 %v275
  %382 = vmatprep.subr.bf16.mxu0 0
  %383 = vmatpush1.bf16.msra.mxu0 %v276
  %384 = vmatprep.subr.bf16.mxu0 0
  %385 = vmatpush1.bf16.msra.mxu0 %v277
  %386 = vmatprep.subr.bf16.mxu0 0
  %387 = vmatpush1.bf16.msra.mxu0 %v278
  %388 = vmatprep.subr.bf16.mxu0 0
  %389 = vmatpush1.bf16.msra.mxu0 %v279
  %390 = vmatprep.subr.bf16.mxu0 0
  %391 = vmatpush1.bf16.msra.mxu0 %v280
  %392 = vmatprep.subr.bf16.mxu0 0
  %393 = vmatpush1.bf16.msra.mxu0 %v281
  %394 = vmatprep.subr.bf16.mxu0 0
  %395 = vmatpush1.bf16.msra.mxu0 %v282
  %396 = vmatprep.subr.bf16.mxu0 0
  %397 = vmatpush1.bf16.msra.mxu0 %v283
  %398 = vmatprep.subr.bf16.mxu0 0
  %399 = vmatpush1.bf16.msra.mxu0 %v284
  %400 = vmatprep.subr.bf16.mxu0 0
  %401 = vmatpush1.bf16.msra.mxu0 %v285
  %402 = vmatprep.mubr.bf16.mxu0 %v104
  %403 = vmatmul.mubr.bf16.gmra.mrb[0].mxu0 %v103
  %v404 = vpop.f32.mrb[0].mxu0
  %v405 = vadd.f32 %v365, %v404
  %v406 = vpop.f32.mrb[0].mxu0
  %v407 = vpop.f32.mrb[0].mxu0
  %v408 = vpop.f32.mrb[0].mxu0
  %409 = vdwg.mxu0
  %410 = vmatprep.subr.bf16.mxu0 0
  %411 = vmatpush1.bf16.msra.mxu0 %v286
  %412 = vmatprep.subr.bf16.mxu0 0
  %413 = vmatpush1.bf16.msra.mxu0 %v287
  %414 = vmatprep.subr.bf16.mxu0 0
  %415 = vmatpush1.bf16.msra.mxu0 %v288
  %416 = vmatprep.subr.bf16.mxu0 0
  %417 = vmatpush1.bf16.msra.mxu0 %v289
  %418 = vmatprep.subr.bf16.mxu0 0
  %419 = vmatpush1.bf16.msra.mxu0 0
  %420 = vmatprep.subr.bf16.mxu0 0
  %421 = vmatpush1.bf16.msra.mxu0 0
  %422 = vmatprep.subr.bf16.mxu0 0
  %423 = vmatpush1.bf16.msra.mxu0 0
  %424 = vmatprep.subr.bf16.mxu0 0
  %425 = vmatpush1.bf16.msra.mxu0 0
  %426 = vmatprep.subr.bf16.mxu0 0
  %427 = vmatpush1.bf16.msra.mxu0 0
  %428 = vmatprep.subr.bf16.mxu0 0
  %429 = vmatpush1.bf16.msra.mxu0 0
  %430 = vmatprep.subr.bf16.mxu0 0
  %431 = vmatpush1.bf16.msra.mxu0 0
  %432 = vmatprep.subr.bf16.mxu0 0
  %433 = vmatpush1.bf16.msra.mxu0 0
  %434 = vmatprep.subr.bf16.mxu0 0
  %435 = vmatpush1.bf16.msra.mxu0 0
  %436 = vmatprep.subr.bf16.mxu0 0
  %437 = vmatpush1.bf16.msra.mxu0 0
  %438 = vmatprep.subr.bf16.mxu0 0
  %439 = vmatpush1.bf16.msra.mxu0 0
  %440 = vmatprep.subr.bf16.mxu0 0
  %441 = vmatpush1.bf16.msra.mxu0 0
  %442 = vmatprep.mubr.bf16.mxu0 0
  %443 = vmatmul.mubr.bf16.gmra.mrb[0].mxu0 %v328
  %v444 = vpop.f32.mrb[0].mxu0
  %v445 = vadd.f32 %v405, %v444
  %v446 = vpop.f32.mrb[0].mxu0
  %v447 = vpop.f32.mrb[0].mxu0
  %v448 = vpop.f32.mrb[0].mxu0
  %449 = vdwg.mxu0
  %v450 = vld [vmem:[%s2] sm:$0x1]
  %v452 = vlaneseq
  %v453 = vshrl.u32 %v452, 7
  %v454 = vsub.s32 0, %v453
  %v455 = vrot.slane %v450, %v454
  %v457 = vmul.f32 %v445, %v455
  %v458 = vld [vmem:[%s3] sm:$0x1]
  %v460 = vlaneseq
  %v461 = vshrl.u32 %v460, 7
  %v462 = vsub.s32 0, %v461
  %v463 = vrot.slane %v458, %v462
  %v465 = vadd.f32 %v457, %v463
  %v466 = vmax.f32 %v465, 0.0
  %v467 = vpack.c.bf16 %v466, %v466
  %468 = vst [vmem:[%s4] sm:$0xf] %v467
  // Predicated region
  $region18: #{unet_forward.31} parent=0 // pred_check
    _
  $region19: #{unet_forward.31} parent=0 // pred_check_branch
    %470 = sbr.rel (0) target = $region21
  $region20: #{unet_forward.31} parent=0 // pred_region
    _
  $region21: #{unet_forward.31} parent=0 // pred_fallthru
    _
  // Predicated region
  $region22: #{unet_forward.31} parent=0 // pred_check
    _
  $region23: #{unet_forward.31} parent=0 // pred_check_branch
    %472 = sbr.rel (0) target = $region25
  $region24: #{unet_forward.31} parent=0 // pred_region
    _
  $region25: #{unet_forward.31} parent=0 // pred_fallthru
    _

// kernel: tile.23
$region0: #{tile.23}
  #allocation0 [shape = 's32[1]{0}', space=sflag, size = 0x4, scoped, tag = 'scoped memory for tile.23']
  %s0 = inlined_call_operand.vmem [shape: f32[64], index: 0, kind: input, shape index: {}]
  %s1 = inlined_call_operand.vmem [shape: f32[4,64], index: 1, kind: output, shape index: {}]
  // Predicated region
  $region2: #{tile.23} parent=0 // pred_check
    _
  $region3: #{tile.23} parent=0 // pred_check_branch
    %3 = sbr.rel (0) target = $region5
  $region4: #{tile.23} parent=0 // pred_region
    _
  $region5: #{tile.23} parent=0 // pred_fallthru
    _
  %v4 = vld [vmem:[%s0] ss:$0 sm:$0xff]
  %5 = vst [vmem:[%s1] sm:$0xf] %v4

// kernel: tile.24
$region0: #{tile.24}
  %s0 = inlined_call_operand.vmem [shape: f32[4,64], index: 0, kind: input, shape index: {}]
  %s1 = inlined_call_operand.vmem [shape: f32[1,256], index: 1, kind: output, shape index: {}]
  $region1: #{tile.24} parent=0
    #allocation0 [shape = 'u8[8192]{0}', space=vmem, size = 0x2000, scoped, tag = 'scoped mem for output reshape']
    #allocation1 [shape = 'u8[4096]{0}', space=vmem, size = 0x1000, scoped, tag = 'scoped mem for input reshape']
    %s3 = sshllo.u32 0, 4
    %v4 = vld [vmem:[%s0] sm:%s3]
    %5 = vst [vmem:[#allocation1] sm:%s3] %v4
    %s6 = smov 3
    %v7 = vld [vmem:[#allocation1] ss:$2 sm:%s6]
    %vm8 = vcmask 523264
    %9 = vst.msk [vmem:[#allocation0] ss:$8 sm:$0x3] %vm8, %v7
    %s10 = scalar_lea.vmem [#allocation1], 1
    %s11 = smov 3
    %v12 = vld [vmem:[%s10] ss:$2 sm:%s11]
    %13 = vrot.lane.b32.xlu0 %v12, 64
    %v14 = vpop.permute.xlu0 %13
    %vm15 = vcmask 1048064
    %16 = vst.msk [vmem:[#allocation0] ss:$8 sm:$0x3] %vm15, %v14
    %s18 = sshllo.u32 0, 1
    %v20 = vld [vmem:[#allocation0] sm:%s18]
    %s21 = sshllo.u32 0, 1
    %22 = vst [vmem:[%s1] sm:%s21] %v20
    %s23 = scalar_lea.vmem [#allocation0], 8
    %v24 = vld [vmem:[%s23] sm:%s18]
    %s25 = sshllo.u32 0, 1
    %s26 = scalar_lea.vmem %s1, 1
    %27 = vst [vmem:[%s26] sm:%s25] %v24

// kernel: unet_forward.33
$region0: #{unet_forward.33}
  #allocation0 [shape = 'u32[]', space=smem, size = 0x4, offset = 0x4, fixed_abs, tag = 'smem constant byte address 0x4 - core index']
  #allocation1 [shape = 'u32[144,128]{1,0:T(1,128)}', space=vmem, size = 0x12000, scoped, tag = 'internal scratch']
  %s0 = inlined_call_operand.vmem [shape: bf16[8,128], index: 0, kind: input, shape index: {}]
  %s1 = inlined_call_operand.vmem [shape: bf16[128,256], index: 1, kind: input, shape index: {}]
  %s2 = inlined_call_operand.vmem [shape: f32[1,256], index: 2, kind: input, shape index: {}]
  %s3 = inlined_call_operand.vmem [shape: f32[1,256], index: 3, kind: input, shape index: {}]
  %s4 = inlined_call_operand.vmem [shape: bf16[8,256], index: 4, kind: output, shape index: {}]
  %s5 = sld [smem:[#allocation0]]
  $region90: #{unet_forward.33} parent=0
    _
  %s7 = ssub.s32 1, %s5
  %s8 = scalar_select 0, %s7, %s5
  $region1: #{unet_forward.33} parent=0
    #allocation2 [shape = 'u8[65536]{0}', space=vmem, size = 0x10000, scoped, tag = 'input window, operand 1']
    loop: start=0, step=1, limit=4
    $region2: #{unet_forward.33} parent=1 // loop_pre_header
      _
    $region3: #{unet_forward.33} parent=1 // loop_header
      %s10 = sphi 0, %s14
      %p11 = scmp.ge.s32.totalorder %s10, 4
      %s17 = sphi 0, %s29
      %s18 = sphi 0, %s25
      %s19 = sphi 0, %s17
      %s20 = sphi 0, %s18
      %s21 = sphi 0, %s19
      %s22 = sphi 0, %s20
      %s32 = sphi 0, %s34
      %s35 = sphi 0, %s32
      %s36 = sphi 0, %s35
      %s52 = sphi 0, %s36
      %s58 = sphi 0, %s60
      %s61 = sphi 0, %s58
      %s62 = sphi 0, %s61
      %s78 = sphi 0, %s62
      %s84 = sphi 0, %s86
      %s87 = sphi 0, %s84
      %s88 = sphi 0, %s87
      %s104 = sphi 0, %s88
      %s110 = sphi 0, %s112
      %s113 = sphi 0, %s110
      %s114 = sphi 0, %s113
      %s130 = sphi 0, %s114
      %s138 = sphi 0, %s140
      %s141 = sphi 0, %s138
      %s142 = sphi 0, %s141
      %s158 = sphi 0, %s142
    $region4: #{unet_forward.33} parent=1 // loop_header_branch
      %13 = sbr.rel (%p11) target = $region8
    $region5: #{unet_forward.33} parent=1 // loop_body
      %s15 = ssub.s32 %s10, 1
      %s16 = ssub.s32 %s10, 2
      %s23 = sadd.s32 1, %s18
      %p24 = scmp.ge.s32.totalorder %s23, 2
      %s25 = scalar_select %p24, 0, %s23
      %s26 = sadd.s32 1, %s17
      %s27 = scalar_select %p24, %s26, %s17
      %p28 = scmp.ge.s32.totalorder %s27, 1
      %s29 = scalar_select %p28, 0, %s27
      %s30 = ssub.s32 %s17, %s29
      %p31 = scmp.eq.s32.totalorder %s30, 0
      %s33 = sadd.s32 %s32, 1
      %s34 = scalar_select %p31, %s32, %s33
      %p37 = pneg %p31
      %p38 = scmp.eq.s32.totalorder %s10, 1
      %p39 = por %p37, %p38
      %p40 = scmp.ne.s32.totalorder %s32, %s35
      %p41 = scmp.eq.s32.totalorder %s10, 0
      %p42 = por %p40, %p41
      %p43 = scmp.ne.s32.totalorder %s32, %s35
      %p44 = scmp.eq.s32.totalorder %s15, 1
      %p45 = por %p43, %p44
      %p46 = scmp.ne.s32.totalorder %s35, %s36
      %p47 = scmp.eq.s32.totalorder %s15, 0
      %p48 = por %p46, %p47
      %p49 = scmp.ne.s32.totalorder %s35, %s36
      %p50 = scmp.eq.s32.totalorder %s16, 1
      %p51 = por %p49, %p50
      %p53 = scmp.ne.s32.totalorder %s36, %s52
      %p54 = scmp.eq.s32.totalorder %s16, 0
      %p55 = por %p53, %p54
      %s56 = ssub.s32 %s18, %s25
      %p57 = scmp.eq.s32.totalorder %s56, 0
      %s59 = sadd.s32 %s58, 1
      %s60 = scalar_select %p57, %s58, %s59
      %p63 = pneg %p57
      %p64 = scmp.eq.s32.totalorder %s10, 1
      %p65 = por %p63, %p64
      %p66 = scmp.ne.s32.totalorder %s58, %s61
      %p67 = scmp.eq.s32.totalorder %s10, 0
      %p68 = por %p66, %p67
      %p69 = scmp.ne.s32.totalorder %s58, %s61
      %p70 = scmp.eq.s32.totalorder %s15, 1
      %p71 = por %p69, %p70
      %p72 = scmp.ne.s32.totalorder %s61, %s62
      %p73 = scmp.eq.s32.totalorder %s15, 0
      %p74 = por %p72, %p73
      %p75 = scmp.ne.s32.totalorder %s61, %s62
      %p76 = scmp.eq.s32.totalorder %s16, 1
      %p77 = por %p75, %p76
      %p79 = scmp.ne.s32.totalorder %s62, %s78
      %p80 = scmp.eq.s32.totalorder %s16, 0
      %p81 = por %p79, %p80
      %s82 = ssub.s32 %s18, %s25
      %p83 = scmp.eq.s32.totalorder %s82, 0
      %s85 = sadd.s32 %s84, 1
      %s86 = scalar_select %p83, %s84, %s85
      %p89 = pneg %p83
      %p90 = scmp.eq.s32.totalorder %s10, 1
      %p91 = por %p89, %p90
      %p92 = scmp.ne.s32.totalorder %s84, %s87
      %p93 = scmp.eq.s32.totalorder %s10, 0
      %p94 = por %p92, %p93
      %p95 = scmp.ne.s32.totalorder %s84, %s87
      %p96 = scmp.eq.s32.totalorder %s15, 1
      %p97 = por %p95, %p96
      %p98 = scmp.ne.s32.totalorder %s87, %s88
      %p99 = scmp.eq.s32.totalorder %s15, 0
      %p100 = por %p98, %p99
      %p101 = scmp.ne.s32.totalorder %s87, %s88
      %p102 = scmp.eq.s32.totalorder %s16, 1
      %p103 = por %p101, %p102
      %p105 = scmp.ne.s32.totalorder %s88, %s104
      %p106 = scmp.eq.s32.totalorder %s16, 0
      %p107 = por %p105, %p106
      %s108 = ssub.s32 %s18, %s25
      %p109 = scmp.eq.s32.totalorder %s108, 0
      %s111 = sadd.s32 %s110, 1
      %s112 = scalar_select %p109, %s110, %s111
      %p115 = pneg %p109
      %p116 = scmp.eq.s32.totalorder %s10, 1
      %p117 = por %p115, %p116
      %p118 = scmp.ne.s32.totalorder %s110, %s113
      %p119 = scmp.eq.s32.totalorder %s10, 0
      %p120 = por %p118, %p119
      %p121 = scmp.ne.s32.totalorder %s110, %s113
      %p122 = scmp.eq.s32.totalorder %s15, 1
      %p123 = por %p121, %p122
      %p124 = scmp.ne.s32.totalorder %s113, %s114
      %p125 = scmp.eq.s32.totalorder %s15, 0
      %p126 = por %p124, %p125
      %p127 = scmp.ne.s32.totalorder %s113, %s114
      %p128 = scmp.eq.s32.totalorder %s16, 1
      %p129 = por %p127, %p128
      %p131 = scmp.ne.s32.totalorder %s114, %s130
      %p132 = scmp.eq.s32.totalorder %s16, 0
      %p133 = por %p131, %p132
      %s134 = ssub.s32 %s17, %s29
      %s135 = ssub.s32 %s18, %s25
      %s136 = sor.u32 %s134, %s135
      %p137 = scmp.eq.s32.totalorder %s136, 0
      %s139 = sadd.s32 %s138, 1
      %s140 = scalar_select %p137, %s138, %s139
      %p143 = pneg %p137
      %p144 = scmp.eq.s32.totalorder %s10, 1
      %p145 = por %p143, %p144
      %p146 = scmp.ne.s32.totalorder %s138, %s141
      %p147 = scmp.eq.s32.totalorder %s10, 0
      %p148 = por %p146, %p147
      %p149 = scmp.ne.s32.totalorder %s138, %s141
      %p150 = scmp.eq.s32.totalorder %s15, 1
      %p151 = por %p149, %p150
      %p152 = scmp.ne.s32.totalorder %s141, %s142
      %p153 = scmp.eq.s32.totalorder %s15, 0
      %p154 = por %p152, %p153
      %p155 = scmp.ne.s32.totalorder %s141, %s142
      %p156 = scmp.eq.s32.totalorder %s16, 1
      %p157 = por %p155, %p156
      %p159 = scmp.ne.s32.totalorder %s142, %s158
      %p160 = scmp.eq.s32.totalorder %s16, 0
      %p161 = por %p159, %p160
      %p162 = scmp.le.s32.totalorder 1, %s10
      %p163 = scmp.lt.s32.totalorder %s10, 3
      %p164 = pnand %p162, %p163
      %p165 = pneg %p164
      // Predicated region
      $region9: #{unet_forward.33} parent=5 // pred_check
        _
      $region10: #{unet_forward.33} parent=5 // pred_check_branch
        %167 = sbr.rel (%p164) target = $region12
      $region11: #{unet_forward.33} parent=5 // pred_region
        %s168 = ssub.s32 %s10, 1
        // Predicated region
        $region13: #{unet_forward.33} parent=11 // pred_check
          %p169 = pneg %p48
        $region14: #{unet_forward.33} parent=11 // pred_check_branch
          %171 = sbr.rel (%p169) target = $region16
        $region15: #{unet_forward.33} parent=11 // pred_region
          %p172 = scmp.lt.s32.totalorder %s19, 0
          %s173 = scalar_select %p172, %s19, 0
          %s174 = smul.addr %s173, 4
          %s175 = scalar_lea.vmem %s0, %s174
        $region16: #{unet_forward.33} parent=11 // pred_fallthru
          _
      $region12: #{unet_forward.33} parent=5 // pred_fallthru
        _
      %p176 = scmp.lt.s32.totalorder %s10, 2
      // Predicated region
      $region17: #{unet_forward.33} parent=5 // pred_check
        %p177 = pneg %p176
      $region18: #{unet_forward.33} parent=5 // pred_check_branch
        %179 = sbr.rel (%p177) target = $region20
      $region19: #{unet_forward.33} parent=5 // pred_region
        // Predicated region
        $region21: #{unet_forward.33} parent=19 // pred_check
          %p180 = pneg %p68
        $region22: #{unet_forward.33} parent=19 // pred_check_branch
          %182 = sbr.rel (%p180) target = $region24
        $region23: #{unet_forward.33} parent=19 // pred_region
          %s183 = sand.u32 %s58, 1
          %s184 = sand.u32 %s58, 1
          %s185 = smul.addr %s184, 64
          %s186 = scalar_lea.vmem [#allocation2], %s185
          %s187 = smul.addr %s18, 4
          %s188 = scalar_lea.vmem %s1, %s187
          // Predicated region
          $region25: #{unet_forward.33} parent=23 // pred_check
            _
          $region26: #{unet_forward.33} parent=23 // pred_check_branch
            %190 = sbr.rel (0) target = $region28
          $region27: #{unet_forward.33} parent=23 // pred_region
            // Predicated region
            $region29: #{unet_forward.33} parent=27 // pred_check
              _
            $region30: #{unet_forward.33} parent=27 // pred_check_branch
              %192 = sbr.rel target = $region32
            $region31: #{unet_forward.33} parent=27 // pred_region
              // Predicated region
              $region44: #{unet_forward.33} parent=31 // pred_check
                _
              $region45: #{unet_forward.33} parent=31 // pred_check_branch
                %237 = sbr.rel (0) target = $region47
              $region46: #{unet_forward.33} parent=31 // pred_region
                loop: start=0, step=1, limit=1
                $region48: #{unet_forward.33} parent=46 // loop_pre_header
                  _
                $region49: #{unet_forward.33} parent=46 // loop_header
                  %s239 = sphi 0, %s243
                  %p240 = scmp.ge.s32.totalorder %s239, 1
                  %s244 = sphi %s188, %s188
                  %s245 = sphi %s186, %s186
                $region50: #{unet_forward.33} parent=46 // loop_header_branch
                  %242 = sbr.rel (%p240) target = $region54
                $region51: #{unet_forward.33} parent=46 // loop_body
                  _
                $region52: #{unet_forward.33} parent=46 // loop_footer
                  %s243 = sadd.s32 1, %s239
                $region53: #{unet_forward.33} parent=46 // loop_footer_branch
                  %238 = sbr.rel target = $region49
                $region54: #{unet_forward.33} parent=46 // loop_exit
                  _
                loop: start=0, step=1, limit=1
                $region55: #{unet_forward.33} parent=46 // loop_pre_header
                  _
                $region56: #{unet_forward.33} parent=46 // loop_header
                  %s248 = sphi 0, %s252
                  %p249 = scmp.ge.s32.totalorder %s248, 1
                  %s253 = sphi %s188, %s188
                  %s254 = sphi %s186, %s186
                $region57: #{unet_forward.33} parent=46 // loop_header_branch
                  %251 = sbr.rel (%p249) target = $region61
                $region58: #{unet_forward.33} parent=46 // loop_body
                  %v255 = vld [vmem:[%s253] sm:$0xf]
                  %256 = vst [vmem:[%s254] sm:$0xf] %v255
                  %v257 = vld [vmem:[%s253 + $0x8] sm:$0xf]
                  %258 = vst [vmem:[%s254 + $0x4] sm:$0xf] %v257
                  %v259 = vld [vmem:[%s253 + $0x10] sm:$0xf]
                  %260 = vst [vmem:[%s254 + $0x8] sm:$0xf] %v259
                  %v261 = vld [vmem:[%s253 + $0x18] sm:$0xf]
                  %262 = vst [vmem:[%s254 + $0xc] sm:$0xf] %v261
                  %v263 = vld [vmem:[%s253 + $0x20] sm:$0xf]
                  %264 = vst [vmem:[%s254 + $0x10] sm:$0xf] %v263
                  %v265 = vld [vmem:[%s253 + $0x28] sm:$0xf]
                  %266 = vst [vmem:[%s254 + $0x14] sm:$0xf] %v265
                  %v267 = vld [vmem:[%s253 + $0x30] sm:$0xf]
                  %268 = vst [vmem:[%s254 + $0x18] sm:$0xf] %v267
                  %v269 = vld [vmem:[%s253 + $0x38] sm:$0xf]
                  %270 = vst [vmem:[%s254 + $0x1c] sm:$0xf] %v269
                  %v271 = vld [vmem:[%s253 + $0x40] sm:$0xf]
                  %272 = vst [vmem:[%s254 + $0x20] sm:$0xf] %v271
                  %v273 = vld [vmem:[%s253 + $0x48] sm:$0xf]
                  %274 = vst [vmem:[%s254 + $0x24] sm:$0xf] %v273
                  %v275 = vld [vmem:[%s253 + $0x50] sm:$0xf]
                  %276 = vst [vmem:[%s254 + $0x28] sm:$0xf] %v275
                  %v277 = vld [vmem:[%s253 + $0x58] sm:$0xf]
                  %278 = vst [vmem:[%s254 + $0x2c] sm:$0xf] %v277
                  %v279 = vld [vmem:[%s253 + $0x60] sm:$0xf]
                  %280 = vst [vmem:[%s254 + $0x30] sm:$0xf] %v279
                  %v281 = vld [vmem:[%s253 + $0x68] sm:$0xf]
                  %282 = vst [vmem:[%s254 + $0x34] sm:$0xf] %v281
                  %v283 = vld [vmem:[%s253 + $0x70] sm:$0xf]
                  %284 = vst [vmem:[%s254 + $0x38] sm:$0xf] %v283
                  %v285 = vld [vmem:[%s253 + $0x78] sm:$0xf]
                  %286 = vst [vmem:[%s254 + $0x3c] sm:$0xf] %v285
                $region59: #{unet_forward.33} parent=46 // loop_footer
                  %s252 = sadd.s32 1, %s248
                $region60: #{unet_forward.33} parent=46 // loop_footer_branch
                  %247 = sbr.rel target = $region56
                $region61: #{unet_forward.33} parent=46 // loop_exit
                  _
              $region47: #{unet_forward.33} parent=31 // pred_fallthru
                _
            $region32: #{unet_forward.33} parent=27 // pred_fallthru
              _
            // Predicated region
            $region33: #{unet_forward.33} parent=27 // pred_check
              _
            $region34: #{unet_forward.33} parent=27 // pred_check_branch
              %194 = sbr.rel (0) target = $region36
            $region35: #{unet_forward.33} parent=27 // pred_region
              loop: start=0, step=1, limit=1
              $region37: #{unet_forward.33} parent=35 // loop_pre_header
                _
              $region38: #{unet_forward.33} parent=35 // loop_header
                %s197 = sphi 0, %s201
                %p198 = scmp.ge.s32.totalorder %s197, 1
                %s202 = sphi %s188, %s188
                %s203 = sphi %s186, %s186
              $region39: #{unet_forward.33} parent=35 // loop_header_branch
                %200 = sbr.rel (%p198) target = $region43
              $region40: #{unet_forward.33} parent=35 // loop_body
                %v204 = vld [vmem:[%s202] sm:$0xf]
                %205 = vst [vmem:[%s203] sm:$0xf] %v204
                %v206 = vld [vmem:[%s202 + $0x8] sm:$0xf]
                %207 = vst [vmem:[%s203 + $0x4] sm:$0xf] %v206
                %v208 = vld [vmem:[%s202 + $0x10] sm:$0xf]
                %209 = vst [vmem:[%s203 + $0x8] sm:$0xf] %v208
                %v210 = vld [vmem:[%s202 + $0x18] sm:$0xf]
                %211 = vst [vmem:[%s203 + $0xc] sm:$0xf] %v210
                %v212 = vld [vmem:[%s202 + $0x20] sm:$0xf]
                %213 = vst [vmem:[%s203 + $0x10] sm:$0xf] %v212
                %v214 = vld [vmem:[%s202 + $0x28] sm:$0xf]
                %215 = vst [vmem:[%s203 + $0x14] sm:$0xf] %v214
                %v216 = vld [vmem:[%s202 + $0x30] sm:$0xf]
                %217 = vst [vmem:[%s203 + $0x18] sm:$0xf] %v216
                %v218 = vld [vmem:[%s202 + $0x38] sm:$0xf]
                %219 = vst [vmem:[%s203 + $0x1c] sm:$0xf] %v218
                %v220 = vld [vmem:[%s202 + $0x40] sm:$0xf]
                %221 = vst [vmem:[%s203 + $0x20] sm:$0xf] %v220
                %v222 = vld [vmem:[%s202 + $0x48] sm:$0xf]
                %223 = vst [vmem:[%s203 + $0x24] sm:$0xf] %v222
                %v224 = vld [vmem:[%s202 + $0x50] sm:$0xf]
                %225 = vst [vmem:[%s203 + $0x28] sm:$0xf] %v224
                %v226 = vld [vmem:[%s202 + $0x58] sm:$0xf]
                %227 = vst [vmem:[%s203 + $0x2c] sm:$0xf] %v226
                %v228 = vld [vmem:[%s202 + $0x60] sm:$0xf]
                %229 = vst [vmem:[%s203 + $0x30] sm:$0xf] %v228
                %v230 = vld [vmem:[%s202 + $0x68] sm:$0xf]
                %231 = vst [vmem:[%s203 + $0x34] sm:$0xf] %v230
                %v232 = vld [vmem:[%s202 + $0x70] sm:$0xf]
                %233 = vst [vmem:[%s203 + $0x38] sm:$0xf] %v232
                %v234 = vld [vmem:[%s202 + $0x78] sm:$0xf]
                %235 = vst [vmem:[%s203 + $0x3c] sm:$0xf] %v234
              $region41: #{unet_forward.33} parent=35 // loop_footer
                %s201 = sadd.s32 1, %s197
              $region42: #{unet_forward.33} parent=35 // loop_footer_branch
                %196 = sbr.rel target = $region38
              $region43: #{unet_forward.33} parent=35 // loop_exit
                _
            $region36: #{unet_forward.33} parent=27 // pred_fallthru
              _
          $region28: #{unet_forward.33} parent=23 // pred_fallthru
            _
          %287 = vnop
        $region24: #{unet_forward.33} parent=19 // pred_fallthru
          _
        // Predicated region
        $region62: #{unet_forward.33} parent=19 // pred_check
          %p288 = pneg %p94
        $region63: #{unet_forward.33} parent=19 // pred_check_branch
          %290 = sbr.rel (%p288) target = $region65
        $region64: #{unet_forward.33} parent=19 // pred_region
          %p291 = scmp.lt.s32.totalorder %s18, 1
          %s292 = scalar_select %p291, %s18, 1
          %s293 = scalar_lea.vmem %s2, %s292
        $region65: #{unet_forward.33} parent=19 // pred_fallthru
          _
        // Predicated region
        $region66: #{unet_forward.33} parent=19 // pred_check
          %p294 = pneg %p120
        $region67: #{unet_forward.33} parent=19 // pred_check_branch
          %296 = sbr.rel (%p294) target = $region69
        $region68: #{unet_forward.33} parent=19 // pred_region
          %p297 = scmp.lt.s32.totalorder %s18, 1
          %s298 = scalar_select %p297, %s18, 1
          %s299 = scalar_lea.vmem %s3, %s298
        $region69: #{unet_forward.33} parent=19 // pred_fallthru
          _
      $region20: #{unet_forward.33} parent=5 // pred_fallthru
        _
      %p300 = scmp.le.s32.totalorder 1, %s10
      %p301 = scmp.lt.s32.totalorder %s10, 3
      %p302 = pnand %p300, %p301
      %p303 = pneg %p302
      // Predicated region
      $region70: #{unet_forward.33} parent=5 // pred_check
        _
      $region71: #{unet_forward.33} parent=5 // pred_check_branch
        %305 = sbr.rel (%p302) target = $region73
      $region72: #{unet_forward.33} parent=5 // pred_region
        %s306 = ssub.s32 %s10, 1
        %s307 = sand.u32 %s61, 1
        %s308 = sand.u32 %s61, 1
        %s309 = smul.addr %s308, 64
        %s310 = scalar_lea.vmem [#allocation2], %s309
        // Predicated region
        $region74: #{unet_forward.33} parent=72 // pred_check
          %p311 = pneg %p74
        $region75: #{unet_forward.33} parent=72 // pred_check_branch
          %313 = sbr.rel (%p311) target = $region77
        $region76: #{unet_forward.33} parent=72 // pred_region
          _
        $region77: #{unet_forward.33} parent=72 // pred_fallthru
          _
        %p314 = scmp.lt.s32.totalorder %s19, 0
        %s315 = scalar_select %p314, %s19, 0
        %s316 = smul.addr %s315, 4
        %s317 = scalar_lea.vmem %s0, %s316
        %p318 = pneg %p48
        %p319 = pneg %p45
        %s320 = sand.u32 %s61, 1
        %s321 = sand.u32 %s61, 1
        %s322 = smul.addr %s321, 64
        %s323 = scalar_lea.vmem [#allocation2], %s322
        %p324 = pneg %p74
        %p325 = pneg %p71
        %p326 = scmp.lt.s32.totalorder %s20, 1
        %s327 = scalar_select %p326, %s20, 1
        %s328 = scalar_lea.vmem %s2, %s327
        %p329 = pneg %p100
        %p330 = pneg %p97
        %p331 = scmp.lt.s32.totalorder %s20, 1
        %s332 = scalar_select %p331, %s20, 1
        %s333 = scalar_lea.vmem %s3, %s332
        %p334 = pneg %p126
        %p335 = pneg %p123
        %p336 = pneg %p154
        %p337 = pneg %p151
        %p338 = scmp.lt.s32.totalorder %s19, 0
        %s339 = scalar_select %p338, %s19, 0
        %p340 = scmp.lt.s32.totalorder %s20, 1
        %s341 = scalar_select %p340, %s20, 1
        %s342 = smul.addr %s339, 2
        %s343 = sadd.s32 %s341, %s342
        %s344 = smul.addr %s343, 4
        %s345 = scalar_lea.vmem %s4, %s344
        %p346 = scmp.lt.s32.totalorder %s19, 0
        %s347 = scalar_select %p346, %s19, 0
        %s348 = smul.addr %s347, 4
        %s349 = scalar_lea.vmem %s0, %s348
        %p350 = scmp.lt.s32.totalorder %s20, 1
        %s351 = scalar_select %p350, %s20, 1
        %s352 = scalar_lea.vmem %s2, %s351
        %p353 = scmp.lt.s32.totalorder %s20, 1
        %s354 = scalar_select %p353, %s20, 1
        %s355 = scalar_lea.vmem %s3, %s354
        %p356 = scmp.lt.s32.totalorder %s19, 0
        %s357 = scalar_select %p356, %s19, 0
        %p358 = scmp.lt.s32.totalorder %s20, 1
        %s359 = scalar_select %p358, %s20, 1
        %s360 = smul.addr %s357, 2
        %s361 = sadd.s32 %s359, %s360
        %s362 = smul.addr %s361, 4
        %s363 = scalar_lea.vmem %s4, %s362
        %v365 = vld [vmem:[%s349] sm:$0xf]
        %v366 = vld [vmem:[%s310] sm:$0xf]
        %v367 = vld [vmem:[%s310 + $0x4] sm:$0xf]
        %v368 = vld [vmem:[%s310 + $0x8] sm:$0xf]
        %v369 = vld [vmem:[%s310 + $0xc] sm:$0xf]
        %v370 = vld [vmem:[%s310 + $0x10] sm:$0xf]
        %v371 = vld [vmem:[%s310 + $0x14] sm:$0xf]
        %v372 = vld [vmem:[%s310 + $0x18] sm:$0xf]
        %v373 = vld [vmem:[%s310 + $0x1c] sm:$0xf]
        %v374 = vld [vmem:[%s310 + $0x20] sm:$0xf]
        %v375 = vld [vmem:[%s310 + $0x24] sm:$0xf]
        %v376 = vld [vmem:[%s310 + $0x28] sm:$0xf]
        %v377 = vld [vmem:[%s310 + $0x2c] sm:$0xf]
        %v378 = vld [vmem:[%s310 + $0x30] sm:$0xf]
        %v379 = vld [vmem:[%s310 + $0x34] sm:$0xf]
        %v380 = vld [vmem:[%s310 + $0x38] sm:$0xf]
        %v381 = vld [vmem:[%s310 + $0x3c] sm:$0xf]
        %v398 = vunpack.c.l.b16 %v366
        %v399 = vunpack.c.l.b16 %v367
        %v400 = vunpack.c.l.b16 %v368
        %v401 = vunpack.c.l.b16 %v369
        %v402 = vunpack.c.l.b16 %v370
        %v403 = vunpack.c.l.b16 %v371
        %v404 = vunpack.c.l.b16 %v372
        %v405 = vunpack.c.l.b16 %v373
        %v406 = vunpack.c.l.b16 %v374
        %v407 = vunpack.c.l.b16 %v375
        %v408 = vunpack.c.l.b16 %v376
        %v409 = vunpack.c.l.b16 %v377
        %v410 = vunpack.c.l.b16 %v378
        %v411 = vunpack.c.l.b16 %v379
        %v412 = vunpack.c.l.b16 %v380
        %v413 = vunpack.c.l.b16 %v381
        %v414 = vpack.c.b16 %v399, %v398
        %v415 = vpack.c.b16 %v401, %v400
        %v416 = vpack.c.b16 %v403, %v402
        %v417 = vpack.c.b16 %v405, %v404
        %v418 = vpack.c.b16 %v407, %v406
        %v419 = vpack.c.b16 %v409, %v408
        %v420 = vpack.c.b16 %v411, %v410
        %v421 = vpack.c.b16 %v413, %v412
        %430 = vmatprep.subr.bf16.mxu0 0
        %431 = vmatpush1.bf16.msra.mxu0 %v414
        %432 = vmatprep.subr.bf16.mxu0 0
        %433 = vmatpush1.bf16.msra.mxu0 %v415
        %434 = vmatprep.subr.bf16.mxu0 0
        %435 = vmatpush1.bf16.msra.mxu0 %v416
        %436 = vmatprep.subr.bf16.mxu0 0
        %437 = vmatpush1.bf16.msra.mxu0 %v417
        %438 = vmatprep.subr.bf16.mxu0 0
        %439 = vmatpush1.bf16.msra.mxu0 %v418
        %440 = vmatprep.subr.bf16.mxu0 0
        %441 = vmatpush1.bf16.msra.mxu0 %v419
        %442 = vmatprep.subr.bf16.mxu0 0
        %443 = vmatpush1.bf16.msra.mxu0 %v420
        %444 = vmatprep.subr.bf16.mxu0 0
        %445 = vmatpush1.bf16.msra.mxu0 %v421
        %446 = vmatprep.subr.bf16.mxu0 0
        %447 = vmatpush1.bf16.msra.mxu0 0
        %448 = vmatprep.subr.bf16.mxu0 0
        %449 = vmatpush1.bf16.msra.mxu0 0
        %450 = vmatprep.subr.bf16.mxu0 0
        %451 = vmatpush1.bf16.msra.mxu0 0
        %452 = vmatprep.subr.bf16.mxu0 0
        %453 = vmatpush1.bf16.msra.mxu0 0
        %454 = vmatprep.subr.bf16.mxu0 0
        %455 = vmatpush1.bf16.msra.mxu0 0
        %456 = vmatprep.subr.bf16.mxu0 0
        %457 = vmatpush1.bf16.msra.mxu0 0
        %458 = vmatprep.subr.bf16.mxu0 0
        %459 = vmatpush1.bf16.msra.mxu0 0
        %460 = vmatprep.subr.bf16.mxu0 0
        %461 = vmatpush1.bf16.msra.mxu0 0
        %462 = vmatprep.mubr.bf16.mxu0 0
        %463 = vmatmul.mubr.bf16.gmra.mrb[0].mxu0 %v365
        %v464 = vpop.f32.mrb[0].mxu0
        %v465 = vadd.f32 0.0, %v464
        %v466 = vpop.f32.mrb[0].mxu0
        %v467 = vpop.f32.mrb[0].mxu0
        %v468 = vpop.f32.mrb[0].mxu0
        %469 = vdwg.mxu0
        %v470 = vld [vmem:[%s352] sm:$0x1]
        %v472 = vlaneseq
        %v473 = vshrl.u32 %v472, 7
        %v474 = vsub.s32 0, %v473
        %v475 = vrot.slane %v470, %v474
        %v477 = vmul.f32 %v465, %v475
        %v478 = vld [vmem:[%s355] sm:$0x1]
        %v480 = vlaneseq
        %v481 = vshrl.u32 %v480, 7
        %v482 = vsub.s32 0, %v481
        %v483 = vrot.slane %v478, %v482
        %v485 = vadd.f32 %v477, %v483
        %v486 = vpack.c.bf16 %v485, %v485
        %487 = vst [vmem:[%s363] sm:$0xf] %v486
        %p488 = scmp.lt.s32.totalorder %s19, 0
        %s489 = scalar_select %p488, %s19, 0
        %p490 = scmp.lt.s32.totalorder %s20, 1
        %s491 = scalar_select %p490, %s20, 1
        %s492 = smul.addr %s489, 2
        %s493 = sadd.s32 %s491, %s492
        %s494 = smul.addr %s493, 4
        %s495 = scalar_lea.vmem %s4, %s494
        // Predicated region
        $region78: #{unet_forward.33} parent=72 // pred_check
          %p496 = pneg %p151
        $region79: #{unet_forward.33} parent=72 // pred_check_branch
          %498 = sbr.rel (%p496) target = $region81
        $region80: #{unet_forward.33} parent=72 // pred_region
          _
        $region81: #{unet_forward.33} parent=72 // pred_fallthru
          _
      $region73: #{unet_forward.33} parent=5 // pred_fallthru
        _
      %p499 = scmp.le.s32.totalorder 2, %s10
      // Predicated region
      $region82: #{unet_forward.33} parent=5 // pred_check
        %p500 = pneg %p499
      $region83: #{unet_forward.33} parent=5 // pred_check_branch
        %502 = sbr.rel (%p500) target = $region85
      $region84: #{unet_forward.33} parent=5 // pred_region
        %s503 = ssub.s32 %s10, 2
        // Predicated region
        $region86: #{unet_forward.33} parent=84 // pred_check
          %p504 = pneg %p157
        $region87: #{unet_forward.33} parent=84 // pred_check_branch
          %506 = sbr.rel (%p504) target = $region89
        $region88: #{unet_forward.33} parent=84 // pred_region
          %p507 = scmp.lt.s32.totalorder %s21, 0
          %s508 = scalar_select %p507, %s21, 0
          %p509 = scmp.lt.s32.totalorder %s22, 1
          %s510 = scalar_select %p509, %s22, 1
          %s511 = smul.addr %s508, 2
          %s512 = sadd.s32 %s510, %s511
          %s513 = smul.addr %s512, 4
          %s514 = scalar_lea.vmem %s4, %s513
        $region89: #{unet_forward.33} parent=84 // pred_fallthru
          _
      $region85: #{unet_forward.33} parent=5 // pred_fallthru
        _
    $region6: #{unet_forward.33} parent=1 // loop_footer
      %s14 = sadd.s32 1, %s10
    $region7: #{unet_forward.33} parent=1 // loop_footer_branch
      %9 = sbr.rel target = $region3
    $region8: #{unet_forward.33} parent=1 // loop_exit
      _

// kernel: unet_forward.32
$region0: #{unet_forward.32}
  #allocation0 [shape = 'u32[]', space=smem, size = 0x4, offset = 0x4, fixed_abs, tag = 'smem constant byte address 0x4 - core index']
  #allocation1 [shape = 'u32[144,128]{1,0:T(1,128)}', space=vmem, size = 0x12000, scoped, tag = 'internal scratch']
  %s0 = inlined_call_operand.vmem [shape: bf16[8,1152], index: 0, kind: input, shape index: {}]
  %s1 = inlined_call_operand.vmem [shape: bf16[1152,128], index: 1, kind: input, shape index: {}]
  %s2 = inlined_call_operand.vmem [shape: f32[1,128], index: 2, kind: input, shape index: {}]
  %s3 = inlined_call_operand.vmem [shape: f32[1,128], index: 3, kind: input, shape index: {}]
  %s4 = inlined_call_operand.vmem [shape: bf16[8,128], index: 4, kind: output, shape index: {}]
  %s5 = sld [smem:[#allocation0]]
  $region26: #{unet_forward.32} parent=0
    _
  %s7 = ssub.s32 1, %s5
  %s8 = scalar_select 0, %s7, %s5
  // Predicated region
  $region2: #{unet_forward.32} parent=0 // pred_check
    _
  $region3: #{unet_forward.32} parent=0 // pred_check_branch
    %10 = sbr.rel (0) target = $region5
  $region4: #{unet_forward.32} parent=0 // pred_region
    _
  $region5: #{unet_forward.32} parent=0 // pred_fallthru
    _
  // Predicated region
  $region6: #{unet_forward.32} parent=0 // pred_check
    _
  $region7: #{unet_forward.32} parent=0 // pred_check_branch
    %12 = sbr.rel (0) target = $region9
  $region8: #{unet_forward.32} parent=0 // pred_region
    _
  $region9: #{unet_forward.32} parent=0 // pred_fallthru
    _
  // Predicated region
  $region10: #{unet_forward.32} parent=0 // pred_check
    _
  $region11: #{unet_forward.32} parent=0 // pred_check_branch
    %14 = sbr.rel (0) target = $region13
  $region12: #{unet_forward.32} parent=0 // pred_region
    _
  $region13: #{unet_forward.32} parent=0 // pred_fallthru
    _
  // Predicated region
  $region14: #{unet_forward.32} parent=0 // pred_check
    _
  $region15: #{unet_forward.32} parent=0 // pred_check_branch
    %16 = sbr.rel (0) target = $region17
  $region16: #{unet_forward.32} parent=0 // pred_region
    _
  $region17: #{unet_forward.32} parent=0 // pred_fallthru
    _
  %v18 = vld [vmem:[%s0] sm:$0xff]
  %v19 = vld [vmem:[%s0 + $0x8] sm:$0xff]
  %v20 = vld [vmem:[%s0 + $0x10] sm:$0xff]
  %v21 = vld [vmem:[%s0 + $0x18] sm:$0xff]
  %v22 = vld [vmem:[%s0 + $0x20] sm:$0xf]
  %v23 = vld [vmem:[%s1] sm:$0xf]
  %v24 = vld [vmem:[%s1 + $0x4] sm:$0xf]
  %v25 = vld [vmem:[%s1 + $0x8] sm:$0xf]
  %v26 = vld [vmem:[%s1 + $0xc] sm:$0xf]
  %v27 = vld [vmem:[%s1 + $0x10] sm:$0xf]
  %v28 = vld [vmem:[%s1 + $0x14] sm:$0xf]
  %v29 = vld [vmem:[%s1 + $0x18] sm:$0xf]
  %v30 = vld [vmem:[%s1 + $0x1c] sm:$0xf]
  %v31 = vld [vmem:[%s1 + $0x20] sm:$0xf]
  %v32 = vld [vmem:[%s1 + $0x24] sm:$0xf]
  %v33 = vld [vmem:[%s1 + $0x28] sm:$0xf]
  %v34 = vld [vmem:[%s1 + $0x2c] sm:$0xf]
  %v35 = vld [vmem:[%s1 + $0x30] sm:$0xf]
  %v36 = vld [vmem:[%s1 + $0x34] sm:$0xf]
  %v37 = vld [vmem:[%s1 + $0x38] sm:$0xf]
  %v38 = vld [vmem:[%s1 + $0x3c] sm:$0xf]
  %v39 = vld [vmem:[%s1 + $0x40] sm:$0xf]
  %v40 = vld [vmem:[%s1 + $0x44] sm:$0xf]
  %v41 = vld [vmem:[%s1 + $0x48] sm:$0xf]
  %v42 = vld [vmem:[%s1 + $0x4c] sm:$0xf]
  %v43 = vld [vmem:[%s1 + $0x50] sm:$0xf]
  %v44 = vld [vmem:[%s1 + $0x54] sm:$0xf]
  %v45 = vld [vmem:[%s1 + $0x58] sm:$0xf]
  %v46 = vld [vmem:[%s1 + $0x5c] sm:$0xf]
  %v47 = vld [vmem:[%s1 + $0x60] sm:$0xf]
  %v48 = vld [vmem:[%s1 + $0x64] sm:$0xf]
  %v49 = vld [vmem:[%s1 + $0x68] sm:$0xf]
  %v50 = vld [vmem:[%s1 + $0x6c] sm:$0xf]
  %v51 = vld [vmem:[%s1 + $0x70] sm:$0xf]
  %v52 = vld [vmem:[%s1 + $0x74] sm:$0xf]
  %v53 = vld [vmem:[%s1 + $0x78] sm:$0xf]
  %v54 = vld [vmem:[%s1 + $0x7c] sm:$0xf]
  %v55 = vld [vmem:[%s1 + $0x80] sm:$0xf]
  %v56 = vld [vmem:[%s1 + $0x84] sm:$0xf]
  %v57 = vld [vmem:[%s1 + $0x88] sm:$0xf]
  %v58 = vld [vmem:[%s1 + $0x8c] sm:$0xf]
  %v59 = vld [vmem:[%s1 + $0x90] sm:$0xf]
  %v60 = vld [vmem:[%s1 + $0x94] sm:$0xf]
  %v61 = vld [vmem:[%s1 + $0x98] sm:$0xf]
  %v62 = vld [vmem:[%s1 + $0x9c] sm:$0xf]
  %v63 = vld [vmem:[%s1 + $0xa0] sm:$0xf]
  %v64 = vld [vmem:[%s1 + $0xa4] sm:$0xf]
  %v65 = vld [vmem:[%s1 + $0xa8] sm:$0xf]
  %v66 = vld [vmem:[%s1 + $0xac] sm:$0xf]
  %v67 = vld [vmem:[%s1 + $0xb0] sm:$0xf]
  %v68 = vld [vmem:[%s1 + $0xb4] sm:$0xf]
  %v69 = vld [vmem:[%s1 + $0xb8] sm:$0xf]
  %v70 = vld [vmem:[%s1 + $0xbc] sm:$0xf]
  %v71 = vld [vmem:[%s1 + $0xc0] sm:$0xf]
  %v72 = vld [vmem:[%s1 + $0xc4] sm:$0xf]
  %v73 = vld [vmem:[%s1 + $0xc8] sm:$0xf]
  %v74 = vld [vmem:[%s1 + $0xcc] sm:$0xf]
  %v75 = vld [vmem:[%s1 + $0xd0] sm:$0xf]
  %v76 = vld [vmem:[%s1 + $0xd4] sm:$0xf]
  %v77 = vld [vmem:[%s1 + $0xd8] sm:$0xf]
  %v78 = vld [vmem:[%s1 + $0xdc] sm:$0xf]
  %v79 = vld [vmem:[%s1 + $0xe0] sm:$0xf]
  %v80 = vld [vmem:[%s1 + $0xe4] sm:$0xf]
  %v81 = vld [vmem:[%s1 + $0xe8] sm:$0xf]
  %v82 = vld [vmem:[%s1 + $0xec] sm:$0xf]
  %v83 = vld [vmem:[%s1 + $0xf0] sm:$0xf]
  %v84 = vld [vmem:[%s1 + $0xf4] sm:$0xf]
  %v85 = vld [vmem:[%s1 + $0xf8] sm:$0xf]
  %v86 = vld [vmem:[%s1 + $0xfc] sm:$0xf]
  %v87 = vld [vmem:[%s1 + $0x100] sm:$0xf]
  %v88 = vld [vmem:[%s1 + $0x104] sm:$0xf]
  %v89 = vld [vmem:[%s1 + $0x108] sm:$0xf]
  %v90 = vld [vmem:[%s1 + $0x10c] sm:$0xf]
  %v91 = vld [vmem:[%s1 + $0x110] sm:$0xf]
  %v92 = vld [vmem:[%s1 + $0x114] sm:$0xf]
  %v93 = vld [vmem:[%s1 + $0x118] sm:$0xf]
  %v94 = vld [vmem:[%s1 + $0x11c] sm:$0xf]
  %v95 = vld [vmem:[%s1 + $0x120] sm:$0xf]
  %v96 = vld [vmem:[%s1 + $0x124] sm:$0xf]
  %v97 = vld [vmem:[%s1 + $0x128] sm:$0xf]
  %v98 = vld [vmem:[%s1 + $0x12c] sm:$0xf]
  %v99 = vld [vmem:[%s1 + $0x130] sm:$0xf]
  %v100 = vld [vmem:[%s1 + $0x134] sm:$0xf]
  %v101 = vld [vmem:[%s1 + $0x138] sm:$0xf]
  %v102 = vld [vmem:[%s1 + $0x13c] sm:$0xf]
  %v103 = vld [vmem:[%s1 + $0x140] sm:$0xf]
  %v104 = vld [vmem:[%s1 + $0x144] sm:$0xf]
  %v105 = vld [vmem:[%s1 + $0x148] sm:$0xf]
  %v106 = vld [vmem:[%s1 + $0x14c] sm:$0xf]
  %v107 = vld [vmem:[%s1 + $0x150] sm:$0xf]
  %v108 = vld [vmem:[%s1 + $0x154] sm:$0xf]
  %v109 = vld [vmem:[%s1 + $0x158] sm:$0xf]
  %v110 = vld [vmem:[%s1 + $0x15c] sm:$0xf]
  %v111 = vld [vmem:[%s1 + $0x160] sm:$0xf]
  %v112 = vld [vmem:[%s1 + $0x164] sm:$0xf]
  %v113 = vld [vmem:[%s1 + $0x168] sm:$0xf]
  %v114 = vld [vmem:[%s1 + $0x16c] sm:$0xf]
  %v115 = vld [vmem:[%s1 + $0x170] sm:$0xf]
  %v116 = vld [vmem:[%s1 + $0x174] sm:$0xf]
  %v117 = vld [vmem:[%s1 + $0x178] sm:$0xf]
  %v118 = vld [vmem:[%s1 + $0x17c] sm:$0xf]
  %v119 = vld [vmem:[%s1 + $0x180] sm:$0xf]
  %v120 = vld [vmem:[%s1 + $0x184] sm:$0xf]
  %v121 = vld [vmem:[%s1 + $0x188] sm:$0xf]
  %v122 = vld [vmem:[%s1 + $0x18c] sm:$0xf]
  %v123 = vld [vmem:[%s1 + $0x190] sm:$0xf]
  %v124 = vld [vmem:[%s1 + $0x194] sm:$0xf]
  %v125 = vld [vmem:[%s1 + $0x198] sm:$0xf]
  %v126 = vld [vmem:[%s1 + $0x19c] sm:$0xf]
  %v127 = vld [vmem:[%s1 + $0x1a0] sm:$0xf]
  %v128 = vld [vmem:[%s1 + $0x1a4] sm:$0xf]
  %v129 = vld [vmem:[%s1 + $0x1a8] sm:$0xf]
  %v130 = vld [vmem:[%s1 + $0x1ac] sm:$0xf]
  %v131 = vld [vmem:[%s1 + $0x1b0] sm:$0xf]
  %v132 = vld [vmem:[%s1 + $0x1b4] sm:$0xf]
  %v133 = vld [vmem:[%s1 + $0x1b8] sm:$0xf]
  %v134 = vld [vmem:[%s1 + $0x1bc] sm:$0xf]
  %v135 = vld [vmem:[%s1 + $0x1c0] sm:$0xf]
  %v136 = vld [vmem:[%s1 + $0x1c4] sm:$0xf]
  %v137 = vld [vmem:[%s1 + $0x1c8] sm:$0xf]
  %v138 = vld [vmem:[%s1 + $0x1cc] sm:$0xf]
  %v139 = vld [vmem:[%s1 + $0x1d0] sm:$0xf]
  %v140 = vld [vmem:[%s1 + $0x1d4] sm:$0xf]
  %v141 = vld [vmem:[%s1 + $0x1d8] sm:$0xf]
  %v142 = vld [vmem:[%s1 + $0x1dc] sm:$0xf]
  %v143 = vld [vmem:[%s1 + $0x1e0] sm:$0xf]
  %v144 = vld [vmem:[%s1 + $0x1e4] sm:$0xf]
  %v145 = vld [vmem:[%s1 + $0x1e8] sm:$0xf]
  %v146 = vld [vmem:[%s1 + $0x1ec] sm:$0xf]
  %v147 = vld [vmem:[%s1 + $0x1f0] sm:$0xf]
  %v148 = vld [vmem:[%s1 + $0x1f4] sm:$0xf]
  %v149 = vld [vmem:[%s1 + $0x1f8] sm:$0xf]
  %v150 = vld [vmem:[%s1 + $0x1fc] sm:$0xf]
  %v151 = vld [vmem:[%s1 + $0x200] sm:$0xf]
  %v152 = vld [vmem:[%s1 + $0x204] sm:$0xf]
  %v153 = vld [vmem:[%s1 + $0x208] sm:$0xf]
  %v154 = vld [vmem:[%s1 + $0x20c] sm:$0xf]
  %v155 = vld [vmem:[%s1 + $0x210] sm:$0xf]
  %v156 = vld [vmem:[%s1 + $0x214] sm:$0xf]
  %v157 = vld [vmem:[%s1 + $0x218] sm:$0xf]
  %v158 = vld [vmem:[%s1 + $0x21c] sm:$0xf]
  %v159 = vld [vmem:[%s1 + $0x220] sm:$0xf]
  %v160 = vld [vmem:[%s1 + $0x224] sm:$0xf]
  %v161 = vld [vmem:[%s1 + $0x228] sm:$0xf]
  %v162 = vld [vmem:[%s1 + $0x22c] sm:$0xf]
  %v163 = vld [vmem:[%s1 + $0x230] sm:$0xf]
  %v164 = vld [vmem:[%s1 + $0x234] sm:$0xf]
  %v165 = vld [vmem:[%s1 + $0x238] sm:$0xf]
  %v166 = vld [vmem:[%s1 + $0x23c] sm:$0xf]
  %v172 = vunpack.c.l.b16 %v18
  %v173 = vunpack.c.h.b16 %v18
  %v174 = vunpack.c.l.b16 %v19
  %v175 = vunpack.c.h.b16 %v19
  %v176 = vunpack.c.l.b16 %v20
  %v177 = vunpack.c.h.b16 %v20
  %v178 = vunpack.c.l.b16 %v21
  %v179 = vunpack.c.h.b16 %v21
  %v180 = vunpack.c.l.b16 %v22
  %v181 = vpack.c.b16 %v172, %v172
  %v182 = vpack.c.b16 %v173, %v173
  %v183 = vpack.c.b16 %v174, %v174
  %v184 = vpack.c.b16 %v175, %v175
  %v185 = vpack.c.b16 %v176, %v176
  %v186 = vpack.c.b16 %v177, %v177
  %v187 = vpack.c.b16 %v178, %v178
  %v188 = vpack.c.b16 %v179, %v179
  %v189 = vpack.c.b16 %v180, %v180
  %v343 = vunpack.c.l.b16 %v23
  %v344 = vunpack.c.l.b16 %v24
  %v345 = vunpack.c.l.b16 %v25
  %v346 = vunpack.c.l.b16 %v26
  %v347 = vunpack.c.l.b16 %v27
  %v348 = vunpack.c.l.b16 %v28
  %v349 = vunpack.c.l.b16 %v29
  %v350 = vunpack.c.l.b16 %v30
  %v351 = vunpack.c.l.b16 %v31
  %v352 = vunpack.c.l.b16 %v32
  %v353 = vunpack.c.l.b16 %v33
  %v354 = vunpack.c.l.b16 %v34
  %v355 = vunpack.c.l.b16 %v35
  %v356 = vunpack.c.l.b16 %v36
  %v357 = vunpack.c.l.b16 %v37
  %v358 = vunpack.c.l.b16 %v38
  %v359 = vunpack.c.l.b16 %v39
  %v360 = vunpack.c.l.b16 %v40
  %v361 = vunpack.c.l.b16 %v41
  %v362 = vunpack.c.l.b16 %v42
  %v363 = vunpack.c.l.b16 %v43
  %v364 = vunpack.c.l.b16 %v44
  %v365 = vunpack.c.l.b16 %v45
  %v366 = vunpack.c.l.b16 %v46
  %v367 = vunpack.c.l.b16 %v47
  %v368 = vunpack.c.l.b16 %v48
  %v369 = vunpack.c.l.b16 %v49
  %v370 = vunpack.c.l.b16 %v50
  %v371 = vunpack.c.l.b16 %v51
  %v372 = vunpack.c.l.b16 %v52
  %v373 = vunpack.c.l.b16 %v53
  %v374 = vunpack.c.l.b16 %v54
  %v375 = vunpack.c.l.b16 %v55
  %v376 = vunpack.c.l.b16 %v56
  %v377 = vunpack.c.l.b16 %v57
  %v378 = vunpack.c.l.b16 %v58
  %v379 = vunpack.c.l.b16 %v59
  %v380 = vunpack.c.l.b16 %v60
  %v381 = vunpack.c.l.b16 %v61
  %v382 = vunpack.c.l.b16 %v62
  %v383 = vunpack.c.l.b16 %v63
  %v384 = vunpack.c.l.b16 %v64
  %v385 = vunpack.c.l.b16 %v65
  %v386 = vunpack.c.l.b16 %v66
  %v387 = vunpack.c.l.b16 %v67
  %v388 = vunpack.c.l.b16 %v68
  %v389 = vunpack.c.l.b16 %v69
  %v390 = vunpack.c.l.b16 %v70
  %v391 = vunpack.c.l.b16 %v71
  %v392 = vunpack.c.l.b16 %v72
  %v393 = vunpack.c.l.b16 %v73
  %v394 = vunpack.c.l.b16 %v74
  %v395 = vunpack.c.l.b16 %v75
  %v396 = vunpack.c.l.b16 %v76
  %v397 = vunpack.c.l.b16 %v77
  %v398 = vunpack.c.l.b16 %v78
  %v399 = vunpack.c.l.b16 %v79
  %v400 = vunpack.c.l.b16 %v80
  %v401 = vunpack.c.l.b16 %v81
  %v402 = vunpack.c.l.b16 %v82
  %v403 = vunpack.c.l.b16 %v83
  %v404 = vunpack.c.l.b16 %v84
  %v405 = vunpack.c.l.b16 %v85
  %v406 = vunpack.c.l.b16 %v86
  %v407 = vunpack.c.l.b16 %v87
  %v408 = vunpack.c.l.b16 %v88
  %v409 = vunpack.c.l.b16 %v89
  %v410 = vunpack.c.l.b16 %v90
  %v411 = vunpack.c.l.b16 %v91
  %v412 = vunpack.c.l.b16 %v92
  %v413 = vunpack.c.l.b16 %v93
  %v414 = vunpack.c.l.b16 %v94
  %v415 = vunpack.c.l.b16 %v95
  %v416 = vunpack.c.l.b16 %v96
  %v417 = vunpack.c.l.b16 %v97
  %v418 = vunpack.c.l.b16 %v98
  %v419 = vunpack.c.l.b16 %v99
  %v420 = vunpack.c.l.b16 %v100
  %v421 = vunpack.c.l.b16 %v101
  %v422 = vunpack.c.l.b16 %v102
  %v423 = vunpack.c.l.b16 %v103
  %v424 = vunpack.c.l.b16 %v104
  %v425 = vunpack.c.l.b16 %v105
  %v426 = vunpack.c.l.b16 %v106
  %v427 = vunpack.c.l.b16 %v107
  %v428 = vunpack.c.l.b16 %v108
  %v429 = vunpack.c.l.b16 %v109
  %v430 = vunpack.c.l.b16 %v110
  %v431 = vunpack.c.l.b16 %v111
  %v432 = vunpack.c.l.b16 %v112
  %v433 = vunpack.c.l.b16 %v113
  %v434 = vunpack.c.l.b16 %v114
  %v435 = vunpack.c.l.b16 %v115
  %v436 = vunpack.c.l.b16 %v116
  %v437 = vunpack.c.l.b16 %v117
  %v438 = vunpack.c.l.b16 %v118
  %v439 = vunpack.c.l.b16 %v119
  %v440 = vunpack.c.l.b16 %v120
  %v441 = vunpack.c.l.b16 %v121
  %v442 = vunpack.c.l.b16 %v122
  %v443 = vunpack.c.l.b16 %v123
  %v444 = vunpack.c.l.b16 %v124
  %v445 = vunpack.c.l.b16 %v125
  %v446 = vunpack.c.l.b16 %v126
  %v447 = vunpack.c.l.b16 %v127
  %v448 = vunpack.c.l.b16 %v128
  %v449 = vunpack.c.l.b16 %v129
  %v450 = vunpack.c.l.b16 %v130
  %v451 = vunpack.c.l.b16 %v131
  %v452 = vunpack.c.l.b16 %v132
  %v453 = vunpack.c.l.b16 %v133
  %v454 = vunpack.c.l.b16 %v134
  %v455 = vunpack.c.l.b16 %v135
  %v456 = vunpack.c.l.b16 %v136
  %v457 = vunpack.c.l.b16 %v137
  %v458 = vunpack.c.l.b16 %v138
  %v459 = vunpack.c.l.b16 %v139
  %v460 = vunpack.c.l.b16 %v140
  %v461 = vunpack.c.l.b16 %v141
  %v462 = vunpack.c.l.b16 %v142
  %v463 = vunpack.c.l.b16 %v143
  %v464 = vunpack.c.l.b16 %v144
  %v465 = vunpack.c.l.b16 %v145
  %v466 = vunpack.c.l.b16 %v146
  %v467 = vunpack.c.l.b16 %v147
  %v468 = vunpack.c.l.b16 %v148
  %v469 = vunpack.c.l.b16 %v149
  %v470 = vunpack.c.l.b16 %v150
  %v471 = vunpack.c.l.b16 %v151
  %v472 = vunpack.c.l.b16 %v152
  %v473 = vunpack.c.l.b16 %v153
  %v474 = vunpack.c.l.b16 %v154
  %v475 = vunpack.c.l.b16 %v155
  %v476 = vunpack.c.l.b16 %v156
  %v477 = vunpack.c.l.b16 %v157
  %v478 = vunpack.c.l.b16 %v158
  %v479 = vunpack.c.l.b16 %v159
  %v480 = vunpack.c.l.b16 %v160
  %v481 = vunpack.c.l.b16 %v161
  %v482 = vunpack.c.l.b16 %v162
  %v483 = vunpack.c.l.b16 %v163
  %v484 = vunpack.c.l.b16 %v164
  %v485 = vunpack.c.l.b16 %v165
  %v486 = vunpack.c.l.b16 %v166
  %v487 = vpack.c.b16 %v344, %v343
  %v488 = vpack.c.b16 %v346, %v345
  %v489 = vpack.c.b16 %v348, %v347
  %v490 = vpack.c.b16 %v350, %v349
  %v491 = vpack.c.b16 %v352, %v351
  %v492 = vpack.c.b16 %v354, %v353
  %v493 = vpack.c.b16 %v356, %v355
  %v494 = vpack.c.b16 %v358, %v357
  %v495 = vpack.c.b16 %v360, %v359
  %v496 = vpack.c.b16 %v362, %v361
  %v497 = vpack.c.b16 %v364, %v363
  %v498 = vpack.c.b16 %v366, %v365
  %v499 = vpack.c.b16 %v368, %v367
  %v500 = vpack.c.b16 %v370, %v369
  %v501 = vpack.c.b16 %v372, %v371
  %v502 = vpack.c.b16 %v374, %v373
  %v503 = vpack.c.b16 %v376, %v375
  %v504 = vpack.c.b16 %v378, %v377
  %v505 = vpack.c.b16 %v380, %v379
  %v506 = vpack.c.b16 %v382, %v381
  %v507 = vpack.c.b16 %v384, %v383
  %v508 = vpack.c.b16 %v386, %v385
  %v509 = vpack.c.b16 %v388, %v387
  %v510 = vpack.c.b16 %v390, %v389
  %v511 = vpack.c.b16 %v392, %v391
  %v512 = vpack.c.b16 %v394, %v393
  %v513 = vpack.c.b16 %v396, %v395
  %v514 = vpack.c.b16 %v398, %v397
  %v515 = vpack.c.b16 %v400, %v399
  %v516 = vpack.c.b16 %v402, %v401
  %v517 = vpack.c.b16 %v404, %v403
  %v518 = vpack.c.b16 %v406, %v405
  %v519 = vpack.c.b16 %v408, %v407
  %v520 = vpack.c.b16 %v410, %v409
  %v521 = vpack.c.b16 %v412, %v411
  %v522 = vpack.c.b16 %v414, %v413
  %v523 = vpack.c.b16 %v416, %v415
  %v524 = vpack.c.b16 %v418, %v417
  %v525 = vpack.c.b16 %v420, %v419
  %v526 = vpack.c.b16 %v422, %v421
  %v527 = vpack.c.b16 %v424, %v423
  %v528 = vpack.c.b16 %v426, %v425
  %v529 = vpack.c.b16 %v428, %v427
  %v530 = vpack.c.b16 %v430, %v429
  %v531 = vpack.c.b16 %v432, %v431
  %v532 = vpack.c.b16 %v434, %v433
  %v533 = vpack.c.b16 %v436, %v435
  %v534 = vpack.c.b16 %v438, %v437
  %v535 = vpack.c.b16 %v440, %v439
  %v536 = vpack.c.b16 %v442, %v441
  %v537 = vpack.c.b16 %v444, %v443
  %v538 = vpack.c.b16 %v446, %v445
  %v539 = vpack.c.b16 %v448, %v447
  %v540 = vpack.c.b16 %v450, %v449
  %v541 = vpack.c.b16 %v452, %v451
  %v542 = vpack.c.b16 %v454, %v453
  %v543 = vpack.c.b16 %v456, %v455
  %v544 = vpack.c.b16 %v458, %v457
  %v545 = vpack.c.b16 %v460, %v459
  %v546 = vpack.c.b16 %v462, %v461
  %v547 = vpack.c.b16 %v464, %v463
  %v548 = vpack.c.b16 %v466, %v465
  %v549 = vpack.c.b16 %v468, %v467
  %v550 = vpack.c.b16 %v470, %v469
  %v551 = vpack.c.b16 %v472, %v471
  %v552 = vpack.c.b16 %v474, %v473
  %v553 = vpack.c.b16 %v476, %v475
  %v554 = vpack.c.b16 %v478, %v477
  %v555 = vpack.c.b16 %v480, %v479
  %v556 = vpack.c.b16 %v482, %v481
  %v557 = vpack.c.b16 %v484, %v483
  %v558 = vpack.c.b16 %v486, %v485
  %631 = vmatprep.subr.bf16.mxu0 0
  %632 = vmatpush1.bf16.msra.mxu0 %v487
  %633 = vmatprep.subr.bf16.mxu0 0
  %634 = vmatpush1.bf16.msra.mxu0 %v488
  %635 = vmatprep.subr.bf16.mxu0 0
  %636 = vmatpush1.bf16.msra.mxu0 %v489
  %637 = vmatprep.subr.bf16.mxu0 0
  %638 = vmatpush1.bf16.msra.mxu0 %v490
  %639 = vmatprep.subr.bf16.mxu0 0
  %640 = vmatpush1.bf16.msra.mxu0 %v491
  %641 = vmatprep.subr.bf16.mxu0 0
  %642 = vmatpush1.bf16.msra.mxu0 %v492
  %643 = vmatprep.subr.bf16.mxu0 0
  %644 = vmatpush1.bf16.msra.mxu0 %v493
  %645 = vmatprep.subr.bf16.mxu0 0
  %646 = vmatpush1.bf16.msra.mxu0 %v494
  %647 = vmatprep.subr.bf16.mxu0 0
  %648 = vmatpush1.bf16.msra.mxu0 %v495
  %649 = vmatprep.subr.bf16.mxu0 0
  %650 = vmatpush1.bf16.msra.mxu0 %v496
  %651 = vmatprep.subr.bf16.mxu0 0
  %652 = vmatpush1.bf16.msra.mxu0 %v497
  %653 = vmatprep.subr.bf16.mxu0 0
  %654 = vmatpush1.bf16.msra.mxu0 %v498
  %655 = vmatprep.subr.bf16.mxu0 0
  %656 = vmatpush1.bf16.msra.mxu0 %v499
  %657 = vmatprep.subr.bf16.mxu0 0
  %658 = vmatpush1.bf16.msra.mxu0 %v500
  %659 = vmatprep.subr.bf16.mxu0 0
  %660 = vmatpush1.bf16.msra.mxu0 %v501
  %661 = vmatprep.subr.bf16.mxu0 0
  %662 = vmatpush1.bf16.msra.mxu0 %v502
  %663 = vmatprep.mubr.bf16.mxu0 %v182
  %664 = vmatmul.mubr.bf16.gmra.mrb[0].mxu0 %v181
  %v665 = vpop.f32.mrb[0].mxu0
  %v666 = vadd.f32 0.0, %v665
  %v667 = vpop.f32.mrb[0].mxu0
  %v668 = vpop.f32.mrb[0].mxu0
  %v669 = vpop.f32.mrb[0].mxu0
  %670 = vdwg.mxu0
  %671 = vmatprep.subr.bf16.mxu0 0
  %672 = vmatpush1.bf16.msra.mxu0 %v503
  %673 = vmatprep.subr.bf16.mxu0 0
  %674 = vmatpush1.bf16.msra.mxu0 %v504
  %675 = vmatprep.subr.bf16.mxu0 0
  %676 = vmatpush1.bf16.msra.mxu0 %v505
  %677 = vmatprep.subr.bf16.mxu0 0
  %678 = vmatpush1.bf16.msra.mxu0 %v506
  %679 = vmatprep.subr.bf16.mxu0 0
  %680 = vmatpush1.bf16.msra.mxu0 %v507
  %681 = vmatprep.subr.bf16.mxu0 0
  %682 = vmatpush1.bf16.msra.mxu0 %v508
  %683 = vmatprep.subr.bf16.mxu0 0
  %684 = vmatpush1.bf16.msra.mxu0 %v509
  %685 = vmatprep.subr.bf16.mxu0 0
  %686 = vmatpush1.bf16.msra.mxu0 %v510
  %687 = vmatprep.subr.bf16.mxu0 0
  %688 = vmatpush1.bf16.msra.mxu0 %v511
  %689 = vmatprep.subr.bf16.mxu0 0
  %690 = vmatpush1.bf16.msra.mxu0 %v512
  %691 = vmatprep.subr.bf16.mxu0 0
  %692 = vmatpush1.bf16.msra.mxu0 %v513
  %693 = vmatprep.subr.bf16.mxu0 0
  %694 = vmatpush1.bf16.msra.mxu0 %v514
  %695 = vmatprep.subr.bf16.mxu0 0
  %696 = vmatpush1.bf16.msra.mxu0 %v515
  %697 = vmatprep.subr.bf16.mxu0 0
  %698 = vmatpush1.bf16.msra.mxu0 %v516
  %699 = vmatprep.subr.bf16.mxu0 0
  %700 = vmatpush1.bf16.msra.mxu0 %v517
  %701 = vmatprep.subr.bf16.mxu0 0
  %702 = vmatpush1.bf16.msra.mxu0 %v518
  %703 = vmatprep.mubr.bf16.mxu0 %v184
  %704 = vmatmul.mubr.bf16.gmra.mrb[0].mxu0 %v183
  %v705 = vpop.f32.mrb[0].mxu0
  %v706 = vadd.f32 %v666, %v705
  %v707 = vpop.f32.mrb[0].mxu0
  %v708 = vpop.f32.mrb[0].mxu0
  %v709 = vpop.f32.mrb[0].mxu0
  %710 = vdwg.mxu0
  %711 = vmatprep.subr.bf16.mxu0 0
  %712 = vmatpush1.bf16.msra.mxu0 %v519
  %713 = vmatprep.subr.bf16.mxu0 0
  %714 = vmatpush1.bf16.msra.mxu0 %v520
  %715 = vmatprep.subr.bf16.mxu0 0
  %716 = vmatpush1.bf16.msra.mxu0 %v521
  %717 = vmatprep.subr.bf16.mxu0 0
  %718 = vmatpush1.bf16.msra.mxu0 %v522
  %719 = vmatprep.subr.bf16.mxu0 0
  %720 = vmatpush1.bf16.msra.mxu0 %v523
  %721 = vmatprep.subr.bf16.mxu0 0
  %722 = vmatpush1.bf16.msra.mxu0 %v524
  %723 = vmatprep.subr.bf16.mxu0 0
  %724 = vmatpush1.bf16.msra.mxu0 %v525
  %725 = vmatprep.subr.bf16.mxu0 0
  %726 = vmatpush1.bf16.msra.mxu0 %v526
  %727 = vmatprep.subr.bf16.mxu0 0
  %728 = vmatpush1.bf16.msra.mxu0 %v527
  %729 = vmatprep.subr.bf16.mxu0 0
  %730 = vmatpush1.bf16.msra.mxu0 %v528
  %731 = vmatprep.subr.bf16.mxu0 0
  %732 = vmatpush1.bf16.msra.mxu0 %v529
  %733 = vmatprep.subr.bf16.mxu0 0
  %734 = vmatpush1.bf16.msra.mxu0 %v530
  %735 = vmatprep.subr.bf16.mxu0 0
  %736 = vmatpush1.bf16.msra.mxu0 %v531
  %737 = vmatprep.subr.bf16.mxu0 0
  %738 = vmatpush1.bf16.msra.mxu0 %v532
  %739 = vmatprep.subr.bf16.mxu0 0
  %740 = vmatpush1.bf16.msra.mxu0 %v533
  %741 = vmatprep.subr.bf16.mxu0 0
  %742 = vmatpush1.bf16.msra.mxu0 %v534
  %743 = vmatprep.mubr.bf16.mxu0 %v186
  %744 = vmatmul.mubr.bf16.gmra.mrb[0].mxu0 %v185
  %v745 = vpop.f32.mrb[0].mxu0
  %v746 = vadd.f32 %v706, %v745
  %v747 = vpop.f32.mrb[0].mxu0
  %v748 = vpop.f32.mrb[0].mxu0
  %v749 = vpop.f32.mrb[0].mxu0
  %750 = vdwg.mxu0
  %751 = vmatprep.subr.bf16.mxu0 0
  %752 = vmatpush1.bf16.msra.mxu0 %v535
  %753 = vmatprep.subr.bf16.mxu0 0
  %754 = vmatpush1.bf16.msra.mxu0 %v536
  %755 = vmatprep.subr.bf16.mxu0 0
  %756 = vmatpush1.bf16.msra.mxu0 %v537
  %757 = vmatprep.subr.bf16.mxu0 0
  %758 = vmatpush1.bf16.msra.mxu0 %v538
  %759 = vmatprep.subr.bf16.mxu0 0
  %760 = vmatpush1.bf16.msra.mxu0 %v539
  %761 = vmatprep.subr.bf16.mxu0 0
  %762 = vmatpush1.bf16.msra.mxu0 %v540
  %763 = vmatprep.subr.bf16.mxu0 0
  %764 = vmatpush1.bf16.msra.mxu0 %v541
  %765 = vmatprep.subr.bf16.mxu0 0
  %766 = vmatpush1.bf16.msra.mxu0 %v542
  %767 = vmatprep.subr.bf16.mxu0 0
  %768 = vmatpush1.bf16.msra.mxu0 %v543
  %769 = vmatprep.subr.bf16.mxu0 0
  %770 = vmatpush1.bf16.msra.mxu0 %v544
  %771 = vmatprep.subr.bf16.mxu0 0
  %772 = vmatpush1.bf16.msra.mxu0 %v545
  %773 = vmatprep.subr.bf16.mxu0 0
  %774 = vmatpush1.bf16.msra.mxu0 %v546
  %775 = vmatprep.subr.bf16.mxu0 0
  %776 = vmatpush1.bf16.msra.mxu0 %v547
  %777 = vmatprep.subr.bf16.mxu0 0
  %778 = vmatpush1.bf16.msra.mxu0 %v548
  %779 = vmatprep.subr.bf16.mxu0 0
  %780 = vmatpush1.bf16.msra.mxu0 %v549
  %781 = vmatprep.subr.bf16.mxu0 0
  %782 = vmatpush1.bf16.msra.mxu0 %v550
  %783 = vmatprep.mubr.bf16.mxu0 %v188
  %784 = vmatmul.mubr.bf16.gmra.mrb[0].mxu0 %v187
  %v785 = vpop.f32.mrb[0].mxu0
  %v786 = vadd.f32 %v746, %v785
  %v787 = vpop.f32.mrb[0].mxu0
  %v788 = vpop.f32.mrb[0].mxu0
  %v789 = vpop.f32.mrb[0].mxu0
  %790 = vdwg.mxu0
  %791 = vmatprep.subr.bf16.mxu0 0
  %792 = vmatpush1.bf16.msra.mxu0 %v551
  %793 = vmatprep.subr.bf16.mxu0 0
  %794 = vmatpush1.bf16.msra.mxu0 %v552
  %795 = vmatprep.subr.bf16.mxu0 0
  %796 = vmatpush1.bf16.msra.mxu0 %v553
  %797 = vmatprep.subr.bf16.mxu0 0
  %798 = vmatpush1.bf16.msra.mxu0 %v554
  %799 = vmatprep.subr.bf16.mxu0 0
  %800 = vmatpush1.bf16.msra.mxu0 %v555
  %801 = vmatprep.subr.bf16.mxu0 0
  %802 = vmatpush1.bf16.msra.mxu0 %v556
  %803 = vmatprep.subr.bf16.mxu0 0
  %804 = vmatpush1.bf16.msra.mxu0 %v557
  %805 = vmatprep.subr.bf16.mxu0 0
  %806 = vmatpush1.bf16.msra.mxu0 %v558
  %807 = vmatprep.subr.bf16.mxu0 0
  %808 = vmatpush1.bf16.msra.mxu0 0
  %809 = vmatprep.subr.bf16.mxu0 0
  %810 = vmatpush1.bf16.msra.mxu0 0
  %811 = vmatprep.subr.bf16.mxu0 0
  %812 = vmatpush1.bf16.msra.mxu0 0
  %813 = vmatprep.subr.bf16.mxu0 0
  %814 = vmatpush1.bf16.msra.mxu0 0
  %815 = vmatprep.subr.bf16.mxu0 0
  %816 = vmatpush1.bf16.msra.mxu0 0
  %817 = vmatprep.subr.bf16.mxu0 0
  %818 = vmatpush1.bf16.msra.mxu0 0
  %819 = vmatprep.subr.bf16.mxu0 0
  %820 = vmatpush1.bf16.msra.mxu0 0
  %821 = vmatprep.subr.bf16.mxu0 0
  %822 = vmatpush1.bf16.msra.mxu0 0
  %823 = vmatprep.mubr.bf16.mxu0 0
  %824 = vmatmul.mubr.bf16.gmra.mrb[0].mxu0 %v189
  %v825 = vpop.f32.mrb[0].mxu0
  %v826 = vadd.f32 %v786, %v825
  %v827 = vpop.f32.mrb[0].mxu0
  %v828 = vpop.f32.mrb[0].mxu0
  %v829 = vpop.f32.mrb[0].mxu0
  %830 = vdwg.mxu0
  %v831 = vld [vmem:[%s2] sm:$0x1]
  %v833 = vlaneseq
  %v834 = vshrl.u32 %v833, 7
  %v835 = vsub.s32 0, %v834
  %v836 = vrot.slane %v831, %v835
  %v838 = vmul.f32 %v826, %v836
  %v839 = vld [vmem:[%s3] sm:$0x1]
  %v841 = vlaneseq
  %v842 = vshrl.u32 %v841, 7
  %v843 = vsub.s32 0, %v842
  %v844 = vrot.slane %v839, %v843
  %v846 = vadd.f32 %v838, %v844
  %v847 = vmax.f32 %v846, 0.0
  %v848 = vpack.c.bf16 %v847, %v847
  %849 = vst [vmem:[%s4] sm:$0xf] %v848
  // Predicated region
  $region18: #{unet_forward.32} parent=0 // pred_check
    _
  $region19: #{unet_forward.32} parent=0 // pred_check_branch
    %851 = sbr.rel (0) target = $region21
  $region20: #{unet_forward.32} parent=0 // pred_region
    _
  $region21: #{unet_forward.32} parent=0 // pred_fallthru
    _
  // Predicated region
  $region22: #{unet_forward.32} parent=0 // pred_check
    _
  $region23: #{unet_forward.32} parent=0 // pred_check_branch
    %853 = sbr.rel (0) target = $region25
  $region24: #{unet_forward.32} parent=0 // pred_region
    _
  $region25: #{unet_forward.32} parent=0 // pred_fallthru
    _

// kernel: tile.28
$region0: #{tile.28}
  #allocation0 [shape = 's32[1]{0}', space=sflag, size = 0x4, scoped, tag = 'scoped memory for tile.28']
  %s0 = inlined_call_operand.vmem [shape: f32[32], index: 0, kind: input, shape index: {}]
  %s1 = inlined_call_operand.vmem [shape: f32[4,32], index: 1, kind: output, shape index: {}]
  // Predicated region
  $region2: #{tile.28} parent=0 // pred_check
    _
  $region3: #{tile.28} parent=0 // pred_check_branch
    %3 = sbr.rel (0) target = $region5
  $region4: #{tile.28} parent=0 // pred_region
    _
  $region5: #{tile.28} parent=0 // pred_fallthru
    _
  %v4 = vld [vmem:[%s0] ss:$0 sm:$0xff]
  %5 = vst [vmem:[%s1] sm:$0xf] %v4

// kernel: tile.29
$region0: #{tile.29}
  %s0 = inlined_call_operand.vmem [shape: f32[4,32], index: 0, kind: input, shape index: {}]
  %s1 = inlined_call_operand.vmem [shape: f32[1,128], index: 1, kind: output, shape index: {}]
  $region1: #{tile.29} parent=0
    #allocation0 [shape = 'u8[4096]{0}', space=vmem, size = 0x1000, scoped, tag = 'scoped mem for output reshape']
    #allocation1 [shape = 'u8[4096]{0}', space=vmem, size = 0x1000, scoped, tag = 'scoped mem for input reshape']
    %s3 = sshllo.u32 0, 4
    %v4 = vld [vmem:[%s0] sm:%s3]
    %5 = vst [vmem:[#allocation1] sm:%s3] %v4
    %v6 = vld [vmem:[#allocation1] sm:$0x1]
    %vm7 = vcmask 261120
    %8 = vst.msk [vmem:[#allocation0] sm:$0x1] %vm7, %v6
    %s9 = scalar_lea.vmem [#allocation1], 3
    %v10 = vld [vmem:[%s9] sm:$0x1]
    %11 = vrot.lane.b32.xlu0 %v10, 96
    %v12 = vpop.permute.xlu0 %11
    %vm13 = vcmask 1048320
    %14 = vst.msk [vmem:[#allocation0] sm:$0x1] %vm13, %v12
    %s15 = scalar_lea.vmem [#allocation1], 2
    %v16 = vld [vmem:[%s15] sm:$0x1]
    %17 = vrot.lane.b32.xlu0 %v16, 64
    %v18 = vpop.permute.xlu0 %17
    %vm19 = vcmask 785920
    %20 = vst.msk [vmem:[#allocation0] sm:$0x1] %vm19, %v18
    %s21 = scalar_lea.vmem [#allocation1], 1
    %v22 = vld [vmem:[%s21] sm:$0x1]
    %23 = vrot.lane.b32.xlu0 %v22, 32
    %v24 = vpop.permute.xlu0 %23
    %vm25 = vcmask 523520
    %26 = vst.msk [vmem:[#allocation0] sm:$0x1] %vm25, %v24
    %s28 = sshllo.u32 0, 1
    %v30 = vld [vmem:[#allocation0] sm:%s28]
    %s31 = sshllo.u32 0, 1
    %32 = vst [vmem:[%s1] sm:%s31] %v30

// kernel: unet_forward.36
$region0: #{unet_forward.36}
  #allocation0 [shape = 'u32[]', space=smem, size = 0x4, offset = 0x4, fixed_abs, tag = 'smem constant byte address 0x4 - core index']
  #allocation1 [shape = 'u32[144,128]{1,0:T(1,128)}', space=vmem, size = 0x12000, scoped, tag = 'internal scratch']
  %s0 = inlined_call_operand.vmem [shape: bf16[8,64], index: 0, kind: input, shape index: {}]
  %s1 = inlined_call_operand.vmem [shape: bf16[64,128], index: 1, kind: input, shape index: {}]
  %s2 = inlined_call_operand.vmem [shape: f32[1,128], index: 2, kind: input, shape index: {}]
  %s3 = inlined_call_operand.vmem [shape: f32[1,128], index: 3, kind: input, shape index: {}]
  %s4 = inlined_call_operand.vmem [shape: bf16[8,128], index: 4, kind: output, shape index: {}]
  %s5 = sld [smem:[#allocation0]]
  $region26: #{unet_forward.36} parent=0
    _
  %s7 = ssub.s32 1, %s5
  %s8 = scalar_select 0, %s7, %s5
  // Predicated region
  $region2: #{unet_forward.36} parent=0 // pred_check
    _
  $region3: #{unet_forward.36} parent=0 // pred_check_branch
    %10 = sbr.rel (0) target = $region5
  $region4: #{unet_forward.36} parent=0 // pred_region
    _
  $region5: #{unet_forward.36} parent=0 // pred_fallthru
    _
  // Predicated region
  $region6: #{unet_forward.36} parent=0 // pred_check
    _
  $region7: #{unet_forward.36} parent=0 // pred_check_branch
    %12 = sbr.rel (0) target = $region9
  $region8: #{unet_forward.36} parent=0 // pred_region
    _
  $region9: #{unet_forward.36} parent=0 // pred_fallthru
    _
  // Predicated region
  $region10: #{unet_forward.36} parent=0 // pred_check
    _
  $region11: #{unet_forward.36} parent=0 // pred_check_branch
    %14 = sbr.rel (0) target = $region13
  $region12: #{unet_forward.36} parent=0 // pred_region
    _
  $region13: #{unet_forward.36} parent=0 // pred_fallthru
    _
  // Predicated region
  $region14: #{unet_forward.36} parent=0 // pred_check
    _
  $region15: #{unet_forward.36} parent=0 // pred_check_branch
    %16 = sbr.rel (0) target = $region17
  $region16: #{unet_forward.36} parent=0 // pred_region
    _
  $region17: #{unet_forward.36} parent=0 // pred_fallthru
    _
  %v18 = vld [vmem:[%s0] sm:$0xf]
  %v19 = vld [vmem:[%s1] sm:$0xf]
  %v20 = vld [vmem:[%s1 + $0x4] sm:$0xf]
  %v21 = vld [vmem:[%s1 + $0x8] sm:$0xf]
  %v22 = vld [vmem:[%s1 + $0xc] sm:$0xf]
  %v23 = vld [vmem:[%s1 + $0x10] sm:$0xf]
  %v24 = vld [vmem:[%s1 + $0x14] sm:$0xf]
  %v25 = vld [vmem:[%s1 + $0x18] sm:$0xf]
  %v26 = vld [vmem:[%s1 + $0x1c] sm:$0xf]
  %v35 = vunpack.c.l.b16 %v19
  %v36 = vunpack.c.l.b16 %v20
  %v37 = vunpack.c.l.b16 %v21
  %v38 = vunpack.c.l.b16 %v22
  %v39 = vunpack.c.l.b16 %v23
  %v40 = vunpack.c.l.b16 %v24
  %v41 = vunpack.c.l.b16 %v25
  %v42 = vunpack.c.l.b16 %v26
  %v43 = vpack.c.b16 %v36, %v35
  %v44 = vpack.c.b16 %v38, %v37
  %v45 = vpack.c.b16 %v40, %v39
  %v46 = vpack.c.b16 %v42, %v41
  %vm51 = vcmask 523264
  %v53 = vsel %vm51, %v18, 0
  %55 = vmatprep.subr.bf16.mxu0 0
  %56 = vmatpush1.bf16.msra.mxu0 %v43
  %57 = vmatprep.subr.bf16.mxu0 0
  %58 = vmatpush1.bf16.msra.mxu0 %v44
  %59 = vmatprep.subr.bf16.mxu0 0
  %60 = vmatpush1.bf16.msra.mxu0 %v45
  %61 = vmatprep.subr.bf16.mxu0 0
  %62 = vmatpush1.bf16.msra.mxu0 %v46
  %63 = vmatprep.subr.bf16.mxu0 0
  %64 = vmatpush1.bf16.msra.mxu0 0
  %65 = vmatprep.subr.bf16.mxu0 0
  %66 = vmatpush1.bf16.msra.mxu0 0
  %67 = vmatprep.subr.bf16.mxu0 0
  %68 = vmatpush1.bf16.msra.mxu0 0
  %69 = vmatprep.subr.bf16.mxu0 0
  %70 = vmatpush1.bf16.msra.mxu0 0
  %71 = vmatprep.subr.bf16.mxu0 0
  %72 = vmatpush1.bf16.msra.mxu0 0
  %73 = vmatprep.subr.bf16.mxu0 0
  %74 = vmatpush1.bf16.msra.mxu0 0
  %75 = vmatprep.subr.bf16.mxu0 0
  %76 = vmatpush1.bf16.msra.mxu0 0
  %77 = vmatprep.subr.bf16.mxu0 0
  %78 = vmatpush1.bf16.msra.mxu0 0
  %79 = vmatprep.subr.bf16.mxu0 0
  %80 = vmatpush1.bf16.msra.mxu0 0
  %81 = vmatprep.subr.bf16.mxu0 0
  %82 = vmatpush1.bf16.msra.mxu0 0
  %83 = vmatprep.subr.bf16.mxu0 0
  %84 = vmatpush1.bf16.msra.mxu0 0
  %85 = vmatprep.subr.bf16.mxu0 0
  %86 = vmatpush1.bf16.msra.mxu0 0
  %87 = vmatprep.mubr.bf16.mxu0 0
  %88 = vmatmul.mubr.bf16.gmra.mrb[0].mxu0 %v53
  %v89 = vpop.f32.mrb[0].mxu0
  %v90 = vadd.f32 0.0, %v89
  %v91 = vpop.f32.mrb[0].mxu0
  %v92 = vpop.f32.mrb[0].mxu0
  %v93 = vpop.f32.mrb[0].mxu0
  %94 = vdwg.mxu0
  %v95 = vld [vmem:[%s2] sm:$0x1]
  %v97 = vlaneseq
  %v98 = vshrl.u32 %v97, 7
  %v99 = vsub.s32 0, %v98
  %v100 = vrot.slane %v95, %v99
  %v102 = vmul.f32 %v90, %v100
  %v103 = vld [vmem:[%s3] sm:$0x1]
  %v105 = vlaneseq
  %v106 = vshrl.u32 %v105, 7
  %v107 = vsub.s32 0, %v106
  %v108 = vrot.slane %v103, %v107
  %v110 = vadd.f32 %v102, %v108
  %v111 = vpack.c.bf16 %v110, %v110
  %112 = vst [vmem:[%s4] sm:$0xf] %v111
  // Predicated region
  $region18: #{unet_forward.36} parent=0 // pred_check
    _
  $region19: #{unet_forward.36} parent=0 // pred_check_branch
    %114 = sbr.rel (0) target = $region21
  $region20: #{unet_forward.36} parent=0 // pred_region
    _
  $region21: #{unet_forward.36} parent=0 // pred_fallthru
    _
  // Predicated region
  $region22: #{unet_forward.36} parent=0 // pred_check
    _
  $region23: #{unet_forward.36} parent=0 // pred_check_branch
    %116 = sbr.rel (0) target = $region25
  $region24: #{unet_forward.36} parent=0 // pred_region
    _
  $region25: #{unet_forward.36} parent=0 // pred_fallthru
    _

// kernel: unet_forward.34
$region0: #{unet_forward.34}
  #allocation0 [shape = 'u32[]', space=smem, size = 0x4, offset = 0x4, fixed_abs, tag = 'smem constant byte address 0x4 - core index']
  #allocation1 [shape = 'u32[144,128]{1,0:T(1,128)}', space=vmem, size = 0x12000, scoped, tag = 'internal scratch']
  %s0 = inlined_call_operand.vmem [shape: bf16[8,1152], index: 0, kind: input, shape index: {}]
  %s1 = inlined_call_operand.vmem [shape: bf16[1152,64], index: 1, kind: input, shape index: {}]
  %s2 = inlined_call_operand.vmem [shape: f32[1,64], index: 2, kind: input, shape index: {}]
  %s3 = inlined_call_operand.vmem [shape: f32[1,64], index: 3, kind: input, shape index: {}]
  %s4 = inlined_call_operand.vmem [shape: bf16[8,64], index: 4, kind: output, shape index: {}]
  %s5 = sld [smem:[#allocation0]]
  $region26: #{unet_forward.34} parent=0
    _
  %s7 = ssub.s32 1, %s5
  %s8 = scalar_select 0, %s7, %s5
  // Predicated region
  $region2: #{unet_forward.34} parent=0 // pred_check
    _
  $region3: #{unet_forward.34} parent=0 // pred_check_branch
    %10 = sbr.rel (0) target = $region5
  $region4: #{unet_forward.34} parent=0 // pred_region
    _
  $region5: #{unet_forward.34} parent=0 // pred_fallthru
    _
  // Predicated region
  $region6: #{unet_forward.34} parent=0 // pred_check
    _
  $region7: #{unet_forward.34} parent=0 // pred_check_branch
    %12 = sbr.rel (0) target = $region9
  $region8: #{unet_forward.34} parent=0 // pred_region
    _
  $region9: #{unet_forward.34} parent=0 // pred_fallthru
    _
  // Predicated region
  $region10: #{unet_forward.34} parent=0 // pred_check
    _
  $region11: #{unet_forward.34} parent=0 // pred_check_branch
    %14 = sbr.rel (0) target = $region13
  $region12: #{unet_forward.34} parent=0 // pred_region
    _
  $region13: #{unet_forward.34} parent=0 // pred_fallthru
    _
  // Predicated region
  $region14: #{unet_forward.34} parent=0 // pred_check
    _
  $region15: #{unet_forward.34} parent=0 // pred_check_branch
    %16 = sbr.rel (0) target = $region17
  $region16: #{unet_forward.34} parent=0 // pred_region
    _
  $region17: #{unet_forward.34} parent=0 // pred_fallthru
    _
  %v18 = vld [vmem:[%s0] sm:$0xff]
  %v19 = vld [vmem:[%s0 + $0x8] sm:$0xff]
  %v20 = vld [vmem:[%s0 + $0x10] sm:$0xff]
  %v21 = vld [vmem:[%s0 + $0x18] sm:$0xff]
  %v22 = vld [vmem:[%s0 + $0x20] sm:$0xf]
  %v23 = vld [vmem:[%s1] sm:$0xf]
  %v24 = vld [vmem:[%s1 + $0x4] sm:$0xf]
  %v25 = vld [vmem:[%s1 + $0x8] sm:$0xf]
  %v26 = vld [vmem:[%s1 + $0xc] sm:$0xf]
  %v27 = vld [vmem:[%s1 + $0x10] sm:$0xf]
  %v28 = vld [vmem:[%s1 + $0x14] sm:$0xf]
  %v29 = vld [vmem:[%s1 + $0x18] sm:$0xf]
  %v30 = vld [vmem:[%s1 + $0x1c] sm:$0xf]
  %v31 = vld [vmem:[%s1 + $0x20] sm:$0xf]
  %v32 = vld [vmem:[%s1 + $0x24] sm:$0xf]
  %v33 = vld [vmem:[%s1 + $0x28] sm:$0xf]
  %v34 = vld [vmem:[%s1 + $0x2c] sm:$0xf]
  %v35 = vld [vmem:[%s1 + $0x30] sm:$0xf]
  %v36 = vld [vmem:[%s1 + $0x34] sm:$0xf]
  %v37 = vld [vmem:[%s1 + $0x38] sm:$0xf]
  %v38 = vld [vmem:[%s1 + $0x3c] sm:$0xf]
  %v39 = vld [vmem:[%s1 + $0x40] sm:$0xf]
  %v40 = vld [vmem:[%s1 + $0x44] sm:$0xf]
  %v41 = vld [vmem:[%s1 + $0x48] sm:$0xf]
  %v42 = vld [vmem:[%s1 + $0x4c] sm:$0xf]
  %v43 = vld [vmem:[%s1 + $0x50] sm:$0xf]
  %v44 = vld [vmem:[%s1 + $0x54] sm:$0xf]
  %v45 = vld [vmem:[%s1 + $0x58] sm:$0xf]
  %v46 = vld [vmem:[%s1 + $0x5c] sm:$0xf]
  %v47 = vld [vmem:[%s1 + $0x60] sm:$0xf]
  %v48 = vld [vmem:[%s1 + $0x64] sm:$0xf]
  %v49 = vld [vmem:[%s1 + $0x68] sm:$0xf]
  %v50 = vld [vmem:[%s1 + $0x6c] sm:$0xf]
  %v51 = vld [vmem:[%s1 + $0x70] sm:$0xf]
  %v52 = vld [vmem:[%s1 + $0x74] sm:$0xf]
  %v53 = vld [vmem:[%s1 + $0x78] sm:$0xf]
  %v54 = vld [vmem:[%s1 + $0x7c] sm:$0xf]
  %v55 = vld [vmem:[%s1 + $0x80] sm:$0xf]
  %v56 = vld [vmem:[%s1 + $0x84] sm:$0xf]
  %v57 = vld [vmem:[%s1 + $0x88] sm:$0xf]
  %v58 = vld [vmem:[%s1 + $0x8c] sm:$0xf]
  %v59 = vld [vmem:[%s1 + $0x90] sm:$0xf]
  %v60 = vld [vmem:[%s1 + $0x94] sm:$0xf]
  %v61 = vld [vmem:[%s1 + $0x98] sm:$0xf]
  %v62 = vld [vmem:[%s1 + $0x9c] sm:$0xf]
  %v63 = vld [vmem:[%s1 + $0xa0] sm:$0xf]
  %v64 = vld [vmem:[%s1 + $0xa4] sm:$0xf]
  %v65 = vld [vmem:[%s1 + $0xa8] sm:$0xf]
  %v66 = vld [vmem:[%s1 + $0xac] sm:$0xf]
  %v67 = vld [vmem:[%s1 + $0xb0] sm:$0xf]
  %v68 = vld [vmem:[%s1 + $0xb4] sm:$0xf]
  %v69 = vld [vmem:[%s1 + $0xb8] sm:$0xf]
  %v70 = vld [vmem:[%s1 + $0xbc] sm:$0xf]
  %v71 = vld [vmem:[%s1 + $0xc0] sm:$0xf]
  %v72 = vld [vmem:[%s1 + $0xc4] sm:$0xf]
  %v73 = vld [vmem:[%s1 + $0xc8] sm:$0xf]
  %v74 = vld [vmem:[%s1 + $0xcc] sm:$0xf]
  %v75 = vld [vmem:[%s1 + $0xd0] sm:$0xf]
  %v76 = vld [vmem:[%s1 + $0xd4] sm:$0xf]
  %v77 = vld [vmem:[%s1 + $0xd8] sm:$0xf]
  %v78 = vld [vmem:[%s1 + $0xdc] sm:$0xf]
  %v79 = vld [vmem:[%s1 + $0xe0] sm:$0xf]
  %v80 = vld [vmem:[%s1 + $0xe4] sm:$0xf]
  %v81 = vld [vmem:[%s1 + $0xe8] sm:$0xf]
  %v82 = vld [vmem:[%s1 + $0xec] sm:$0xf]
  %v83 = vld [vmem:[%s1 + $0xf0] sm:$0xf]
  %v84 = vld [vmem:[%s1 + $0xf4] sm:$0xf]
  %v85 = vld [vmem:[%s1 + $0xf8] sm:$0xf]
  %v86 = vld [vmem:[%s1 + $0xfc] sm:$0xf]
  %v87 = vld [vmem:[%s1 + $0x100] sm:$0xf]
  %v88 = vld [vmem:[%s1 + $0x104] sm:$0xf]
  %v89 = vld [vmem:[%s1 + $0x108] sm:$0xf]
  %v90 = vld [vmem:[%s1 + $0x10c] sm:$0xf]
  %v91 = vld [vmem:[%s1 + $0x110] sm:$0xf]
  %v92 = vld [vmem:[%s1 + $0x114] sm:$0xf]
  %v93 = vld [vmem:[%s1 + $0x118] sm:$0xf]
  %v94 = vld [vmem:[%s1 + $0x11c] sm:$0xf]
  %v95 = vld [vmem:[%s1 + $0x120] sm:$0xf]
  %v96 = vld [vmem:[%s1 + $0x124] sm:$0xf]
  %v97 = vld [vmem:[%s1 + $0x128] sm:$0xf]
  %v98 = vld [vmem:[%s1 + $0x12c] sm:$0xf]
  %v99 = vld [vmem:[%s1 + $0x130] sm:$0xf]
  %v100 = vld [vmem:[%s1 + $0x134] sm:$0xf]
  %v101 = vld [vmem:[%s1 + $0x138] sm:$0xf]
  %v102 = vld [vmem:[%s1 + $0x13c] sm:$0xf]
  %v103 = vld [vmem:[%s1 + $0x140] sm:$0xf]
  %v104 = vld [vmem:[%s1 + $0x144] sm:$0xf]
  %v105 = vld [vmem:[%s1 + $0x148] sm:$0xf]
  %v106 = vld [vmem:[%s1 + $0x14c] sm:$0xf]
  %v107 = vld [vmem:[%s1 + $0x150] sm:$0xf]
  %v108 = vld [vmem:[%s1 + $0x154] sm:$0xf]
  %v109 = vld [vmem:[%s1 + $0x158] sm:$0xf]
  %v110 = vld [vmem:[%s1 + $0x15c] sm:$0xf]
  %v111 = vld [vmem:[%s1 + $0x160] sm:$0xf]
  %v112 = vld [vmem:[%s1 + $0x164] sm:$0xf]
  %v113 = vld [vmem:[%s1 + $0x168] sm:$0xf]
  %v114 = vld [vmem:[%s1 + $0x16c] sm:$0xf]
  %v115 = vld [vmem:[%s1 + $0x170] sm:$0xf]
  %v116 = vld [vmem:[%s1 + $0x174] sm:$0xf]
  %v117 = vld [vmem:[%s1 + $0x178] sm:$0xf]
  %v118 = vld [vmem:[%s1 + $0x17c] sm:$0xf]
  %v119 = vld [vmem:[%s1 + $0x180] sm:$0xf]
  %v120 = vld [vmem:[%s1 + $0x184] sm:$0xf]
  %v121 = vld [vmem:[%s1 + $0x188] sm:$0xf]
  %v122 = vld [vmem:[%s1 + $0x18c] sm:$0xf]
  %v123 = vld [vmem:[%s1 + $0x190] sm:$0xf]
  %v124 = vld [vmem:[%s1 + $0x194] sm:$0xf]
  %v125 = vld [vmem:[%s1 + $0x198] sm:$0xf]
  %v126 = vld [vmem:[%s1 + $0x19c] sm:$0xf]
  %v127 = vld [vmem:[%s1 + $0x1a0] sm:$0xf]
  %v128 = vld [vmem:[%s1 + $0x1a4] sm:$0xf]
  %v129 = vld [vmem:[%s1 + $0x1a8] sm:$0xf]
  %v130 = vld [vmem:[%s1 + $0x1ac] sm:$0xf]
  %v131 = vld [vmem:[%s1 + $0x1b0] sm:$0xf]
  %v132 = vld [vmem:[%s1 + $0x1b4] sm:$0xf]
  %v133 = vld [vmem:[%s1 + $0x1b8] sm:$0xf]
  %v134 = vld [vmem:[%s1 + $0x1bc] sm:$0xf]
  %v135 = vld [vmem:[%s1 + $0x1c0] sm:$0xf]
  %v136 = vld [vmem:[%s1 + $0x1c4] sm:$0xf]
  %v137 = vld [vmem:[%s1 + $0x1c8] sm:$0xf]
  %v138 = vld [vmem:[%s1 + $0x1cc] sm:$0xf]
  %v139 = vld [vmem:[%s1 + $0x1d0] sm:$0xf]
  %v140 = vld [vmem:[%s1 + $0x1d4] sm:$0xf]
  %v141 = vld [vmem:[%s1 + $0x1d8] sm:$0xf]
  %v142 = vld [vmem:[%s1 + $0x1dc] sm:$0xf]
  %v143 = vld [vmem:[%s1 + $0x1e0] sm:$0xf]
  %v144 = vld [vmem:[%s1 + $0x1e4] sm:$0xf]
  %v145 = vld [vmem:[%s1 + $0x1e8] sm:$0xf]
  %v146 = vld [vmem:[%s1 + $0x1ec] sm:$0xf]
  %v147 = vld [vmem:[%s1 + $0x1f0] sm:$0xf]
  %v148 = vld [vmem:[%s1 + $0x1f4] sm:$0xf]
  %v149 = vld [vmem:[%s1 + $0x1f8] sm:$0xf]
  %v150 = vld [vmem:[%s1 + $0x1fc] sm:$0xf]
  %v151 = vld [vmem:[%s1 + $0x200] sm:$0xf]
  %v152 = vld [vmem:[%s1 + $0x204] sm:$0xf]
  %v153 = vld [vmem:[%s1 + $0x208] sm:$0xf]
  %v154 = vld [vmem:[%s1 + $0x20c] sm:$0xf]
  %v155 = vld [vmem:[%s1 + $0x210] sm:$0xf]
  %v156 = vld [vmem:[%s1 + $0x214] sm:$0xf]
  %v157 = vld [vmem:[%s1 + $0x218] sm:$0xf]
  %v158 = vld [vmem:[%s1 + $0x21c] sm:$0xf]
  %v159 = vld [vmem:[%s1 + $0x220] sm:$0xf]
  %v160 = vld [vmem:[%s1 + $0x224] sm:$0xf]
  %v161 = vld [vmem:[%s1 + $0x228] sm:$0xf]
  %v162 = vld [vmem:[%s1 + $0x22c] sm:$0xf]
  %v163 = vld [vmem:[%s1 + $0x230] sm:$0xf]
  %v164 = vld [vmem:[%s1 + $0x234] sm:$0xf]
  %v165 = vld [vmem:[%s1 + $0x238] sm:$0xf]
  %v166 = vld [vmem:[%s1 + $0x23c] sm:$0xf]
  %v172 = vunpack.c.l.b16 %v18
  %v173 = vunpack.c.h.b16 %v18
  %v174 = vunpack.c.l.b16 %v19
  %v175 = vunpack.c.h.b16 %v19
  %v176 = vunpack.c.l.b16 %v20
  %v177 = vunpack.c.h.b16 %v20
  %v178 = vunpack.c.l.b16 %v21
  %v179 = vunpack.c.h.b16 %v21
  %v180 = vunpack.c.l.b16 %v22
  %v181 = vpack.c.b16 %v172, %v172
  %v182 = vpack.c.b16 %v173, %v173
  %v183 = vpack.c.b16 %v174, %v174
  %v184 = vpack.c.b16 %v175, %v175
  %v185 = vpack.c.b16 %v176, %v176
  %v186 = vpack.c.b16 %v177, %v177
  %v187 = vpack.c.b16 %v178, %v178
  %v188 = vpack.c.b16 %v179, %v179
  %v189 = vpack.c.b16 %v180, %v180
  %v343 = vunpack.c.l.b16 %v23
  %v344 = vunpack.c.l.b16 %v24
  %v345 = vunpack.c.l.b16 %v25
  %v346 = vunpack.c.l.b16 %v26
  %v347 = vunpack.c.l.b16 %v27
  %v348 = vunpack.c.l.b16 %v28
  %v349 = vunpack.c.l.b16 %v29
  %v350 = vunpack.c.l.b16 %v30
  %v351 = vunpack.c.l.b16 %v31
  %v352 = vunpack.c.l.b16 %v32
  %v353 = vunpack.c.l.b16 %v33
  %v354 = vunpack.c.l.b16 %v34
  %v355 = vunpack.c.l.b16 %v35
  %v356 = vunpack.c.l.b16 %v36
  %v357 = vunpack.c.l.b16 %v37
  %v358 = vunpack.c.l.b16 %v38
  %v359 = vunpack.c.l.b16 %v39
  %v360 = vunpack.c.l.b16 %v40
  %v361 = vunpack.c.l.b16 %v41
  %v362 = vunpack.c.l.b16 %v42
  %v363 = vunpack.c.l.b16 %v43
  %v364 = vunpack.c.l.b16 %v44
  %v365 = vunpack.c.l.b16 %v45
  %v366 = vunpack.c.l.b16 %v46
  %v367 = vunpack.c.l.b16 %v47
  %v368 = vunpack.c.l.b16 %v48
  %v369 = vunpack.c.l.b16 %v49
  %v370 = vunpack.c.l.b16 %v50
  %v371 = vunpack.c.l.b16 %v51
  %v372 = vunpack.c.l.b16 %v52
  %v373 = vunpack.c.l.b16 %v53
  %v374 = vunpack.c.l.b16 %v54
  %v375 = vunpack.c.l.b16 %v55
  %v376 = vunpack.c.l.b16 %v56
  %v377 = vunpack.c.l.b16 %v57
  %v378 = vunpack.c.l.b16 %v58
  %v379 = vunpack.c.l.b16 %v59
  %v380 = vunpack.c.l.b16 %v60
  %v381 = vunpack.c.l.b16 %v61
  %v382 = vunpack.c.l.b16 %v62
  %v383 = vunpack.c.l.b16 %v63
  %v384 = vunpack.c.l.b16 %v64
  %v385 = vunpack.c.l.b16 %v65
  %v386 = vunpack.c.l.b16 %v66
  %v387 = vunpack.c.l.b16 %v67
  %v388 = vunpack.c.l.b16 %v68
  %v389 = vunpack.c.l.b16 %v69
  %v390 = vunpack.c.l.b16 %v70
  %v391 = vunpack.c.l.b16 %v71
  %v392 = vunpack.c.l.b16 %v72
  %v393 = vunpack.c.l.b16 %v73
  %v394 = vunpack.c.l.b16 %v74
  %v395 = vunpack.c.l.b16 %v75
  %v396 = vunpack.c.l.b16 %v76
  %v397 = vunpack.c.l.b16 %v77
  %v398 = vunpack.c.l.b16 %v78
  %v399 = vunpack.c.l.b16 %v79
  %v400 = vunpack.c.l.b16 %v80
  %v401 = vunpack.c.l.b16 %v81
  %v402 = vunpack.c.l.b16 %v82
  %v403 = vunpack.c.l.b16 %v83
  %v404 = vunpack.c.l.b16 %v84
  %v405 = vunpack.c.l.b16 %v85
  %v406 = vunpack.c.l.b16 %v86
  %v407 = vunpack.c.l.b16 %v87
  %v408 = vunpack.c.l.b16 %v88
  %v409 = vunpack.c.l.b16 %v89
  %v410 = vunpack.c.l.b16 %v90
  %v411 = vunpack.c.l.b16 %v91
  %v412 = vunpack.c.l.b16 %v92
  %v413 = vunpack.c.l.b16 %v93
  %v414 = vunpack.c.l.b16 %v94
  %v415 = vunpack.c.l.b16 %v95
  %v416 = vunpack.c.l.b16 %v96
  %v417 = vunpack.c.l.b16 %v97
  %v418 = vunpack.c.l.b16 %v98
  %v419 = vunpack.c.l.b16 %v99
  %v420 = vunpack.c.l.b16 %v100
  %v421 = vunpack.c.l.b16 %v101
  %v422 = vunpack.c.l.b16 %v102
  %v423 = vunpack.c.l.b16 %v103
  %v424 = vunpack.c.l.b16 %v104
  %v425 = vunpack.c.l.b16 %v105
  %v426 = vunpack.c.l.b16 %v106
  %v427 = vunpack.c.l.b16 %v107
  %v428 = vunpack.c.l.b16 %v108
  %v429 = vunpack.c.l.b16 %v109
  %v430 = vunpack.c.l.b16 %v110
  %v431 = vunpack.c.l.b16 %v111
  %v432 = vunpack.c.l.b16 %v112
  %v433 = vunpack.c.l.b16 %v113
  %v434 = vunpack.c.l.b16 %v114
  %v435 = vunpack.c.l.b16 %v115
  %v436 = vunpack.c.l.b16 %v116
  %v437 = vunpack.c.l.b16 %v117
  %v438 = vunpack.c.l.b16 %v118
  %v439 = vunpack.c.l.b16 %v119
  %v440 = vunpack.c.l.b16 %v120
  %v441 = vunpack.c.l.b16 %v121
  %v442 = vunpack.c.l.b16 %v122
  %v443 = vunpack.c.l.b16 %v123
  %v444 = vunpack.c.l.b16 %v124
  %v445 = vunpack.c.l.b16 %v125
  %v446 = vunpack.c.l.b16 %v126
  %v447 = vunpack.c.l.b16 %v127
  %v448 = vunpack.c.l.b16 %v128
  %v449 = vunpack.c.l.b16 %v129
  %v450 = vunpack.c.l.b16 %v130
  %v451 = vunpack.c.l.b16 %v131
  %v452 = vunpack.c.l.b16 %v132
  %v453 = vunpack.c.l.b16 %v133
  %v454 = vunpack.c.l.b16 %v134
  %v455 = vunpack.c.l.b16 %v135
  %v456 = vunpack.c.l.b16 %v136
  %v457 = vunpack.c.l.b16 %v137
  %v458 = vunpack.c.l.b16 %v138
  %v459 = vunpack.c.l.b16 %v139
  %v460 = vunpack.c.l.b16 %v140
  %v461 = vunpack.c.l.b16 %v141
  %v462 = vunpack.c.l.b16 %v142
  %v463 = vunpack.c.l.b16 %v143
  %v464 = vunpack.c.l.b16 %v144
  %v465 = vunpack.c.l.b16 %v145
  %v466 = vunpack.c.l.b16 %v146
  %v467 = vunpack.c.l.b16 %v147
  %v468 = vunpack.c.l.b16 %v148
  %v469 = vunpack.c.l.b16 %v149
  %v470 = vunpack.c.l.b16 %v150
  %v471 = vunpack.c.l.b16 %v151
  %v472 = vunpack.c.l.b16 %v152
  %v473 = vunpack.c.l.b16 %v153
  %v474 = vunpack.c.l.b16 %v154
  %v475 = vunpack.c.l.b16 %v155
  %v476 = vunpack.c.l.b16 %v156
  %v477 = vunpack.c.l.b16 %v157
  %v478 = vunpack.c.l.b16 %v158
  %v479 = vunpack.c.l.b16 %v159
  %v480 = vunpack.c.l.b16 %v160
  %v481 = vunpack.c.l.b16 %v161
  %v482 = vunpack.c.l.b16 %v162
  %v483 = vunpack.c.l.b16 %v163
  %v484 = vunpack.c.l.b16 %v164
  %v485 = vunpack.c.l.b16 %v165
  %v486 = vunpack.c.l.b16 %v166
  %v487 = vpack.c.b16 %v344, %v343
  %v488 = vpack.c.b16 %v346, %v345
  %v489 = vpack.c.b16 %v348, %v347
  %v490 = vpack.c.b16 %v350, %v349
  %v491 = vpack.c.b16 %v352, %v351
  %v492 = vpack.c.b16 %v354, %v353
  %v493 = vpack.c.b16 %v356, %v355
  %v494 = vpack.c.b16 %v358, %v357
  %v495 = vpack.c.b16 %v360, %v359
  %v496 = vpack.c.b16 %v362, %v361
  %v497 = vpack.c.b16 %v364, %v363
  %v498 = vpack.c.b16 %v366, %v365
  %v499 = vpack.c.b16 %v368, %v367
  %v500 = vpack.c.b16 %v370, %v369
  %v501 = vpack.c.b16 %v372, %v371
  %v502 = vpack.c.b16 %v374, %v373
  %v503 = vpack.c.b16 %v376, %v375
  %v504 = vpack.c.b16 %v378, %v377
  %v505 = vpack.c.b16 %v380, %v379
  %v506 = vpack.c.b16 %v382, %v381
  %v507 = vpack.c.b16 %v384, %v383
  %v508 = vpack.c.b16 %v386, %v385
  %v509 = vpack.c.b16 %v388, %v387
  %v510 = vpack.c.b16 %v390, %v389
  %v511 = vpack.c.b16 %v392, %v391
  %v512 = vpack.c.b16 %v394, %v393
  %v513 = vpack.c.b16 %v396, %v395
  %v514 = vpack.c.b16 %v398, %v397
  %v515 = vpack.c.b16 %v400, %v399
  %v516 = vpack.c.b16 %v402, %v401
  %v517 = vpack.c.b16 %v404, %v403
  %v518 = vpack.c.b16 %v406, %v405
  %v519 = vpack.c.b16 %v408, %v407
  %v520 = vpack.c.b16 %v410, %v409
  %v521 = vpack.c.b16 %v412, %v411
  %v522 = vpack.c.b16 %v414, %v413
  %v523 = vpack.c.b16 %v416, %v415
  %v524 = vpack.c.b16 %v418, %v417
  %v525 = vpack.c.b16 %v420, %v419
  %v526 = vpack.c.b16 %v422, %v421
  %v527 = vpack.c.b16 %v424, %v423
  %v528 = vpack.c.b16 %v426, %v425
  %v529 = vpack.c.b16 %v428, %v427
  %v530 = vpack.c.b16 %v430, %v429
  %v531 = vpack.c.b16 %v432, %v431
  %v532 = vpack.c.b16 %v434, %v433
  %v533 = vpack.c.b16 %v436, %v435
  %v534 = vpack.c.b16 %v438, %v437
  %v535 = vpack.c.b16 %v440, %v439
  %v536 = vpack.c.b16 %v442, %v441
  %v537 = vpack.c.b16 %v444, %v443
  %v538 = vpack.c.b16 %v446, %v445
  %v539 = vpack.c.b16 %v448, %v447
  %v540 = vpack.c.b16 %v450, %v449
  %v541 = vpack.c.b16 %v452, %v451
  %v542 = vpack.c.b16 %v454, %v453
  %v543 = vpack.c.b16 %v456, %v455
  %v544 = vpack.c.b16 %v458, %v457
  %v545 = vpack.c.b16 %v460, %v459
  %v546 = vpack.c.b16 %v462, %v461
  %v547 = vpack.c.b16 %v464, %v463
  %v548 = vpack.c.b16 %v466, %v465
  %v549 = vpack.c.b16 %v468, %v467
  %v550 = vpack.c.b16 %v470, %v469
  %v551 = vpack.c.b16 %v472, %v471
  %v552 = vpack.c.b16 %v474, %v473
  %v553 = vpack.c.b16 %v476, %v475
  %v554 = vpack.c.b16 %v478, %v477
  %v555 = vpack.c.b16 %v480, %v479
  %v556 = vpack.c.b16 %v482, %v481
  %v557 = vpack.c.b16 %v484, %v483
  %v558 = vpack.c.b16 %v486, %v485
  %631 = vmatprep.subr.bf16.mxu0 0
  %632 = vmatpush1.bf16.msra.mxu0 %v487
  %633 = vmatprep.subr.bf16.mxu0 0
  %634 = vmatpush1.bf16.msra.mxu0 %v488
  %635 = vmatprep.subr.bf16.mxu0 0
  %636 = vmatpush1.bf16.msra.mxu0 %v489
  %637 = vmatprep.subr.bf16.mxu0 0
  %638 = vmatpush1.bf16.msra.mxu0 %v490
  %639 = vmatprep.subr.bf16.mxu0 0
  %640 = vmatpush1.bf16.msra.mxu0 %v491
  %641 = vmatprep.subr.bf16.mxu0 0
  %642 = vmatpush1.bf16.msra.mxu0 %v492
  %643 = vmatprep.subr.bf16.mxu0 0
  %644 = vmatpush1.bf16.msra.mxu0 %v493
  %645 = vmatprep.subr.bf16.mxu0 0
  %646 = vmatpush1.bf16.msra.mxu0 %v494
  %647 = vmatprep.subr.bf16.mxu0 0
  %648 = vmatpush1.bf16.msra.mxu0 %v495
  %649 = vmatprep.subr.bf16.mxu0 0
  %650 = vmatpush1.bf16.msra.mxu0 %v496
  %651 = vmatprep.subr.bf16.mxu0 0
  %652 = vmatpush1.bf16.msra.mxu0 %v497
  %653 = vmatprep.subr.bf16.mxu0 0
  %654 = vmatpush1.bf16.msra.mxu0 %v498
  %655 = vmatprep.subr.bf16.mxu0 0
  %656 = vmatpush1.bf16.msra.mxu0 %v499
  %657 = vmatprep.subr.bf16.mxu0 0
  %658 = vmatpush1.bf16.msra.mxu0 %v500
  %659 = vmatprep.subr.bf16.mxu0 0
  %660 = vmatpush1.bf16.msra.mxu0 %v501
  %661 = vmatprep.subr.bf16.mxu0 0
  %662 = vmatpush1.bf16.msra.mxu0 %v502
  %663 = vmatprep.mubr.bf16.mxu0 %v182
  %664 = vmatmul.mubr.bf16.gmra.mrb[0].mxu0 %v181
  %v665 = vpop.f32.mrb[0].mxu0
  %v666 = vadd.f32 0.0, %v665
  %v667 = vpop.f32.mrb[0].mxu0
  %v668 = vpop.f32.mrb[0].mxu0
  %v669 = vpop.f32.mrb[0].mxu0
  %670 = vdwg.mxu0
  %671 = vmatprep.subr.bf16.mxu0 0
  %672 = vmatpush1.bf16.msra.mxu0 %v503
  %673 = vmatprep.subr.bf16.mxu0 0
  %674 = vmatpush1.bf16.msra.mxu0 %v504
  %675 = vmatprep.subr.bf16.mxu0 0
  %676 = vmatpush1.bf16.msra.mxu0 %v505
  %677 = vmatprep.subr.bf16.mxu0 0
  %678 = vmatpush1.bf16.msra.mxu0 %v506
  %679 = vmatprep.subr.bf16.mxu0 0
  %680 = vmatpush1.bf16.msra.mxu0 %v507
  %681 = vmatprep.subr.bf16.mxu0 0
  %682 = vmatpush1.bf16.msra.mxu0 %v508
  %683 = vmatprep.subr.bf16.mxu0 0
  %684 = vmatpush1.bf16.msra.mxu0 %v509
  %685 = vmatprep.subr.bf16.mxu0 0
  %686 = vmatpush1.bf16.msra.mxu0 %v510
  %687 = vmatprep.subr.bf16.mxu0 0
  %688 = vmatpush1.bf16.msra.mxu0 %v511
  %689 = vmatprep.subr.bf16.mxu0 0
  %690 = vmatpush1.bf16.msra.mxu0 %v512
  %691 = vmatprep.subr.bf16.mxu0 0
  %692 = vmatpush1.bf16.msra.mxu0 %v513
  %693 = vmatprep.subr.bf16.mxu0 0
  %694 = vmatpush1.bf16.msra.mxu0 %v514
  %695 = vmatprep.subr.bf16.mxu0 0
  %696 = vmatpush1.bf16.msra.mxu0 %v515
  %697 = vmatprep.subr.bf16.mxu0 0
  %698 = vmatpush1.bf16.msra.mxu0 %v516
  %699 = vmatprep.subr.bf16.mxu0 0
  %700 = vmatpush1.bf16.msra.mxu0 %v517
  %701 = vmatprep.subr.bf16.mxu0 0
  %702 = vmatpush1.bf16.msra.mxu0 %v518
  %703 = vmatprep.mubr.bf16.mxu0 %v184
  %704 = vmatmul.mubr.bf16.gmra.mrb[0].mxu0 %v183
  %v705 = vpop.f32.mrb[0].mxu0
  %v706 = vadd.f32 %v666, %v705
  %v707 = vpop.f32.mrb[0].mxu0
  %v708 = vpop.f32.mrb[0].mxu0
  %v709 = vpop.f32.mrb[0].mxu0
  %710 = vdwg.mxu0
  %711 = vmatprep.subr.bf16.mxu0 0
  %712 = vmatpush1.bf16.msra.mxu0 %v519
  %713 = vmatprep.subr.bf16.mxu0 0
  %714 = vmatpush1.bf16.msra.mxu0 %v520
  %715 = vmatprep.subr.bf16.mxu0 0
  %716 = vmatpush1.bf16.msra.mxu0 %v521
  %717 = vmatprep.subr.bf16.mxu0 0
  %718 = vmatpush1.bf16.msra.mxu0 %v522
  %719 = vmatprep.subr.bf16.mxu0 0
  %720 = vmatpush1.bf16.msra.mxu0 %v523
  %721 = vmatprep.subr.bf16.mxu0 0
  %722 = vmatpush1.bf16.msra.mxu0 %v524
  %723 = vmatprep.subr.bf16.mxu0 0
  %724 = vmatpush1.bf16.msra.mxu0 %v525
  %725 = vmatprep.subr.bf16.mxu0 0
  %726 = vmatpush1.bf16.msra.mxu0 %v526
  %727 = vmatprep.subr.bf16.mxu0 0
  %728 = vmatpush1.bf16.msra.mxu0 %v527
  %729 = vmatprep.subr.bf16.mxu0 0
  %730 = vmatpush1.bf16.msra.mxu0 %v528
  %731 = vmatprep.subr.bf16.mxu0 0
  %732 = vmatpush1.bf16.msra.mxu0 %v529
  %733 = vmatprep.subr.bf16.mxu0 0
  %734 = vmatpush1.bf16.msra.mxu0 %v530
  %735 = vmatprep.subr.bf16.mxu0 0
  %736 = vmatpush1.bf16.msra.mxu0 %v531
  %737 = vmatprep.subr.bf16.mxu0 0
  %738 = vmatpush1.bf16.msra.mxu0 %v532
  %739 = vmatprep.subr.bf16.mxu0 0
  %740 = vmatpush1.bf16.msra.mxu0 %v533
  %741 = vmatprep.subr.bf16.mxu0 0
  %742 = vmatpush1.bf16.msra.mxu0 %v534
  %743 = vmatprep.mubr.bf16.mxu0 %v186
  %744 = vmatmul.mubr.bf16.gmra.mrb[0].mxu0 %v185
  %v745 = vpop.f32.mrb[0].mxu0
  %v746 = vadd.f32 %v706, %v745
  %v747 = vpop.f32.mrb[0].mxu0
  %v748 = vpop.f32.mrb[0].mxu0
  %v749 = vpop.f32.mrb[0].mxu0
  %750 = vdwg.mxu0
  %751 = vmatprep.subr.bf16.mxu0 0
  %752 = vmatpush1.bf16.msra.mxu0 %v535
  %753 = vmatprep.subr.bf16.mxu0 0
  %754 = vmatpush1.bf16.msra.mxu0 %v536
  %755 = vmatprep.subr.bf16.mxu0 0
  %756 = vmatpush1.bf16.msra.mxu0 %v537
  %757 = vmatprep.subr.bf16.mxu0 0
  %758 = vmatpush1.bf16.msra.mxu0 %v538
  %759 = vmatprep.subr.bf16.mxu0 0
  %760 = vmatpush1.bf16.msra.mxu0 %v539
  %761 = vmatprep.subr.bf16.mxu0 0
  %762 = vmatpush1.bf16.msra.mxu0 %v540
  %763 = vmatprep.subr.bf16.mxu0 0
  %764 = vmatpush1.bf16.msra.mxu0 %v541
  %765 = vmatprep.subr.bf16.mxu0 0
  %766 = vmatpush1.bf16.msra.mxu0 %v542
  %767 = vmatprep.subr.bf16.mxu0 0
  %768 = vmatpush1.bf16.msra.mxu0 %v543
  %769 = vmatprep.subr.bf16.mxu0 0
  %770 = vmatpush1.bf16.msra.mxu0 %v544
  %771 = vmatprep.subr.bf16.mxu0 0
  %772 = vmatpush1.bf16.msra.mxu0 %v545
  %773 = vmatprep.subr.bf16.mxu0 0
  %774 = vmatpush1.bf16.msra.mxu0 %v546
  %775 = vmatprep.subr.bf16.mxu0 0
  %776 = vmatpush1.bf16.msra.mxu0 %v547
  %777 = vmatprep.subr.bf16.mxu0 0
  %778 = vmatpush1.bf16.msra.mxu0 %v548
  %779 = vmatprep.subr.bf16.mxu0 0
  %780 = vmatpush1.bf16.msra.mxu0 %v549
  %781 = vmatprep.subr.bf16.mxu0 0
  %782 = vmatpush1.bf16.msra.mxu0 %v550
  %783 = vmatprep.mubr.bf16.mxu0 %v188
  %784 = vmatmul.mubr.bf16.gmra.mrb[0].mxu0 %v187
  %v785 = vpop.f32.mrb[0].mxu0
  %v786 = vadd.f32 %v746, %v785
  %v787 = vpop.f32.mrb[0].mxu0
  %v788 = vpop.f32.mrb[0].mxu0
  %v789 = vpop.f32.mrb[0].mxu0
  %790 = vdwg.mxu0
  %791 = vmatprep.subr.bf16.mxu0 0
  %792 = vmatpush1.bf16.msra.mxu0 %v551
  %793 = vmatprep.subr.bf16.mxu0 0
  %794 = vmatpush1.bf16.msra.mxu0 %v552
  %795 = vmatprep.subr.bf16.mxu0 0
  %796 = vmatpush1.bf16.msra.mxu0 %v553
  %797 = vmatprep.subr.bf16.mxu0 0
  %798 = vmatpush1.bf16.msra.mxu0 %v554
  %799 = vmatprep.subr.bf16.mxu0 0
  %800 = vmatpush1.bf16.msra.mxu0 %v555
  %801 = vmatprep.subr.bf16.mxu0 0
  %802 = vmatpush1.bf16.msra.mxu0 %v556
  %803 = vmatprep.subr.bf16.mxu0 0
  %804 = vmatpush1.bf16.msra.mxu0 %v557
  %805 = vmatprep.subr.bf16.mxu0 0
  %806 = vmatpush1.bf16.msra.mxu0 %v558
  %807 = vmatprep.subr.bf16.mxu0 0
  %808 = vmatpush1.bf16.msra.mxu0 0
  %809 = vmatprep.subr.bf16.mxu0 0
  %810 = vmatpush1.bf16.msra.mxu0 0
  %811 = vmatprep.subr.bf16.mxu0 0
  %812 = vmatpush1.bf16.msra.mxu0 0
  %813 = vmatprep.subr.bf16.mxu0 0
  %814 = vmatpush1.bf16.msra.mxu0 0
  %815 = vmatprep.subr.bf16.mxu0 0
  %816 = vmatpush1.bf16.msra.mxu0 0
  %817 = vmatprep.subr.bf16.mxu0 0
  %818 = vmatpush1.bf16.msra.mxu0 0
  %819 = vmatprep.subr.bf16.mxu0 0
  %820 = vmatpush1.bf16.msra.mxu0 0
  %821 = vmatprep.subr.bf16.mxu0 0
  %822 = vmatpush1.bf16.msra.mxu0 0
  %823 = vmatprep.mubr.bf16.mxu0 0
  %824 = vmatmul.mubr.bf16.gmra.mrb[0].mxu0 %v189
  %v825 = vpop.f32.mrb[0].mxu0
  %v826 = vadd.f32 %v786, %v825
  %v827 = vpop.f32.mrb[0].mxu0
  %v828 = vpop.f32.mrb[0].mxu0
  %v829 = vpop.f32.mrb[0].mxu0
  %830 = vdwg.mxu0
  %v831 = vld [vmem:[%s2] sm:$0x1]
  %v833 = vlaneseq
  %v834 = vshrl.u32 %v833, 7
  %v835 = vsub.s32 0, %v834
  %v836 = vrot.slane %v831, %v835
  %v838 = vmul.f32 %v826, %v836
  %v839 = vld [vmem:[%s3] sm:$0x1]
  %v841 = vlaneseq
  %v842 = vshrl.u32 %v841, 7
  %v843 = vsub.s32 0, %v842
  %v844 = vrot.slane %v839, %v843
  %v846 = vadd.f32 %v838, %v844
  %v847 = vmax.f32 %v846, 0.0
  %v848 = vpack.c.bf16 %v847, %v847
  %vm849 = vcmask 519168
  %850 = vst.msk [vmem:[%s4] sm:$0xf] %vm849, %v848
  // Predicated region
  $region18: #{unet_forward.34} parent=0 // pred_check
    _
  $region19: #{unet_forward.34} parent=0 // pred_check_branch
    %852 = sbr.rel (0) target = $region21
  $region20: #{unet_forward.34} parent=0 // pred_region
    _
  $region21: #{unet_forward.34} parent=0 // pred_fallthru
    _
  // Predicated region
  $region22: #{unet_forward.34} parent=0 // pred_check
    _
  $region23: #{unet_forward.34} parent=0 // pred_check_branch
    %854 = sbr.rel (0) target = $region25
  $region24: #{unet_forward.34} parent=0 // pred_region
    _
  $region25: #{unet_forward.34} parent=0 // pred_fallthru
    _

// kernel: tile.33
$region0: #{tile.33}
  #allocation0 [shape = 's32[1]{0}', space=sflag, size = 0x4, scoped, tag = 'scoped memory for tile.33']
  %s0 = inlined_call_operand.vmem [shape: f32[16], index: 0, kind: input, shape index: {}]
  %s1 = inlined_call_operand.vmem [shape: f32[4,16], index: 1, kind: output, shape index: {}]
  // Predicated region
  $region2: #{tile.33} parent=0 // pred_check
    _
  $region3: #{tile.33} parent=0 // pred_check_branch
    %3 = sbr.rel (0) target = $region5
  $region4: #{tile.33} parent=0 // pred_region
    _
  $region5: #{tile.33} parent=0 // pred_fallthru
    _
  %v4 = vld [vmem:[%s0] ss:$0 sm:$0xff]
  %5 = vst [vmem:[%s1] sm:$0xf] %v4

// kernel: tile.34
$region0: #{tile.34}
  %s0 = inlined_call_operand.vmem [shape: f32[4,16], index: 0, kind: input, shape index: {}]
  %s1 = inlined_call_operand.vmem [shape: f32[1,64], index: 1, kind: output, shape index: {}]
  $region1: #{tile.34} parent=0
    #allocation0 [shape = 'u8[4096]{0}', space=vmem, size = 0x1000, scoped, tag = 'scoped mem for output reshape']
    #allocation1 [shape = 'u8[4096]{0}', space=vmem, size = 0x1000, scoped, tag = 'scoped mem for input reshape']
    %s3 = sshllo.u32 0, 4
    %v4 = vld [vmem:[%s0] sm:%s3]
    %5 = vst [vmem:[#allocation1] sm:%s3] %v4
    %v6 = vld [vmem:[#allocation1] sm:$0x1]
    %vm7 = vcmask 130048
    %8 = vst.msk [vmem:[#allocation0] sm:$0x1] %vm7, %v6
    %s9 = scalar_lea.vmem [#allocation1], 3
    %v10 = vld [vmem:[%s9] sm:$0x1]
    %11 = vrot.lane.b32.xlu0 %v10, 48
    %v12 = vpop.permute.xlu0 %11
    %vm13 = vcmask 523648
    %14 = vst.msk [vmem:[#allocation0] sm:$0x1] %vm13, %v12
    %s15 = scalar_lea.vmem [#allocation1], 2
    %v16 = vld [vmem:[%s15] sm:$0x1]
    %17 = vrot.lane.b32.xlu0 %v16, 32
    %v18 = vpop.permute.xlu0 %17
    %vm19 = vcmask 392448
    %20 = vst.msk [vmem:[#allocation0] sm:$0x1] %vm19, %v18
    %s21 = scalar_lea.vmem [#allocation1], 1
    %v22 = vld [vmem:[%s21] sm:$0x1]
    %23 = vrot.lane.b32.xlu0 %v22, 16
    %v24 = vpop.permute.xlu0 %23
    %vm25 = vcmask 261248
    %26 = vst.msk [vmem:[#allocation0] sm:$0x1] %vm25, %v24
    %s28 = sshllo.u32 0, 1
    %v30 = vld [vmem:[#allocation0] sm:%s28]
    %s31 = sshllo.u32 0, 1
    %32 = vst [vmem:[%s1] sm:%s31] %v30

// kernel: unet_forward.37
$region0: #{unet_forward.37}
  #allocation0 [shape = 'u32[]', space=smem, size = 0x4, offset = 0x4, fixed_abs, tag = 'smem constant byte address 0x4 - core index']
  #allocation1 [shape = 'u32[144,128]{1,0:T(1,128)}', space=vmem, size = 0x12000, scoped, tag = 'internal scratch']
  %s0 = inlined_call_operand.vmem [shape: bf16[32,576], index: 0, kind: input, shape index: {}]
  %s1 = inlined_call_operand.vmem [shape: bf16[576,32], index: 1, kind: input, shape index: {}]
  %s2 = inlined_call_operand.vmem [shape: f32[1,32], index: 2, kind: input, shape index: {}]
  %s3 = inlined_call_operand.vmem [shape: f32[1,32], index: 3, kind: input, shape index: {}]
  %s4 = inlined_call_operand.vmem [shape: bf16[32,32], index: 4, kind: output, shape index: {}]
  %s5 = sld [smem:[#allocation0]]
  $region26: #{unet_forward.37} parent=0
    _
  %s7 = ssub.s32 1, %s5
  %s8 = scalar_select 0, %s7, %s5
  // Predicated region
  $region2: #{unet_forward.37} parent=0 // pred_check
    _
  $region3: #{unet_forward.37} parent=0 // pred_check_branch
    %10 = sbr.rel (0) target = $region5
  $region4: #{unet_forward.37} parent=0 // pred_region
    _
  $region5: #{unet_forward.37} parent=0 // pred_fallthru
    _
  // Predicated region
  $region6: #{unet_forward.37} parent=0 // pred_check
    _
  $region7: #{unet_forward.37} parent=0 // pred_check_branch
    %12 = sbr.rel (0) target = $region9
  $region8: #{unet_forward.37} parent=0 // pred_region
    _
  $region9: #{unet_forward.37} parent=0 // pred_fallthru
    _
  // Predicated region
  $region10: #{unet_forward.37} parent=0 // pred_check
    _
  $region11: #{unet_forward.37} parent=0 // pred_check_branch
    %14 = sbr.rel (0) target = $region13
  $region12: #{unet_forward.37} parent=0 // pred_region
    _
  $region13: #{unet_forward.37} parent=0 // pred_fallthru
    _
  // Predicated region
  $region14: #{unet_forward.37} parent=0 // pred_check
    _
  $region15: #{unet_forward.37} parent=0 // pred_check_branch
    %16 = sbr.rel (0) target = $region17
  $region16: #{unet_forward.37} parent=0 // pred_region
    _
  $region17: #{unet_forward.37} parent=0 // pred_fallthru
    _
  %v18 = vld [vmem:[%s0] sm:$0xff]
  %v19 = vld [vmem:[%s0 + $0x8] sm:$0xff]
  %v20 = vld [vmem:[%s0 + $0x10] sm:$0xf]
  %v21 = vld [vmem:[%s0 + $0x14] sm:$0xff]
  %v22 = vld [vmem:[%s0 + $0x1c] sm:$0xff]
  %v23 = vld [vmem:[%s0 + $0x24] sm:$0xf]
  %v24 = vld [vmem:[%s0 + $0x28] sm:$0xff]
  %v25 = vld [vmem:[%s0 + $0x30] sm:$0xff]
  %v26 = vld [vmem:[%s0 + $0x38] sm:$0xf]
  %v27 = vld [vmem:[%s0 + $0x3c] sm:$0xff]
  %v28 = vld [vmem:[%s0 + $0x44] sm:$0xff]
  %v29 = vld [vmem:[%s0 + $0x4c] sm:$0xf]
  %v30 = vld [vmem:[%s1] sm:$0xf]
  %v31 = vld [vmem:[%s1 + $0x4] sm:$0xf]
  %v32 = vld [vmem:[%s1 + $0x8] sm:$0xf]
  %v33 = vld [vmem:[%s1 + $0xc] sm:$0xf]
  %v34 = vld [vmem:[%s1 + $0x10] sm:$0xf]
  %v35 = vld [vmem:[%s1 + $0x14] sm:$0xf]
  %v36 = vld [vmem:[%s1 + $0x18] sm:$0xf]
  %v37 = vld [vmem:[%s1 + $0x1c] sm:$0xf]
  %v38 = vld [vmem:[%s1 + $0x20] sm:$0xf]
  %v39 = vld [vmem:[%s1 + $0x24] sm:$0xf]
  %v40 = vld [vmem:[%s1 + $0x28] sm:$0xf]
  %v41 = vld [vmem:[%s1 + $0x2c] sm:$0xf]
  %v42 = vld [vmem:[%s1 + $0x30] sm:$0xf]
  %v43 = vld [vmem:[%s1 + $0x34] sm:$0xf]
  %v44 = vld [vmem:[%s1 + $0x38] sm:$0xf]
  %v45 = vld [vmem:[%s1 + $0x3c] sm:$0xf]
  %v46 = vld [vmem:[%s1 + $0x40] sm:$0xf]
  %v47 = vld [vmem:[%s1 + $0x44] sm:$0xf]
  %v48 = vld [vmem:[%s1 + $0x48] sm:$0xf]
  %v49 = vld [vmem:[%s1 + $0x4c] sm:$0xf]
  %v50 = vld [vmem:[%s1 + $0x50] sm:$0xf]
  %v51 = vld [vmem:[%s1 + $0x54] sm:$0xf]
  %v52 = vld [vmem:[%s1 + $0x58] sm:$0xf]
  %v53 = vld [vmem:[%s1 + $0x5c] sm:$0xf]
  %v54 = vld [vmem:[%s1 + $0x60] sm:$0xf]
  %v55 = vld [vmem:[%s1 + $0x64] sm:$0xf]
  %v56 = vld [vmem:[%s1 + $0x68] sm:$0xf]
  %v57 = vld [vmem:[%s1 + $0x6c] sm:$0xf]
  %v58 = vld [vmem:[%s1 + $0x70] sm:$0xf]
  %v59 = vld [vmem:[%s1 + $0x74] sm:$0xf]
  %v60 = vld [vmem:[%s1 + $0x78] sm:$0xf]
  %v61 = vld [vmem:[%s1 + $0x7c] sm:$0xf]
  %v62 = vld [vmem:[%s1 + $0x80] sm:$0xf]
  %v63 = vld [vmem:[%s1 + $0x84] sm:$0xf]
  %v64 = vld [vmem:[%s1 + $0x88] sm:$0xf]
  %v65 = vld [vmem:[%s1 + $0x8c] sm:$0xf]
  %v66 = vld [vmem:[%s1 + $0x90] sm:$0xf]
  %v67 = vld [vmem:[%s1 + $0x94] sm:$0xf]
  %v68 = vld [vmem:[%s1 + $0x98] sm:$0xf]
  %v69 = vld [vmem:[%s1 + $0x9c] sm:$0xf]
  %v70 = vld [vmem:[%s1 + $0xa0] sm:$0xf]
  %v71 = vld [vmem:[%s1 + $0xa4] sm:$0xf]
  %v72 = vld [vmem:[%s1 + $0xa8] sm:$0xf]
  %v73 = vld [vmem:[%s1 + $0xac] sm:$0xf]
  %v74 = vld [vmem:[%s1 + $0xb0] sm:$0xf]
  %v75 = vld [vmem:[%s1 + $0xb4] sm:$0xf]
  %v76 = vld [vmem:[%s1 + $0xb8] sm:$0xf]
  %v77 = vld [vmem:[%s1 + $0xbc] sm:$0xf]
  %v78 = vld [vmem:[%s1 + $0xc0] sm:$0xf]
  %v79 = vld [vmem:[%s1 + $0xc4] sm:$0xf]
  %v80 = vld [vmem:[%s1 + $0xc8] sm:$0xf]
  %v81 = vld [vmem:[%s1 + $0xcc] sm:$0xf]
  %v82 = vld [vmem:[%s1 + $0xd0] sm:$0xf]
  %v83 = vld [vmem:[%s1 + $0xd4] sm:$0xf]
  %v84 = vld [vmem:[%s1 + $0xd8] sm:$0xf]
  %v85 = vld [vmem:[%s1 + $0xdc] sm:$0xf]
  %v86 = vld [vmem:[%s1 + $0xe0] sm:$0xf]
  %v87 = vld [vmem:[%s1 + $0xe4] sm:$0xf]
  %v88 = vld [vmem:[%s1 + $0xe8] sm:$0xf]
  %v89 = vld [vmem:[%s1 + $0xec] sm:$0xf]
  %v90 = vld [vmem:[%s1 + $0xf0] sm:$0xf]
  %v91 = vld [vmem:[%s1 + $0xf4] sm:$0xf]
  %v92 = vld [vmem:[%s1 + $0xf8] sm:$0xf]
  %v93 = vld [vmem:[%s1 + $0xfc] sm:$0xf]
  %v94 = vld [vmem:[%s1 + $0x100] sm:$0xf]
  %v95 = vld [vmem:[%s1 + $0x104] sm:$0xf]
  %v96 = vld [vmem:[%s1 + $0x108] sm:$0xf]
  %v97 = vld [vmem:[%s1 + $0x10c] sm:$0xf]
  %v98 = vld [vmem:[%s1 + $0x110] sm:$0xf]
  %v99 = vld [vmem:[%s1 + $0x114] sm:$0xf]
  %v100 = vld [vmem:[%s1 + $0x118] sm:$0xf]
  %v101 = vld [vmem:[%s1 + $0x11c] sm:$0xf]
  %v114 = vunpack.c.l.b16 %v18
  %v115 = vunpack.c.h.b16 %v18
  %v116 = vunpack.c.l.b16 %v19
  %v117 = vunpack.c.h.b16 %v19
  %v118 = vunpack.c.l.b16 %v20
  %v119 = vunpack.c.l.b16 %v21
  %v120 = vunpack.c.h.b16 %v21
  %v121 = vunpack.c.l.b16 %v22
  %v122 = vunpack.c.h.b16 %v22
  %v123 = vunpack.c.l.b16 %v23
  %v124 = vunpack.c.l.b16 %v24
  %v125 = vunpack.c.h.b16 %v24
  %v126 = vunpack.c.l.b16 %v25
  %v127 = vunpack.c.h.b16 %v25
  %v128 = vunpack.c.l.b16 %v26
  %v129 = vunpack.c.l.b16 %v27
  %v130 = vunpack.c.h.b16 %v27
  %v131 = vunpack.c.l.b16 %v28
  %v132 = vunpack.c.h.b16 %v28
  %v133 = vunpack.c.l.b16 %v29
  %v134 = vpack.c.b16 %v119, %v114
  %v135 = vpack.c.b16 %v120, %v115
  %v136 = vpack.c.b16 %v121, %v116
  %v137 = vpack.c.b16 %v122, %v117
  %v138 = vpack.c.b16 %v123, %v118
  %v139 = vpack.c.b16 %v129, %v124
  %v140 = vpack.c.b16 %v130, %v125
  %v141 = vpack.c.b16 %v131, %v126
  %v142 = vpack.c.b16 %v132, %v127
  %v143 = vpack.c.b16 %v133, %v128
  %v224 = vunpack.c.l.b16 %v30
  %v225 = vunpack.c.l.b16 %v31
  %v226 = vunpack.c.l.b16 %v32
  %v227 = vunpack.c.l.b16 %v33
  %v228 = vunpack.c.l.b16 %v34
  %v229 = vunpack.c.l.b16 %v35
  %v230 = vunpack.c.l.b16 %v36
  %v231 = vunpack.c.l.b16 %v37
  %v232 = vunpack.c.l.b16 %v38
  %v233 = vunpack.c.l.b16 %v39
  %v234 = vunpack.c.l.b16 %v40
  %v235 = vunpack.c.l.b16 %v41
  %v236 = vunpack.c.l.b16 %v42
  %v237 = vunpack.c.l.b16 %v43
  %v238 = vunpack.c.l.b16 %v44
  %v239 = vunpack.c.l.b16 %v45
  %v240 = vunpack.c.l.b16 %v46
  %v241 = vunpack.c.l.b16 %v47
  %v242 = vunpack.c.l.b16 %v48
  %v243 = vunpack.c.l.b16 %v49
  %v244 = vunpack.c.l.b16 %v50
  %v245 = vunpack.c.l.b16 %v51
  %v246 = vunpack.c.l.b16 %v52
  %v247 = vunpack.c.l.b16 %v53
  %v248 = vunpack.c.l.b16 %v54
  %v249 = vunpack.c.l.b16 %v55
  %v250 = vunpack.c.l.b16 %v56
  %v251 = vunpack.c.l.b16 %v57
  %v252 = vunpack.c.l.b16 %v58
  %v253 = vunpack.c.l.b16 %v59
  %v254 = vunpack.c.l.b16 %v60
  %v255 = vunpack.c.l.b16 %v61
  %v256 = vunpack.c.l.b16 %v62
  %v257 = vunpack.c.l.b16 %v63
  %v258 = vunpack.c.l.b16 %v64
  %v259 = vunpack.c.l.b16 %v65
  %v260 = vunpack.c.l.b16 %v66
  %v261 = vunpack.c.l.b16 %v67
  %v262 = vunpack.c.l.b16 %v68
  %v263 = vunpack.c.l.b16 %v69
  %v264 = vunpack.c.l.b16 %v70
  %v265 = vunpack.c.l.b16 %v71
  %v266 = vunpack.c.l.b16 %v72
  %v267 = vunpack.c.l.b16 %v73
  %v268 = vunpack.c.l.b16 %v74
  %v269 = vunpack.c.l.b16 %v75
  %v270 = vunpack.c.l.b16 %v76
  %v271 = vunpack.c.l.b16 %v77
  %v272 = vunpack.c.l.b16 %v78
  %v273 = vunpack.c.l.b16 %v79
  %v274 = vunpack.c.l.b16 %v80
  %v275 = vunpack.c.l.b16 %v81
  %v276 = vunpack.c.l.b16 %v82
  %v277 = vunpack.c.l.b16 %v83
  %v278 = vunpack.c.l.b16 %v84
  %v279 = vunpack.c.l.b16 %v85
  %v280 = vunpack.c.l.b16 %v86
  %v281 = vunpack.c.l.b16 %v87
  %v282 = vunpack.c.l.b16 %v88
  %v283 = vunpack.c.l.b16 %v89
  %v284 = vunpack.c.l.b16 %v90
  %v285 = vunpack.c.l.b16 %v91
  %v286 = vunpack.c.l.b16 %v92
  %v287 = vunpack.c.l.b16 %v93
  %v288 = vunpack.c.l.b16 %v94
  %v289 = vunpack.c.l.b16 %v95
  %v290 = vunpack.c.l.b16 %v96
  %v291 = vunpack.c.l.b16 %v97
  %v292 = vunpack.c.l.b16 %v98
  %v293 = vunpack.c.l.b16 %v99
  %v294 = vunpack.c.l.b16 %v100
  %v295 = vunpack.c.l.b16 %v101
  %v296 = vpack.c.b16 %v225, %v224
  %v297 = vpack.c.b16 %v227, %v226
  %v298 = vpack.c.b16 %v229, %v228
  %v299 = vpack.c.b16 %v231, %v230
  %v300 = vpack.c.b16 %v233, %v232
  %v301 = vpack.c.b16 %v235, %v234
  %v302 = vpack.c.b16 %v237, %v236
  %v303 = vpack.c.b16 %v239, %v238
  %v304 = vpack.c.b16 %v241, %v240
  %v305 = vpack.c.b16 %v243, %v242
  %v306 = vpack.c.b16 %v245, %v244
  %v307 = vpack.c.b16 %v247, %v246
  %v308 = vpack.c.b16 %v249, %v248
  %v309 = vpack.c.b16 %v251, %v250
  %v310 = vpack.c.b16 %v253, %v252
  %v311 = vpack.c.b16 %v255, %v254
  %v312 = vpack.c.b16 %v257, %v256
  %v313 = vpack.c.b16 %v259, %v258
  %v314 = vpack.c.b16 %v261, %v260
  %v315 = vpack.c.b16 %v263, %v262
  %v316 = vpack.c.b16 %v265, %v264
  %v317 = vpack.c.b16 %v267, %v266
  %v318 = vpack.c.b16 %v269, %v268
  %v319 = vpack.c.b16 %v271, %v270
  %v320 = vpack.c.b16 %v273, %v272
  %v321 = vpack.c.b16 %v275, %v274
  %v322 = vpack.c.b16 %v277, %v276
  %v323 = vpack.c.b16 %v279, %v278
  %v324 = vpack.c.b16 %v281, %v280
  %v325 = vpack.c.b16 %v283, %v282
  %v326 = vpack.c.b16 %v285, %v284
  %v327 = vpack.c.b16 %v287, %v286
  %v328 = vpack.c.b16 %v289, %v288
  %v329 = vpack.c.b16 %v291, %v290
  %v330 = vpack.c.b16 %v293, %v292
  %v331 = vpack.c.b16 %v295, %v294
  %vm368 = vcmask 523264
  %v370 = vsel %vm368, %v138, 0
  %v373 = vsel %vm368, %v143, 0
  %375 = vmatprep.subr.bf16.mxu0 0
  %376 = vmatpush1.bf16.msra.mxu0 %v296
  %377 = vmatprep.subr.bf16.mxu0 0
  %378 = vmatpush1.bf16.msra.mxu0 %v297
  %379 = vmatprep.subr.bf16.mxu0 0
  %380 = vmatpush1.bf16.msra.mxu0 %v298
  %381 = vmatprep.subr.bf16.mxu0 0
  %382 = vmatpush1.bf16.msra.mxu0 %v299
  %383 = vmatprep.subr.bf16.mxu0 0
  %384 = vmatpush1.bf16.msra.mxu0 %v300
  %385 = vmatprep.subr.bf16.mxu0 0
  %386 = vmatpush1.bf16.msra.mxu0 %v301
  %387 = vmatprep.subr.bf16.mxu0 0
  %388 = vmatpush1.bf16.msra.mxu0 %v302
  %389 = vmatprep.subr.bf16.mxu0 0
  %390 = vmatpush1.bf16.msra.mxu0 %v303
  %391 = vmatprep.subr.bf16.mxu0 0
  %392 = vmatpush1.bf16.msra.mxu0 %v304
  %393 = vmatprep.subr.bf16.mxu0 0
  %394 = vmatpush1.bf16.msra.mxu0 %v305
  %395 = vmatprep.subr.bf16.mxu0 0
  %396 = vmatpush1.bf16.msra.mxu0 %v306
  %397 = vmatprep.subr.bf16.mxu0 0
  %398 = vmatpush1.bf16.msra.mxu0 %v307
  %399 = vmatprep.subr.bf16.mxu0 0
  %400 = vmatpush1.bf16.msra.mxu0 %v308
  %401 = vmatprep.subr.bf16.mxu0 0
  %402 = vmatpush1.bf16.msra.mxu0 %v309
  %403 = vmatprep.subr.bf16.mxu0 0
  %404 = vmatpush1.bf16.msra.mxu0 %v310
  %405 = vmatprep.subr.bf16.mxu0 0
  %406 = vmatpush1.bf16.msra.mxu0 %v311
  %407 = vmatprep.mubr.bf16.mxu0 %v135
  %408 = vmatmul.mubr.bf16.gmra.mrb[0].mxu0 %v134
  %v409 = vpop.f32.mrb[0].mxu0
  %v410 = vadd.f32 0.0, %v409
  %v411 = vpop.f32.mrb[0].mxu0
  %v412 = vpop.f32.mrb[0].mxu0
  %v413 = vadd.f32 0.0, %v412
  %v414 = vpop.f32.mrb[0].mxu0
  %415 = vmatprep.mubr.bf16.mxu0 %v140
  %416 = vmatmul.mubr.bf16.gmra.mrb[0].mxu0 %v139
  %v417 = vpop.f32.mrb[0].mxu0
  %v418 = vadd.f32 0.0, %v417
  %v419 = vpop.f32.mrb[0].mxu0
  %v420 = vpop.f32.mrb[0].mxu0
  %v421 = vadd.f32 0.0, %v420
  %v422 = vpop.f32.mrb[0].mxu0
  %423 = vdwg.mxu0
  %424 = vmatprep.subr.bf16.mxu0 0
  %425 = vmatpush1.bf16.msra.mxu0 %v312
  %426 = vmatprep.subr.bf16.mxu0 0
  %427 = vmatpush1.bf16.msra.mxu0 %v313
  %428 = vmatprep.subr.bf16.mxu0 0
  %429 = vmatpush1.bf16.msra.mxu0 %v314
  %430 = vmatprep.subr.bf16.mxu0 0
  %431 = vmatpush1.bf16.msra.mxu0 %v315
  %432 = vmatprep.subr.bf16.mxu0 0
  %433 = vmatpush1.bf16.msra.mxu0 %v316
  %434 = vmatprep.subr.bf16.mxu0 0
  %435 = vmatpush1.bf16.msra.mxu0 %v317
  %436 = vmatprep.subr.bf16.mxu0 0
  %437 = vmatpush1.bf16.msra.mxu0 %v318
  %438 = vmatprep.subr.bf16.mxu0 0
  %439 = vmatpush1.bf16.msra.mxu0 %v319
  %440 = vmatprep.subr.bf16.mxu0 0
  %441 = vmatpush1.bf16.msra.mxu0 %v320
  %442 = vmatprep.subr.bf16.mxu0 0
  %443 = vmatpush1.bf16.msra.mxu0 %v321
  %444 = vmatprep.subr.bf16.mxu0 0
  %445 = vmatpush1.bf16.msra.mxu0 %v322
  %446 = vmatprep.subr.bf16.mxu0 0
  %447 = vmatpush1.bf16.msra.mxu0 %v323
  %448 = vmatprep.subr.bf16.mxu0 0
  %449 = vmatpush1.bf16.msra.mxu0 %v324
  %450 = vmatprep.subr.bf16.mxu0 0
  %451 = vmatpush1.bf16.msra.mxu0 %v325
  %452 = vmatprep.subr.bf16.mxu0 0
  %453 = vmatpush1.bf16.msra.mxu0 %v326
  %454 = vmatprep.subr.bf16.mxu0 0
  %455 = vmatpush1.bf16.msra.mxu0 %v327
  %456 = vmatprep.mubr.bf16.mxu0 %v137
  %457 = vmatmul.mubr.bf16.gmra.mrb[0].mxu0 %v136
  %v458 = vpop.f32.mrb[0].mxu0
  %v459 = vadd.f32 %v410, %v458
  %v460 = vpop.f32.mrb[0].mxu0
  %v461 = vpop.f32.mrb[0].mxu0
  %v462 = vadd.f32 %v413, %v461
  %v463 = vpop.f32.mrb[0].mxu0
  %464 = vmatprep.mubr.bf16.mxu0 %v142
  %465 = vmatmul.mubr.bf16.gmra.mrb[0].mxu0 %v141
  %v466 = vpop.f32.mrb[0].mxu0
  %v467 = vadd.f32 %v418, %v466
  %v468 = vpop.f32.mrb[0].mxu0
  %v469 = vpop.f32.mrb[0].mxu0
  %v470 = vadd.f32 %v421, %v469
  %v471 = vpop.f32.mrb[0].mxu0
  %472 = vdwg.mxu0
  %473 = vmatprep.subr.bf16.mxu0 0
  %474 = vmatpush1.bf16.msra.mxu0 %v328
  %475 = vmatprep.subr.bf16.mxu0 0
  %476 = vmatpush1.bf16.msra.mxu0 %v329
  %477 = vmatprep.subr.bf16.mxu0 0
  %478 = vmatpush1.bf16.msra.mxu0 %v330
  %479 = vmatprep.subr.bf16.mxu0 0
  %480 = vmatpush1.bf16.msra.mxu0 %v331
  %481 = vmatprep.subr.bf16.mxu0 0
  %482 = vmatpush1.bf16.msra.mxu0 0
  %483 = vmatprep.subr.bf16.mxu0 0
  %484 = vmatpush1.bf16.msra.mxu0 0
  %485 = vmatprep.subr.bf16.mxu0 0
  %486 = vmatpush1.bf16.msra.mxu0 0
  %487 = vmatprep.subr.bf16.mxu0 0
  %488 = vmatpush1.bf16.msra.mxu0 0
  %489 = vmatprep.subr.bf16.mxu0 0
  %490 = vmatpush1.bf16.msra.mxu0 0
  %491 = vmatprep.subr.bf16.mxu0 0
  %492 = vmatpush1.bf16.msra.mxu0 0
  %493 = vmatprep.subr.bf16.mxu0 0
  %494 = vmatpush1.bf16.msra.mxu0 0
  %495 = vmatprep.subr.bf16.mxu0 0
  %496 = vmatpush1.bf16.msra.mxu0 0
  %497 = vmatprep.subr.bf16.mxu0 0
  %498 = vmatpush1.bf16.msra.mxu0 0
  %499 = vmatprep.subr.bf16.mxu0 0
  %500 = vmatpush1.bf16.msra.mxu0 0
  %501 = vmatprep.subr.bf16.mxu0 0
  %502 = vmatpush1.bf16.msra.mxu0 0
  %503 = vmatprep.subr.bf16.mxu0 0
  %504 = vmatpush1.bf16.msra.mxu0 0
  %505 = vmatprep.mubr.bf16.mxu0 0
  %506 = vmatmul.mubr.bf16.gmra.mrb[0].mxu0 %v370
  %v507 = vpop.f32.mrb[0].mxu0
  %v508 = vadd.f32 %v459, %v507
  %v509 = vpop.f32.mrb[0].mxu0
  %v510 = vpop.f32.mrb[0].mxu0
  %v511 = vadd.f32 %v462, %v510
  %v512 = vpop.f32.mrb[0].mxu0
  %513 = vmatprep.mubr.bf16.mxu0 0
  %514 = vmatmul.mubr.bf16.gmra.mrb[0].mxu0 %v373
  %v515 = vpop.f32.mrb[0].mxu0
  %v516 = vadd.f32 %v467, %v515
  %v517 = vpop.f32.mrb[0].mxu0
  %v518 = vpop.f32.mrb[0].mxu0
  %v519 = vadd.f32 %v470, %v518
  %v520 = vpop.f32.mrb[0].mxu0
  %521 = vdwg.mxu0
  %v522 = vld [vmem:[%s2] sm:$0x1]
  %v524 = vlaneseq
  %v525 = vshrl.u32 %v524, 7
  %v526 = vsub.s32 0, %v525
  %v527 = vrot.slane %v522, %v526
  %v529 = vmul.f32 %v508, %v527
  %v530 = vmul.f32 %v511, %v527
  %v531 = vmul.f32 %v516, %v527
  %v532 = vmul.f32 %v519, %v527
  %v533 = vld [vmem:[%s3] sm:$0x1]
  %v535 = vlaneseq
  %v536 = vshrl.u32 %v535, 7
  %v537 = vsub.s32 0, %v536
  %v538 = vrot.slane %v533, %v537
  %v540 = vadd.f32 %v529, %v538
  %v541 = vadd.f32 %v530, %v538
  %v542 = vadd.f32 %v531, %v538
  %v543 = vadd.f32 %v532, %v538
  %v544 = vmax.f32 %v540, 0.0
  %v545 = vmax.f32 %v541, 0.0
  %v546 = vmax.f32 %v542, 0.0
  %v547 = vmax.f32 %v543, 0.0
  %v548 = vpack.c.bf16 %v545, %v544
  %v549 = vpack.c.bf16 %v547, %v546
  %v552 = vunpack.c.l.b16 %v548
  %v553 = vunpack.c.h.b16 %v548
  %v554 = vunpack.c.l.b16 %v549
  %v555 = vunpack.c.h.b16 %v549
  %v556 = vpack.c.b16 %v552, %v552
  %v557 = vpack.c.b16 %v553, %v553
  %v558 = vpack.c.b16 %v554, %v554
  %v559 = vpack.c.b16 %v555, %v555
  %vm564 = vcmask 257024
  %565 = vst.msk [vmem:[%s4] sm:$0xf] %vm564, %v556
  %566 = vst.msk [vmem:[%s4 + $0x4] sm:$0xf] %vm564, %v557
  %567 = vst.msk [vmem:[%s4 + $0x8] sm:$0xf] %vm564, %v558
  %568 = vst.msk [vmem:[%s4 + $0xc] sm:$0xf] %vm564, %v559
  // Predicated region
  $region18: #{unet_forward.37} parent=0 // pred_check
    _
  $region19: #{unet_forward.37} parent=0 // pred_check_branch
    %570 = sbr.rel (0) target = $region21
  $region20: #{unet_forward.37} parent=0 // pred_region
    _
  $region21: #{unet_forward.37} parent=0 // pred_fallthru
    _
  // Predicated region
  $region22: #{unet_forward.37} parent=0 // pred_check
    _
  $region23: #{unet_forward.37} parent=0 // pred_check_branch
    %572 = sbr.rel (0) target = $region25
  $region24: #{unet_forward.37} parent=0 // pred_region
    _
  $region25: #{unet_forward.37} parent=0 // pred_fallthru
    _

// kernel: unet_forward.39
$region0: #{unet_forward.39}
  #allocation0 [shape = 'u32[]', space=smem, size = 0x4, offset = 0x4, fixed_abs, tag = 'smem constant byte address 0x4 - core index']
  #allocation1 [shape = 'u32[144,128]{1,0:T(1,128)}', space=vmem, size = 0x12000, scoped, tag = 'internal scratch']
  %s0 = inlined_call_operand.vmem [shape: bf16[32,32], index: 0, kind: input, shape index: {}]
  %s1 = inlined_call_operand.vmem [shape: bf16[32,64], index: 1, kind: input, shape index: {}]
  %s2 = inlined_call_operand.vmem [shape: f32[1,64], index: 2, kind: input, shape index: {}]
  %s3 = inlined_call_operand.vmem [shape: f32[1,64], index: 3, kind: input, shape index: {}]
  %s4 = inlined_call_operand.vmem [shape: bf16[32,64], index: 4, kind: output, shape index: {}]
  %s5 = sld [smem:[#allocation0]]
  $region26: #{unet_forward.39} parent=0
    _
  %s7 = ssub.s32 1, %s5
  %s8 = scalar_select 0, %s7, %s5
  // Predicated region
  $region2: #{unet_forward.39} parent=0 // pred_check
    _
  $region3: #{unet_forward.39} parent=0 // pred_check_branch
    %10 = sbr.rel (0) target = $region5
  $region4: #{unet_forward.39} parent=0 // pred_region
    _
  $region5: #{unet_forward.39} parent=0 // pred_fallthru
    _
  // Predicated region
  $region6: #{unet_forward.39} parent=0 // pred_check
    _
  $region7: #{unet_forward.39} parent=0 // pred_check_branch
    %12 = sbr.rel (0) target = $region9
  $region8: #{unet_forward.39} parent=0 // pred_region
    _
  $region9: #{unet_forward.39} parent=0 // pred_fallthru
    _
  // Predicated region
  $region10: #{unet_forward.39} parent=0 // pred_check
    _
  $region11: #{unet_forward.39} parent=0 // pred_check_branch
    %14 = sbr.rel (0) target = $region13
  $region12: #{unet_forward.39} parent=0 // pred_region
    _
  $region13: #{unet_forward.39} parent=0 // pred_fallthru
    _
  // Predicated region
  $region14: #{unet_forward.39} parent=0 // pred_check
    _
  $region15: #{unet_forward.39} parent=0 // pred_check_branch
    %16 = sbr.rel (0) target = $region17
  $region16: #{unet_forward.39} parent=0 // pred_region
    _
  $region17: #{unet_forward.39} parent=0 // pred_fallthru
    _
  %v18 = vld [vmem:[%s0] sm:$0xf]
  %v19 = vld [vmem:[%s0 + $0x4] sm:$0xf]
  %v20 = vld [vmem:[%s0 + $0x8] sm:$0xf]
  %v21 = vld [vmem:[%s0 + $0xc] sm:$0xf]
  %v22 = vld [vmem:[%s1] sm:$0xf]
  %v23 = vld [vmem:[%s1 + $0x4] sm:$0xf]
  %v24 = vld [vmem:[%s1 + $0x8] sm:$0xf]
  %v25 = vld [vmem:[%s1 + $0xc] sm:$0xf]
  %v30 = vunpack.c.l.b16 %v18
  %v31 = vunpack.c.l.b16 %v19
  %v32 = vunpack.c.l.b16 %v20
  %v33 = vunpack.c.l.b16 %v21
  %v34 = vpack.c.b16 %v31, %v30
  %v35 = vpack.c.b16 %v33, %v32
  %v40 = vunpack.c.l.b16 %v22
  %v41 = vunpack.c.l.b16 %v23
  %v42 = vunpack.c.l.b16 %v24
  %v43 = vunpack.c.l.b16 %v25
  %v44 = vpack.c.b16 %v41, %v40
  %v45 = vpack.c.b16 %v43, %v42
  %vm48 = vcmask 261120
  %v50 = vsel %vm48, %v34, 0
  %v53 = vsel %vm48, %v35, 0
  %55 = vmatprep.subr.bf16.mxu0 0
  %56 = vmatpush1.bf16.msra.mxu0 %v44
  %57 = vmatprep.subr.bf16.mxu0 0
  %58 = vmatpush1.bf16.msra.mxu0 %v45
  %59 = vmatprep.subr.bf16.mxu0 0
  %60 = vmatpush1.bf16.msra.mxu0 0
  %61 = vmatprep.subr.bf16.mxu0 0
  %62 = vmatpush1.bf16.msra.mxu0 0
  %63 = vmatprep.subr.bf16.mxu0 0
  %64 = vmatpush1.bf16.msra.mxu0 0
  %65 = vmatprep.subr.bf16.mxu0 0
  %66 = vmatpush1.bf16.msra.mxu0 0
  %67 = vmatprep.subr.bf16.mxu0 0
  %68 = vmatpush1.bf16.msra.mxu0 0
  %69 = vmatprep.subr.bf16.mxu0 0
  %70 = vmatpush1.bf16.msra.mxu0 0
  %71 = vmatprep.subr.bf16.mxu0 0
  %72 = vmatpush1.bf16.msra.mxu0 0
  %73 = vmatprep.subr.bf16.mxu0 0
  %74 = vmatpush1.bf16.msra.mxu0 0
  %75 = vmatprep.subr.bf16.mxu0 0
  %76 = vmatpush1.bf16.msra.mxu0 0
  %77 = vmatprep.subr.bf16.mxu0 0
  %78 = vmatpush1.bf16.msra.mxu0 0
  %79 = vmatprep.subr.bf16.mxu0 0
  %80 = vmatpush1.bf16.msra.mxu0 0
  %81 = vmatprep.subr.bf16.mxu0 0
  %82 = vmatpush1.bf16.msra.mxu0 0
  %83 = vmatprep.subr.bf16.mxu0 0
  %84 = vmatpush1.bf16.msra.mxu0 0
  %85 = vmatprep.subr.bf16.mxu0 0
  %86 = vmatpush1.bf16.msra.mxu0 0
  %87 = vmatprep.mubr.bf16.mxu0 0
  %88 = vmatmul.mubr.bf16.gmra.mrb[0].mxu0 %v50
  %v89 = vpop.f32.mrb[0].mxu0
  %v90 = vadd.f32 0.0, %v89
  %v91 = vpop.f32.mrb[0].mxu0
  %v92 = vpop.f32.mrb[0].mxu0
  %v93 = vadd.f32 0.0, %v92
  %v94 = vpop.f32.mrb[0].mxu0
  %95 = vmatprep.mubr.bf16.mxu0 0
  %96 = vmatmul.mubr.bf16.gmra.mrb[0].mxu0 %v53
  %v97 = vpop.f32.mrb[0].mxu0
  %v98 = vadd.f32 0.0, %v97
  %v99 = vpop.f32.mrb[0].mxu0
  %v100 = vpop.f32.mrb[0].mxu0
  %v101 = vadd.f32 0.0, %v100
  %v102 = vpop.f32.mrb[0].mxu0
  %103 = vdwg.mxu0
  %v104 = vld [vmem:[%s2] sm:$0x1]
  %v106 = vlaneseq
  %v107 = vshrl.u32 %v106, 7
  %v108 = vsub.s32 0, %v107
  %v109 = vrot.slane %v104, %v108
  %v111 = vmul.f32 %v90, %v109
  %v112 = vmul.f32 %v93, %v109
  %v113 = vmul.f32 %v98, %v109
  %v114 = vmul.f32 %v101, %v109
  %v115 = vld [vmem:[%s3] sm:$0x1]
  %v117 = vlaneseq
  %v118 = vshrl.u32 %v117, 7
  %v119 = vsub.s32 0, %v118
  %v120 = vrot.slane %v115, %v119
  %v122 = vadd.f32 %v111, %v120
  %v123 = vadd.f32 %v112, %v120
  %v124 = vadd.f32 %v113, %v120
  %v125 = vadd.f32 %v114, %v120
  %v126 = vpack.c.bf16 %v123, %v122
  %v127 = vpack.c.bf16 %v125, %v124
  %v130 = vunpack.c.l.b16 %v126
  %v131 = vunpack.c.h.b16 %v126
  %v132 = vunpack.c.l.b16 %v127
  %v133 = vunpack.c.h.b16 %v127
  %v134 = vpack.c.b16 %v130, %v130
  %v135 = vpack.c.b16 %v131, %v131
  %v136 = vpack.c.b16 %v132, %v132
  %v137 = vpack.c.b16 %v133, %v133
  %vm142 = vcmask 519168
  %143 = vst.msk [vmem:[%s4] sm:$0xf] %vm142, %v134
  %144 = vst.msk [vmem:[%s4 + $0x4] sm:$0xf] %vm142, %v135
  %145 = vst.msk [vmem:[%s4 + $0x8] sm:$0xf] %vm142, %v136
  %146 = vst.msk [vmem:[%s4 + $0xc] sm:$0xf] %vm142, %v137
  // Predicated region
  $region18: #{unet_forward.39} parent=0 // pred_check
    _
  $region19: #{unet_forward.39} parent=0 // pred_check_branch
    %148 = sbr.rel (0) target = $region21
  $region20: #{unet_forward.39} parent=0 // pred_region
    _
  $region21: #{unet_forward.39} parent=0 // pred_fallthru
    _
  // Predicated region
  $region22: #{unet_forward.39} parent=0 // pred_check
    _
  $region23: #{unet_forward.39} parent=0 // pred_check_branch
    %150 = sbr.rel (0) target = $region25
  $region24: #{unet_forward.39} parent=0 // pred_region
    _
  $region25: #{unet_forward.39} parent=0 // pred_fallthru
    _

// kernel: tile.38
$region0: #{tile.38}
  #allocation0 [shape = 's32[1]{0}', space=sflag, size = 0x4, scoped, tag = 'scoped memory for tile.38']
  %s0 = inlined_call_operand.vmem [shape: f32[8], index: 0, kind: input, shape index: {}]
  %s1 = inlined_call_operand.vmem [shape: f32[4,8], index: 1, kind: output, shape index: {}]
  // Predicated region
  $region2: #{tile.38} parent=0 // pred_check
    _
  $region3: #{tile.38} parent=0 // pred_check_branch
    %3 = sbr.rel (0) target = $region5
  $region4: #{tile.38} parent=0 // pred_region
    _
  $region5: #{tile.38} parent=0 // pred_fallthru
    _
  %v4 = vld [vmem:[%s0] ss:$0 sm:$0xff]
  %5 = vst [vmem:[%s1] sm:$0xf] %v4

// kernel: tile.39
$region0: #{tile.39}
  %s0 = inlined_call_operand.vmem [shape: f32[4,8], index: 0, kind: input, shape index: {}]
  %s1 = inlined_call_operand.vmem [shape: f32[1,32], index: 1, kind: output, shape index: {}]
  $region1: #{tile.39} parent=0
    #allocation0 [shape = 'u8[4096]{0}', space=vmem, size = 0x1000, scoped, tag = 'scoped mem for output reshape']
    #allocation1 [shape = 'u8[4096]{0}', space=vmem, size = 0x1000, scoped, tag = 'scoped mem for input reshape']
    %s3 = sshllo.u32 0, 4
    %v4 = vld [vmem:[%s0] sm:%s3]
    %5 = vst [vmem:[#allocation1] sm:%s3] %v4
    %v6 = vld [vmem:[#allocation1] sm:$0x1]
    %vm7 = vcmask 64512
    %8 = vst.msk [vmem:[#allocation0] sm:$0x1] %vm7, %v6
    %s9 = scalar_lea.vmem [#allocation1], 3
    %v10 = vld [vmem:[%s9] sm:$0x1]
    %11 = vrot.lane.b32.xlu0 %v10, 24
    %v12 = vpop.permute.xlu0 %11
    %vm13 = vcmask 261312
    %14 = vst.msk [vmem:[#allocation0] sm:$0x1] %vm13, %v12
    %s15 = scalar_lea.vmem [#allocation1], 2
    %v16 = vld [vmem:[%s15] sm:$0x1]
    %17 = vrot.lane.b32.xlu0 %v16, 16
    %v18 = vpop.permute.xlu0 %17
    %vm19 = vcmask 195712
    %20 = vst.msk [vmem:[#allocation0] sm:$0x1] %vm19, %v18
    %s21 = scalar_lea.vmem [#allocation1], 1
    %v22 = vld [vmem:[%s21] sm:$0x1]
    %23 = vrot.lane.b32.xlu0 %v22, 8
    %v24 = vpop.permute.xlu0 %23
    %vm25 = vcmask 130112
    %26 = vst.msk [vmem:[#allocation0] sm:$0x1] %vm25, %v24
    %s28 = sshllo.u32 0, 1
    %v30 = vld [vmem:[#allocation0] sm:%s28]
    %s31 = sshllo.u32 0, 1
    %32 = vst [vmem:[%s1] sm:%s31] %v30

// kernel: unet_forward.40
$region0: #{unet_forward.40}
  #allocation0 [shape = 'u32[]', space=smem, size = 0x4, offset = 0x4, fixed_abs, tag = 'smem constant byte address 0x4 - core index']
  #allocation1 [shape = 'u32[144,128]{1,0:T(1,128)}', space=vmem, size = 0x12000, scoped, tag = 'internal scratch']
  %s0 = inlined_call_operand.vmem [shape: bf16[128,288], index: 0, kind: input, shape index: {}]
  %s1 = inlined_call_operand.vmem [shape: bf16[288,16], index: 1, kind: input, shape index: {}]
  %s2 = inlined_call_operand.vmem [shape: f32[1,16], index: 2, kind: input, shape index: {}]
  %s3 = inlined_call_operand.vmem [shape: f32[1,16], index: 3, kind: input, shape index: {}]
  %s4 = inlined_call_operand.vmem [shape: bf16[128,16], index: 4, kind: output, shape index: {}]
  %s5 = sld [smem:[#allocation0]]
  $region26: #{unet_forward.40} parent=0
    _
  %s7 = ssub.s32 1, %s5
  %s8 = scalar_select 0, %s7, %s5
  // Predicated region
  $region2: #{unet_forward.40} parent=0 // pred_check
    _
  $region3: #{unet_forward.40} parent=0 // pred_check_branch
    %10 = sbr.rel (0) target = $region5
  $region4: #{unet_forward.40} parent=0 // pred_region
    _
  $region5: #{unet_forward.40} parent=0 // pred_fallthru
    _
  // Predicated region
  $region6: #{unet_forward.40} parent=0 // pred_check
    _
  $region7: #{unet_forward.40} parent=0 // pred_check_branch
    %12 = sbr.rel (0) target = $region9
  $region8: #{unet_forward.40} parent=0 // pred_region
    _
  $region9: #{unet_forward.40} parent=0 // pred_fallthru
    _
  // Predicated region
  $region10: #{unet_forward.40} parent=0 // pred_check
    _
  $region11: #{unet_forward.40} parent=0 // pred_check_branch
    %14 = sbr.rel (0) target = $region13
  $region12: #{unet_forward.40} parent=0 // pred_region
    _
  $region13: #{unet_forward.40} parent=0 // pred_fallthru
    _
  // Predicated region
  $region14: #{unet_forward.40} parent=0 // pred_check
    _
  $region15: #{unet_forward.40} parent=0 // pred_check_branch
    %16 = sbr.rel (0) target = $region17
  $region16: #{unet_forward.40} parent=0 // pred_region
    _
  $region17: #{unet_forward.40} parent=0 // pred_fallthru
    _
  %v18 = vld [vmem:[%s0] sm:$0xff]
  %v19 = vld [vmem:[%s0 + $0x8] sm:$0xf]
  %v20 = vld [vmem:[%s0 + $0xc] sm:$0xff]
  %v21 = vld [vmem:[%s0 + $0x14] sm:$0xf]
  %v22 = vld [vmem:[%s0 + $0x18] sm:$0xff]
  %v23 = vld [vmem:[%s0 + $0x20] sm:$0xf]
  %v24 = vld [vmem:[%s0 + $0x24] sm:$0xff]
  %v25 = vld [vmem:[%s0 + $0x2c] sm:$0xf]
  %v26 = vld [vmem:[%s0 + $0x30] sm:$0xff]
  %v27 = vld [vmem:[%s0 + $0x38] sm:$0xf]
  %v28 = vld [vmem:[%s0 + $0x3c] sm:$0xff]
  %v29 = vld [vmem:[%s0 + $0x44] sm:$0xf]
  %v30 = vld [vmem:[%s0 + $0x48] sm:$0xff]
  %v31 = vld [vmem:[%s0 + $0x50] sm:$0xf]
  %v32 = vld [vmem:[%s0 + $0x54] sm:$0xff]
  %v33 = vld [vmem:[%s0 + $0x5c] sm:$0xf]
  %v34 = vld [vmem:[%s0 + $0x60] sm:$0xff]
  %v35 = vld [vmem:[%s0 + $0x68] sm:$0xf]
  %v36 = vld [vmem:[%s0 + $0x6c] sm:$0xff]
  %v37 = vld [vmem:[%s0 + $0x74] sm:$0xf]
  %v38 = vld [vmem:[%s0 + $0x78] sm:$0xff]
  %v39 = vld [vmem:[%s0 + $0x80] sm:$0xf]
  %v40 = vld [vmem:[%s0 + $0x84] sm:$0xff]
  %v41 = vld [vmem:[%s0 + $0x8c] sm:$0xf]
  %v42 = vld [vmem:[%s0 + $0x90] sm:$0xff]
  %v43 = vld [vmem:[%s0 + $0x98] sm:$0xf]
  %v44 = vld [vmem:[%s0 + $0x9c] sm:$0xff]
  %v45 = vld [vmem:[%s0 + $0xa4] sm:$0xf]
  %v46 = vld [vmem:[%s0 + $0xa8] sm:$0xff]
  %v47 = vld [vmem:[%s0 + $0xb0] sm:$0xf]
  %v48 = vld [vmem:[%s0 + $0xb4] sm:$0xff]
  %v49 = vld [vmem:[%s0 + $0xbc] sm:$0xf]
  %v50 = vld [vmem:[%s1] sm:$0xf]
  %v51 = vld [vmem:[%s1 + $0x4] sm:$0xf]
  %v52 = vld [vmem:[%s1 + $0x8] sm:$0xf]
  %v53 = vld [vmem:[%s1 + $0xc] sm:$0xf]
  %v54 = vld [vmem:[%s1 + $0x10] sm:$0xf]
  %v55 = vld [vmem:[%s1 + $0x14] sm:$0xf]
  %v56 = vld [vmem:[%s1 + $0x18] sm:$0xf]
  %v57 = vld [vmem:[%s1 + $0x1c] sm:$0xf]
  %v58 = vld [vmem:[%s1 + $0x20] sm:$0xf]
  %v59 = vld [vmem:[%s1 + $0x24] sm:$0xf]
  %v60 = vld [vmem:[%s1 + $0x28] sm:$0xf]
  %v61 = vld [vmem:[%s1 + $0x2c] sm:$0xf]
  %v62 = vld [vmem:[%s1 + $0x30] sm:$0xf]
  %v63 = vld [vmem:[%s1 + $0x34] sm:$0xf]
  %v64 = vld [vmem:[%s1 + $0x38] sm:$0xf]
  %v65 = vld [vmem:[%s1 + $0x3c] sm:$0xf]
  %v66 = vld [vmem:[%s1 + $0x40] sm:$0xf]
  %v67 = vld [vmem:[%s1 + $0x44] sm:$0xf]
  %v68 = vld [vmem:[%s1 + $0x48] sm:$0xf]
  %v69 = vld [vmem:[%s1 + $0x4c] sm:$0xf]
  %v70 = vld [vmem:[%s1 + $0x50] sm:$0xf]
  %v71 = vld [vmem:[%s1 + $0x54] sm:$0xf]
  %v72 = vld [vmem:[%s1 + $0x58] sm:$0xf]
  %v73 = vld [vmem:[%s1 + $0x5c] sm:$0xf]
  %v74 = vld [vmem:[%s1 + $0x60] sm:$0xf]
  %v75 = vld [vmem:[%s1 + $0x64] sm:$0xf]
  %v76 = vld [vmem:[%s1 + $0x68] sm:$0xf]
  %v77 = vld [vmem:[%s1 + $0x6c] sm:$0xf]
  %v78 = vld [vmem:[%s1 + $0x70] sm:$0xf]
  %v79 = vld [vmem:[%s1 + $0x74] sm:$0xf]
  %v80 = vld [vmem:[%s1 + $0x78] sm:$0xf]
  %v81 = vld [vmem:[%s1 + $0x7c] sm:$0xf]
  %v82 = vld [vmem:[%s1 + $0x80] sm:$0xf]
  %v83 = vld [vmem:[%s1 + $0x84] sm:$0xf]
  %v84 = vld [vmem:[%s1 + $0x88] sm:$0xf]
  %v85 = vld [vmem:[%s1 + $0x8c] sm:$0xf]
  %v118 = vunpack.c.l.b16 %v18
  %v119 = vunpack.c.h.b16 %v18
  %v120 = vunpack.c.l.b16 %v19
  %v121 = vunpack.c.l.b16 %v20
  %v122 = vunpack.c.h.b16 %v20
  %v123 = vunpack.c.l.b16 %v21
  %v124 = vunpack.c.l.b16 %v22
  %v125 = vunpack.c.h.b16 %v22
  %v126 = vunpack.c.l.b16 %v23
  %v127 = vunpack.c.l.b16 %v24
  %v128 = vunpack.c.h.b16 %v24
  %v129 = vunpack.c.l.b16 %v25
  %v130 = vunpack.c.l.b16 %v26
  %v131 = vunpack.c.h.b16 %v26
  %v132 = vunpack.c.l.b16 %v27
  %v133 = vunpack.c.l.b16 %v28
  %v134 = vunpack.c.h.b16 %v28
  %v135 = vunpack.c.l.b16 %v29
  %v136 = vunpack.c.l.b16 %v30
  %v137 = vunpack.c.h.b16 %v30
  %v138 = vunpack.c.l.b16 %v31
  %v139 = vunpack.c.l.b16 %v32
  %v140 = vunpack.c.h.b16 %v32
  %v141 = vunpack.c.l.b16 %v33
  %v142 = vunpack.c.l.b16 %v34
  %v143 = vunpack.c.h.b16 %v34
  %v144 = vunpack.c.l.b16 %v35
  %v145 = vunpack.c.l.b16 %v36
  %v146 = vunpack.c.h.b16 %v36
  %v147 = vunpack.c.l.b16 %v37
  %v148 = vunpack.c.l.b16 %v38
  %v149 = vunpack.c.h.b16 %v38
  %v150 = vunpack.c.l.b16 %v39
  %v151 = vunpack.c.l.b16 %v40
  %v152 = vunpack.c.h.b16 %v40
  %v153 = vunpack.c.l.b16 %v41
  %v154 = vunpack.c.l.b16 %v42
  %v155 = vunpack.c.h.b16 %v42
  %v156 = vunpack.c.l.b16 %v43
  %v157 = vunpack.c.l.b16 %v44
  %v158 = vunpack.c.h.b16 %v44
  %v159 = vunpack.c.l.b16 %v45
  %v160 = vunpack.c.l.b16 %v46
  %v161 = vunpack.c.h.b16 %v46
  %v162 = vunpack.c.l.b16 %v47
  %v163 = vunpack.c.l.b16 %v48
  %v164 = vunpack.c.h.b16 %v48
  %v165 = vunpack.c.l.b16 %v49
  %v166 = vpack.c.b16 %v121, %v118
  %v167 = vpack.c.b16 %v122, %v119
  %v168 = vpack.c.b16 %v123, %v120
  %v169 = vpack.c.b16 %v127, %v124
  %v170 = vpack.c.b16 %v128, %v125
  %v171 = vpack.c.b16 %v129, %v126
  %v172 = vpack.c.b16 %v133, %v130
  %v173 = vpack.c.b16 %v134, %v131
  %v174 = vpack.c.b16 %v135, %v132
  %v175 = vpack.c.b16 %v139, %v136
  %v176 = vpack.c.b16 %v140, %v137
  %v177 = vpack.c.b16 %v141, %v138
  %v178 = vpack.c.b16 %v145, %v142
  %v179 = vpack.c.b16 %v146, %v143
  %v180 = vpack.c.b16 %v147, %v144
  %v181 = vpack.c.b16 %v151, %v148
  %v182 = vpack.c.b16 %v152, %v149
  %v183 = vpack.c.b16 %v153, %v150
  %v184 = vpack.c.b16 %v157, %v154
  %v185 = vpack.c.b16 %v158, %v155
  %v186 = vpack.c.b16 %v159, %v156
  %v187 = vpack.c.b16 %v163, %v160
  %v188 = vpack.c.b16 %v164, %v161
  %v189 = vpack.c.b16 %v165, %v162
  %v242 = vunpack.c.l.b16 %v50
  %v243 = vunpack.c.l.b16 %v51
  %v244 = vunpack.c.l.b16 %v52
  %v245 = vunpack.c.l.b16 %v53
  %v246 = vunpack.c.l.b16 %v54
  %v247 = vunpack.c.l.b16 %v55
  %v248 = vunpack.c.l.b16 %v56
  %v249 = vunpack.c.l.b16 %v57
  %v250 = vunpack.c.l.b16 %v58
  %v251 = vunpack.c.l.b16 %v59
  %v252 = vunpack.c.l.b16 %v60
  %v253 = vunpack.c.l.b16 %v61
  %v254 = vunpack.c.l.b16 %v62
  %v255 = vunpack.c.l.b16 %v63
  %v256 = vunpack.c.l.b16 %v64
  %v257 = vunpack.c.l.b16 %v65
  %v258 = vunpack.c.l.b16 %v66
  %v259 = vunpack.c.l.b16 %v67
  %v260 = vunpack.c.l.b16 %v68
  %v261 = vunpack.c.l.b16 %v69
  %v262 = vunpack.c.l.b16 %v70
  %v263 = vunpack.c.l.b16 %v71
  %v264 = vunpack.c.l.b16 %v72
  %v265 = vunpack.c.l.b16 %v73
  %v266 = vunpack.c.l.b16 %v74
  %v267 = vunpack.c.l.b16 %v75
  %v268 = vunpack.c.l.b16 %v76
  %v269 = vunpack.c.l.b16 %v77
  %v270 = vunpack.c.l.b16 %v78
  %v271 = vunpack.c.l.b16 %v79
  %v272 = vunpack.c.l.b16 %v80
  %v273 = vunpack.c.l.b16 %v81
  %v274 = vunpack.c.l.b16 %v82
  %v275 = vunpack.c.l.b16 %v83
  %v276 = vunpack.c.l.b16 %v84
  %v277 = vunpack.c.l.b16 %v85
  %v278 = vpack.c.b16 %v243, %v242
  %v279 = vpack.c.b16 %v245, %v244
  %v280 = vpack.c.b16 %v247, %v246
  %v281 = vpack.c.b16 %v249, %v248
  %v282 = vpack.c.b16 %v251, %v250
  %v283 = vpack.c.b16 %v253, %v252
  %v284 = vpack.c.b16 %v255, %v254
  %v285 = vpack.c.b16 %v257, %v256
  %v286 = vpack.c.b16 %v259, %v258
  %v287 = vpack.c.b16 %v261, %v260
  %v288 = vpack.c.b16 %v263, %v262
  %v289 = vpack.c.b16 %v265, %v264
  %v290 = vpack.c.b16 %v267, %v266
  %v291 = vpack.c.b16 %v269, %v268
  %v292 = vpack.c.b16 %v271, %v270
  %v293 = vpack.c.b16 %v273, %v272
  %v294 = vpack.c.b16 %v275, %v274
  %v295 = vpack.c.b16 %v277, %v276
  %vm314 = vcmask 261120
  %v316 = vsel %vm314, %v168, 0
  %v319 = vsel %vm314, %v171, 0
  %v322 = vsel %vm314, %v174, 0
  %v325 = vsel %vm314, %v177, 0
  %v328 = vsel %vm314, %v180, 0
  %v331 = vsel %vm314, %v183, 0
  %v334 = vsel %vm314, %v186, 0
  %v337 = vsel %vm314, %v189, 0
  %339 = vmatprep.subr.bf16.mxu0 0
  %340 = vmatpush1.bf16.msra.mxu0 %v278
  %341 = vmatprep.subr.bf16.mxu0 0
  %342 = vmatpush1.bf16.msra.mxu0 %v279
  %343 = vmatprep.subr.bf16.mxu0 0
  %344 = vmatpush1.bf16.msra.mxu0 %v280
  %345 = vmatprep.subr.bf16.mxu0 0
  %346 = vmatpush1.bf16.msra.mxu0 %v281
  %347 = vmatprep.subr.bf16.mxu0 0
  %348 = vmatpush1.bf16.msra.mxu0 %v282
  %349 = vmatprep.subr.bf16.mxu0 0
  %350 = vmatpush1.bf16.msra.mxu0 %v283
  %351 = vmatprep.subr.bf16.mxu0 0
  %352 = vmatpush1.bf16.msra.mxu0 %v284
  %353 = vmatprep.subr.bf16.mxu0 0
  %354 = vmatpush1.bf16.msra.mxu0 %v285
  %355 = vmatprep.subr.bf16.mxu0 0
  %356 = vmatpush1.bf16.msra.mxu0 %v286
  %357 = vmatprep.subr.bf16.mxu0 0
  %358 = vmatpush1.bf16.msra.mxu0 %v287
  %359 = vmatprep.subr.bf16.mxu0 0
  %360 = vmatpush1.bf16.msra.mxu0 %v288
  %361 = vmatprep.subr.bf16.mxu0 0
  %362 = vmatpush1.bf16.msra.mxu0 %v289
  %363 = vmatprep.subr.bf16.mxu0 0
  %364 = vmatpush1.bf16.msra.mxu0 %v290
  %365 = vmatprep.subr.bf16.mxu0 0
  %366 = vmatpush1.bf16.msra.mxu0 %v291
  %367 = vmatprep.subr.bf16.mxu0 0
  %368 = vmatpush1.bf16.msra.mxu0 %v292
  %369 = vmatprep.subr.bf16.mxu0 0
  %370 = vmatpush1.bf16.msra.mxu0 %v293
  %371 = vmatprep.mubr.bf16.mxu0 %v167
  %372 = vmatmul.mubr.bf16.gmra.mrb[0].mxu0 %v166
  %v373 = vpop.f32.mrb[0].mxu0
  %v374 = vadd.f32 0.0, %v373
  %v375 = vpop.f32.mrb[0].mxu0
  %v376 = vpop.f32.mrb[0].mxu0
  %v377 = vadd.f32 0.0, %v376
  %v378 = vpop.f32.mrb[0].mxu0
  %379 = vmatprep.mubr.bf16.mxu0 %v170
  %380 = vmatmul.mubr.bf16.gmra.mrb[0].mxu0 %v169
  %v381 = vpop.f32.mrb[0].mxu0
  %v382 = vadd.f32 0.0, %v381
  %v383 = vpop.f32.mrb[0].mxu0
  %v384 = vpop.f32.mrb[0].mxu0
  %v385 = vadd.f32 0.0, %v384
  %v386 = vpop.f32.mrb[0].mxu0
  %387 = vmatprep.mubr.bf16.mxu0 %v173
  %388 = vmatmul.mubr.bf16.gmra.mrb[0].mxu0 %v172
  %v389 = vpop.f32.mrb[0].mxu0
  %v390 = vadd.f32 0.0, %v389
  %v391 = vpop.f32.mrb[0].mxu0
  %v392 = vpop.f32.mrb[0].mxu0
  %v393 = vadd.f32 0.0, %v392
  %v394 = vpop.f32.mrb[0].mxu0
  %395 = vmatprep.mubr.bf16.mxu0 %v176
  %396 = vmatmul.mubr.bf16.gmra.mrb[0].mxu0 %v175
  %v397 = vpop.f32.mrb[0].mxu0
  %v398 = vadd.f32 0.0, %v397
  %v399 = vpop.f32.mrb[0].mxu0
  %v400 = vpop.f32.mrb[0].mxu0
  %v401 = vadd.f32 0.0, %v400
  %v402 = vpop.f32.mrb[0].mxu0
  %403 = vmatprep.mubr.bf16.mxu0 %v179
  %404 = vmatmul.mubr.bf16.gmra.mrb[0].mxu0 %v178
  %v405 = vpop.f32.mrb[0].mxu0
  %v406 = vadd.f32 0.0, %v405
  %v407 = vpop.f32.mrb[0].mxu0
  %v408 = vpop.f32.mrb[0].mxu0
  %v409 = vadd.f32 0.0, %v408
  %v410 = vpop.f32.mrb[0].mxu0
  %411 = vmatprep.mubr.bf16.mxu0 %v182
  %412 = vmatmul.mubr.bf16.gmra.mrb[0].mxu0 %v181
  %v413 = vpop.f32.mrb[0].mxu0
  %v414 = vadd.f32 0.0, %v413
  %v415 = vpop.f32.mrb[0].mxu0
  %v416 = vpop.f32.mrb[0].mxu0
  %v417 = vadd.f32 0.0, %v416
  %v418 = vpop.f32.mrb[0].mxu0
  %419 = vmatprep.mubr.bf16.mxu0 %v185
  %420 = vmatmul.mubr.bf16.gmra.mrb[0].mxu0 %v184
  %v421 = vpop.f32.mrb[0].mxu0
  %v422 = vadd.f32 0.0, %v421
  %v423 = vpop.f32.mrb[0].mxu0
  %v424 = vpop.f32.mrb[0].mxu0
  %v425 = vadd.f32 0.0, %v424
  %v426 = vpop.f32.mrb[0].mxu0
  %427 = vmatprep.mubr.bf16.mxu0 %v188
  %428 = vmatmul.mubr.bf16.gmra.mrb[0].mxu0 %v187
  %v429 = vpop.f32.mrb[0].mxu0
  %v430 = vadd.f32 0.0, %v429
  %v431 = vpop.f32.mrb[0].mxu0
  %v432 = vpop.f32.mrb[0].mxu0
  %v433 = vadd.f32 0.0, %v432
  %v434 = vpop.f32.mrb[0].mxu0
  %435 = vdwg.mxu0
  %436 = vmatprep.subr.bf16.mxu0 0
  %437 = vmatpush1.bf16.msra.mxu0 %v294
  %438 = vmatprep.subr.bf16.mxu0 0
  %439 = vmatpush1.bf16.msra.mxu0 %v295
  %440 = vmatprep.subr.bf16.mxu0 0
  %441 = vmatpush1.bf16.msra.mxu0 0
  %442 = vmatprep.subr.bf16.mxu0 0
  %443 = vmatpush1.bf16.msra.mxu0 0
  %444 = vmatprep.subr.bf16.mxu0 0
  %445 = vmatpush1.bf16.msra.mxu0 0
  %446 = vmatprep.subr.bf16.mxu0 0
  %447 = vmatpush1.bf16.msra.mxu0 0
  %448 = vmatprep.subr.bf16.mxu0 0
  %449 = vmatpush1.bf16.msra.mxu0 0
  %450 = vmatprep.subr.bf16.mxu0 0
  %451 = vmatpush1.bf16.msra.mxu0 0
  %452 = vmatprep.subr.bf16.mxu0 0
  %453 = vmatpush1.bf16.msra.mxu0 0
  %454 = vmatprep.subr.bf16.mxu0 0
  %455 = vmatpush1.bf16.msra.mxu0 0
  %456 = vmatprep.subr.bf16.mxu0 0
  %457 = vmatpush1.bf16.msra.mxu0 0
  %458 = vmatprep.subr.bf16.mxu0 0
  %459 = vmatpush1.bf16.msra.mxu0 0
  %460 = vmatprep.subr.bf16.mxu0 0
  %461 = vmatpush1.bf16.msra.mxu0 0
  %462 = vmatprep.subr.bf16.mxu0 0
  %463 = vmatpush1.bf16.msra.mxu0 0
  %464 = vmatprep.subr.bf16.mxu0 0
  %465 = vmatpush1.bf16.msra.mxu0 0
  %466 = vmatprep.subr.bf16.mxu0 0
  %467 = vmatpush1.bf16.msra.mxu0 0
  %468 = vmatprep.mubr.bf16.mxu0 0
  %469 = vmatmul.mubr.bf16.gmra.mrb[0].mxu0 %v316
  %v470 = vpop.f32.mrb[0].mxu0
  %v471 = vadd.f32 %v374, %v470
  %v472 = vpop.f32.mrb[0].mxu0
  %v473 = vpop.f32.mrb[0].mxu0
  %v474 = vadd.f32 %v377, %v473
  %v475 = vpop.f32.mrb[0].mxu0
  %476 = vmatprep.mubr.bf16.mxu0 0
  %477 = vmatmul.mubr.bf16.gmra.mrb[0].mxu0 %v319
  %v478 = vpop.f32.mrb[0].mxu0
  %v479 = vadd.f32 %v382, %v478
  %v480 = vpop.f32.mrb[0].mxu0
  %v481 = vpop.f32.mrb[0].mxu0
  %v482 = vadd.f32 %v385, %v481
  %v483 = vpop.f32.mrb[0].mxu0
  %484 = vmatprep.mubr.bf16.mxu0 0
  %485 = vmatmul.mubr.bf16.gmra.mrb[0].mxu0 %v322
  %v486 = vpop.f32.mrb[0].mxu0
  %v487 = vadd.f32 %v390, %v486
  %v488 = vpop.f32.mrb[0].mxu0
  %v489 = vpop.f32.mrb[0].mxu0
  %v490 = vadd.f32 %v393, %v489
  %v491 = vpop.f32.mrb[0].mxu0
  %492 = vmatprep.mubr.bf16.mxu0 0
  %493 = vmatmul.mubr.bf16.gmra.mrb[0].mxu0 %v325
  %v494 = vpop.f32.mrb[0].mxu0
  %v495 = vadd.f32 %v398, %v494
  %v496 = vpop.f32.mrb[0].mxu0
  %v497 = vpop.f32.mrb[0].mxu0
  %v498 = vadd.f32 %v401, %v497
  %v499 = vpop.f32.mrb[0].mxu0
  %500 = vmatprep.mubr.bf16.mxu0 0
  %501 = vmatmul.mubr.bf16.gmra.mrb[0].mxu0 %v328
  %v502 = vpop.f32.mrb[0].mxu0
  %v503 = vadd.f32 %v406, %v502
  %v504 = vpop.f32.mrb[0].mxu0
  %v505 = vpop.f32.mrb[0].mxu0
  %v506 = vadd.f32 %v409, %v505
  %v507 = vpop.f32.mrb[0].mxu0
  %508 = vmatprep.mubr.bf16.mxu0 0
  %509 = vmatmul.mubr.bf16.gmra.mrb[0].mxu0 %v331
  %v510 = vpop.f32.mrb[0].mxu0
  %v511 = vadd.f32 %v414, %v510
  %v512 = vpop.f32.mrb[0].mxu0
  %v513 = vpop.f32.mrb[0].mxu0
  %v514 = vadd.f32 %v417, %v513
  %v515 = vpop.f32.mrb[0].mxu0
  %516 = vmatprep.mubr.bf16.mxu0 0
  %517 = vmatmul.mubr.bf16.gmra.mrb[0].mxu0 %v334
  %v518 = vpop.f32.mrb[0].mxu0
  %v519 = vadd.f32 %v422, %v518
  %v520 = vpop.f32.mrb[0].mxu0
  %v521 = vpop.f32.mrb[0].mxu0
  %v522 = vadd.f32 %v425, %v521
  %v523 = vpop.f32.mrb[0].mxu0
  %524 = vmatprep.mubr.bf16.mxu0 0
  %525 = vmatmul.mubr.bf16.gmra.mrb[0].mxu0 %v337
  %v526 = vpop.f32.mrb[0].mxu0
  %v527 = vadd.f32 %v430, %v526
  %v528 = vpop.f32.mrb[0].mxu0
  %v529 = vpop.f32.mrb[0].mxu0
  %v530 = vadd.f32 %v433, %v529
  %v531 = vpop.f32.mrb[0].mxu0
  %532 = vdwg.mxu0
  %v533 = vld [vmem:[%s2] sm:$0x1]
  %v535 = vlaneseq
  %v536 = vshrl.u32 %v535, 7
  %v537 = vsub.s32 0, %v536
  %v538 = vrot.slane %v533, %v537
  %v540 = vmul.f32 %v471, %v538
  %v541 = vmul.f32 %v474, %v538
  %v542 = vmul.f32 %v479, %v538
  %v543 = vmul.f32 %v482, %v538
  %v544 = vmul.f32 %v487, %v538
  %v545 = vmul.f32 %v490, %v538
  %v546 = vmul.f32 %v495, %v538
  %v547 = vmul.f32 %v498, %v538
  %v548 = vmul.f32 %v503, %v538
  %v549 = vmul.f32 %v506, %v538
  %v550 = vmul.f32 %v511, %v538
  %v551 = vmul.f32 %v514, %v538
  %v552 = vmul.f32 %v519, %v538
  %v553 = vmul.f32 %v522, %v538
  %v554 = vmul.f32 %v527, %v538
  %v555 = vmul.f32 %v530, %v538
  %v556 = vld [vmem:[%s3] sm:$0x1]
  %v558 = vlaneseq
  %v559 = vshrl.u32 %v558, 7
  %v560 = vsub.s32 0, %v559
  %v561 = vrot.slane %v556, %v560
  %v563 = vadd.f32 %v540, %v561
  %v564 = vadd.f32 %v541, %v561
  %v565 = vadd.f32 %v542, %v561
  %v566 = vadd.f32 %v543, %v561
  %v567 = vadd.f32 %v544, %v561
  %v568 = vadd.f32 %v545, %v561
  %v569 = vadd.f32 %v546, %v561
  %v570 = vadd.f32 %v547, %v561
  %v571 = vadd.f32 %v548, %v561
  %v572 = vadd.f32 %v549, %v561
  %v573 = vadd.f32 %v550, %v561
  %v574 = vadd.f32 %v551, %v561
  %v575 = vadd.f32 %v552, %v561
  %v576 = vadd.f32 %v553, %v561
  %v577 = vadd.f32 %v554, %v561
  %v578 = vadd.f32 %v555, %v561
  %v579 = vmax.f32 %v563, 0.0
  %v580 = vmax.f32 %v564, 0.0
  %v581 = vmax.f32 %v565, 0.0
  %v582 = vmax.f32 %v566, 0.0
  %v583 = vmax.f32 %v567, 0.0
  %v584 = vmax.f32 %v568, 0.0
  %v585 = vmax.f32 %v569, 0.0
  %v586 = vmax.f32 %v570, 0.0
  %v587 = vmax.f32 %v571, 0.0
  %v588 = vmax.f32 %v572, 0.0
  %v589 = vmax.f32 %v573, 0.0
  %v590 = vmax.f32 %v574, 0.0
  %v591 = vmax.f32 %v575, 0.0
  %v592 = vmax.f32 %v576, 0.0
  %v593 = vmax.f32 %v577, 0.0
  %v594 = vmax.f32 %v578, 0.0
  %v595 = vpack.c.bf16 %v580, %v579
  %v596 = vpack.c.bf16 %v582, %v581
  %v597 = vpack.c.bf16 %v584, %v583
  %v598 = vpack.c.bf16 %v586, %v585
  %v599 = vpack.c.bf16 %v588, %v587
  %v600 = vpack.c.bf16 %v590, %v589
  %v601 = vpack.c.bf16 %v592, %v591
  %v602 = vpack.c.bf16 %v594, %v593
  %v611 = vunpack.c.l.b16 %v595
  %v612 = vunpack.c.h.b16 %v595
  %v613 = vunpack.c.l.b16 %v596
  %v614 = vunpack.c.h.b16 %v596
  %v615 = vunpack.c.l.b16 %v597
  %v616 = vunpack.c.h.b16 %v597
  %v617 = vunpack.c.l.b16 %v598
  %v618 = vunpack.c.h.b16 %v598
  %v619 = vunpack.c.l.b16 %v599
  %v620 = vunpack.c.h.b16 %v599
  %v621 = vunpack.c.l.b16 %v600
  %v622 = vunpack.c.h.b16 %v600
  %v623 = vunpack.c.l.b16 %v601
  %v624 = vunpack.c.h.b16 %v601
  %v625 = vunpack.c.l.b16 %v602
  %v626 = vunpack.c.h.b16 %v602
  %v627 = vpack.c.b16 %v611, %v611
  %v628 = vpack.c.b16 %v612, %v612
  %v629 = vpack.c.b16 %v613, %v613
  %v630 = vpack.c.b16 %v614, %v614
  %v631 = vpack.c.b16 %v615, %v615
  %v632 = vpack.c.b16 %v616, %v616
  %v633 = vpack.c.b16 %v617, %v617
  %v634 = vpack.c.b16 %v618, %v618
  %v635 = vpack.c.b16 %v619, %v619
  %v636 = vpack.c.b16 %v620, %v620
  %v637 = vpack.c.b16 %v621, %v621
  %v638 = vpack.c.b16 %v622, %v622
  %v639 = vpack.c.b16 %v623, %v623
  %v640 = vpack.c.b16 %v624, %v624
  %v641 = vpack.c.b16 %v625, %v625
  %v642 = vpack.c.b16 %v626, %v626
  %vm659 = vcmask 125952
  %660 = vst.msk [vmem:[%s4] sm:$0xf] %vm659, %v627
  %661 = vst.msk [vmem:[%s4 + $0x4] sm:$0xf] %vm659, %v628
  %662 = vst.msk [vmem:[%s4 + $0x8] sm:$0xf] %vm659, %v629
  %663 = vst.msk [vmem:[%s4 + $0xc] sm:$0xf] %vm659, %v630
  %664 = vst.msk [vmem:[%s4 + $0x10] sm:$0xf] %vm659, %v631
  %665 = vst.msk [vmem:[%s4 + $0x14] sm:$0xf] %vm659, %v632
  %666 = vst.msk [vmem:[%s4 + $0x18] sm:$0xf] %vm659, %v633
  %667 = vst.msk [vmem:[%s4 + $0x1c] sm:$0xf] %vm659, %v634
  %668 = vst.msk [vmem:[%s4 + $0x20] sm:$0xf] %vm659, %v635
  %669 = vst.msk [vmem:[%s4 + $0x24] sm:$0xf] %vm659, %v636
  %670 = vst.msk [vmem:[%s4 + $0x28] sm:$0xf] %vm659, %v637
  %671 = vst.msk [vmem:[%s4 + $0x2c] sm:$0xf] %vm659, %v638
  %672 = vst.msk [vmem:[%s4 + $0x30] sm:$0xf] %vm659, %v639
  %673 = vst.msk [vmem:[%s4 + $0x34] sm:$0xf] %vm659, %v640
  %674 = vst.msk [vmem:[%s4 + $0x38] sm:$0xf] %vm659, %v641
  %675 = vst.msk [vmem:[%s4 + $0x3c] sm:$0xf] %vm659, %v642
  // Predicated region
  $region18: #{unet_forward.40} parent=0 // pred_check
    _
  $region19: #{unet_forward.40} parent=0 // pred_check_branch
    %677 = sbr.rel (0) target = $region21
  $region20: #{unet_forward.40} parent=0 // pred_region
    _
  $region21: #{unet_forward.40} parent=0 // pred_fallthru
    _
  // Predicated region
  $region22: #{unet_forward.40} parent=0 // pred_check
    _
  $region23: #{unet_forward.40} parent=0 // pred_check_branch
    %679 = sbr.rel (0) target = $region25
  $region24: #{unet_forward.40} parent=0 // pred_region
    _
  $region25: #{unet_forward.40} parent=0 // pred_fallthru
    _

// kernel: unet_forward.42
$region0: #{unet_forward.42}
  #allocation0 [shape = 'u32[]', space=smem, size = 0x4, offset = 0x4, fixed_abs, tag = 'smem constant byte address 0x4 - core index']
  #allocation1 [shape = 'u32[144,128]{1,0:T(1,128)}', space=vmem, size = 0x12000, scoped, tag = 'internal scratch']
  %s0 = inlined_call_operand.vmem [shape: bf16[128,16], index: 0, kind: input, shape index: {}]
  %s1 = inlined_call_operand.vmem [shape: bf16[16,32], index: 1, kind: input, shape index: {}]
  %s2 = inlined_call_operand.vmem [shape: f32[1,32], index: 2, kind: input, shape index: {}]
  %s3 = inlined_call_operand.vmem [shape: f32[1,32], index: 3, kind: input, shape index: {}]
  %s4 = inlined_call_operand.vmem [shape: bf16[128,32], index: 4, kind: output, shape index: {}]
  %s5 = sld [smem:[#allocation0]]
  $region26: #{unet_forward.42} parent=0
    _
  %s7 = ssub.s32 1, %s5
  %s8 = scalar_select 0, %s7, %s5
  // Predicated region
  $region2: #{unet_forward.42} parent=0 // pred_check
    _
  $region3: #{unet_forward.42} parent=0 // pred_check_branch
    %10 = sbr.rel (0) target = $region5
  $region4: #{unet_forward.42} parent=0 // pred_region
    _
  $region5: #{unet_forward.42} parent=0 // pred_fallthru
    _
  // Predicated region
  $region6: #{unet_forward.42} parent=0 // pred_check
    _
  $region7: #{unet_forward.42} parent=0 // pred_check_branch
    %12 = sbr.rel (0) target = $region9
  $region8: #{unet_forward.42} parent=0 // pred_region
    _
  $region9: #{unet_forward.42} parent=0 // pred_fallthru
    _
  // Predicated region
  $region10: #{unet_forward.42} parent=0 // pred_check
    _
  $region11: #{unet_forward.42} parent=0 // pred_check_branch
    %14 = sbr.rel (0) target = $region13
  $region12: #{unet_forward.42} parent=0 // pred_region
    _
  $region13: #{unet_forward.42} parent=0 // pred_fallthru
    _
  // Predicated region
  $region14: #{unet_forward.42} parent=0 // pred_check
    _
  $region15: #{unet_forward.42} parent=0 // pred_check_branch
    %16 = sbr.rel (0) target = $region17
  $region16: #{unet_forward.42} parent=0 // pred_region
    _
  $region17: #{unet_forward.42} parent=0 // pred_fallthru
    _
  %v18 = vld [vmem:[%s0] sm:$0xf]
  %v19 = vld [vmem:[%s0 + $0x4] sm:$0xf]
  %v20 = vld [vmem:[%s0 + $0x8] sm:$0xf]
  %v21 = vld [vmem:[%s0 + $0xc] sm:$0xf]
  %v22 = vld [vmem:[%s0 + $0x10] sm:$0xf]
  %v23 = vld [vmem:[%s0 + $0x14] sm:$0xf]
  %v24 = vld [vmem:[%s0 + $0x18] sm:$0xf]
  %v25 = vld [vmem:[%s0 + $0x1c] sm:$0xf]
  %v26 = vld [vmem:[%s0 + $0x20] sm:$0xf]
  %v27 = vld [vmem:[%s0 + $0x24] sm:$0xf]
  %v28 = vld [vmem:[%s0 + $0x28] sm:$0xf]
  %v29 = vld [vmem:[%s0 + $0x2c] sm:$0xf]
  %v30 = vld [vmem:[%s0 + $0x30] sm:$0xf]
  %v31 = vld [vmem:[%s0 + $0x34] sm:$0xf]
  %v32 = vld [vmem:[%s0 + $0x38] sm:$0xf]
  %v33 = vld [vmem:[%s0 + $0x3c] sm:$0xf]
  %v34 = vld [vmem:[%s1] sm:$0xf]
  %v35 = vld [vmem:[%s1 + $0x4] sm:$0xf]
  %v52 = vunpack.c.l.b16 %v18
  %v53 = vunpack.c.l.b16 %v19
  %v54 = vunpack.c.l.b16 %v20
  %v55 = vunpack.c.l.b16 %v21
  %v56 = vunpack.c.l.b16 %v22
  %v57 = vunpack.c.l.b16 %v23
  %v58 = vunpack.c.l.b16 %v24
  %v59 = vunpack.c.l.b16 %v25
  %v60 = vunpack.c.l.b16 %v26
  %v61 = vunpack.c.l.b16 %v27
  %v62 = vunpack.c.l.b16 %v28
  %v63 = vunpack.c.l.b16 %v29
  %v64 = vunpack.c.l.b16 %v30
  %v65 = vunpack.c.l.b16 %v31
  %v66 = vunpack.c.l.b16 %v32
  %v67 = vunpack.c.l.b16 %v33
  %v68 = vpack.c.b16 %v53, %v52
  %v69 = vpack.c.b16 %v55, %v54
  %v70 = vpack.c.b16 %v57, %v56
  %v71 = vpack.c.b16 %v59, %v58
  %v72 = vpack.c.b16 %v61, %v60
  %v73 = vpack.c.b16 %v63, %v62
  %v74 = vpack.c.b16 %v65, %v64
  %v75 = vpack.c.b16 %v67, %v66
  %v78 = vunpack.c.l.b16 %v34
  %v79 = vunpack.c.l.b16 %v35
  %v80 = vpack.c.b16 %v79, %v78
  %vm82 = vcmask 130048
  %v84 = vsel %vm82, %v68, 0
  %v87 = vsel %vm82, %v69, 0
  %v90 = vsel %vm82, %v70, 0
  %v93 = vsel %vm82, %v71, 0
  %v96 = vsel %vm82, %v72, 0
  %v99 = vsel %vm82, %v73, 0
  %v102 = vsel %vm82, %v74, 0
  %v105 = vsel %vm82, %v75, 0
  %107 = vmatprep.subr.bf16.mxu0 0
  %108 = vmatpush1.bf16.msra.mxu0 %v80
  %109 = vmatprep.subr.bf16.mxu0 0
  %110 = vmatpush1.bf16.msra.mxu0 0
  %111 = vmatprep.subr.bf16.mxu0 0
  %112 = vmatpush1.bf16.msra.mxu0 0
  %113 = vmatprep.subr.bf16.mxu0 0
  %114 = vmatpush1.bf16.msra.mxu0 0
  %115 = vmatprep.subr.bf16.mxu0 0
  %116 = vmatpush1.bf16.msra.mxu0 0
  %117 = vmatprep.subr.bf16.mxu0 0
  %118 = vmatpush1.bf16.msra.mxu0 0
  %119 = vmatprep.subr.bf16.mxu0 0
  %120 = vmatpush1.bf16.msra.mxu0 0
  %121 = vmatprep.subr.bf16.mxu0 0
  %122 = vmatpush1.bf16.msra.mxu0 0
  %123 = vmatprep.subr.bf16.mxu0 0
  %124 = vmatpush1.bf16.msra.mxu0 0
  %125 = vmatprep.subr.bf16.mxu0 0
  %126 = vmatpush1.bf16.msra.mxu0 0
  %127 = vmatprep.subr.bf16.mxu0 0
  %128 = vmatpush1.bf16.msra.mxu0 0
  %129 = vmatprep.subr.bf16.mxu0 0
  %130 = vmatpush1.bf16.msra.mxu0 0
  %131 = vmatprep.subr.bf16.mxu0 0
  %132 = vmatpush1.bf16.msra.mxu0 0
  %133 = vmatprep.subr.bf16.mxu0 0
  %134 = vmatpush1.bf16.msra.mxu0 0
  %135 = vmatprep.subr.bf16.mxu0 0
  %136 = vmatpush1.bf16.msra.mxu0 0
  %137 = vmatprep.subr.bf16.mxu0 0
  %138 = vmatpush1.bf16.msra.mxu0 0
  %139 = vmatprep.mubr.bf16.mxu0 0
  %140 = vmatmul.mubr.bf16.gmra.mrb[0].mxu0 %v84
  %v141 = vpop.f32.mrb[0].mxu0
  %v142 = vadd.f32 0.0, %v141
  %v143 = vpop.f32.mrb[0].mxu0
  %v144 = vpop.f32.mrb[0].mxu0
  %v145 = vadd.f32 0.0, %v144
  %v146 = vpop.f32.mrb[0].mxu0
  %147 = vmatprep.mubr.bf16.mxu0 0
  %148 = vmatmul.mubr.bf16.gmra.mrb[0].mxu0 %v87
  %v149 = vpop.f32.mrb[0].mxu0
  %v150 = vadd.f32 0.0, %v149
  %v151 = vpop.f32.mrb[0].mxu0
  %v152 = vpop.f32.mrb[0].mxu0
  %v153 = vadd.f32 0.0, %v152
  %v154 = vpop.f32.mrb[0].mxu0
  %155 = vmatprep.mubr.bf16.mxu0 0
  %156 = vmatmul.mubr.bf16.gmra.mrb[0].mxu0 %v90
  %v157 = vpop.f32.mrb[0].mxu0
  %v158 = vadd.f32 0.0, %v157
  %v159 = vpop.f32.mrb[0].mxu0
  %v160 = vpop.f32.mrb[0].mxu0
  %v161 = vadd.f32 0.0, %v160
  %v162 = vpop.f32.mrb[0].mxu0
  %163 = vmatprep.mubr.bf16.mxu0 0
  %164 = vmatmul.mubr.bf16.gmra.mrb[0].mxu0 %v93
  %v165 = vpop.f32.mrb[0].mxu0
  %v166 = vadd.f32 0.0, %v165
  %v167 = vpop.f32.mrb[0].mxu0
  %v168 = vpop.f32.mrb[0].mxu0
  %v169 = vadd.f32 0.0, %v168
  %v170 = vpop.f32.mrb[0].mxu0
  %171 = vmatprep.mubr.bf16.mxu0 0
  %172 = vmatmul.mubr.bf16.gmra.mrb[0].mxu0 %v96
  %v173 = vpop.f32.mrb[0].mxu0
  %v174 = vadd.f32 0.0, %v173
  %v175 = vpop.f32.mrb[0].mxu0
  %v176 = vpop.f32.mrb[0].mxu0
  %v177 = vadd.f32 0.0, %v176
  %v178 = vpop.f32.mrb[0].mxu0
  %179 = vmatprep.mubr.bf16.mxu0 0
  %180 = vmatmul.mubr.bf16.gmra.mrb[0].mxu0 %v99
  %v181 = vpop.f32.mrb[0].mxu0
  %v182 = vadd.f32 0.0, %v181
  %v183 = vpop.f32.mrb[0].mxu0
  %v184 = vpop.f32.mrb[0].mxu0
  %v185 = vadd.f32 0.0, %v184
  %v186 = vpop.f32.mrb[0].mxu0
  %187 = vmatprep.mubr.bf16.mxu0 0
  %188 = vmatmul.mubr.bf16.gmra.mrb[0].mxu0 %v102
  %v189 = vpop.f32.mrb[0].mxu0
  %v190 = vadd.f32 0.0, %v189
  %v191 = vpop.f32.mrb[0].mxu0
  %v192 = vpop.f32.mrb[0].mxu0
  %v193 = vadd.f32 0.0, %v192
  %v194 = vpop.f32.mrb[0].mxu0
  %195 = vmatprep.mubr.bf16.mxu0 0
  %196 = vmatmul.mubr.bf16.gmra.mrb[0].mxu0 %v105
  %v197 = vpop.f32.mrb[0].mxu0
  %v198 = vadd.f32 0.0, %v197
  %v199 = vpop.f32.mrb[0].mxu0
  %v200 = vpop.f32.mrb[0].mxu0
  %v201 = vadd.f32 0.0, %v200
  %v202 = vpop.f32.mrb[0].mxu0
  %203 = vdwg.mxu0
  %v204 = vld [vmem:[%s2] sm:$0x1]
  %v206 = vlaneseq
  %v207 = vshrl.u32 %v206, 7
  %v208 = vsub.s32 0, %v207
  %v209 = vrot.slane %v204, %v208
  %v211 = vmul.f32 %v142, %v209
  %v212 = vmul.f32 %v145, %v209
  %v213 = vmul.f32 %v150, %v209
  %v214 = vmul.f32 %v153, %v209
  %v215 = vmul.f32 %v158, %v209
  %v216 = vmul.f32 %v161, %v209
  %v217 = vmul.f32 %v166, %v209
  %v218 = vmul.f32 %v169, %v209
  %v219 = vmul.f32 %v174, %v209
  %v220 = vmul.f32 %v177, %v209
  %v221 = vmul.f32 %v182, %v209
  %v222 = vmul.f32 %v185, %v209
  %v223 = vmul.f32 %v190, %v209
  %v224 = vmul.f32 %v193, %v209
  %v225 = vmul.f32 %v198, %v209
  %v226 = vmul.f32 %v201, %v209
  %v227 = vld [vmem:[%s3] sm:$0x1]
  %v229 = vlaneseq
  %v230 = vshrl.u32 %v229, 7
  %v231 = vsub.s32 0, %v230
  %v232 = vrot.slane %v227, %v231
  %v234 = vadd.f32 %v211, %v232
  %v235 = vadd.f32 %v212, %v232
  %v236 = vadd.f32 %v213, %v232
  %v237 = vadd.f32 %v214, %v232
  %v238 = vadd.f32 %v215, %v232
  %v239 = vadd.f32 %v216, %v232
  %v240 = vadd.f32 %v217, %v232
  %v241 = vadd.f32 %v218, %v232
  %v242 = vadd.f32 %v219, %v232
  %v243 = vadd.f32 %v220, %v232
  %v244 = vadd.f32 %v221, %v232
  %v245 = vadd.f32 %v222, %v232
  %v246 = vadd.f32 %v223, %v232
  %v247 = vadd.f32 %v224, %v232
  %v248 = vadd.f32 %v225, %v232
  %v249 = vadd.f32 %v226, %v232
  %v250 = vpack.c.bf16 %v235, %v234
  %v251 = vpack.c.bf16 %v237, %v236
  %v252 = vpack.c.bf16 %v239, %v238
  %v253 = vpack.c.bf16 %v241, %v240
  %v254 = vpack.c.bf16 %v243, %v242
  %v255 = vpack.c.bf16 %v245, %v244
  %v256 = vpack.c.bf16 %v247, %v246
  %v257 = vpack.c.bf16 %v249, %v248
  %v266 = vunpack.c.l.b16 %v250
  %v267 = vunpack.c.h.b16 %v250
  %v268 = vunpack.c.l.b16 %v251
  %v269 = vunpack.c.h.b16 %v251
  %v270 = vunpack.c.l.b16 %v252
  %v271 = vunpack.c.h.b16 %v252
  %v272 = vunpack.c.l.b16 %v253
  %v273 = vunpack.c.h.b16 %v253
  %v274 = vunpack.c.l.b16 %v254
  %v275 = vunpack.c.h.b16 %v254
  %v276 = vunpack.c.l.b16 %v255
  %v277 = vunpack.c.h.b16 %v255
  %v278 = vunpack.c.l.b16 %v256
  %v279 = vunpack.c.h.b16 %v256
  %v280 = vunpack.c.l.b16 %v257
  %v281 = vunpack.c.h.b16 %v257
  %v282 = vpack.c.b16 %v266, %v266
  %v283 = vpack.c.b16 %v267, %v267
  %v284 = vpack.c.b16 %v268, %v268
  %v285 = vpack.c.b16 %v269, %v269
  %v286 = vpack.c.b16 %v270, %v270
  %v287 = vpack.c.b16 %v271, %v271
  %v288 = vpack.c.b16 %v272, %v272
  %v289 = vpack.c.b16 %v273, %v273
  %v290 = vpack.c.b16 %v274, %v274
  %v291 = vpack.c.b16 %v275, %v275
  %v292 = vpack.c.b16 %v276, %v276
  %v293 = vpack.c.b16 %v277, %v277
  %v294 = vpack.c.b16 %v278, %v278
  %v295 = vpack.c.b16 %v279, %v279
  %v296 = vpack.c.b16 %v280, %v280
  %v297 = vpack.c.b16 %v281, %v281
  %vm314 = vcmask 257024
  %315 = vst.msk [vmem:[%s4] sm:$0xf] %vm314, %v282
  %316 = vst.msk [vmem:[%s4 + $0x4] sm:$0xf] %vm314, %v283
  %317 = vst.msk [vmem:[%s4 + $0x8] sm:$0xf] %vm314, %v284
  %318 = vst.msk [vmem:[%s4 + $0xc] sm:$0xf] %vm314, %v285
  %319 = vst.msk [vmem:[%s4 + $0x10] sm:$0xf] %vm314, %v286
  %320 = vst.msk [vmem:[%s4 + $0x14] sm:$0xf] %vm314, %v287
  %321 = vst.msk [vmem:[%s4 + $0x18] sm:$0xf] %vm314, %v288
  %322 = vst.msk [vmem:[%s4 + $0x1c] sm:$0xf] %vm314, %v289
  %323 = vst.msk [vmem:[%s4 + $0x20] sm:$0xf] %vm314, %v290
  %324 = vst.msk [vmem:[%s4 + $0x24] sm:$0xf] %vm314, %v291
  %325 = vst.msk [vmem:[%s4 + $0x28] sm:$0xf] %vm314, %v292
  %326 = vst.msk [vmem:[%s4 + $0x2c] sm:$0xf] %vm314, %v293
  %327 = vst.msk [vmem:[%s4 + $0x30] sm:$0xf] %vm314, %v294
  %328 = vst.msk [vmem:[%s4 + $0x34] sm:$0xf] %vm314, %v295
  %329 = vst.msk [vmem:[%s4 + $0x38] sm:$0xf] %vm314, %v296
  %330 = vst.msk [vmem:[%s4 + $0x3c] sm:$0xf] %vm314, %v297
  // Predicated region
  $region18: #{unet_forward.42} parent=0 // pred_check
    _
  $region19: #{unet_forward.42} parent=0 // pred_check_branch
    %332 = sbr.rel (0) target = $region21
  $region20: #{unet_forward.42} parent=0 // pred_region
    _
  $region21: #{unet_forward.42} parent=0 // pred_fallthru
    _
  // Predicated region
  $region22: #{unet_forward.42} parent=0 // pred_check
    _
  $region23: #{unet_forward.42} parent=0 // pred_check_branch
    %334 = sbr.rel (0) target = $region25
  $region24: #{unet_forward.42} parent=0 // pred_region
    _
  $region25: #{unet_forward.42} parent=0 // pred_fallthru
    _

// kernel: unet_forward.43
$region0: #{unet_forward.43}
  #allocation0 [shape = 'u32[]', space=smem, size = 0x4, offset = 0x4, fixed_abs, tag = 'smem constant byte address 0x4 - core index']
  #allocation1 [shape = 'u32[144,128]{1,0:T(1,128)}', space=vmem, size = 0x12000, scoped, tag = 'internal scratch']
  %s0 = inlined_call_operand.vmem [shape: bf16[512,144], index: 0, kind: input, shape index: {}]
  %s1 = inlined_call_operand.vmem [shape: bf16[144,8], index: 1, kind: input, shape index: {}]
  %s2 = inlined_call_operand.vmem [shape: f32[1,8], index: 2, kind: input, shape index: {}]
  %s3 = inlined_call_operand.vmem [shape: f32[1,8], index: 3, kind: input, shape index: {}]
  %s4 = inlined_call_operand.vmem [shape: bf16[512,8], index: 4, kind: output, shape index: {}]
  %s5 = sld [smem:[#allocation0]]
  $region49: #{unet_forward.43} parent=0
    _
  %s7 = ssub.s32 1, %s5
  %s8 = scalar_select 0, %s7, %s5
  loop: start=0, step=1, limit=6
  $region2: #{unet_forward.43} parent=0 // loop_pre_header
    _
  $region3: #{unet_forward.43} parent=0 // loop_header
    %s10 = sphi 0, %s14
    %p11 = scmp.ge.s32.totalorder %s10, 6
    %s17 = sphi 0, %s29
    %s18 = sphi 0, %s25
    %s19 = sphi 0, %s17
    %s20 = sphi 0, %s18
    %s21 = sphi 0, %s19
    %s22 = sphi 0, %s20
    %s32 = sphi 0, %s34
    %s35 = sphi 0, %s32
    %s36 = sphi 0, %s35
    %s52 = sphi 0, %s36
    %s58 = sphi 0, %s60
    %s61 = sphi 0, %s58
    %s62 = sphi 0, %s61
    %s78 = sphi 0, %s62
    %s84 = sphi 0, %s86
    %s87 = sphi 0, %s84
    %s88 = sphi 0, %s87
    %s104 = sphi 0, %s88
    %s110 = sphi 0, %s112
    %s113 = sphi 0, %s110
    %s114 = sphi 0, %s113
    %s130 = sphi 0, %s114
    %s138 = sphi 0, %s140
    %s141 = sphi 0, %s138
    %s142 = sphi 0, %s141
    %s158 = sphi 0, %s142
  $region4: #{unet_forward.43} parent=0 // loop_header_branch
    %13 = sbr.rel (%p11) target = $region8
  $region5: #{unet_forward.43} parent=0 // loop_body
    %s15 = ssub.s32 %s10, 1
    %s16 = ssub.s32 %s10, 2
    %s23 = sadd.s32 1, %s18
    %p24 = scmp.ge.s32.totalorder %s23, 1
    %s25 = scalar_select %p24, 0, %s23
    %s26 = sadd.s32 1, %s17
    %s27 = scalar_select %p24, %s26, %s17
    %p28 = scmp.ge.s32.totalorder %s27, 4
    %s29 = scalar_select %p28, 0, %s27
    %s30 = ssub.s32 %s17, %s29
    %p31 = scmp.eq.s32.totalorder %s30, 0
    %s33 = sadd.s32 %s32, 1
    %s34 = scalar_select %p31, %s32, %s33
    %p37 = pneg %p31
    %p38 = scmp.eq.s32.totalorder %s10, 3
    %p39 = por %p37, %p38
    %p40 = scmp.ne.s32.totalorder %s32, %s35
    %p41 = scmp.eq.s32.totalorder %s10, 0
    %p42 = por %p40, %p41
    %p43 = scmp.ne.s32.totalorder %s32, %s35
    %p44 = scmp.eq.s32.totalorder %s15, 3
    %p45 = por %p43, %p44
    %p46 = scmp.ne.s32.totalorder %s35, %s36
    %p47 = scmp.eq.s32.totalorder %s15, 0
    %p48 = por %p46, %p47
    %p49 = scmp.ne.s32.totalorder %s35, %s36
    %p50 = scmp.eq.s32.totalorder %s16, 3
    %p51 = por %p49, %p50
    %p53 = scmp.ne.s32.totalorder %s36, %s52
    %p54 = scmp.eq.s32.totalorder %s16, 0
    %p55 = por %p53, %p54
    %s56 = ssub.s32 %s18, %s25
    %p57 = scmp.eq.s32.totalorder %s56, 0
    %s59 = sadd.s32 %s58, 1
    %s60 = scalar_select %p57, %s58, %s59
    %p63 = pneg %p57
    %p64 = scmp.eq.s32.totalorder %s10, 3
    %p65 = por %p63, %p64
    %p66 = scmp.ne.s32.totalorder %s58, %s61
    %p67 = scmp.eq.s32.totalorder %s10, 0
    %p68 = por %p66, %p67
    %p69 = scmp.ne.s32.totalorder %s58, %s61
    %p70 = scmp.eq.s32.totalorder %s15, 3
    %p71 = por %p69, %p70
    %p72 = scmp.ne.s32.totalorder %s61, %s62
    %p73 = scmp.eq.s32.totalorder %s15, 0
    %p74 = por %p72, %p73
    %p75 = scmp.ne.s32.totalorder %s61, %s62
    %p76 = scmp.eq.s32.totalorder %s16, 3
    %p77 = por %p75, %p76
    %p79 = scmp.ne.s32.totalorder %s62, %s78
    %p80 = scmp.eq.s32.totalorder %s16, 0
    %p81 = por %p79, %p80
    %s82 = ssub.s32 %s18, %s25
    %p83 = scmp.eq.s32.totalorder %s82, 0
    %s85 = sadd.s32 %s84, 1
    %s86 = scalar_select %p83, %s84, %s85
    %p89 = pneg %p83
    %p90 = scmp.eq.s32.totalorder %s10, 3
    %p91 = por %p89, %p90
    %p92 = scmp.ne.s32.totalorder %s84, %s87
    %p93 = scmp.eq.s32.totalorder %s10, 0
    %p94 = por %p92, %p93
    %p95 = scmp.ne.s32.totalorder %s84, %s87
    %p96 = scmp.eq.s32.totalorder %s15, 3
    %p97 = por %p95, %p96
    %p98 = scmp.ne.s32.totalorder %s87, %s88
    %p99 = scmp.eq.s32.totalorder %s15, 0
    %p100 = por %p98, %p99
    %p101 = scmp.ne.s32.totalorder %s87, %s88
    %p102 = scmp.eq.s32.totalorder %s16, 3
    %p103 = por %p101, %p102
    %p105 = scmp.ne.s32.totalorder %s88, %s104
    %p106 = scmp.eq.s32.totalorder %s16, 0
    %p107 = por %p105, %p106
    %s108 = ssub.s32 %s18, %s25
    %p109 = scmp.eq.s32.totalorder %s108, 0
    %s111 = sadd.s32 %s110, 1
    %s112 = scalar_select %p109, %s110, %s111
    %p115 = pneg %p109
    %p116 = scmp.eq.s32.totalorder %s10, 3
    %p117 = por %p115, %p116
    %p118 = scmp.ne.s32.totalorder %s110, %s113
    %p119 = scmp.eq.s32.totalorder %s10, 0
    %p120 = por %p118, %p119
    %p121 = scmp.ne.s32.totalorder %s110, %s113
    %p122 = scmp.eq.s32.totalorder %s15, 3
    %p123 = por %p121, %p122
    %p124 = scmp.ne.s32.totalorder %s113, %s114
    %p125 = scmp.eq.s32.totalorder %s15, 0
    %p126 = por %p124, %p125
    %p127 = scmp.ne.s32.totalorder %s113, %s114
    %p128 = scmp.eq.s32.totalorder %s16, 3
    %p129 = por %p127, %p128
    %p131 = scmp.ne.s32.totalorder %s114, %s130
    %p132 = scmp.eq.s32.totalorder %s16, 0
    %p133 = por %p131, %p132
    %s134 = ssub.s32 %s17, %s29
    %s135 = ssub.s32 %s18, %s25
    %s136 = sor.u32 %s134, %s135
    %p137 = scmp.eq.s32.totalorder %s136, 0
    %s139 = sadd.s32 %s138, 1
    %s140 = scalar_select %p137, %s138, %s139
    %p143 = pneg %p137
    %p144 = scmp.eq.s32.totalorder %s10, 3
    %p145 = por %p143, %p144
    %p146 = scmp.ne.s32.totalorder %s138, %s141
    %p147 = scmp.eq.s32.totalorder %s10, 0
    %p148 = por %p146, %p147
    %p149 = scmp.ne.s32.totalorder %s138, %s141
    %p150 = scmp.eq.s32.totalorder %s15, 3
    %p151 = por %p149, %p150
    %p152 = scmp.ne.s32.totalorder %s141, %s142
    %p153 = scmp.eq.s32.totalorder %s15, 0
    %p154 = por %p152, %p153
    %p155 = scmp.ne.s32.totalorder %s141, %s142
    %p156 = scmp.eq.s32.totalorder %s16, 3
    %p157 = por %p155, %p156
    %p159 = scmp.ne.s32.totalorder %s142, %s158
    %p160 = scmp.eq.s32.totalorder %s16, 0
    %p161 = por %p159, %p160
    %p162 = scmp.le.s32.totalorder 1, %s10
    %p163 = scmp.lt.s32.totalorder %s10, 5
    %p164 = pnand %p162, %p163
    %p165 = pneg %p164
    // Predicated region
    $region9: #{unet_forward.43} parent=5 // pred_check
      _
    $region10: #{unet_forward.43} parent=5 // pred_check_branch
      %167 = sbr.rel (%p164) target = $region12
    $region11: #{unet_forward.43} parent=5 // pred_region
      %s168 = ssub.s32 %s10, 1
      // Predicated region
      $region13: #{unet_forward.43} parent=11 // pred_check
        %p169 = pneg %p74
      $region14: #{unet_forward.43} parent=11 // pred_check_branch
        %171 = sbr.rel (%p169) target = $region16
      $region15: #{unet_forward.43} parent=11 // pred_region
        %p172 = scmp.lt.s32.totalorder %s20, 0
        %s173 = scalar_select %p172, %s20, 0
        %s174 = smul.addr %s173, 4
        %s175 = scalar_lea.vmem %s1, %s174
      $region16: #{unet_forward.43} parent=11 // pred_fallthru
        _
      // Predicated region
      $region17: #{unet_forward.43} parent=11 // pred_check
        %p176 = pneg %p100
      $region18: #{unet_forward.43} parent=11 // pred_check_branch
        %178 = sbr.rel (%p176) target = $region20
      $region19: #{unet_forward.43} parent=11 // pred_region
        %p179 = scmp.lt.s32.totalorder %s20, 0
        %s180 = scalar_select %p179, %s20, 0
        %s181 = scalar_lea.vmem %s2, %s180
      $region20: #{unet_forward.43} parent=11 // pred_fallthru
        _
      // Predicated region
      $region21: #{unet_forward.43} parent=11 // pred_check
        %p182 = pneg %p126
      $region22: #{unet_forward.43} parent=11 // pred_check_branch
        %184 = sbr.rel (%p182) target = $region24
      $region23: #{unet_forward.43} parent=11 // pred_region
        %p185 = scmp.lt.s32.totalorder %s20, 0
        %s186 = scalar_select %p185, %s20, 0
        %s187 = scalar_lea.vmem %s3, %s186
      $region24: #{unet_forward.43} parent=11 // pred_fallthru
        _
    $region12: #{unet_forward.43} parent=5 // pred_fallthru
      _
    %p188 = scmp.lt.s32.totalorder %s10, 4
    // Predicated region
    $region25: #{unet_forward.43} parent=5 // pred_check
      %p189 = pneg %p188
    $region26: #{unet_forward.43} parent=5 // pred_check_branch
      %191 = sbr.rel (%p189) target = $region28
    $region27: #{unet_forward.43} parent=5 // pred_region
      // Predicated region
      $region29: #{unet_forward.43} parent=27 // pred_check
        %p192 = pneg %p42
      $region30: #{unet_forward.43} parent=27 // pred_check_branch
        %194 = sbr.rel (%p192) target = $region32
      $region31: #{unet_forward.43} parent=27 // pred_region
        %s195 = smul.u32 16, %s17
        %p196 = scmp.lt.s32.totalorder %s195, 63
        %s197 = scalar_select %p196, %s195, 63
        %s198 = smul.addr %s197, 2
        %s199 = smul.addr %s198, 4
        %s200 = scalar_lea.vmem %s0, %s199
        %s201 = smul.u32 16, %s17
      $region32: #{unet_forward.43} parent=27 // pred_fallthru
        _
    $region28: #{unet_forward.43} parent=5 // pred_fallthru
      _
    %p202 = scmp.le.s32.totalorder 1, %s10
    %p203 = scmp.lt.s32.totalorder %s10, 5
    %p204 = pnand %p202, %p203
    %p205 = pneg %p204
    // Predicated region
    $region33: #{unet_forward.43} parent=5 // pred_check
      _
    $region34: #{unet_forward.43} parent=5 // pred_check_branch
      %207 = sbr.rel (%p204) target = $region36
    $region35: #{unet_forward.43} parent=5 // pred_region
      %s208 = ssub.s32 %s10, 1
      %s209 = smul.u32 16, %s19
      %p210 = scmp.lt.s32.totalorder %s209, 63
      %s211 = scalar_select %p210, %s209, 63
      %s212 = smul.addr %s211, 2
      %s213 = smul.addr %s212, 4
      %s214 = scalar_lea.vmem %s0, %s213
      %p215 = pneg %p48
      %p216 = pneg %p45
      %p217 = scmp.lt.s32.totalorder %s20, 0
      %s218 = scalar_select %p217, %s20, 0
      %s219 = smul.addr %s218, 4
      %s220 = scalar_lea.vmem %s1, %s219
      %p221 = pneg %p74
      %p222 = pneg %p71
      %p223 = scmp.lt.s32.totalorder %s20, 0
      %s224 = scalar_select %p223, %s20, 0
      %s225 = scalar_lea.vmem %s2, %s224
      %p226 = pneg %p100
      %p227 = pneg %p97
      %p228 = scmp.lt.s32.totalorder %s20, 0
      %s229 = scalar_select %p228, %s20, 0
      %s230 = scalar_lea.vmem %s3, %s229
      %p231 = pneg %p126
      %p232 = pneg %p123
      %p233 = pneg %p154
      %p234 = pneg %p151
      %s235 = smul.u32 16, %s19
      %p236 = scmp.lt.s32.totalorder %s235, 63
      %s237 = scalar_select %p236, %s235, 63
      %p238 = scmp.lt.s32.totalorder %s20, 0
      %s239 = scalar_select %p238, %s20, 0
      %s240 = sadd.s32 %s239, %s237
      %s241 = smul.addr %s240, 4
      %s242 = scalar_lea.vmem %s4, %s241
      %s243 = smul.u32 16, %s19
      %p244 = scmp.lt.s32.totalorder %s243, 63
      %s245 = scalar_select %p244, %s243, 63
      %s246 = smul.addr %s245, 2
      %s247 = smul.addr %s246, 4
      %s248 = scalar_lea.vmem %s0, %s247
      %s249 = smul.u32 16, %s19
      %p250 = scmp.lt.s32.totalorder %s20, 0
      %s251 = scalar_select %p250, %s20, 0
      %s252 = smul.addr %s251, 4
      %s253 = scalar_lea.vmem %s1, %s252
      %p254 = scmp.lt.s32.totalorder %s20, 0
      %s255 = scalar_select %p254, %s20, 0
      %s256 = scalar_lea.vmem %s2, %s255
      %p257 = scmp.lt.s32.totalorder %s20, 0
      %s258 = scalar_select %p257, %s20, 0
      %s259 = scalar_lea.vmem %s3, %s258
      %s260 = smul.u32 16, %s19
      %p261 = scmp.lt.s32.totalorder %s260, 63
      %s262 = scalar_select %p261, %s260, 63
      %p263 = scmp.lt.s32.totalorder %s20, 0
      %s264 = scalar_select %p263, %s20, 0
      %s265 = sadd.s32 %s264, %s262
      %s266 = smul.addr %s265, 4
      %s267 = scalar_lea.vmem %s4, %s266
      %s268 = smul.u32 16, %s19
      %v270 = vld [vmem:[%s248] sm:$0xff]
      %v271 = vld [vmem:[%s248 + $0x8] sm:$0xff]
      %v272 = vld [vmem:[%s248 + $0x10] sm:$0xff]
      %v273 = vld [vmem:[%s248 + $0x18] sm:$0xff]
      %v274 = vld [vmem:[%s248 + $0x20] sm:$0xff]
      %v275 = vld [vmem:[%s248 + $0x28] sm:$0xff]
      %v276 = vld [vmem:[%s248 + $0x30] sm:$0xff]
      %v277 = vld [vmem:[%s248 + $0x38] sm:$0xff]
      %v278 = vld [vmem:[%s248 + $0x40] sm:$0xff]
      %v279 = vld [vmem:[%s248 + $0x48] sm:$0xff]
      %v280 = vld [vmem:[%s248 + $0x50] sm:$0xff]
      %v281 = vld [vmem:[%s248 + $0x58] sm:$0xff]
      %v282 = vld [vmem:[%s248 + $0x60] sm:$0xff]
      %v283 = vld [vmem:[%s248 + $0x68] sm:$0xff]
      %v284 = vld [vmem:[%s248 + $0x70] sm:$0xff]
      %v285 = vld [vmem:[%s248 + $0x78] sm:$0xff]
      %v286 = vld [vmem:[%s253] sm:$0xf]
      %v287 = vld [vmem:[%s253 + $0x4] sm:$0xf]
      %v288 = vld [vmem:[%s253 + $0x8] sm:$0xf]
      %v289 = vld [vmem:[%s253 + $0xc] sm:$0xf]
      %v290 = vld [vmem:[%s253 + $0x10] sm:$0xf]
      %v291 = vld [vmem:[%s253 + $0x14] sm:$0xf]
      %v292 = vld [vmem:[%s253 + $0x18] sm:$0xf]
      %v293 = vld [vmem:[%s253 + $0x1c] sm:$0xf]
      %v294 = vld [vmem:[%s253 + $0x20] sm:$0xf]
      %v295 = vld [vmem:[%s253 + $0x24] sm:$0xf]
      %v296 = vld [vmem:[%s253 + $0x28] sm:$0xf]
      %v297 = vld [vmem:[%s253 + $0x2c] sm:$0xf]
      %v298 = vld [vmem:[%s253 + $0x30] sm:$0xf]
      %v299 = vld [vmem:[%s253 + $0x34] sm:$0xf]
      %v300 = vld [vmem:[%s253 + $0x38] sm:$0xf]
      %v301 = vld [vmem:[%s253 + $0x3c] sm:$0xf]
      %v302 = vld [vmem:[%s253 + $0x40] sm:$0xf]
      %v303 = vld [vmem:[%s253 + $0x44] sm:$0xf]
      %v320 = vunpack.c.l.b16 %v270
      %v321 = vunpack.c.h.b16 %v270
      %v322 = vunpack.c.l.b16 %v271
      %v323 = vunpack.c.h.b16 %v271
      %v324 = vunpack.c.l.b16 %v272
      %v325 = vunpack.c.h.b16 %v272
      %v326 = vunpack.c.l.b16 %v273
      %v327 = vunpack.c.h.b16 %v273
      %v328 = vunpack.c.l.b16 %v274
      %v329 = vunpack.c.h.b16 %v274
      %v330 = vunpack.c.l.b16 %v275
      %v331 = vunpack.c.h.b16 %v275
      %v332 = vunpack.c.l.b16 %v276
      %v333 = vunpack.c.h.b16 %v276
      %v334 = vunpack.c.l.b16 %v277
      %v335 = vunpack.c.h.b16 %v277
      %v336 = vunpack.c.l.b16 %v278
      %v337 = vunpack.c.h.b16 %v278
      %v338 = vunpack.c.l.b16 %v279
      %v339 = vunpack.c.h.b16 %v279
      %v340 = vunpack.c.l.b16 %v280
      %v341 = vunpack.c.h.b16 %v280
      %v342 = vunpack.c.l.b16 %v281
      %v343 = vunpack.c.h.b16 %v281
      %v344 = vunpack.c.l.b16 %v282
      %v345 = vunpack.c.h.b16 %v282
      %v346 = vunpack.c.l.b16 %v283
      %v347 = vunpack.c.h.b16 %v283
      %v348 = vunpack.c.l.b16 %v284
      %v349 = vunpack.c.h.b16 %v284
      %v350 = vunpack.c.l.b16 %v285
      %v351 = vunpack.c.h.b16 %v285
      %v352 = vpack.c.b16 %v322, %v320
      %v353 = vpack.c.b16 %v323, %v321
      %v354 = vpack.c.b16 %v326, %v324
      %v355 = vpack.c.b16 %v327, %v325
      %v356 = vpack.c.b16 %v330, %v328
      %v357 = vpack.c.b16 %v331, %v329
      %v358 = vpack.c.b16 %v334, %v332
      %v359 = vpack.c.b16 %v335, %v333
      %v360 = vpack.c.b16 %v338, %v336
      %v361 = vpack.c.b16 %v339, %v337
      %v362 = vpack.c.b16 %v342, %v340
      %v363 = vpack.c.b16 %v343, %v341
      %v364 = vpack.c.b16 %v346, %v344
      %v365 = vpack.c.b16 %v347, %v345
      %v366 = vpack.c.b16 %v350, %v348
      %v367 = vpack.c.b16 %v351, %v349
      %v394 = vunpack.c.l.b16 %v286
      %v395 = vunpack.c.l.b16 %v287
      %v396 = vunpack.c.l.b16 %v288
      %v397 = vunpack.c.l.b16 %v289
      %v398 = vunpack.c.l.b16 %v290
      %v399 = vunpack.c.l.b16 %v291
      %v400 = vunpack.c.l.b16 %v292
      %v401 = vunpack.c.l.b16 %v293
      %v402 = vunpack.c.l.b16 %v294
      %v403 = vunpack.c.l.b16 %v295
      %v404 = vunpack.c.l.b16 %v296
      %v405 = vunpack.c.l.b16 %v297
      %v406 = vunpack.c.l.b16 %v298
      %v407 = vunpack.c.l.b16 %v299
      %v408 = vunpack.c.l.b16 %v300
      %v409 = vunpack.c.l.b16 %v301
      %v410 = vunpack.c.l.b16 %v302
      %v411 = vunpack.c.l.b16 %v303
      %v412 = vpack.c.b16 %v395, %v394
      %v413 = vpack.c.b16 %v397, %v396
      %v414 = vpack.c.b16 %v399, %v398
      %v415 = vpack.c.b16 %v401, %v400
      %v416 = vpack.c.b16 %v403, %v402
      %v417 = vpack.c.b16 %v405, %v404
      %v418 = vpack.c.b16 %v407, %v406
      %v419 = vpack.c.b16 %v409, %v408
      %v420 = vpack.c.b16 %v411, %v410
      %vm430 = vcmask 130048
      %v432 = vsel %vm430, %v353, 0
      %v435 = vsel %vm430, %v355, 0
      %v438 = vsel %vm430, %v357, 0
      %v441 = vsel %vm430, %v359, 0
      %v444 = vsel %vm430, %v361, 0
      %v447 = vsel %vm430, %v363, 0
      %v450 = vsel %vm430, %v365, 0
      %v453 = vsel %vm430, %v367, 0
      %455 = vmatprep.subr.bf16.mxu0 0
      %456 = vmatpush1.bf16.msra.mxu0 %v412
      %457 = vmatprep.subr.bf16.mxu0 0
      %458 = vmatpush1.bf16.msra.mxu0 %v413
      %459 = vmatprep.subr.bf16.mxu0 0
      %460 = vmatpush1.bf16.msra.mxu0 %v414
      %461 = vmatprep.subr.bf16.mxu0 0
      %462 = vmatpush1.bf16.msra.mxu0 %v415
      %463 = vmatprep.subr.bf16.mxu0 0
      %464 = vmatpush1.bf16.msra.mxu0 %v416
      %465 = vmatprep.subr.bf16.mxu0 0
      %466 = vmatpush1.bf16.msra.mxu0 %v417
      %467 = vmatprep.subr.bf16.mxu0 0
      %468 = vmatpush1.bf16.msra.mxu0 %v418
      %469 = vmatprep.subr.bf16.mxu0 0
      %470 = vmatpush1.bf16.msra.mxu0 %v419
      %471 = vmatprep.subr.bf16.mxu0 0
      %472 = vmatpush1.bf16.msra.mxu0 %v420
      %473 = vmatprep.subr.bf16.mxu0 0
      %474 = vmatpush1.bf16.msra.mxu0 0
      %475 = vmatprep.subr.bf16.mxu0 0
      %476 = vmatpush1.bf16.msra.mxu0 0
      %477 = vmatprep.subr.bf16.mxu0 0
      %478 = vmatpush1.bf16.msra.mxu0 0
      %479 = vmatprep.subr.bf16.mxu0 0
      %480 = vmatpush1.bf16.msra.mxu0 0
      %481 = vmatprep.subr.bf16.mxu0 0
      %482 = vmatpush1.bf16.msra.mxu0 0
      %483 = vmatprep.subr.bf16.mxu0 0
      %484 = vmatpush1.bf16.msra.mxu0 0
      %485 = vmatprep.subr.bf16.mxu0 0
      %486 = vmatpush1.bf16.msra.mxu0 0
      %487 = vmatprep.mubr.bf16.mxu0 %v432
      %488 = vmatmul.mubr.bf16.gmra.mrb[0].mxu0 %v352
      %v489 = vpop.f32.mrb[0].mxu0
      %v490 = vadd.f32 0.0, %v489
      %v491 = vpop.f32.mrb[0].mxu0
      %v492 = vpop.f32.mrb[0].mxu0
      %v493 = vadd.f32 0.0, %v492
      %v494 = vpop.f32.mrb[0].mxu0
      %495 = vmatprep.mubr.bf16.mxu0 %v435
      %496 = vmatmul.mubr.bf16.gmra.mrb[0].mxu0 %v354
      %v497 = vpop.f32.mrb[0].mxu0
      %v498 = vadd.f32 0.0, %v497
      %v499 = vpop.f32.mrb[0].mxu0
      %v500 = vpop.f32.mrb[0].mxu0
      %v501 = vadd.f32 0.0, %v500
      %v502 = vpop.f32.mrb[0].mxu0
      %503 = vmatprep.mubr.bf16.mxu0 %v438
      %504 = vmatmul.mubr.bf16.gmra.mrb[0].mxu0 %v356
      %v505 = vpop.f32.mrb[0].mxu0
      %v506 = vadd.f32 0.0, %v505
      %v507 = vpop.f32.mrb[0].mxu0
      %v508 = vpop.f32.mrb[0].mxu0
      %v509 = vadd.f32 0.0, %v508
      %v510 = vpop.f32.mrb[0].mxu0
      %511 = vmatprep.mubr.bf16.mxu0 %v441
      %512 = vmatmul.mubr.bf16.gmra.mrb[0].mxu0 %v358
      %v513 = vpop.f32.mrb[0].mxu0
      %v514 = vadd.f32 0.0, %v513
      %v515 = vpop.f32.mrb[0].mxu0
      %v516 = vpop.f32.mrb[0].mxu0
      %v517 = vadd.f32 0.0, %v516
      %v518 = vpop.f32.mrb[0].mxu0
      %519 = vmatprep.mubr.bf16.mxu0 %v444
      %520 = vmatmul.mubr.bf16.gmra.mrb[0].mxu0 %v360
      %v521 = vpop.f32.mrb[0].mxu0
      %v522 = vadd.f32 0.0, %v521
      %v523 = vpop.f32.mrb[0].mxu0
      %v524 = vpop.f32.mrb[0].mxu0
      %v525 = vadd.f32 0.0, %v524
      %v526 = vpop.f32.mrb[0].mxu0
      %527 = vmatprep.mubr.bf16.mxu0 %v447
      %528 = vmatmul.mubr.bf16.gmra.mrb[0].mxu0 %v362
      %v529 = vpop.f32.mrb[0].mxu0
      %v530 = vadd.f32 0.0, %v529
      %v531 = vpop.f32.mrb[0].mxu0
      %v532 = vpop.f32.mrb[0].mxu0
      %v533 = vadd.f32 0.0, %v532
      %v534 = vpop.f32.mrb[0].mxu0
      %535 = vmatprep.mubr.bf16.mxu0 %v450
      %536 = vmatmul.mubr.bf16.gmra.mrb[0].mxu0 %v364
      %v537 = vpop.f32.mrb[0].mxu0
      %v538 = vadd.f32 0.0, %v537
      %v539 = vpop.f32.mrb[0].mxu0
      %v540 = vpop.f32.mrb[0].mxu0
      %v541 = vadd.f32 0.0, %v540
      %v542 = vpop.f32.mrb[0].mxu0
      %543 = vmatprep.mubr.bf16.mxu0 %v453
      %544 = vmatmul.mubr.bf16.gmra.mrb[0].mxu0 %v366
      %v545 = vpop.f32.mrb[0].mxu0
      %v546 = vadd.f32 0.0, %v545
      %v547 = vpop.f32.mrb[0].mxu0
      %v548 = vpop.f32.mrb[0].mxu0
      %v549 = vadd.f32 0.0, %v548
      %v550 = vpop.f32.mrb[0].mxu0
      %551 = vdwg.mxu0
      %v552 = vld [vmem:[%s256] sm:$0x1]
      %v554 = vlaneseq
      %v555 = vshrl.u32 %v554, 7
      %v556 = vsub.s32 0, %v555
      %v557 = vrot.slane %v552, %v556
      %v559 = vmul.f32 %v490, %v557
      %v560 = vmul.f32 %v493, %v557
      %v561 = vmul.f32 %v498, %v557
      %v562 = vmul.f32 %v501, %v557
      %v563 = vmul.f32 %v506, %v557
      %v564 = vmul.f32 %v509, %v557
      %v565 = vmul.f32 %v514, %v557
      %v566 = vmul.f32 %v517, %v557
      %v567 = vmul.f32 %v522, %v557
      %v568 = vmul.f32 %v525, %v557
      %v569 = vmul.f32 %v530, %v557
      %v570 = vmul.f32 %v533, %v557
      %v571 = vmul.f32 %v538, %v557
      %v572 = vmul.f32 %v541, %v557
      %v573 = vmul.f32 %v546, %v557
      %v574 = vmul.f32 %v549, %v557
      %v575 = vld [vmem:[%s259] sm:$0x1]
      %v577 = vlaneseq
      %v578 = vshrl.u32 %v577, 7
      %v579 = vsub.s32 0, %v578
      %v580 = vrot.slane %v575, %v579
      %v582 = vadd.f32 %v559, %v580
      %v583 = vadd.f32 %v560, %v580
      %v584 = vadd.f32 %v561, %v580
      %v585 = vadd.f32 %v562, %v580
      %v586 = vadd.f32 %v563, %v580
      %v587 = vadd.f32 %v564, %v580
      %v588 = vadd.f32 %v565, %v580
      %v589 = vadd.f32 %v566, %v580
      %v590 = vadd.f32 %v567, %v580
      %v591 = vadd.f32 %v568, %v580
      %v592 = vadd.f32 %v569, %v580
      %v593 = vadd.f32 %v570, %v580
      %v594 = vadd.f32 %v571, %v580
      %v595 = vadd.f32 %v572, %v580
      %v596 = vadd.f32 %v573, %v580
      %v597 = vadd.f32 %v574, %v580
      %v598 = vmax.f32 %v582, 0.0
      %v599 = vmax.f32 %v583, 0.0
      %v600 = vmax.f32 %v584, 0.0
      %v601 = vmax.f32 %v585, 0.0
      %v602 = vmax.f32 %v586, 0.0
      %v603 = vmax.f32 %v587, 0.0
      %v604 = vmax.f32 %v588, 0.0
      %v605 = vmax.f32 %v589, 0.0
      %v606 = vmax.f32 %v590, 0.0
      %v607 = vmax.f32 %v591, 0.0
      %v608 = vmax.f32 %v592, 0.0
      %v609 = vmax.f32 %v593, 0.0
      %v610 = vmax.f32 %v594, 0.0
      %v611 = vmax.f32 %v595, 0.0
      %v612 = vmax.f32 %v596, 0.0
      %v613 = vmax.f32 %v597, 0.0
      %v614 = vpack.c.bf16 %v599, %v598
      %v615 = vpack.c.bf16 %v601, %v600
      %v616 = vpack.c.bf16 %v603, %v602
      %v617 = vpack.c.bf16 %v605, %v604
      %v618 = vpack.c.bf16 %v607, %v606
      %v619 = vpack.c.bf16 %v609, %v608
      %v620 = vpack.c.bf16 %v611, %v610
      %v621 = vpack.c.bf16 %v613, %v612
      %v630 = vunpack.c.l.b16 %v614
      %v631 = vunpack.c.h.b16 %v614
      %v632 = vunpack.c.l.b16 %v615
      %v633 = vunpack.c.h.b16 %v615
      %v634 = vunpack.c.l.b16 %v616
      %v635 = vunpack.c.h.b16 %v616
      %v636 = vunpack.c.l.b16 %v617
      %v637 = vunpack.c.h.b16 %v617
      %v638 = vunpack.c.l.b16 %v618
      %v639 = vunpack.c.h.b16 %v618
      %v640 = vunpack.c.l.b16 %v619
      %v641 = vunpack.c.h.b16 %v619
      %v642 = vunpack.c.l.b16 %v620
      %v643 = vunpack.c.h.b16 %v620
      %v644 = vunpack.c.l.b16 %v621
      %v645 = vunpack.c.h.b16 %v621
      %v646 = vpack.c.b16 %v630, %v630
      %v647 = vpack.c.b16 %v631, %v631
      %v648 = vpack.c.b16 %v632, %v632
      %v649 = vpack.c.b16 %v633, %v633
      %v650 = vpack.c.b16 %v634, %v634
      %v651 = vpack.c.b16 %v635, %v635
      %v652 = vpack.c.b16 %v636, %v636
      %v653 = vpack.c.b16 %v637, %v637
      %v654 = vpack.c.b16 %v638, %v638
      %v655 = vpack.c.b16 %v639, %v639
      %v656 = vpack.c.b16 %v640, %v640
      %v657 = vpack.c.b16 %v641, %v641
      %v658 = vpack.c.b16 %v642, %v642
      %v659 = vpack.c.b16 %v643, %v643
      %v660 = vpack.c.b16 %v644, %v644
      %v661 = vpack.c.b16 %v645, %v645
      %vm678 = vcmask 60416
      %679 = vst.msk [vmem:[%s267] sm:$0xf] %vm678, %v646
      %680 = vst.msk [vmem:[%s267 + $0x4] sm:$0xf] %vm678, %v647
      %681 = vst.msk [vmem:[%s267 + $0x8] sm:$0xf] %vm678, %v648
      %682 = vst.msk [vmem:[%s267 + $0xc] sm:$0xf] %vm678, %v649
      %683 = vst.msk [vmem:[%s267 + $0x10] sm:$0xf] %vm678, %v650
      %684 = vst.msk [vmem:[%s267 + $0x14] sm:$0xf] %vm678, %v651
      %685 = vst.msk [vmem:[%s267 + $0x18] sm:$0xf] %vm678, %v652
      %686 = vst.msk [vmem:[%s267 + $0x1c] sm:$0xf] %vm678, %v653
      %687 = vst.msk [vmem:[%s267 + $0x20] sm:$0xf] %vm678, %v654
      %688 = vst.msk [vmem:[%s267 + $0x24] sm:$0xf] %vm678, %v655
      %689 = vst.msk [vmem:[%s267 + $0x28] sm:$0xf] %vm678, %v656
      %690 = vst.msk [vmem:[%s267 + $0x2c] sm:$0xf] %vm678, %v657
      %691 = vst.msk [vmem:[%s267 + $0x30] sm:$0xf] %vm678, %v658
      %692 = vst.msk [vmem:[%s267 + $0x34] sm:$0xf] %vm678, %v659
      %693 = vst.msk [vmem:[%s267 + $0x38] sm:$0xf] %vm678, %v660
      %694 = vst.msk [vmem:[%s267 + $0x3c] sm:$0xf] %vm678, %v661
      %s695 = smul.u32 16, %s19
      %p696 = scmp.lt.s32.totalorder %s695, 63
      %s697 = scalar_select %p696, %s695, 63
      %p698 = scmp.lt.s32.totalorder %s20, 0
      %s699 = scalar_select %p698, %s20, 0
      %s700 = sadd.s32 %s699, %s697
      %s701 = smul.addr %s700, 4
      %s702 = scalar_lea.vmem %s4, %s701
      // Predicated region
      $region37: #{unet_forward.43} parent=35 // pred_check
        %p703 = pneg %p151
      $region38: #{unet_forward.43} parent=35 // pred_check_branch
        %705 = sbr.rel (%p703) target = $region40
      $region39: #{unet_forward.43} parent=35 // pred_region
        %s706 = smul.u32 16, %s19
      $region40: #{unet_forward.43} parent=35 // pred_fallthru
        _
    $region36: #{unet_forward.43} parent=5 // pred_fallthru
      _
    %p707 = scmp.le.s32.totalorder 2, %s10
    // Predicated region
    $region41: #{unet_forward.43} parent=5 // pred_check
      %p708 = pneg %p707
    $region42: #{unet_forward.43} parent=5 // pred_check_branch
      %710 = sbr.rel (%p708) target = $region44
    $region43: #{unet_forward.43} parent=5 // pred_region
      %s711 = ssub.s32 %s10, 2
      // Predicated region
      $region45: #{unet_forward.43} parent=43 // pred_check
        %p712 = pneg %p157
      $region46: #{unet_forward.43} parent=43 // pred_check_branch
        %714 = sbr.rel (%p712) target = $region48
      $region47: #{unet_forward.43} parent=43 // pred_region
        %s715 = smul.u32 16, %s21
        %p716 = scmp.lt.s32.totalorder %s715, 63
        %s717 = scalar_select %p716, %s715, 63
        %p718 = scmp.lt.s32.totalorder %s22, 0
        %s719 = scalar_select %p718, %s22, 0
        %s720 = sadd.s32 %s719, %s717
        %s721 = smul.addr %s720, 4
        %s722 = scalar_lea.vmem %s4, %s721
      $region48: #{unet_forward.43} parent=43 // pred_fallthru
        _
    $region44: #{unet_forward.43} parent=5 // pred_fallthru
      _
  $region6: #{unet_forward.43} parent=0 // loop_footer
    %s14 = sadd.s32 1, %s10
  $region7: #{unet_forward.43} parent=0 // loop_footer_branch
    %9 = sbr.rel target = $region3
  $region8: #{unet_forward.43} parent=0 // loop_exit
    _

// kernel: unet_forward.45
$region0: #{unet_forward.45}
  #allocation0 [shape = 'u32[]', space=smem, size = 0x4, offset = 0x4, fixed_abs, tag = 'smem constant byte address 0x4 - core index']
  #allocation1 [shape = 'u32[144,128]{1,0:T(1,128)}', space=vmem, size = 0x12000, scoped, tag = 'internal scratch']
  %s0 = inlined_call_operand.vmem [shape: bf16[512,8], index: 0, kind: input, shape index: {}]
  %s1 = inlined_call_operand.vmem [shape: bf16[8,4], index: 1, kind: input, shape index: {}]
  %s2 = inlined_call_operand.vmem [shape: f32[1,4], index: 2, kind: input, shape index: {}]
  %s3 = inlined_call_operand.vmem [shape: f32[1,4], index: 3, kind: input, shape index: {}]
  %s4 = inlined_call_operand.vmem [shape: f32[512,4], index: 4, kind: output, shape index: {}]
  %s5 = sld [smem:[#allocation0]]
  $region49: #{unet_forward.45} parent=0
    _
  %s7 = ssub.s32 1, %s5
  %s8 = scalar_select 0, %s7, %s5
  loop: start=0, step=1, limit=6
  $region2: #{unet_forward.45} parent=0 // loop_pre_header
    _
  $region3: #{unet_forward.45} parent=0 // loop_header
    %s10 = sphi 0, %s14
    %p11 = scmp.ge.s32.totalorder %s10, 6
    %s17 = sphi 0, %s29
    %s18 = sphi 0, %s25
    %s19 = sphi 0, %s17
    %s20 = sphi 0, %s18
    %s21 = sphi 0, %s19
    %s22 = sphi 0, %s20
    %s32 = sphi 0, %s34
    %s35 = sphi 0, %s32
    %s36 = sphi 0, %s35
    %s52 = sphi 0, %s36
    %s58 = sphi 0, %s60
    %s61 = sphi 0, %s58
    %s62 = sphi 0, %s61
    %s78 = sphi 0, %s62
    %s84 = sphi 0, %s86
    %s87 = sphi 0, %s84
    %s88 = sphi 0, %s87
    %s104 = sphi 0, %s88
    %s110 = sphi 0, %s112
    %s113 = sphi 0, %s110
    %s114 = sphi 0, %s113
    %s130 = sphi 0, %s114
    %s138 = sphi 0, %s140
    %s141 = sphi 0, %s138
    %s142 = sphi 0, %s141
    %s158 = sphi 0, %s142
  $region4: #{unet_forward.45} parent=0 // loop_header_branch
    %13 = sbr.rel (%p11) target = $region8
  $region5: #{unet_forward.45} parent=0 // loop_body
    %s15 = ssub.s32 %s10, 1
    %s16 = ssub.s32 %s10, 2
    %s23 = sadd.s32 1, %s18
    %p24 = scmp.ge.s32.totalorder %s23, 1
    %s25 = scalar_select %p24, 0, %s23
    %s26 = sadd.s32 1, %s17
    %s27 = scalar_select %p24, %s26, %s17
    %p28 = scmp.ge.s32.totalorder %s27, 4
    %s29 = scalar_select %p28, 0, %s27
    %s30 = ssub.s32 %s17, %s29
    %p31 = scmp.eq.s32.totalorder %s30, 0
    %s33 = sadd.s32 %s32, 1
    %s34 = scalar_select %p31, %s32, %s33
    %p37 = pneg %p31
    %p38 = scmp.eq.s32.totalorder %s10, 3
    %p39 = por %p37, %p38
    %p40 = scmp.ne.s32.totalorder %s32, %s35
    %p41 = scmp.eq.s32.totalorder %s10, 0
    %p42 = por %p40, %p41
    %p43 = scmp.ne.s32.totalorder %s32, %s35
    %p44 = scmp.eq.s32.totalorder %s15, 3
    %p45 = por %p43, %p44
    %p46 = scmp.ne.s32.totalorder %s35, %s36
    %p47 = scmp.eq.s32.totalorder %s15, 0
    %p48 = por %p46, %p47
    %p49 = scmp.ne.s32.totalorder %s35, %s36
    %p50 = scmp.eq.s32.totalorder %s16, 3
    %p51 = por %p49, %p50
    %p53 = scmp.ne.s32.totalorder %s36, %s52
    %p54 = scmp.eq.s32.totalorder %s16, 0
    %p55 = por %p53, %p54
    %s56 = ssub.s32 %s18, %s25
    %p57 = scmp.eq.s32.totalorder %s56, 0
    %s59 = sadd.s32 %s58, 1
    %s60 = scalar_select %p57, %s58, %s59
    %p63 = pneg %p57
    %p64 = scmp.eq.s32.totalorder %s10, 3
    %p65 = por %p63, %p64
    %p66 = scmp.ne.s32.totalorder %s58, %s61
    %p67 = scmp.eq.s32.totalorder %s10, 0
    %p68 = por %p66, %p67
    %p69 = scmp.ne.s32.totalorder %s58, %s61
    %p70 = scmp.eq.s32.totalorder %s15, 3
    %p71 = por %p69, %p70
    %p72 = scmp.ne.s32.totalorder %s61, %s62
    %p73 = scmp.eq.s32.totalorder %s15, 0
    %p74 = por %p72, %p73
    %p75 = scmp.ne.s32.totalorder %s61, %s62
    %p76 = scmp.eq.s32.totalorder %s16, 3
    %p77 = por %p75, %p76
    %p79 = scmp.ne.s32.totalorder %s62, %s78
    %p80 = scmp.eq.s32.totalorder %s16, 0
    %p81 = por %p79, %p80
    %s82 = ssub.s32 %s18, %s25
    %p83 = scmp.eq.s32.totalorder %s82, 0
    %s85 = sadd.s32 %s84, 1
    %s86 = scalar_select %p83, %s84, %s85
    %p89 = pneg %p83
    %p90 = scmp.eq.s32.totalorder %s10, 3
    %p91 = por %p89, %p90
    %p92 = scmp.ne.s32.totalorder %s84, %s87
    %p93 = scmp.eq.s32.totalorder %s10, 0
    %p94 = por %p92, %p93
    %p95 = scmp.ne.s32.totalorder %s84, %s87
    %p96 = scmp.eq.s32.totalorder %s15, 3
    %p97 = por %p95, %p96
    %p98 = scmp.ne.s32.totalorder %s87, %s88
    %p99 = scmp.eq.s32.totalorder %s15, 0
    %p100 = por %p98, %p99
    %p101 = scmp.ne.s32.totalorder %s87, %s88
    %p102 = scmp.eq.s32.totalorder %s16, 3
    %p103 = por %p101, %p102
    %p105 = scmp.ne.s32.totalorder %s88, %s104
    %p106 = scmp.eq.s32.totalorder %s16, 0
    %p107 = por %p105, %p106
    %s108 = ssub.s32 %s18, %s25
    %p109 = scmp.eq.s32.totalorder %s108, 0
    %s111 = sadd.s32 %s110, 1
    %s112 = scalar_select %p109, %s110, %s111
    %p115 = pneg %p109
    %p116 = scmp.eq.s32.totalorder %s10, 3
    %p117 = por %p115, %p116
    %p118 = scmp.ne.s32.totalorder %s110, %s113
    %p119 = scmp.eq.s32.totalorder %s10, 0
    %p120 = por %p118, %p119
    %p121 = scmp.ne.s32.totalorder %s110, %s113
    %p122 = scmp.eq.s32.totalorder %s15, 3
    %p123 = por %p121, %p122
    %p124 = scmp.ne.s32.totalorder %s113, %s114
    %p125 = scmp.eq.s32.totalorder %s15, 0
    %p126 = por %p124, %p125
    %p127 = scmp.ne.s32.totalorder %s113, %s114
    %p128 = scmp.eq.s32.totalorder %s16, 3
    %p129 = por %p127, %p128
    %p131 = scmp.ne.s32.totalorder %s114, %s130
    %p132 = scmp.eq.s32.totalorder %s16, 0
    %p133 = por %p131, %p132
    %s134 = ssub.s32 %s17, %s29
    %s135 = ssub.s32 %s18, %s25
    %s136 = sor.u32 %s134, %s135
    %p137 = scmp.eq.s32.totalorder %s136, 0
    %s139 = sadd.s32 %s138, 1
    %s140 = scalar_select %p137, %s138, %s139
    %p143 = pneg %p137
    %p144 = scmp.eq.s32.totalorder %s10, 3
    %p145 = por %p143, %p144
    %p146 = scmp.ne.s32.totalorder %s138, %s141
    %p147 = scmp.eq.s32.totalorder %s10, 0
    %p148 = por %p146, %p147
    %p149 = scmp.ne.s32.totalorder %s138, %s141
    %p150 = scmp.eq.s32.totalorder %s15, 3
    %p151 = por %p149, %p150
    %p152 = scmp.ne.s32.totalorder %s141, %s142
    %p153 = scmp.eq.s32.totalorder %s15, 0
    %p154 = por %p152, %p153
    %p155 = scmp.ne.s32.totalorder %s141, %s142
    %p156 = scmp.eq.s32.totalorder %s16, 3
    %p157 = por %p155, %p156
    %p159 = scmp.ne.s32.totalorder %s142, %s158
    %p160 = scmp.eq.s32.totalorder %s16, 0
    %p161 = por %p159, %p160
    %p162 = scmp.le.s32.totalorder 1, %s10
    %p163 = scmp.lt.s32.totalorder %s10, 5
    %p164 = pnand %p162, %p163
    %p165 = pneg %p164
    // Predicated region
    $region9: #{unet_forward.45} parent=5 // pred_check
      _
    $region10: #{unet_forward.45} parent=5 // pred_check_branch
      %167 = sbr.rel (%p164) target = $region12
    $region11: #{unet_forward.45} parent=5 // pred_region
      %s168 = ssub.s32 %s10, 1
      // Predicated region
      $region13: #{unet_forward.45} parent=11 // pred_check
        %p169 = pneg %p74
      $region14: #{unet_forward.45} parent=11 // pred_check_branch
        %171 = sbr.rel (%p169) target = $region16
      $region15: #{unet_forward.45} parent=11 // pred_region
        %p172 = scmp.lt.s32.totalorder %s20, 0
        %s173 = scalar_select %p172, %s20, 0
        %s174 = smul.addr %s173, 4
        %s175 = scalar_lea.vmem %s1, %s174
      $region16: #{unet_forward.45} parent=11 // pred_fallthru
        _
      // Predicated region
      $region17: #{unet_forward.45} parent=11 // pred_check
        %p176 = pneg %p100
      $region18: #{unet_forward.45} parent=11 // pred_check_branch
        %178 = sbr.rel (%p176) target = $region20
      $region19: #{unet_forward.45} parent=11 // pred_region
        %p179 = scmp.lt.s32.totalorder %s20, 0
        %s180 = scalar_select %p179, %s20, 0
        %s181 = scalar_lea.vmem %s2, %s180
      $region20: #{unet_forward.45} parent=11 // pred_fallthru
        _
      // Predicated region
      $region21: #{unet_forward.45} parent=11 // pred_check
        %p182 = pneg %p126
      $region22: #{unet_forward.45} parent=11 // pred_check_branch
        %184 = sbr.rel (%p182) target = $region24
      $region23: #{unet_forward.45} parent=11 // pred_region
        %p185 = scmp.lt.s32.totalorder %s20, 0
        %s186 = scalar_select %p185, %s20, 0
        %s187 = scalar_lea.vmem %s3, %s186
      $region24: #{unet_forward.45} parent=11 // pred_fallthru
        _
    $region12: #{unet_forward.45} parent=5 // pred_fallthru
      _
    %p188 = scmp.lt.s32.totalorder %s10, 4
    // Predicated region
    $region25: #{unet_forward.45} parent=5 // pred_check
      %p189 = pneg %p188
    $region26: #{unet_forward.45} parent=5 // pred_check_branch
      %191 = sbr.rel (%p189) target = $region28
    $region27: #{unet_forward.45} parent=5 // pred_region
      // Predicated region
      $region29: #{unet_forward.45} parent=27 // pred_check
        %p192 = pneg %p42
      $region30: #{unet_forward.45} parent=27 // pred_check_branch
        %194 = sbr.rel (%p192) target = $region32
      $region31: #{unet_forward.45} parent=27 // pred_region
        %s195 = smul.u32 16, %s17
        %p196 = scmp.lt.s32.totalorder %s195, 63
        %s197 = scalar_select %p196, %s195, 63
        %s198 = smul.addr %s197, 4
        %s199 = scalar_lea.vmem %s0, %s198
        %s200 = smul.u32 16, %s17
      $region32: #{unet_forward.45} parent=27 // pred_fallthru
        _
    $region28: #{unet_forward.45} parent=5 // pred_fallthru
      _
    %p201 = scmp.le.s32.totalorder 1, %s10
    %p202 = scmp.lt.s32.totalorder %s10, 5
    %p203 = pnand %p201, %p202
    %p204 = pneg %p203
    // Predicated region
    $region33: #{unet_forward.45} parent=5 // pred_check
      _
    $region34: #{unet_forward.45} parent=5 // pred_check_branch
      %206 = sbr.rel (%p203) target = $region36
    $region35: #{unet_forward.45} parent=5 // pred_region
      %s207 = ssub.s32 %s10, 1
      %s208 = smul.u32 16, %s19
      %p209 = scmp.lt.s32.totalorder %s208, 63
      %s210 = scalar_select %p209, %s208, 63
      %s211 = smul.addr %s210, 4
      %s212 = scalar_lea.vmem %s0, %s211
      %p213 = pneg %p48
      %p214 = pneg %p45
      %p215 = scmp.lt.s32.totalorder %s20, 0
      %s216 = scalar_select %p215, %s20, 0
      %s217 = smul.addr %s216, 4
      %s218 = scalar_lea.vmem %s1, %s217
      %p219 = pneg %p74
      %p220 = pneg %p71
      %p221 = scmp.lt.s32.totalorder %s20, 0
      %s222 = scalar_select %p221, %s20, 0
      %s223 = scalar_lea.vmem %s2, %s222
      %p224 = pneg %p100
      %p225 = pneg %p97
      %p226 = scmp.lt.s32.totalorder %s20, 0
      %s227 = scalar_select %p226, %s20, 0
      %s228 = scalar_lea.vmem %s3, %s227
      %p229 = pneg %p126
      %p230 = pneg %p123
      %p231 = pneg %p154
      %p232 = pneg %p151
      %s233 = smul.u32 16, %s19
      %p234 = scmp.lt.s32.totalorder %s233, 63
      %s235 = scalar_select %p234, %s233, 63
      %p236 = scmp.lt.s32.totalorder %s20, 0
      %s237 = scalar_select %p236, %s20, 0
      %s238 = sadd.s32 %s237, %s235
      %s239 = smul.addr %s238, 8
      %s240 = scalar_lea.vmem %s4, %s239
      %s241 = smul.u32 16, %s19
      %p242 = scmp.lt.s32.totalorder %s241, 63
      %s243 = scalar_select %p242, %s241, 63
      %s244 = smul.addr %s243, 4
      %s245 = scalar_lea.vmem %s0, %s244
      %s246 = smul.u32 16, %s19
      %p247 = scmp.lt.s32.totalorder %s20, 0
      %s248 = scalar_select %p247, %s20, 0
      %s249 = smul.addr %s248, 4
      %s250 = scalar_lea.vmem %s1, %s249
      %p251 = scmp.lt.s32.totalorder %s20, 0
      %s252 = scalar_select %p251, %s20, 0
      %s253 = scalar_lea.vmem %s2, %s252
      %p254 = scmp.lt.s32.totalorder %s20, 0
      %s255 = scalar_select %p254, %s20, 0
      %s256 = scalar_lea.vmem %s3, %s255
      %s257 = smul.u32 16, %s19
      %p258 = scmp.lt.s32.totalorder %s257, 63
      %s259 = scalar_select %p258, %s257, 63
      %p260 = scmp.lt.s32.totalorder %s20, 0
      %s261 = scalar_select %p260, %s20, 0
      %s262 = sadd.s32 %s261, %s259
      %s263 = smul.addr %s262, 8
      %s264 = scalar_lea.vmem %s4, %s263
      %s265 = smul.u32 16, %s19
      %v267 = vld [vmem:[%s245] sm:$0xf]
      %v268 = vld [vmem:[%s245 + $0x4] sm:$0xf]
      %v269 = vld [vmem:[%s245 + $0x8] sm:$0xf]
      %v270 = vld [vmem:[%s245 + $0xc] sm:$0xf]
      %v271 = vld [vmem:[%s245 + $0x10] sm:$0xf]
      %v272 = vld [vmem:[%s245 + $0x14] sm:$0xf]
      %v273 = vld [vmem:[%s245 + $0x18] sm:$0xf]
      %v274 = vld [vmem:[%s245 + $0x1c] sm:$0xf]
      %v275 = vld [vmem:[%s245 + $0x20] sm:$0xf]
      %v276 = vld [vmem:[%s245 + $0x24] sm:$0xf]
      %v277 = vld [vmem:[%s245 + $0x28] sm:$0xf]
      %v278 = vld [vmem:[%s245 + $0x2c] sm:$0xf]
      %v279 = vld [vmem:[%s245 + $0x30] sm:$0xf]
      %v280 = vld [vmem:[%s245 + $0x34] sm:$0xf]
      %v281 = vld [vmem:[%s245 + $0x38] sm:$0xf]
      %v282 = vld [vmem:[%s245 + $0x3c] sm:$0xf]
      %v283 = vld [vmem:[%s250] sm:$0xf]
      %v300 = vunpack.c.l.b16 %v267
      %v301 = vunpack.c.l.b16 %v268
      %v302 = vunpack.c.l.b16 %v269
      %v303 = vunpack.c.l.b16 %v270
      %v304 = vunpack.c.l.b16 %v271
      %v305 = vunpack.c.l.b16 %v272
      %v306 = vunpack.c.l.b16 %v273
      %v307 = vunpack.c.l.b16 %v274
      %v308 = vunpack.c.l.b16 %v275
      %v309 = vunpack.c.l.b16 %v276
      %v310 = vunpack.c.l.b16 %v277
      %v311 = vunpack.c.l.b16 %v278
      %v312 = vunpack.c.l.b16 %v279
      %v313 = vunpack.c.l.b16 %v280
      %v314 = vunpack.c.l.b16 %v281
      %v315 = vunpack.c.l.b16 %v282
      %v316 = vpack.c.b16 %v301, %v300
      %v317 = vpack.c.b16 %v303, %v302
      %v318 = vpack.c.b16 %v305, %v304
      %v319 = vpack.c.b16 %v307, %v306
      %v320 = vpack.c.b16 %v309, %v308
      %v321 = vpack.c.b16 %v311, %v310
      %v322 = vpack.c.b16 %v313, %v312
      %v323 = vpack.c.b16 %v315, %v314
      %vm324 = vcmask 64512
      %v326 = vsel %vm324, %v316, 0
      %v329 = vsel %vm324, %v317, 0
      %v332 = vsel %vm324, %v318, 0
      %v335 = vsel %vm324, %v319, 0
      %v338 = vsel %vm324, %v320, 0
      %v341 = vsel %vm324, %v321, 0
      %v344 = vsel %vm324, %v322, 0
      %v347 = vsel %vm324, %v323, 0
      %vm349 = vcmask 1043456
      %v351 = vsel %vm349, %v283, 0
      %353 = vmatprep.subr.bf16.mxu0 0
      %354 = vmatpush1.bf16.msra.mxu0 %v351
      %355 = vmatprep.subr.bf16.mxu0 0
      %356 = vmatpush1.bf16.msra.mxu0 0
      %357 = vmatprep.subr.bf16.mxu0 0
      %358 = vmatpush1.bf16.msra.mxu0 0
      %359 = vmatprep.subr.bf16.mxu0 0
      %360 = vmatpush1.bf16.msra.mxu0 0
      %361 = vmatprep.subr.bf16.mxu0 0
      %362 = vmatpush1.bf16.msra.mxu0 0
      %363 = vmatprep.subr.bf16.mxu0 0
      %364 = vmatpush1.bf16.msra.mxu0 0
      %365 = vmatprep.subr.bf16.mxu0 0
      %366 = vmatpush1.bf16.msra.mxu0 0
      %367 = vmatprep.subr.bf16.mxu0 0
      %368 = vmatpush1.bf16.msra.mxu0 0
      %369 = vmatprep.subr.bf16.mxu0 0
      %370 = vmatpush1.bf16.msra.mxu0 0
      %371 = vmatprep.subr.bf16.mxu0 0
      %372 = vmatpush1.bf16.msra.mxu0 0
      %373 = vmatprep.subr.bf16.mxu0 0
      %374 = vmatpush1.bf16.msra.mxu0 0
      %375 = vmatprep.subr.bf16.mxu0 0
      %376 = vmatpush1.bf16.msra.mxu0 0
      %377 = vmatprep.subr.bf16.mxu0 0
      %378 = vmatpush1.bf16.msra.mxu0 0
      %379 = vmatprep.subr.bf16.mxu0 0
      %380 = vmatpush1.bf16.msra.mxu0 0
      %381 = vmatprep.subr.bf16.mxu0 0
      %382 = vmatpush1.bf16.msra.mxu0 0
      %383 = vmatprep.subr.bf16.mxu0 0
      %384 = vmatpush1.bf16.msra.mxu0 0
      %385 = vmatprep.mubr.bf16.mxu0 0
      %386 = vmatmul.mubr.bf16.gmra.mrb[0].mxu0 %v326
      %v387 = vpop.f32.mrb[0].mxu0
      %v388 = vadd.f32 0.0, %v387
      %v389 = vpop.f32.mrb[0].mxu0
      %v390 = vpop.f32.mrb[0].mxu0
      %v391 = vadd.f32 0.0, %v390
      %v392 = vpop.f32.mrb[0].mxu0
      %393 = vmatprep.mubr.bf16.mxu0 0
      %394 = vmatmul.mubr.bf16.gmra.mrb[0].mxu0 %v329
      %v395 = vpop.f32.mrb[0].mxu0
      %v396 = vadd.f32 0.0, %v395
      %v397 = vpop.f32.mrb[0].mxu0
      %v398 = vpop.f32.mrb[0].mxu0
      %v399 = vadd.f32 0.0, %v398
      %v400 = vpop.f32.mrb[0].mxu0
      %401 = vmatprep.mubr.bf16.mxu0 0
      %402 = vmatmul.mubr.bf16.gmra.mrb[0].mxu0 %v332
      %v403 = vpop.f32.mrb[0].mxu0
      %v404 = vadd.f32 0.0, %v403
      %v405 = vpop.f32.mrb[0].mxu0
      %v406 = vpop.f32.mrb[0].mxu0
      %v407 = vadd.f32 0.0, %v406
      %v408 = vpop.f32.mrb[0].mxu0
      %409 = vmatprep.mubr.bf16.mxu0 0
      %410 = vmatmul.mubr.bf16.gmra.mrb[0].mxu0 %v335
      %v411 = vpop.f32.mrb[0].mxu0
      %v412 = vadd.f32 0.0, %v411
      %v413 = vpop.f32.mrb[0].mxu0
      %v414 = vpop.f32.mrb[0].mxu0
      %v415 = vadd.f32 0.0, %v414
      %v416 = vpop.f32.mrb[0].mxu0
      %417 = vmatprep.mubr.bf16.mxu0 0
      %418 = vmatmul.mubr.bf16.gmra.mrb[0].mxu0 %v338
      %v419 = vpop.f32.mrb[0].mxu0
      %v420 = vadd.f32 0.0, %v419
      %v421 = vpop.f32.mrb[0].mxu0
      %v422 = vpop.f32.mrb[0].mxu0
      %v423 = vadd.f32 0.0, %v422
      %v424 = vpop.f32.mrb[0].mxu0
      %425 = vmatprep.mubr.bf16.mxu0 0
      %426 = vmatmul.mubr.bf16.gmra.mrb[0].mxu0 %v341
      %v427 = vpop.f32.mrb[0].mxu0
      %v428 = vadd.f32 0.0, %v427
      %v429 = vpop.f32.mrb[0].mxu0
      %v430 = vpop.f32.mrb[0].mxu0
      %v431 = vadd.f32 0.0, %v430
      %v432 = vpop.f32.mrb[0].mxu0
      %433 = vmatprep.mubr.bf16.mxu0 0
      %434 = vmatmul.mubr.bf16.gmra.mrb[0].mxu0 %v344
      %v435 = vpop.f32.mrb[0].mxu0
      %v436 = vadd.f32 0.0, %v435
      %v437 = vpop.f32.mrb[0].mxu0
      %v438 = vpop.f32.mrb[0].mxu0
      %v439 = vadd.f32 0.0, %v438
      %v440 = vpop.f32.mrb[0].mxu0
      %441 = vmatprep.mubr.bf16.mxu0 0
      %442 = vmatmul.mubr.bf16.gmra.mrb[0].mxu0 %v347
      %v443 = vpop.f32.mrb[0].mxu0
      %v444 = vadd.f32 0.0, %v443
      %v445 = vpop.f32.mrb[0].mxu0
      %v446 = vpop.f32.mrb[0].mxu0
      %v447 = vadd.f32 0.0, %v446
      %v448 = vpop.f32.mrb[0].mxu0
      %449 = vdwg.mxu0
      %v450 = vld [vmem:[%s253] sm:$0x1]
      %v452 = vlaneseq
      %v453 = vshrl.u32 %v452, 7
      %v454 = vsub.s32 0, %v453
      %v455 = vrot.slane %v450, %v454
      %v457 = vmul.f32 %v388, %v455
      %v458 = vmul.f32 %v391, %v455
      %v459 = vmul.f32 %v396, %v455
      %v460 = vmul.f32 %v399, %v455
      %v461 = vmul.f32 %v404, %v455
      %v462 = vmul.f32 %v407, %v455
      %v463 = vmul.f32 %v412, %v455
      %v464 = vmul.f32 %v415, %v455
      %v465 = vmul.f32 %v420, %v455
      %v466 = vmul.f32 %v423, %v455
      %v467 = vmul.f32 %v428, %v455
      %v468 = vmul.f32 %v431, %v455
      %v469 = vmul.f32 %v436, %v455
      %v470 = vmul.f32 %v439, %v455
      %v471 = vmul.f32 %v444, %v455
      %v472 = vmul.f32 %v447, %v455
      %v473 = vld [vmem:[%s256] sm:$0x1]
      %v475 = vlaneseq
      %v476 = vshrl.u32 %v475, 7
      %v477 = vsub.s32 0, %v476
      %v478 = vrot.slane %v473, %v477
      %v480 = vadd.f32 %v457, %v478
      %v481 = vadd.f32 %v458, %v478
      %v482 = vadd.f32 %v459, %v478
      %v483 = vadd.f32 %v460, %v478
      %v484 = vadd.f32 %v461, %v478
      %v485 = vadd.f32 %v462, %v478
      %v486 = vadd.f32 %v463, %v478
      %v487 = vadd.f32 %v464, %v478
      %v488 = vadd.f32 %v465, %v478
      %v489 = vadd.f32 %v466, %v478
      %v490 = vadd.f32 %v467, %v478
      %v491 = vadd.f32 %v468, %v478
      %v492 = vadd.f32 %v469, %v478
      %v493 = vadd.f32 %v470, %v478
      %v494 = vadd.f32 %v471, %v478
      %v495 = vadd.f32 %v472, %v478
      %vm496 = vcmask 31744
      %497 = vst.msk [vmem:[%s264] sm:$0xff] %vm496, %v480
      %498 = vst.msk [vmem:[%s264 + $0x8] sm:$0xff] %vm496, %v481
      %499 = vst.msk [vmem:[%s264 + $0x10] sm:$0xff] %vm496, %v482
      %500 = vst.msk [vmem:[%s264 + $0x18] sm:$0xff] %vm496, %v483
      %501 = vst.msk [vmem:[%s264 + $0x20] sm:$0xff] %vm496, %v484
      %502 = vst.msk [vmem:[%s264 + $0x28] sm:$0xff] %vm496, %v485
      %503 = vst.msk [vmem:[%s264 + $0x30] sm:$0xff] %vm496, %v486
      %504 = vst.msk [vmem:[%s264 + $0x38] sm:$0xff] %vm496, %v487
      %505 = vst.msk [vmem:[%s264 + $0x40] sm:$0xff] %vm496, %v488
      %506 = vst.msk [vmem:[%s264 + $0x48] sm:$0xff] %vm496, %v489
      %507 = vst.msk [vmem:[%s264 + $0x50] sm:$0xff] %vm496, %v490
      %508 = vst.msk [vmem:[%s264 + $0x58] sm:$0xff] %vm496, %v491
      %509 = vst.msk [vmem:[%s264 + $0x60] sm:$0xff] %vm496, %v492
      %510 = vst.msk [vmem:[%s264 + $0x68] sm:$0xff] %vm496, %v493
      %511 = vst.msk [vmem:[%s264 + $0x70] sm:$0xff] %vm496, %v494
      %512 = vst.msk [vmem:[%s264 + $0x78] sm:$0xff] %vm496, %v495
      %s513 = smul.u32 16, %s19
      %p514 = scmp.lt.s32.totalorder %s513, 63
      %s515 = scalar_select %p514, %s513, 63
      %p516 = scmp.lt.s32.totalorder %s20, 0
      %s517 = scalar_select %p516, %s20, 0
      %s518 = sadd.s32 %s517, %s515
      %s519 = smul.addr %s518, 8
      %s520 = scalar_lea.vmem %s4, %s519
      // Predicated region
      $region37: #{unet_forward.45} parent=35 // pred_check
        %p521 = pneg %p151
      $region38: #{unet_forward.45} parent=35 // pred_check_branch
        %523 = sbr.rel (%p521) target = $region40
      $region39: #{unet_forward.45} parent=35 // pred_region
        %s524 = smul.u32 16, %s19
      $region40: #{unet_forward.45} parent=35 // pred_fallthru
        _
    $region36: #{unet_forward.45} parent=5 // pred_fallthru
      _
    %p525 = scmp.le.s32.totalorder 2, %s10
    // Predicated region
    $region41: #{unet_forward.45} parent=5 // pred_check
      %p526 = pneg %p525
    $region42: #{unet_forward.45} parent=5 // pred_check_branch
      %528 = sbr.rel (%p526) target = $region44
    $region43: #{unet_forward.45} parent=5 // pred_region
      %s529 = ssub.s32 %s10, 2
      // Predicated region
      $region45: #{unet_forward.45} parent=43 // pred_check
        %p530 = pneg %p157
      $region46: #{unet_forward.45} parent=43 // pred_check_branch
        %532 = sbr.rel (%p530) target = $region48
      $region47: #{unet_forward.45} parent=43 // pred_region
        %s533 = smul.u32 16, %s21
        %p534 = scmp.lt.s32.totalorder %s533, 63
        %s535 = scalar_select %p534, %s533, 63
        %p536 = scmp.lt.s32.totalorder %s22, 0
        %s537 = scalar_select %p536, %s22, 0
        %s538 = sadd.s32 %s537, %s535
        %s539 = smul.addr %s538, 8
        %s540 = scalar_lea.vmem %s4, %s539
      $region48: #{unet_forward.45} parent=43 // pred_fallthru
        _
    $region44: #{unet_forward.45} parent=5 // pred_fallthru
      _
  $region6: #{unet_forward.45} parent=0 // loop_footer
    %s14 = sadd.s32 1, %s10
  $region7: #{unet_forward.45} parent=0 // loop_footer_branch
    %9 = sbr.rel target = $region3
  $region8: #{unet_forward.45} parent=0 // loop_exit
    _

</llo_original>
